<compile_context>
chip_gen: v7x
topology: tpu7x:2x2x1
jax: 0.10.0
libtpu: 0.0.40
codegen_flags: <defaults>
</compile_context>

<pallas_src>
import numpy as np
import jax
import jax.numpy as jnp
from jax.experimental import pallas as pl
from jax.experimental.pallas import tpu as pltpu

# The `params` dict referenced by the PyTorch module (576 = 64 * 3 * 3 forces
# conv_channels3 = 64 with 28x28 MNIST inputs, 3x3 kernels and 2x2 pooling).
PARAMS = {
    "conv_channels1": 16,
    "conv_channels2": 32,
    "conv_channels3": 64,
    "conv_kernel_size": 3,
    "maxpool_size": 2,
    "linear_features1": 128,
}
NUM_CLASSES = 10

IMG = 28                       # input spatial size
KS = PARAMS["conv_kernel_size"]
C1 = PARAMS["conv_channels1"]
C2 = PARAMS["conv_channels2"]
C3 = PARAMS["conv_channels3"]
F1 = PARAMS["linear_features1"]
H1 = IMG - KS + 1              # 26  conv1 output H == W
P1 = H1 // 2                   # 13  after pool1
H2 = P1 - KS + 1               # 11  conv2 output H == W
H2K = (H2 // 2) * 2            # 10  conv2 rows/cols actually used (floor pool)
P2 = H2 // 2                   # 5   after pool2
H3 = P2 - KS + 1               # 3   conv3 output H == W
FLAT = H3 * H3 * C3            # 576

HALF = 256                     # lane width of one width-parity half
K1 = 128                       # conv1 matmul K (3*28 = 84, zero padded)
K2 = KS * HALF                 # 768 conv2 matmul K
K3 = KS * HALF                 # 768 conv3 matmul K
N1 = 2 * HALF                  # 512 conv1 matmul N (even | odd width halves)
N2 = 2 * HALF                  # 512 conv2 matmul N
N3 = H3 * C3                   # 192 conv3 matmul N (natural (w, c) order)
OUT_PAD = 128                  # lane-dense output width (10 real classes)


# --------------------------------- kernel ------------------------------------
def make_net_kernel(nb):
    """Fused forward pass for a block of `nb` images per grid step."""

    def kernel(x_ref, m1_ref, b1_ref, m2_ref, b2_ref, m3_ref, b3_ref,
               wd1_ref, bd1_ref, wd2_ref, bd2_ref, out_ref):
        f32 = jnp.float32
        bf16 = jnp.bfloat16

        # ---- conv1 + bias + relu --------------------------------------------
        # x_ref: (26*nb, 128) bf16, height blocks ordered [even h | odd h].
        a1 = jnp.dot(x_ref[...], m1_ref[...], preferred_element_type=f32)
        a1 = jnp.maximum(a1 + b1_ref[...], 0.0)                  # (26nb, 512)
        # width pool: even-width lanes [0,256) vs odd-width lanes [256,512)
        a1w = jnp.maximum(a1[:, :HALF], a1[:, HALF:])            # (26nb, 256)
        # height pool: even-height half vs odd-height half (contiguous halves)
        p1 = jnp.maximum(a1w[: P1 * nb], a1w[P1 * nb:])          # (13nb, 256)

        # ---- conv2 + bias + relu --------------------------------------------
        # im2row = lane-concat of 3 contiguous, nb-aligned height windows.
        lhs2 = jnp.concatenate(
            [p1[ky * nb:(ky + H2K) * nb] for ky in range(KS)], axis=1)
        a2 = jnp.dot(lhs2.astype(bf16), m2_ref[...],
                     preferred_element_type=f32)
        a2 = jnp.maximum(a2 + b2_ref[...], 0.0)                  # (10nb, 512)
        a2w = jnp.maximum(a2[:, :HALF], a2[:, HALF:])            # (10nb, 256)
        # height pool: gather even / odd height blocks (nb-aligned slices)
        p2 = jnp.maximum(
            jnp.concatenate([a2w[(2 * j) * nb:(2 * j + 1) * nb]
                             for j in range(P2)], axis=0),
            jnp.concatenate([a2w[(2 * j + 1) * nb:(2 * j + 2) * nb]
                             for j in range(P2)], axis=0))       # (5nb, 256)

        # ---- conv3 + bias + relu --------------------------------------------
        lhs3 = jnp.concatenate(
            [p2[ky * nb:(ky + H3) * nb] for ky in range(KS)], axis=1)
        a3 = jnp.dot(lhs3.astype(bf16), m3_ref[...],
                     preferred_element_type=f32)
        a3 = jnp.maximum(a3 + b3_ref[...], 0.0)                  # (3nb, 192)

        # ---- dense1 + relu: accumulate one dot per conv3 output height ------
        d1 = bd1_ref[...]                                        # (1, 128)
        for h in range(H3):
            d1 = d1 + jnp.dot(a3[h * nb:(h + 1) * nb].astype(bf16),
                              wd1_ref[h], preferred_element_type=f32)
        d1 = jnp.maximum(d1, 0.0)                                # (nb, 128)

        # ---- dense2 + softmax (lanes >= 10 carry a -1e30 bias -> exp == 0) --
        logits = jnp.dot(d1.astype(bf16), wd2_ref[...],
                         preferred_element_type=f32) + bd2_ref[...]
        m = jnp.max(logits, axis=-1, keepdims=True)
        e = jnp.exp(logits - m)
        out_ref[...] = e / jnp.sum(e, axis=-1, keepdims=True)    # (nb, 128)

    return kernel


# -------------------------------- wrapper ------------------------------------
def net_forward_pallas(x_nchw, kparams, nb=32):
    """x_nchw: (B, 1, 28, 28) float32 (PyTorch layout). Returns (B, 10)."""
    assert nb % 8 == 0, "nb must be a multiple of 8 (sublane alignment)"
    (m1, b1, m2, b2, m3, b3, wd1, bd1, wd2, bd2) = kparams
    B = x_nchw.shape[0]
    bp = ((B + nb - 1) // nb) * nb                               # padded batch

    x = x_nchw.reshape(B, IMG, IMG).astype(jnp.float32)
    if bp != B:
        x = jnp.pad(x, ((0, bp - B), (0, 0), (0, 0)))

    # Host/XLA-side im2row for conv1: for each output height h the row is the
    # 3 input rows h..h+2 concatenated (84 lanes, zero-padded to 128).  Heights
    # are ordered [even | odd] so in-kernel height pooling is a half-split max,
    # and rows are grouped per batch block so each grid step reads one
    # contiguous (26*nb, 128) slab.
    win = jnp.stack([x[:, ky:ky + H1, :] for ky in range(KS)], axis=2)
    win = win.reshape(bp, H1, KS * IMG)                          # (bp, 26, 84)
    win = jnp.pad(win, ((0, 0), (0, 0), (0, K1 - KS * IMG)))     # (bp, 26, 128)
    order = np.concatenate([np.arange(0, H1, 2), np.arange(1, H1, 2)])
    win = win[:, order, :]
    lhs1 = (win.reshape(bp // nb, nb, H1, K1)
               .transpose(0, 2, 1, 3)
               .reshape(bp * H1, K1)
               .astype(jnp.bfloat16))                            # (26*bp, 128)

    weights = (m1, b1, m2, b2, m3, b3, wd1, bd1, wd2, bd2)

    # NOTE: weights could use pipeline_mode=pl.Buffered(1) (constant index_map)
    # to drop the second pipeline buffer (~1.4 MB); skipped to keep lowering
    # risk minimal -- VMEM headroom is large even on v7x at nb<=64.
    def const_spec(a):                 # full-array block, same for every step
        return pl.BlockSpec(a.shape, lambda b: (0,) * a.ndim)

    out = pl.pallas_call(
        make_net_kernel(nb),
        out_shape=jax.ShapeDtypeStruct((bp, OUT_PAD), jnp.float32),
        grid=(bp // nb,),
        in_specs=[pl.BlockSpec((H1 * nb, K1), lambda b: (b, 0))]
                 + [const_spec(a) for a in weights],
        out_specs=pl.BlockSpec((nb, OUT_PAD), lambda b: (b, 0)),
        compiler_params=pltpu.CompilerParams(
            dimension_semantics=("parallel",),      # batch blocks independent
            vmem_limit_bytes=32 * 1024 * 1024),
    )(lhs1, *weights)
    return out[:B, :NUM_CLASSES]


# ----------------------------- host-side glue --------------------------------
def init_torch_params(key):
    """Deterministic synthetic parameters in the PyTorch layouts."""
    ks = jax.random.split(key, 10)
    n = lambda k, shape, s: s * jax.random.normal(k, shape, jnp.float32)
    return dict(
        conv1_w=n(ks[0], (C1, 1, KS, KS), 0.2),  conv1_b=n(ks[1], (C1,), 0.1),
        conv2_w=n(ks[2], (C2, C1, KS, KS), 0.1), conv2_b=n(ks[3], (C2,), 0.05),
        conv3_w=n(ks[4], (C3, C2, KS, KS), 0.1), conv3_b=n(ks[5], (C3,), 0.05),
        dense1_w=n(ks[6], (F1, FLAT), 0.1),      dense1_b=n(ks[7], (F1,), 0.05),
        dense2_w=n(ks[8], (NUM_CLASSES, F1), 0.2),
        dense2_b=n(ks[9], (NUM_CLASSES,), 0.05),
    )


def _banded_conv_matrix(w_oihw, c_in, ky_stride, out_widths, col_of,
                        k_total, n_total):
    """Fold a torch conv weight (Cout, Cin, 3, 3) into a banded matmul matrix.

    lhs lane layout per row: ky*ky_stride + wi*c_in + ci (wi = input width
    position, ci = input channel).  Column col_of(w_out)+co produces output
    width w_out, channel co.
    """
    w = np.asarray(w_oihw, np.float32)
    c_out = w.shape[0]
    m = np.zeros((k_total, n_total), np.float32)
    for ky in range(KS):
        for kx in range(KS):
            for wo in out_widths:
                wi = wo + kx
                base = col_of(wo)
                for ci in range(c_in):
                    m[ky * ky_stride + wi * c_in + ci,
                      base:base + c_out] = w[:, ci, ky, kx]
    return m


def _conv_bias(b, out_widths, col_of, n_total):
    b = np.asarray(b, np.float32)
    v = np.zeros((1, n_total), np.float32)
    for wo in out_widths:
        base = col_of(wo)
        v[0, base:base + b.shape[0]] = b
    return v


def to_kernel_params(tp):
    """Rearrange PyTorch-layout parameters into the kernel layouts (glue)."""
    # Width-pooling-friendly column order: even output widths in lanes
    # [0, 256), odd output widths in lanes [256, 512) (zero-padded so both
    # halves are 128-lane aligned).  conv3 has no pooling -> natural order.
    col1 = lambda w: (w // 2) * C1 + (0 if w % 2 == 0 else HALF)
    col2 = lambda w: (w // 2) * C2 + (0 if w % 2 == 0 else HALF)
    col3 = lambda w: w * C3

    m1 = _banded_conv_matrix(tp["conv1_w"], 1, IMG, range(H1), col1, K1, N1)
    b1 = _conv_bias(tp["conv1_b"], range(H1), col1, N1)
    m2 = _banded_conv_matrix(tp["conv2_w"], C1, HALF, range(H2K), col2, K2, N2)
    b2 = _conv_bias(tp["conv2_b"], range(H2K), col2, N2)
    m3 = _banded_conv_matrix(tp["conv3_w"], C2, HALF, range(H3), col3, K3, N3)
    b3 = _conv_bias(tp["conv3_b"], range(H3), col3, N3)

    # dense1: torch.flatten order is (c, h, w); the kernel accumulates one dot
    # per conv3 output height h with lane order (w, c) -> wd1[h, w*C3 + c, f].
    wd1 = np.transpose(
        np.asarray(tp["dense1_w"], np.float32).reshape(F1, C3, H3, H3),
        (2, 3, 1, 0)).reshape(H3, H3 * C3, F1)                   # (3, 192, 128)
    bd1 = np.asarray(tp["dense1_b"], np.float32)[None, :]        # (1, 128)

    # dense2: pad N to 128 lanes; pad logits get a -1e30 bias so the in-kernel
    # softmax over 128 lanes equals the softmax over the 10 real classes.
    wd2 = np.zeros((F1, OUT_PAD), np.float32)
    wd2[:, :NUM_CLASSES] = np.asarray(tp["dense2_w"], np.float32).T
    bd2 = np.full((1, OUT_PAD), -1e30, np.float32)
    bd2[0, :NUM_CLASSES] = np.asarray(tp["dense2_b"], np.float32)

    bf = lambda a: jnp.asarray(a, jnp.bfloat16)    # matmul operands -> bf16
    f32 = lambda a: jnp.asarray(a, jnp.float32)    # biases stay f32
    return (bf(m1), f32(b1), bf(m2), f32(b2), bf(m3), f32(b3),
            bf(wd1), f32(bd1), bf(wd2), f32(bd2))


def reference_forward(x_nchw, tp, matmul_dtype=jnp.float32):
    """Pure-JAX replica of the PyTorch forward.

    `matmul_dtype` controls the conv/dense operand precision (accumulation is
    always float32), so the bf16-operand kernel can be checked tightly against
    a matching-precision reference and loosely against full f32.
    """
    md = matmul_dtype

    def conv(x, w, b):
        y = jax.lax.conv_general_dilated(
            x.astype(md), w.astype(md), window_strides=(1, 1), padding="VALID",
            dimension_numbers=("NCHW", "OIHW", "NCHW"),
            preferred_element_type=jnp.float32)
        return y + b[None, :, None, None]

    def pool(x):
        return jax.lax.reduce_window(x, -jnp.inf, jax.lax.max,
                                     (1, 1, 2, 2), (1, 1, 2, 2), "VALID")

    a = pool(jax.nn.relu(conv(x_nchw, tp["conv1_w"], tp["conv1_b"])))
    a = pool(jax.nn.relu(conv(a, tp["conv2_w"], tp["conv2_b"])))
    a = jax.nn.relu(conv(a, tp["conv3_w"], tp["conv3_b"]))
    a = a.reshape(a.shape[0], -1)                      # torch.flatten(x, 1)
    a = jax.nn.relu(
        jnp.dot(a.astype(md), tp["dense1_w"].T.astype(md),
                preferred_element_type=jnp.float32) + tp["dense1_b"])
    logits = jnp.dot(a.astype(md), tp["dense2_w"].T.astype(md),
                     preferred_element_type=jnp.float32) + tp["dense2_b"]
    return jax.nn.softmax(logits, axis=1)


if __name__ == "__main__":
    key = jax.random.PRNGKey(0)
    k_params, k_x = jax.random.split(key)

    torch_params = init_torch_params(k_params)
    kernel_params = to_kernel_params(torch_params)

    # MNIST-shaped NCHW batch: 2 batch blocks of nb=32 (keeps both v7x TCs fed).
    B = 64
    x_nchw = jax.random.normal(k_x, (B, 1, IMG, IMG), jnp.float32)

    fwd = jax.jit(lambda xx: net_forward_pallas(xx, kernel_params, nb=32))
    out = jax.block_until_ready(fwd(x_nchw))

    # Tight check vs a reference with the SAME matmul precision (bf16 operands,
    # f32 accumulation) and a loose semantic check vs the full-f32 forward.
    ref_match = reference_forward(x_nchw, torch_params, jnp.bfloat16)
    ref_full = reference_forward(x_nchw, torch_params, jnp.float32)

    assert out.shape == (B, NUM_CLASSES)
    assert bool(jnp.all(jnp.isfinite(out)))
    assert bool(jnp.allclose(jnp.sum(out, axis=1), 1.0, atol=1e-4))
    assert bool(jnp.allclose(out, ref_match, atol=2e-3, rtol=2e-3))
    assert bool(jnp.allclose(out, ref_full, atol=1e-1, rtol=1e-1))
    print("KERNEL_OK")
</pallas_src>

<mosaic_0001>
module attributes {stable_mosaic.version = 11 : i64} {
  func.func @kernel(%arg0: i32, %arg1: memref<832x128xbf16, #tpu.memory_space<vmem>>, %arg2: memref<128x512xbf16, #tpu.memory_space<vmem>>, %arg3: memref<1x512xf32, #tpu.memory_space<vmem>>, %arg4: memref<768x512xbf16, #tpu.memory_space<vmem>>, %arg5: memref<1x512xf32, #tpu.memory_space<vmem>>, %arg6: memref<768x192xbf16, #tpu.memory_space<vmem>>, %arg7: memref<1x192xf32, #tpu.memory_space<vmem>>, %arg8: memref<3x192x128xbf16, #tpu.memory_space<vmem>>, %arg9: memref<1x128xf32, #tpu.memory_space<vmem>>, %arg10: memref<128x128xbf16, #tpu.memory_space<vmem>>, %arg11: memref<1x128xf32, #tpu.memory_space<vmem>>, %arg12: memref<32x128xf32, #tpu.memory_space<vmem>>) attributes {dimension_semantics = [#tpu.dimension_semantics<parallel>], iteration_bounds = array<i64: 2>, scalar_prefetch = 0 : i64, scratch_operands = 0 : i64, tpu.core_type = #tpu.core_type<tc>, window_params = [{transform_indices = @transform_0, window_bounds = array<i64: 832, 128>}, {pipeline_mode = #tpu.pipeline_mode<synchronous>, transform_indices = @transform_1, window_bounds = array<i64: 128, 512>}, {pipeline_mode = #tpu.pipeline_mode<synchronous>, transform_indices = @transform_2, window_bounds = array<i64: 1, 512>}, {pipeline_mode = #tpu.pipeline_mode<synchronous>, transform_indices = @transform_3, window_bounds = array<i64: 768, 512>}, {pipeline_mode = #tpu.pipeline_mode<synchronous>, transform_indices = @transform_4, window_bounds = array<i64: 1, 512>}, {pipeline_mode = #tpu.pipeline_mode<synchronous>, transform_indices = @transform_5, window_bounds = array<i64: 768, 192>}, {pipeline_mode = #tpu.pipeline_mode<synchronous>, transform_indices = @transform_6, window_bounds = array<i64: 1, 192>}, {pipeline_mode = #tpu.pipeline_mode<synchronous>, transform_indices = @transform_7, window_bounds = array<i64: 3, 192, 128>}, {pipeline_mode = #tpu.pipeline_mode<synchronous>, transform_indices = @transform_8, window_bounds = array<i64: 1, 128>}, {pipeline_mode = #tpu.pipeline_mode<synchronous>, transform_indices = @transform_9, window_bounds = array<i64: 128, 128>}, {pipeline_mode = #tpu.pipeline_mode<synchronous>, transform_indices = @transform_10, window_bounds = array<i64: 1, 128>}, {transform_indices = @transform_11, window_bounds = array<i64: 32, 128>}]} {
    %c0 = arith.constant 0 : index
    %c0_0 = arith.constant 0 : index
    %0 = vector.load %arg1[%c0, %c0_0] : memref<832x128xbf16, #tpu.memory_space<vmem>>, vector<832x128xbf16>
    %c0_1 = arith.constant 0 : index
    %c0_2 = arith.constant 0 : index
    %1 = vector.load %arg2[%c0_1, %c0_2] : memref<128x512xbf16, #tpu.memory_space<vmem>>, vector<128x512xbf16>
    %cst = arith.constant dense<0.000000e+00> : vector<832x512xf32>
    %2 = tpu.matmul %0, %1, %cst {dimension_numbers = #tpu.dot_dimension_numbers<[1], [0], [0], [1], [0, 0, 1, 1], [], []>} : vector<832x128xbf16>, vector<128x512xbf16>, vector<832x512xf32> -> vector<832x512xf32>
    %c0_3 = arith.constant 0 : index
    %c0_4 = arith.constant 0 : index
    %3 = vector.load %arg3[%c0_3, %c0_4] : memref<1x512xf32, #tpu.memory_space<vmem>>, vector<1x512xf32>
    %4 = vector.broadcast %3 : vector<1x512xf32> to vector<832x512xf32>
    %5 = arith.addf %2, %4 : vector<832x512xf32>
    %cst_5 = arith.constant 0.000000e+00 : f32
    %6 = vector.broadcast %cst_5 : f32 to vector<832x512xf32>
    %7 = arith.maximumf %5, %6 : vector<832x512xf32>
    %8 = vector.extract_strided_slice %7 {offsets = [0, 0], sizes = [832, 256], strides = [1, 1]} : vector<832x512xf32> to vector<832x256xf32>
    %9 = vector.extract_strided_slice %7 {offsets = [0, 256], sizes = [832, 256], strides = [1, 1]} : vector<832x512xf32> to vector<832x256xf32>
    %10 = arith.maximumf %8, %9 : vector<832x256xf32>
    %11 = vector.extract_strided_slice %10 {offsets = [0, 0], sizes = [416, 256], strides = [1, 1]} : vector<832x256xf32> to vector<416x256xf32>
    %12 = vector.extract_strided_slice %10 {offsets = [416, 0], sizes = [416, 256], strides = [1, 1]} : vector<832x256xf32> to vector<416x256xf32>
    %13 = arith.maximumf %11, %12 : vector<416x256xf32>
    %14 = vector.extract_strided_slice %13 {offsets = [0, 0], sizes = [320, 256], strides = [1, 1]} : vector<416x256xf32> to vector<320x256xf32>
    %15 = vector.extract_strided_slice %13 {offsets = [32, 0], sizes = [320, 256], strides = [1, 1]} : vector<416x256xf32> to vector<320x256xf32>
    %16 = vector.extract_strided_slice %13 {offsets = [64, 0], sizes = [320, 256], strides = [1, 1]} : vector<416x256xf32> to vector<320x256xf32>
    %17 = tpu.concatenate %14, %15, %16 in 1 : vector<320x256xf32>, vector<320x256xf32>, vector<320x256xf32> -> vector<320x768xf32>
    %18 = arith.truncf %17 : vector<320x768xf32> to vector<320x768xbf16>
    %c0_6 = arith.constant 0 : index
    %c0_7 = arith.constant 0 : index
    %19 = vector.load %arg4[%c0_6, %c0_7] : memref<768x512xbf16, #tpu.memory_space<vmem>>, vector<768x512xbf16>
    %cst_8 = arith.constant dense<0.000000e+00> : vector<320x512xf32>
    %20 = tpu.matmul %18, %19, %cst_8 {dimension_numbers = #tpu.dot_dimension_numbers<[1], [0], [0], [1], [0, 0, 1, 1], [], []>} : vector<320x768xbf16>, vector<768x512xbf16>, vector<320x512xf32> -> vector<320x512xf32>
    %c0_9 = arith.constant 0 : index
    %c0_10 = arith.constant 0 : index
    %21 = vector.load %arg5[%c0_9, %c0_10] : memref<1x512xf32, #tpu.memory_space<vmem>>, vector<1x512xf32>
    %22 = vector.broadcast %21 : vector<1x512xf32> to vector<320x512xf32>
    %23 = arith.addf %20, %22 : vector<320x512xf32>
    %cst_11 = arith.constant 0.000000e+00 : f32
    %24 = vector.broadcast %cst_11 : f32 to vector<320x512xf32>
    %25 = arith.maximumf %23, %24 : vector<320x512xf32>
    %26 = vector.extract_strided_slice %25 {offsets = [0, 0], sizes = [320, 256], strides = [1, 1]} : vector<320x512xf32> to vector<320x256xf32>
    %27 = vector.extract_strided_slice %25 {offsets = [0, 256], sizes = [320, 256], strides = [1, 1]} : vector<320x512xf32> to vector<320x256xf32>
    %28 = arith.maximumf %26, %27 : vector<320x256xf32>
    %29 = vector.extract_strided_slice %28 {offsets = [0, 0], sizes = [32, 256], strides = [1, 1]} : vector<320x256xf32> to vector<32x256xf32>
    %30 = vector.extract_strided_slice %28 {offsets = [64, 0], sizes = [32, 256], strides = [1, 1]} : vector<320x256xf32> to vector<32x256xf32>
    %31 = vector.extract_strided_slice %28 {offsets = [128, 0], sizes = [32, 256], strides = [1, 1]} : vector<320x256xf32> to vector<32x256xf32>
    %32 = vector.extract_strided_slice %28 {offsets = [192, 0], sizes = [32, 256], strides = [1, 1]} : vector<320x256xf32> to vector<32x256xf32>
    %33 = vector.extract_strided_slice %28 {offsets = [256, 0], sizes = [32, 256], strides = [1, 1]} : vector<320x256xf32> to vector<32x256xf32>
    %34 = tpu.concatenate %29, %30, %31, %32, %33 in 0 : vector<32x256xf32>, vector<32x256xf32>, vector<32x256xf32>, vector<32x256xf32>, vector<32x256xf32> -> vector<160x256xf32>
    %35 = vector.extract_strided_slice %28 {offsets = [32, 0], sizes = [32, 256], strides = [1, 1]} : vector<320x256xf32> to vector<32x256xf32>
    %36 = vector.extract_strided_slice %28 {offsets = [96, 0], sizes = [32, 256], strides = [1, 1]} : vector<320x256xf32> to vector<32x256xf32>
    %37 = vector.extract_strided_slice %28 {offsets = [160, 0], sizes = [32, 256], strides = [1, 1]} : vector<320x256xf32> to vector<32x256xf32>
    %38 = vector.extract_strided_slice %28 {offsets = [224, 0], sizes = [32, 256], strides = [1, 1]} : vector<320x256xf32> to vector<32x256xf32>
    %39 = vector.extract_strided_slice %28 {offsets = [288, 0], sizes = [32, 256], strides = [1, 1]} : vector<320x256xf32> to vector<32x256xf32>
    %40 = tpu.concatenate %35, %36, %37, %38, %39 in 0 : vector<32x256xf32>, vector<32x256xf32>, vector<32x256xf32>, vector<32x256xf32>, vector<32x256xf32> -> vector<160x256xf32>
    %41 = arith.maximumf %34, %40 : vector<160x256xf32>
    %42 = vector.extract_strided_slice %41 {offsets = [0, 0], sizes = [96, 256], strides = [1, 1]} : vector<160x256xf32> to vector<96x256xf32>
    %43 = vector.extract_strided_slice %41 {offsets = [32, 0], sizes = [96, 256], strides = [1, 1]} : vector<160x256xf32> to vector<96x256xf32>
    %44 = vector.extract_strided_slice %41 {offsets = [64, 0], sizes = [96, 256], strides = [1, 1]} : vector<160x256xf32> to vector<96x256xf32>
    %45 = tpu.concatenate %42, %43, %44 in 1 : vector<96x256xf32>, vector<96x256xf32>, vector<96x256xf32> -> vector<96x768xf32>
    %46 = arith.truncf %45 : vector<96x768xf32> to vector<96x768xbf16>
    %c0_12 = arith.constant 0 : index
    %c0_13 = arith.constant 0 : index
    %47 = vector.load %arg6[%c0_12, %c0_13] : memref<768x192xbf16, #tpu.memory_space<vmem>>, vector<768x192xbf16>
    %cst_14 = arith.constant dense<0.000000e+00> : vector<96x192xf32>
    %48 = tpu.matmul %46, %47, %cst_14 {dimension_numbers = #tpu.dot_dimension_numbers<[1], [0], [0], [1], [0, 0, 1, 1], [], []>} : vector<96x768xbf16>, vector<768x192xbf16>, vector<96x192xf32> -> vector<96x192xf32>
    %c0_15 = arith.constant 0 : index
    %c0_16 = arith.constant 0 : index
    %49 = vector.load %arg7[%c0_15, %c0_16] : memref<1x192xf32, #tpu.memory_space<vmem>>, vector<1x192xf32>
    %50 = vector.broadcast %49 : vector<1x192xf32> to vector<96x192xf32>
    %51 = arith.addf %48, %50 : vector<96x192xf32>
    %cst_17 = arith.constant 0.000000e+00 : f32
    %52 = vector.broadcast %cst_17 : f32 to vector<96x192xf32>
    %53 = arith.maximumf %51, %52 : vector<96x192xf32>
    %c0_18 = arith.constant 0 : index
    %c0_19 = arith.constant 0 : index
    %54 = vector.load %arg9[%c0_18, %c0_19] : memref<1x128xf32, #tpu.memory_space<vmem>>, vector<1x128xf32>
    %55 = vector.extract_strided_slice %53 {offsets = [0, 0], sizes = [32, 192], strides = [1, 1]} : vector<96x192xf32> to vector<32x192xf32>
    %56 = arith.truncf %55 : vector<32x192xf32> to vector<32x192xbf16>
    %c0_20 = arith.constant 0 : index
    %c0_21 = arith.constant 0 : index
    %c0_22 = arith.constant 0 : index
    %57 = vector.load %arg8[%c0_20, %c0_21, %c0_22] : memref<3x192x128xbf16, #tpu.memory_space<vmem>>, vector<1x192x128xbf16>
    %58 = vector.shape_cast %57 : vector<1x192x128xbf16> to vector<192x128xbf16>
    %cst_23 = arith.constant dense<0.000000e+00> : vector<32x128xf32>
    %59 = tpu.matmul %56, %58, %cst_23 {dimension_numbers = #tpu.dot_dimension_numbers<[1], [0], [0], [1], [0, 0, 1, 1], [], []>} : vector<32x192xbf16>, vector<192x128xbf16>, vector<32x128xf32> -> vector<32x128xf32>
    %60 = vector.broadcast %54 : vector<1x128xf32> to vector<32x128xf32>
    %61 = arith.addf %60, %59 : vector<32x128xf32>
    %62 = vector.extract_strided_slice %53 {offsets = [32, 0], sizes = [32, 192], strides = [1, 1]} : vector<96x192xf32> to vector<32x192xf32>
    %63 = arith.truncf %62 : vector<32x192xf32> to vector<32x192xbf16>
    %c1 = arith.constant 1 : index
    %c0_24 = arith.constant 0 : index
    %c0_25 = arith.constant 0 : index
    %64 = vector.load %arg8[%c1, %c0_24, %c0_25] : memref<3x192x128xbf16, #tpu.memory_space<vmem>>, vector<1x192x128xbf16>
    %65 = vector.shape_cast %64 : vector<1x192x128xbf16> to vector<192x128xbf16>
    %cst_26 = arith.constant dense<0.000000e+00> : vector<32x128xf32>
    %66 = tpu.matmul %63, %65, %cst_26 {dimension_numbers = #tpu.dot_dimension_numbers<[1], [0], [0], [1], [0, 0, 1, 1], [], []>} : vector<32x192xbf16>, vector<192x128xbf16>, vector<32x128xf32> -> vector<32x128xf32>
    %67 = arith.addf %61, %66 : vector<32x128xf32>
    %68 = vector.extract_strided_slice %53 {offsets = [64, 0], sizes = [32, 192], strides = [1, 1]} : vector<96x192xf32> to vector<32x192xf32>
    %69 = arith.truncf %68 : vector<32x192xf32> to vector<32x192xbf16>
    %c2 = arith.constant 2 : index
    %c0_27 = arith.constant 0 : index
    %c0_28 = arith.constant 0 : index
    %70 = vector.load %arg8[%c2, %c0_27, %c0_28] : memref<3x192x128xbf16, #tpu.memory_space<vmem>>, vector<1x192x128xbf16>
    %71 = vector.shape_cast %70 : vector<1x192x128xbf16> to vector<192x128xbf16>
    %cst_29 = arith.constant dense<0.000000e+00> : vector<32x128xf32>
    %72 = tpu.matmul %69, %71, %cst_29 {dimension_numbers = #tpu.dot_dimension_numbers<[1], [0], [0], [1], [0, 0, 1, 1], [], []>} : vector<32x192xbf16>, vector<192x128xbf16>, vector<32x128xf32> -> vector<32x128xf32>
    %73 = arith.addf %67, %72 : vector<32x128xf32>
    %cst_30 = arith.constant 0.000000e+00 : f32
    %74 = vector.broadcast %cst_30 : f32 to vector<32x128xf32>
    %75 = arith.maximumf %73, %74 : vector<32x128xf32>
    %76 = arith.truncf %75 : vector<32x128xf32> to vector<32x128xbf16>
    %c0_31 = arith.constant 0 : index
    %c0_32 = arith.constant 0 : index
    %77 = vector.load %arg10[%c0_31, %c0_32] : memref<128x128xbf16, #tpu.memory_space<vmem>>, vector<128x128xbf16>
    %cst_33 = arith.constant dense<0.000000e+00> : vector<32x128xf32>
    %78 = tpu.matmul %76, %77, %cst_33 {dimension_numbers = #tpu.dot_dimension_numbers<[1], [0], [0], [1], [0, 0, 1, 1], [], []>} : vector<32x128xbf16>, vector<128x128xbf16>, vector<32x128xf32> -> vector<32x128xf32>
    %c0_34 = arith.constant 0 : index
    %c0_35 = arith.constant 0 : index
    %79 = vector.load %arg11[%c0_34, %c0_35] : memref<1x128xf32, #tpu.memory_space<vmem>>, vector<1x128xf32>
    %80 = vector.broadcast %79 : vector<1x128xf32> to vector<32x128xf32>
    %81 = arith.addf %78, %80 : vector<32x128xf32>
    %cst_36 = arith.constant dense<0xFF800000> : vector<32xf32>
    %82 = vector.multi_reduction <maximumf>, %81, %cst_36 [1] : vector<32x128xf32> to vector<32xf32>
    %83 = vector.shape_cast %82 : vector<32xf32> to vector<32x1xf32>
    %84 = vector.broadcast %83 : vector<32x1xf32> to vector<32x128xf32>
    %85 = arith.subf %81, %84 : vector<32x128xf32>
    %86 = math.exp %85 : vector<32x128xf32>
    %cst_37 = arith.constant dense<0.000000e+00> : vector<32xf32>
    %87 = vector.multi_reduction <add>, %86, %cst_37 [1] : vector<32x128xf32> to vector<32xf32>
    %88 = vector.shape_cast %87 : vector<32xf32> to vector<32x1xf32>
    %89 = vector.broadcast %88 : vector<32x1xf32> to vector<32x128xf32>
    %90 = arith.divf %86, %89 : vector<32x128xf32>
    %c0_38 = arith.constant 0 : index
    %c0_39 = arith.constant 0 : index
    %91 = vector.load %arg12[%c0_38, %c0_39] : memref<32x128xf32, #tpu.memory_space<vmem>>, vector<32x128xf32>
    tpu.vector_store %arg12[%c0_38, %c0_39], %90 {strides = array<i32>} : memref<32x128xf32, #tpu.memory_space<vmem>>, vector<32x128xf32>,
    return
  }
  func.func @transform_0(%arg0: i32) -> (i32, i32) {
    %c0_i32 = arith.constant 0 : i32
    %c0_i32_0 = arith.constant 0 : i32
    return %arg0, %c0_i32 : i32, i32
  }
  func.func @transform_1(%arg0: i32) -> (i32, i32) {
    %c0_i32 = arith.constant 0 : i32
    %c0_i32_0 = arith.constant 0 : i32
    %c0_i32_1 = arith.constant 0 : i32
    return %c0_i32, %c0_i32_0 : i32, i32
  }
  func.func @transform_2(%arg0: i32) -> (i32, i32) {
    %c0_i32 = arith.constant 0 : i32
    %c0_i32_0 = arith.constant 0 : i32
    %c0_i32_1 = arith.constant 0 : i32
    return %c0_i32, %c0_i32_0 : i32, i32
  }
  func.func @transform_3(%arg0: i32) -> (i32, i32) {
    %c0_i32 = arith.constant 0 : i32
    %c0_i32_0 = arith.constant 0 : i32
    %c0_i32_1 = arith.constant 0 : i32
    return %c0_i32, %c0_i32_0 : i32, i32
  }
  func.func @transform_4(%arg0: i32) -> (i32, i32) {
    %c0_i32 = arith.constant 0 : i32
    %c0_i32_0 = arith.constant 0 : i32
    %c0_i32_1 = arith.constant 0 : i32
    return %c0_i32, %c0_i32_0 : i32, i32
  }
  func.func @transform_5(%arg0: i32) -> (i32, i32) {
    %c0_i32 = arith.constant 0 : i32
    %c0_i32_0 = arith.constant 0 : i32
    %c0_i32_1 = arith.constant 0 : i32
    return %c0_i32, %c0_i32_0 : i32, i32
  }
  func.func @transform_6(%arg0: i32) -> (i32, i32) {
    %c0_i32 = arith.constant 0 : i32
    %c0_i32_0 = arith.constant 0 : i32
    %c0_i32_1 = arith.constant 0 : i32
    return %c0_i32, %c0_i32_0 : i32, i32
  }
  func.func @transform_7(%arg0: i32) -> (i32, i32, i32) {
    %c0_i32 = arith.constant 0 : i32
    %c0_i32_0 = arith.constant 0 : i32
    %c0_i32_1 = arith.constant 0 : i32
    %c0_i32_2 = arith.constant 0 : i32
    return %c0_i32, %c0_i32_0, %c0_i32_1 : i32, i32, i32
  }
  func.func @transform_8(%arg0: i32) -> (i32, i32) {
    %c0_i32 = arith.constant 0 : i32
    %c0_i32_0 = arith.constant 0 : i32
    %c0_i32_1 = arith.constant 0 : i32
    return %c0_i32, %c0_i32_0 : i32, i32
  }
  func.func @transform_9(%arg0: i32) -> (i32, i32) {
    %c0_i32 = arith.constant 0 : i32
    %c0_i32_0 = arith.constant 0 : i32
    %c0_i32_1 = arith.constant 0 : i32
    return %c0_i32, %c0_i32_0 : i32, i32
  }
  func.func @transform_10(%arg0: i32) -> (i32, i32) {
    %c0_i32 = arith.constant 0 : i32
    %c0_i32_0 = arith.constant 0 : i32
    %c0_i32_1 = arith.constant 0 : i32
    return %c0_i32, %c0_i32_0 : i32, i32
  }
  func.func @transform_11(%arg0: i32) -> (i32, i32) {
    %c0_i32 = arith.constant 0 : i32
    %c0_i32_0 = arith.constant 0 : i32
    return %arg0, %c0_i32 : i32, i32
  }
}

</mosaic_0001>

<llo_original>
// kernel: _lambda_.1
$region0: #{_lambda_.1}
  #allocation0 [shape = 'u32[]', space=smem, size = 0x4, offset = 0x4, fixed_abs, tag = 'smem constant byte address 0x4 - core index']
  #allocation1 [shape = 'u32[144,128]{1,0:T(1,128)}', space=vmem, size = 0x12000, scoped, tag = 'internal scratch']
  %s0 = inlined_call_operand.vmem [shape: bf16[1664,128], index: 0, kind: input, shape index: {}]
  %s1 = inlined_call_operand.vmem [shape: bf16[128,512], index: 1, kind: input, shape index: {}]
  %s2 = inlined_call_operand.vmem [shape: f32[1,512], index: 2, kind: input, shape index: {}]
  %s3 = inlined_call_operand.vmem [shape: bf16[768,512], index: 3, kind: input, shape index: {}]
  %s4 = inlined_call_operand.vmem [shape: f32[1,512], index: 4, kind: input, shape index: {}]
  %s5 = inlined_call_operand.vmem [shape: bf16[768,192], index: 5, kind: input, shape index: {}]
  %s6 = inlined_call_operand.vmem [shape: f32[1,192], index: 6, kind: input, shape index: {}]
  %s7 = inlined_call_operand.vmem [shape: bf16[3,192,128], index: 7, kind: input, shape index: {}]
  %s8 = inlined_call_operand.vmem [shape: f32[1,128], index: 8, kind: input, shape index: {}]
  %s9 = inlined_call_operand.vmem [shape: bf16[128,128], index: 9, kind: input, shape index: {}]
  %s10 = inlined_call_operand.vmem [shape: f32[1,128], index: 10, kind: input, shape index: {}]
  %s11 = inlined_call_operand.vmem [shape: f32[64,128], index: 11, kind: output, shape index: {}]
  %s12 = sld [smem:[#allocation0]]
  $region77: #{_lambda_.1} parent=0
    _
  %s14 = ssub.s32 1, %s12
  %s15 = scalar_select 0, %s14, %s12
  loop: start=0, step=1, limit=4
  $region2: #{_lambda_.1} parent=0 // loop_pre_header
    _
  $region3: #{_lambda_.1} parent=0 // loop_header
    %s17 = sphi 0, %s21
    %p18 = scmp.ge.s32.totalorder %s17, 4
    %s27 = sphi 0, %s29
    %s30 = sphi 0, %s27
    %s31 = sphi 0, %s30
    %s47 = sphi 0, %s31
    %s51 = sphi 0, %s51
    %s53 = sphi 0, %s51
    %s54 = sphi 0, %s53
    %s68 = sphi 0, %s54
    %s72 = sphi 0, %s72
    %s74 = sphi 0, %s72
    %s75 = sphi 0, %s74
    %s89 = sphi 0, %s75
    %s93 = sphi 0, %s93
    %s95 = sphi 0, %s93
    %s96 = sphi 0, %s95
    %s110 = sphi 0, %s96
    %s114 = sphi 0, %s114
    %s116 = sphi 0, %s114
    %s117 = sphi 0, %s116
    %s131 = sphi 0, %s117
    %s135 = sphi 0, %s135
    %s137 = sphi 0, %s135
    %s138 = sphi 0, %s137
    %s152 = sphi 0, %s138
    %s156 = sphi 0, %s156
    %s158 = sphi 0, %s156
    %s159 = sphi 0, %s158
    %s173 = sphi 0, %s159
    %s177 = sphi 0, %s177
    %s179 = sphi 0, %s177
    %s180 = sphi 0, %s179
    %s194 = sphi 0, %s180
    %s198 = sphi 0, %s198
    %s200 = sphi 0, %s198
    %s201 = sphi 0, %s200
    %s215 = sphi 0, %s201
    %s219 = sphi 0, %s219
    %s221 = sphi 0, %s219
    %s222 = sphi 0, %s221
    %s236 = sphi 0, %s222
    %s240 = sphi 0, %s240
    %s242 = sphi 0, %s240
    %s243 = sphi 0, %s242
    %s257 = sphi 0, %s243
    %s263 = sphi 0, %s265
    %s266 = sphi 0, %s263
    %s267 = sphi 0, %s266
    %s283 = sphi 0, %s267
  $region4: #{_lambda_.1} parent=0 // loop_header_branch
    %20 = sbr.rel (%p18) target = $region8
  $region5: #{_lambda_.1} parent=0 // loop_body
    %s22 = ssub.s32 %s17, 1
    %s23 = ssub.s32 %s17, 2
    %s24 = sadd.s32 %s17, 1
    %s25 = ssub.s32 %s17, %s24
    %p26 = scmp.eq.s32.totalorder %s25, 0
    %s28 = sadd.s32 %s27, 1
    %s29 = scalar_select %p26, %s27, %s28
    %p32 = pneg %p26
    %p33 = scmp.eq.s32.totalorder %s17, 1
    %p34 = por %p32, %p33
    %p35 = scmp.ne.s32.totalorder %s27, %s30
    %p36 = scmp.eq.s32.totalorder %s17, 0
    %p37 = por %p35, %p36
    %p38 = scmp.ne.s32.totalorder %s27, %s30
    %p39 = scmp.eq.s32.totalorder %s22, 1
    %p40 = por %p38, %p39
    %p41 = scmp.ne.s32.totalorder %s30, %s31
    %p42 = scmp.eq.s32.totalorder %s22, 0
    %p43 = por %p41, %p42
    %p44 = scmp.ne.s32.totalorder %s30, %s31
    %p45 = scmp.eq.s32.totalorder %s23, 1
    %p46 = por %p44, %p45
    %p48 = scmp.ne.s32.totalorder %s31, %s47
    %p49 = scmp.eq.s32.totalorder %s23, 0
    %p50 = por %p48, %p49
    %s52 = sadd.s32 %s51, 1
    %p55 = scmp.eq.s32.totalorder %s17, 1
    %p56 = scmp.ne.s32.totalorder %s51, %s53
    %p57 = scmp.eq.s32.totalorder %s17, 0
    %p58 = por %p56, %p57
    %p59 = scmp.ne.s32.totalorder %s51, %s53
    %p60 = scmp.eq.s32.totalorder %s22, 1
    %p61 = por %p59, %p60
    %p62 = scmp.ne.s32.totalorder %s53, %s54
    %p63 = scmp.eq.s32.totalorder %s22, 0
    %p64 = por %p62, %p63
    %p65 = scmp.ne.s32.totalorder %s53, %s54
    %p66 = scmp.eq.s32.totalorder %s23, 1
    %p67 = por %p65, %p66
    %p69 = scmp.ne.s32.totalorder %s54, %s68
    %p70 = scmp.eq.s32.totalorder %s23, 0
    %p71 = por %p69, %p70
    %s73 = sadd.s32 %s72, 1
    %p76 = scmp.eq.s32.totalorder %s17, 1
    %p77 = scmp.ne.s32.totalorder %s72, %s74
    %p78 = scmp.eq.s32.totalorder %s17, 0
    %p79 = por %p77, %p78
    %p80 = scmp.ne.s32.totalorder %s72, %s74
    %p81 = scmp.eq.s32.totalorder %s22, 1
    %p82 = por %p80, %p81
    %p83 = scmp.ne.s32.totalorder %s74, %s75
    %p84 = scmp.eq.s32.totalorder %s22, 0
    %p85 = por %p83, %p84
    %p86 = scmp.ne.s32.totalorder %s74, %s75
    %p87 = scmp.eq.s32.totalorder %s23, 1
    %p88 = por %p86, %p87
    %p90 = scmp.ne.s32.totalorder %s75, %s89
    %p91 = scmp.eq.s32.totalorder %s23, 0
    %p92 = por %p90, %p91
    %s94 = sadd.s32 %s93, 1
    %p97 = scmp.eq.s32.totalorder %s17, 1
    %p98 = scmp.ne.s32.totalorder %s93, %s95
    %p99 = scmp.eq.s32.totalorder %s17, 0
    %p100 = por %p98, %p99
    %p101 = scmp.ne.s32.totalorder %s93, %s95
    %p102 = scmp.eq.s32.totalorder %s22, 1
    %p103 = por %p101, %p102
    %p104 = scmp.ne.s32.totalorder %s95, %s96
    %p105 = scmp.eq.s32.totalorder %s22, 0
    %p106 = por %p104, %p105
    %p107 = scmp.ne.s32.totalorder %s95, %s96
    %p108 = scmp.eq.s32.totalorder %s23, 1
    %p109 = por %p107, %p108
    %p111 = scmp.ne.s32.totalorder %s96, %s110
    %p112 = scmp.eq.s32.totalorder %s23, 0
    %p113 = por %p111, %p112
    %s115 = sadd.s32 %s114, 1
    %p118 = scmp.eq.s32.totalorder %s17, 1
    %p119 = scmp.ne.s32.totalorder %s114, %s116
    %p120 = scmp.eq.s32.totalorder %s17, 0
    %p121 = por %p119, %p120
    %p122 = scmp.ne.s32.totalorder %s114, %s116
    %p123 = scmp.eq.s32.totalorder %s22, 1
    %p124 = por %p122, %p123
    %p125 = scmp.ne.s32.totalorder %s116, %s117
    %p126 = scmp.eq.s32.totalorder %s22, 0
    %p127 = por %p125, %p126
    %p128 = scmp.ne.s32.totalorder %s116, %s117
    %p129 = scmp.eq.s32.totalorder %s23, 1
    %p130 = por %p128, %p129
    %p132 = scmp.ne.s32.totalorder %s117, %s131
    %p133 = scmp.eq.s32.totalorder %s23, 0
    %p134 = por %p132, %p133
    %s136 = sadd.s32 %s135, 1
    %p139 = scmp.eq.s32.totalorder %s17, 1
    %p140 = scmp.ne.s32.totalorder %s135, %s137
    %p141 = scmp.eq.s32.totalorder %s17, 0
    %p142 = por %p140, %p141
    %p143 = scmp.ne.s32.totalorder %s135, %s137
    %p144 = scmp.eq.s32.totalorder %s22, 1
    %p145 = por %p143, %p144
    %p146 = scmp.ne.s32.totalorder %s137, %s138
    %p147 = scmp.eq.s32.totalorder %s22, 0
    %p148 = por %p146, %p147
    %p149 = scmp.ne.s32.totalorder %s137, %s138
    %p150 = scmp.eq.s32.totalorder %s23, 1
    %p151 = por %p149, %p150
    %p153 = scmp.ne.s32.totalorder %s138, %s152
    %p154 = scmp.eq.s32.totalorder %s23, 0
    %p155 = por %p153, %p154
    %s157 = sadd.s32 %s156, 1
    %p160 = scmp.eq.s32.totalorder %s17, 1
    %p161 = scmp.ne.s32.totalorder %s156, %s158
    %p162 = scmp.eq.s32.totalorder %s17, 0
    %p163 = por %p161, %p162
    %p164 = scmp.ne.s32.totalorder %s156, %s158
    %p165 = scmp.eq.s32.totalorder %s22, 1
    %p166 = por %p164, %p165
    %p167 = scmp.ne.s32.totalorder %s158, %s159
    %p168 = scmp.eq.s32.totalorder %s22, 0
    %p169 = por %p167, %p168
    %p170 = scmp.ne.s32.totalorder %s158, %s159
    %p171 = scmp.eq.s32.totalorder %s23, 1
    %p172 = por %p170, %p171
    %p174 = scmp.ne.s32.totalorder %s159, %s173
    %p175 = scmp.eq.s32.totalorder %s23, 0
    %p176 = por %p174, %p175
    %s178 = sadd.s32 %s177, 1
    %p181 = scmp.eq.s32.totalorder %s17, 1
    %p182 = scmp.ne.s32.totalorder %s177, %s179
    %p183 = scmp.eq.s32.totalorder %s17, 0
    %p184 = por %p182, %p183
    %p185 = scmp.ne.s32.totalorder %s177, %s179
    %p186 = scmp.eq.s32.totalorder %s22, 1
    %p187 = por %p185, %p186
    %p188 = scmp.ne.s32.totalorder %s179, %s180
    %p189 = scmp.eq.s32.totalorder %s22, 0
    %p190 = por %p188, %p189
    %p191 = scmp.ne.s32.totalorder %s179, %s180
    %p192 = scmp.eq.s32.totalorder %s23, 1
    %p193 = por %p191, %p192
    %p195 = scmp.ne.s32.totalorder %s180, %s194
    %p196 = scmp.eq.s32.totalorder %s23, 0
    %p197 = por %p195, %p196
    %s199 = sadd.s32 %s198, 1
    %p202 = scmp.eq.s32.totalorder %s17, 1
    %p203 = scmp.ne.s32.totalorder %s198, %s200
    %p204 = scmp.eq.s32.totalorder %s17, 0
    %p205 = por %p203, %p204
    %p206 = scmp.ne.s32.totalorder %s198, %s200
    %p207 = scmp.eq.s32.totalorder %s22, 1
    %p208 = por %p206, %p207
    %p209 = scmp.ne.s32.totalorder %s200, %s201
    %p210 = scmp.eq.s32.totalorder %s22, 0
    %p211 = por %p209, %p210
    %p212 = scmp.ne.s32.totalorder %s200, %s201
    %p213 = scmp.eq.s32.totalorder %s23, 1
    %p214 = por %p212, %p213
    %p216 = scmp.ne.s32.totalorder %s201, %s215
    %p217 = scmp.eq.s32.totalorder %s23, 0
    %p218 = por %p216, %p217
    %s220 = sadd.s32 %s219, 1
    %p223 = scmp.eq.s32.totalorder %s17, 1
    %p224 = scmp.ne.s32.totalorder %s219, %s221
    %p225 = scmp.eq.s32.totalorder %s17, 0
    %p226 = por %p224, %p225
    %p227 = scmp.ne.s32.totalorder %s219, %s221
    %p228 = scmp.eq.s32.totalorder %s22, 1
    %p229 = por %p227, %p228
    %p230 = scmp.ne.s32.totalorder %s221, %s222
    %p231 = scmp.eq.s32.totalorder %s22, 0
    %p232 = por %p230, %p231
    %p233 = scmp.ne.s32.totalorder %s221, %s222
    %p234 = scmp.eq.s32.totalorder %s23, 1
    %p235 = por %p233, %p234
    %p237 = scmp.ne.s32.totalorder %s222, %s236
    %p238 = scmp.eq.s32.totalorder %s23, 0
    %p239 = por %p237, %p238
    %s241 = sadd.s32 %s240, 1
    %p244 = scmp.eq.s32.totalorder %s17, 1
    %p245 = scmp.ne.s32.totalorder %s240, %s242
    %p246 = scmp.eq.s32.totalorder %s17, 0
    %p247 = por %p245, %p246
    %p248 = scmp.ne.s32.totalorder %s240, %s242
    %p249 = scmp.eq.s32.totalorder %s22, 1
    %p250 = por %p248, %p249
    %p251 = scmp.ne.s32.totalorder %s242, %s243
    %p252 = scmp.eq.s32.totalorder %s22, 0
    %p253 = por %p251, %p252
    %p254 = scmp.ne.s32.totalorder %s242, %s243
    %p255 = scmp.eq.s32.totalorder %s23, 1
    %p256 = por %p254, %p255
    %p258 = scmp.ne.s32.totalorder %s243, %s257
    %p259 = scmp.eq.s32.totalorder %s23, 0
    %p260 = por %p258, %p259
    %s261 = ssub.s32 %s17, %s24
    %p262 = scmp.eq.s32.totalorder %s261, 0
    %s264 = sadd.s32 %s263, 1
    %s265 = scalar_select %p262, %s263, %s264
    %p268 = pneg %p262
    %p269 = scmp.eq.s32.totalorder %s17, 1
    %p270 = por %p268, %p269
    %p271 = scmp.ne.s32.totalorder %s263, %s266
    %p272 = scmp.eq.s32.totalorder %s17, 0
    %p273 = por %p271, %p272
    %p274 = scmp.ne.s32.totalorder %s263, %s266
    %p275 = scmp.eq.s32.totalorder %s22, 1
    %p276 = por %p274, %p275
    %p277 = scmp.ne.s32.totalorder %s266, %s267
    %p278 = scmp.eq.s32.totalorder %s22, 0
    %p279 = por %p277, %p278
    %p280 = scmp.ne.s32.totalorder %s266, %s267
    %p281 = scmp.eq.s32.totalorder %s23, 1
    %p282 = por %p280, %p281
    %p284 = scmp.ne.s32.totalorder %s267, %s283
    %p285 = scmp.eq.s32.totalorder %s23, 0
    %p286 = por %p284, %p285
    %p287 = scmp.le.s32.totalorder 1, %s17
    %p288 = scmp.lt.s32.totalorder %s17, 3
    %p289 = pnand %p287, %p288
    %p290 = pneg %p289
    // Predicated region
    $region9: #{_lambda_.1} parent=5 // pred_check
      _
    $region10: #{_lambda_.1} parent=5 // pred_check_branch
      %292 = sbr.rel (%p289) target = $region12
    $region11: #{_lambda_.1} parent=5 // pred_region
      %s293 = ssub.s32 %s17, 1
      // Predicated region
      $region13: #{_lambda_.1} parent=11 // pred_check
        %p294 = pneg %p64
      $region14: #{_lambda_.1} parent=11 // pred_check_branch
        %296 = sbr.rel (%p294) target = $region16
      $region15: #{_lambda_.1} parent=11 // pred_region
        _
      $region16: #{_lambda_.1} parent=11 // pred_fallthru
        _
      // Predicated region
      $region17: #{_lambda_.1} parent=11 // pred_check
        %p297 = pneg %p85
      $region18: #{_lambda_.1} parent=11 // pred_check_branch
        %299 = sbr.rel (%p297) target = $region20
      $region19: #{_lambda_.1} parent=11 // pred_region
        _
      $region20: #{_lambda_.1} parent=11 // pred_fallthru
        _
      // Predicated region
      $region21: #{_lambda_.1} parent=11 // pred_check
        %p300 = pneg %p106
      $region22: #{_lambda_.1} parent=11 // pred_check_branch
        %302 = sbr.rel (%p300) target = $region24
      $region23: #{_lambda_.1} parent=11 // pred_region
        _
      $region24: #{_lambda_.1} parent=11 // pred_fallthru
        _
      // Predicated region
      $region25: #{_lambda_.1} parent=11 // pred_check
        %p303 = pneg %p127
      $region26: #{_lambda_.1} parent=11 // pred_check_branch
        %305 = sbr.rel (%p303) target = $region28
      $region27: #{_lambda_.1} parent=11 // pred_region
        _
      $region28: #{_lambda_.1} parent=11 // pred_fallthru
        _
      // Predicated region
      $region29: #{_lambda_.1} parent=11 // pred_check
        %p306 = pneg %p148
      $region30: #{_lambda_.1} parent=11 // pred_check_branch
        %308 = sbr.rel (%p306) target = $region32
      $region31: #{_lambda_.1} parent=11 // pred_region
        _
      $region32: #{_lambda_.1} parent=11 // pred_fallthru
        _
      // Predicated region
      $region33: #{_lambda_.1} parent=11 // pred_check
        %p309 = pneg %p169
      $region34: #{_lambda_.1} parent=11 // pred_check_branch
        %311 = sbr.rel (%p309) target = $region36
      $region35: #{_lambda_.1} parent=11 // pred_region
        _
      $region36: #{_lambda_.1} parent=11 // pred_fallthru
        _
      // Predicated region
      $region37: #{_lambda_.1} parent=11 // pred_check
        %p312 = pneg %p190
      $region38: #{_lambda_.1} parent=11 // pred_check_branch
        %314 = sbr.rel (%p312) target = $region40
      $region39: #{_lambda_.1} parent=11 // pred_region
        _
      $region40: #{_lambda_.1} parent=11 // pred_fallthru
        _
      // Predicated region
      $region41: #{_lambda_.1} parent=11 // pred_check
        %p315 = pneg %p211
      $region42: #{_lambda_.1} parent=11 // pred_check_branch
        %317 = sbr.rel (%p315) target = $region44
      $region43: #{_lambda_.1} parent=11 // pred_region
        _
      $region44: #{_lambda_.1} parent=11 // pred_fallthru
        _
      // Predicated region
      $region45: #{_lambda_.1} parent=11 // pred_check
        %p318 = pneg %p232
      $region46: #{_lambda_.1} parent=11 // pred_check_branch
        %320 = sbr.rel (%p318) target = $region48
      $region47: #{_lambda_.1} parent=11 // pred_region
        _
      $region48: #{_lambda_.1} parent=11 // pred_fallthru
        _
      // Predicated region
      $region49: #{_lambda_.1} parent=11 // pred_check
        %p321 = pneg %p253
      $region50: #{_lambda_.1} parent=11 // pred_check_branch
        %323 = sbr.rel (%p321) target = $region52
      $region51: #{_lambda_.1} parent=11 // pred_region
        _
      $region52: #{_lambda_.1} parent=11 // pred_fallthru
        _
    $region12: #{_lambda_.1} parent=5 // pred_fallthru
      _
    %p324 = scmp.lt.s32.totalorder %s17, 2
    // Predicated region
    $region53: #{_lambda_.1} parent=5 // pred_check
      %p325 = pneg %p324
    $region54: #{_lambda_.1} parent=5 // pred_check_branch
      %327 = sbr.rel (%p325) target = $region56
    $region55: #{_lambda_.1} parent=5 // pred_region
      // Predicated region
      $region57: #{_lambda_.1} parent=55 // pred_check
        %p328 = pneg %p37
      $region58: #{_lambda_.1} parent=55 // pred_check_branch
        %330 = sbr.rel (%p328) target = $region60
      $region59: #{_lambda_.1} parent=55 // pred_region
        %s331 = smul.u32 104, %s17
        %p332 = scmp.lt.s32.totalorder %s331, 207
        %s333 = scalar_select %p332, %s331, 207
        %s334 = smul.addr %s333, 4
        %s335 = scalar_lea.vmem %s0, %s334
        %s336 = smul.u32 104, %s17
      $region60: #{_lambda_.1} parent=55 // pred_fallthru
        _
    $region56: #{_lambda_.1} parent=5 // pred_fallthru
      _
    %p337 = scmp.le.s32.totalorder 1, %s17
    %p338 = scmp.lt.s32.totalorder %s17, 3
    %p339 = pnand %p337, %p338
    %p340 = pneg %p339
    // Predicated region
    $region61: #{_lambda_.1} parent=5 // pred_check
      _
    $region62: #{_lambda_.1} parent=5 // pred_check_branch
      %342 = sbr.rel (%p339) target = $region64
    $region63: #{_lambda_.1} parent=5 // pred_region
      %s343 = ssub.s32 %s17, 1
      %s344 = smul.u32 104, %s22
      %p345 = scmp.lt.s32.totalorder %s344, 207
      %s346 = scalar_select %p345, %s344, 207
      %s347 = smul.addr %s346, 4
      %s348 = scalar_lea.vmem %s0, %s347
      %p349 = pneg %p43
      %p350 = pneg %p40
      %p351 = pneg %p64
      %p352 = pneg %p61
      %p353 = pneg %p85
      %p354 = pneg %p82
      %p355 = pneg %p106
      %p356 = pneg %p103
      %p357 = pneg %p127
      %p358 = pneg %p124
      %p359 = pneg %p148
      %p360 = pneg %p145
      %p361 = pneg %p169
      %p362 = pneg %p166
      %p363 = pneg %p190
      %p364 = pneg %p187
      %p365 = pneg %p211
      %p366 = pneg %p208
      %p367 = pneg %p232
      %p368 = pneg %p229
      %p369 = pneg %p253
      %p370 = pneg %p250
      %p371 = pneg %p279
      %p372 = pneg %p276
      %s373 = smul.u32 4, %s22
      %p374 = scmp.lt.s32.totalorder %s373, 7
      %s375 = scalar_select %p374, %s373, 7
      %s376 = smul.addr %s375, 8
      %s377 = scalar_lea.vmem %s11, %s376
      %s378 = smul.u32 104, %s22
      %p379 = scmp.lt.s32.totalorder %s378, 207
      %s380 = scalar_select %p379, %s378, 207
      %s381 = smul.addr %s380, 4
      %s382 = scalar_lea.vmem %s0, %s381
      %s383 = smul.u32 104, %s22
      %s384 = smul.u32 4, %s22
      %p385 = scmp.lt.s32.totalorder %s384, 7
      %s386 = scalar_select %p385, %s384, 7
      %s387 = smul.addr %s386, 8
      %s388 = scalar_lea.vmem %s11, %s387
      %s389 = smul.u32 4, %s22
      %v391 = vld [vmem:[%s382] sm:$0xf]
      %v392 = vld [vmem:[%s382 + $0x4] sm:$0xf]
      %v393 = vld [vmem:[%s382 + $0x8] sm:$0xf]
      %v394 = vld [vmem:[%s382 + $0xc] sm:$0xf]
      %v395 = vld [vmem:[%s382 + $0x10] sm:$0xf]
      %v396 = vld [vmem:[%s382 + $0x14] sm:$0xf]
      %v397 = vld [vmem:[%s382 + $0x18] sm:$0xf]
      %v398 = vld [vmem:[%s382 + $0x1c] sm:$0xf]
      %v399 = vld [vmem:[%s382 + $0x20] sm:$0xf]
      %v400 = vld [vmem:[%s382 + $0x24] sm:$0xf]
      %v401 = vld [vmem:[%s382 + $0x28] sm:$0xf]
      %v402 = vld [vmem:[%s382 + $0x2c] sm:$0xf]
      %v403 = vld [vmem:[%s382 + $0x30] sm:$0xf]
      %v404 = vld [vmem:[%s382 + $0x34] sm:$0xf]
      %v405 = vld [vmem:[%s382 + $0x38] sm:$0xf]
      %v406 = vld [vmem:[%s382 + $0x3c] sm:$0xf]
      %v407 = vld [vmem:[%s382 + $0x40] sm:$0xf]
      %v408 = vld [vmem:[%s382 + $0x44] sm:$0xf]
      %v409 = vld [vmem:[%s382 + $0x48] sm:$0xf]
      %v410 = vld [vmem:[%s382 + $0x4c] sm:$0xf]
      %v411 = vld [vmem:[%s382 + $0x50] sm:$0xf]
      %v412 = vld [vmem:[%s382 + $0x54] sm:$0xf]
      %v413 = vld [vmem:[%s382 + $0x58] sm:$0xf]
      %v414 = vld [vmem:[%s382 + $0x5c] sm:$0xf]
      %v415 = vld [vmem:[%s382 + $0x60] sm:$0xf]
      %v416 = vld [vmem:[%s382 + $0x64] sm:$0xf]
      %v417 = vld [vmem:[%s382 + $0x68] sm:$0xf]
      %v418 = vld [vmem:[%s382 + $0x6c] sm:$0xf]
      %v419 = vld [vmem:[%s382 + $0x70] sm:$0xf]
      %v420 = vld [vmem:[%s382 + $0x74] sm:$0xf]
      %v421 = vld [vmem:[%s382 + $0x78] sm:$0xf]
      %v422 = vld [vmem:[%s382 + $0x7c] sm:$0xf]
      %v423 = vld [vmem:[%s382 + $0x80] sm:$0xf]
      %v424 = vld [vmem:[%s382 + $0x84] sm:$0xf]
      %v425 = vld [vmem:[%s382 + $0x88] sm:$0xf]
      %v426 = vld [vmem:[%s382 + $0x8c] sm:$0xf]
      %v427 = vld [vmem:[%s382 + $0x90] sm:$0xf]
      %v428 = vld [vmem:[%s382 + $0x94] sm:$0xf]
      %v429 = vld [vmem:[%s382 + $0x98] sm:$0xf]
      %v430 = vld [vmem:[%s382 + $0x9c] sm:$0xf]
      %v431 = vld [vmem:[%s382 + $0xa0] sm:$0xf]
      %v432 = vld [vmem:[%s382 + $0xa4] sm:$0xf]
      %v433 = vld [vmem:[%s382 + $0xa8] sm:$0xf]
      %v434 = vld [vmem:[%s382 + $0xac] sm:$0xf]
      %v435 = vld [vmem:[%s382 + $0xb0] sm:$0xf]
      %v436 = vld [vmem:[%s382 + $0xb4] sm:$0xf]
      %v437 = vld [vmem:[%s382 + $0xb8] sm:$0xf]
      %v438 = vld [vmem:[%s382 + $0xbc] sm:$0xf]
      %v439 = vld [vmem:[%s382 + $0xc0] sm:$0xf]
      %v440 = vld [vmem:[%s382 + $0xc4] sm:$0xf]
      %v441 = vld [vmem:[%s382 + $0xc8] sm:$0xf]
      %v442 = vld [vmem:[%s382 + $0xcc] sm:$0xf]
      %v443 = vld [vmem:[%s382 + $0xd0] sm:$0xf]
      %v444 = vld [vmem:[%s382 + $0xd4] sm:$0xf]
      %v445 = vld [vmem:[%s382 + $0xd8] sm:$0xf]
      %v446 = vld [vmem:[%s382 + $0xdc] sm:$0xf]
      %v447 = vld [vmem:[%s382 + $0xe0] sm:$0xf]
      %v448 = vld [vmem:[%s382 + $0xe4] sm:$0xf]
      %v449 = vld [vmem:[%s382 + $0xe8] sm:$0xf]
      %v450 = vld [vmem:[%s382 + $0xec] sm:$0xf]
      %v451 = vld [vmem:[%s382 + $0xf0] sm:$0xf]
      %v452 = vld [vmem:[%s382 + $0xf4] sm:$0xf]
      %v453 = vld [vmem:[%s382 + $0xf8] sm:$0xf]
      %v454 = vld [vmem:[%s382 + $0xfc] sm:$0xf]
      %v455 = vld [vmem:[%s382 + $0x100] sm:$0xf]
      %v456 = vld [vmem:[%s382 + $0x104] sm:$0xf]
      %v457 = vld [vmem:[%s382 + $0x108] sm:$0xf]
      %v458 = vld [vmem:[%s382 + $0x10c] sm:$0xf]
      %v459 = vld [vmem:[%s382 + $0x110] sm:$0xf]
      %v460 = vld [vmem:[%s382 + $0x114] sm:$0xf]
      %v461 = vld [vmem:[%s382 + $0x118] sm:$0xf]
      %v462 = vld [vmem:[%s382 + $0x11c] sm:$0xf]
      %v463 = vld [vmem:[%s382 + $0x120] sm:$0xf]
      %v464 = vld [vmem:[%s382 + $0x124] sm:$0xf]
      %v465 = vld [vmem:[%s382 + $0x128] sm:$0xf]
      %v466 = vld [vmem:[%s382 + $0x12c] sm:$0xf]
      %v467 = vld [vmem:[%s382 + $0x130] sm:$0xf]
      %v468 = vld [vmem:[%s382 + $0x134] sm:$0xf]
      %v469 = vld [vmem:[%s382 + $0x138] sm:$0xf]
      %v470 = vld [vmem:[%s382 + $0x13c] sm:$0xf]
      %v471 = vld [vmem:[%s382 + $0x140] sm:$0xf]
      %v472 = vld [vmem:[%s382 + $0x144] sm:$0xf]
      %v473 = vld [vmem:[%s382 + $0x148] sm:$0xf]
      %v474 = vld [vmem:[%s382 + $0x14c] sm:$0xf]
      %v475 = vld [vmem:[%s382 + $0x150] sm:$0xf]
      %v476 = vld [vmem:[%s382 + $0x154] sm:$0xf]
      %v477 = vld [vmem:[%s382 + $0x158] sm:$0xf]
      %v478 = vld [vmem:[%s382 + $0x15c] sm:$0xf]
      %v479 = vld [vmem:[%s382 + $0x160] sm:$0xf]
      %v480 = vld [vmem:[%s382 + $0x164] sm:$0xf]
      %v481 = vld [vmem:[%s382 + $0x168] sm:$0xf]
      %v482 = vld [vmem:[%s382 + $0x16c] sm:$0xf]
      %v483 = vld [vmem:[%s382 + $0x170] sm:$0xf]
      %v484 = vld [vmem:[%s382 + $0x174] sm:$0xf]
      %v485 = vld [vmem:[%s382 + $0x178] sm:$0xf]
      %v486 = vld [vmem:[%s382 + $0x17c] sm:$0xf]
      %v487 = vld [vmem:[%s382 + $0x180] sm:$0xf]
      %v488 = vld [vmem:[%s382 + $0x184] sm:$0xf]
      %v489 = vld [vmem:[%s382 + $0x188] sm:$0xf]
      %v490 = vld [vmem:[%s382 + $0x18c] sm:$0xf]
      %v491 = vld [vmem:[%s382 + $0x190] sm:$0xf]
      %v492 = vld [vmem:[%s382 + $0x194] sm:$0xf]
      %v493 = vld [vmem:[%s382 + $0x198] sm:$0xf]
      %v494 = vld [vmem:[%s382 + $0x19c] sm:$0xf]
      %v495 = vld [vmem:[%s1] sm:$0xff]
      %v496 = vld [vmem:[%s1 + $0x8] sm:$0xff]
      %v497 = vld [vmem:[%s1 + $0x10] sm:$0xff]
      %v498 = vld [vmem:[%s1 + $0x18] sm:$0xff]
      %v499 = vld [vmem:[%s1 + $0x20] sm:$0xff]
      %v500 = vld [vmem:[%s1 + $0x28] sm:$0xff]
      %v501 = vld [vmem:[%s1 + $0x30] sm:$0xff]
      %v502 = vld [vmem:[%s1 + $0x38] sm:$0xff]
      %v503 = vld [vmem:[%s1 + $0x40] sm:$0xff]
      %v504 = vld [vmem:[%s1 + $0x48] sm:$0xff]
      %v505 = vld [vmem:[%s1 + $0x50] sm:$0xff]
      %v506 = vld [vmem:[%s1 + $0x58] sm:$0xff]
      %v507 = vld [vmem:[%s1 + $0x60] sm:$0xff]
      %v508 = vld [vmem:[%s1 + $0x68] sm:$0xff]
      %v509 = vld [vmem:[%s1 + $0x70] sm:$0xff]
      %v510 = vld [vmem:[%s1 + $0x78] sm:$0xff]
      %v511 = vld [vmem:[%s1 + $0x80] sm:$0xff]
      %v512 = vld [vmem:[%s1 + $0x88] sm:$0xff]
      %v513 = vld [vmem:[%s1 + $0x90] sm:$0xff]
      %v514 = vld [vmem:[%s1 + $0x98] sm:$0xff]
      %v515 = vld [vmem:[%s1 + $0xa0] sm:$0xff]
      %v516 = vld [vmem:[%s1 + $0xa8] sm:$0xff]
      %v517 = vld [vmem:[%s1 + $0xb0] sm:$0xff]
      %v518 = vld [vmem:[%s1 + $0xb8] sm:$0xff]
      %v519 = vld [vmem:[%s1 + $0xc0] sm:$0xff]
      %v520 = vld [vmem:[%s1 + $0xc8] sm:$0xff]
      %v521 = vld [vmem:[%s1 + $0xd0] sm:$0xff]
      %v522 = vld [vmem:[%s1 + $0xd8] sm:$0xff]
      %v523 = vld [vmem:[%s1 + $0xe0] sm:$0xff]
      %v524 = vld [vmem:[%s1 + $0xe8] sm:$0xff]
      %v525 = vld [vmem:[%s1 + $0xf0] sm:$0xff]
      %v526 = vld [vmem:[%s1 + $0xf8] sm:$0xff]
      %v527 = vld [vmem:[%s2] sm:$0xf]
      %v529 = vlaneseq
      %v530 = vshrl.u32 %v529, 7
      %v531 = vsub.s32 0, %v530
      %v532 = vrot.slane %v527, %v531
      %v533 = vlaneseq
      %v534 = vshrl.u32 %v533, 7
      %v535 = vsub.s32 1, %v534
      %v536 = vrot.slane %v527, %v535
      %v537 = vlaneseq
      %v538 = vshrl.u32 %v537, 7
      %v539 = vsub.s32 2, %v538
      %v540 = vrot.slane %v527, %v539
      %v541 = vlaneseq
      %v542 = vshrl.u32 %v541, 7
      %v543 = vsub.s32 3, %v542
      %v544 = vrot.slane %v527, %v543
      %v653 = vunpack.c.l.b16 %v391
      %v654 = vunpack.c.l.b16 %v392
      %v655 = vunpack.c.l.b16 %v393
      %v656 = vunpack.c.l.b16 %v394
      %v657 = vunpack.c.l.b16 %v395
      %v658 = vunpack.c.l.b16 %v396
      %v659 = vunpack.c.l.b16 %v397
      %v660 = vunpack.c.l.b16 %v398
      %v661 = vunpack.c.l.b16 %v399
      %v662 = vunpack.c.l.b16 %v400
      %v663 = vunpack.c.l.b16 %v401
      %v664 = vunpack.c.l.b16 %v402
      %v665 = vunpack.c.l.b16 %v403
      %v666 = vunpack.c.l.b16 %v404
      %v667 = vunpack.c.l.b16 %v405
      %v668 = vunpack.c.l.b16 %v406
      %v669 = vunpack.c.l.b16 %v407
      %v670 = vunpack.c.l.b16 %v408
      %v671 = vunpack.c.l.b16 %v409
      %v672 = vunpack.c.l.b16 %v410
      %v673 = vunpack.c.l.b16 %v411
      %v674 = vunpack.c.l.b16 %v412
      %v675 = vunpack.c.l.b16 %v413
      %v676 = vunpack.c.l.b16 %v414
      %v677 = vunpack.c.l.b16 %v415
      %v678 = vunpack.c.l.b16 %v416
      %v679 = vunpack.c.l.b16 %v417
      %v680 = vunpack.c.l.b16 %v418
      %v681 = vunpack.c.l.b16 %v419
      %v682 = vunpack.c.l.b16 %v420
      %v683 = vunpack.c.l.b16 %v421
      %v684 = vunpack.c.l.b16 %v422
      %v685 = vunpack.c.l.b16 %v423
      %v686 = vunpack.c.l.b16 %v424
      %v687 = vunpack.c.l.b16 %v425
      %v688 = vunpack.c.l.b16 %v426
      %v689 = vunpack.c.l.b16 %v427
      %v690 = vunpack.c.l.b16 %v428
      %v691 = vunpack.c.l.b16 %v429
      %v692 = vunpack.c.l.b16 %v430
      %v693 = vunpack.c.l.b16 %v431
      %v694 = vunpack.c.l.b16 %v432
      %v695 = vunpack.c.l.b16 %v433
      %v696 = vunpack.c.l.b16 %v434
      %v697 = vunpack.c.l.b16 %v435
      %v698 = vunpack.c.l.b16 %v436
      %v699 = vunpack.c.l.b16 %v437
      %v700 = vunpack.c.l.b16 %v438
      %v701 = vunpack.c.l.b16 %v439
      %v702 = vunpack.c.l.b16 %v440
      %v703 = vunpack.c.l.b16 %v441
      %v704 = vunpack.c.l.b16 %v442
      %v705 = vunpack.c.l.b16 %v443
      %v706 = vunpack.c.l.b16 %v444
      %v707 = vunpack.c.l.b16 %v445
      %v708 = vunpack.c.l.b16 %v446
      %v709 = vunpack.c.l.b16 %v447
      %v710 = vunpack.c.l.b16 %v448
      %v711 = vunpack.c.l.b16 %v449
      %v712 = vunpack.c.l.b16 %v450
      %v713 = vunpack.c.l.b16 %v451
      %v714 = vunpack.c.l.b16 %v452
      %v715 = vunpack.c.l.b16 %v453
      %v716 = vunpack.c.l.b16 %v454
      %v717 = vunpack.c.l.b16 %v455
      %v718 = vunpack.c.l.b16 %v456
      %v719 = vunpack.c.l.b16 %v457
      %v720 = vunpack.c.l.b16 %v458
      %v721 = vunpack.c.l.b16 %v459
      %v722 = vunpack.c.l.b16 %v460
      %v723 = vunpack.c.l.b16 %v461
      %v724 = vunpack.c.l.b16 %v462
      %v725 = vunpack.c.l.b16 %v463
      %v726 = vunpack.c.l.b16 %v464
      %v727 = vunpack.c.l.b16 %v465
      %v728 = vunpack.c.l.b16 %v466
      %v729 = vunpack.c.l.b16 %v467
      %v730 = vunpack.c.l.b16 %v468
      %v731 = vunpack.c.l.b16 %v469
      %v732 = vunpack.c.l.b16 %v470
      %v733 = vunpack.c.l.b16 %v471
      %v734 = vunpack.c.l.b16 %v472
      %v735 = vunpack.c.l.b16 %v473
      %v736 = vunpack.c.l.b16 %v474
      %v737 = vunpack.c.l.b16 %v475
      %v738 = vunpack.c.l.b16 %v476
      %v739 = vunpack.c.l.b16 %v477
      %v740 = vunpack.c.l.b16 %v478
      %v741 = vunpack.c.l.b16 %v479
      %v742 = vunpack.c.l.b16 %v480
      %v743 = vunpack.c.l.b16 %v481
      %v744 = vunpack.c.l.b16 %v482
      %v745 = vunpack.c.l.b16 %v483
      %v746 = vunpack.c.l.b16 %v484
      %v747 = vunpack.c.l.b16 %v485
      %v748 = vunpack.c.l.b16 %v486
      %v749 = vunpack.c.l.b16 %v487
      %v750 = vunpack.c.l.b16 %v488
      %v751 = vunpack.c.l.b16 %v489
      %v752 = vunpack.c.l.b16 %v490
      %v753 = vunpack.c.l.b16 %v491
      %v754 = vunpack.c.l.b16 %v492
      %v755 = vunpack.c.l.b16 %v493
      %v756 = vunpack.c.l.b16 %v494
      %v757 = vpack.c.b16 %v654, %v653
      %v758 = vpack.c.b16 %v656, %v655
      %v759 = vpack.c.b16 %v658, %v657
      %v760 = vpack.c.b16 %v660, %v659
      %v761 = vpack.c.b16 %v662, %v661
      %v762 = vpack.c.b16 %v664, %v663
      %v763 = vpack.c.b16 %v666, %v665
      %v764 = vpack.c.b16 %v668, %v667
      %v765 = vpack.c.b16 %v670, %v669
      %v766 = vpack.c.b16 %v672, %v671
      %v767 = vpack.c.b16 %v674, %v673
      %v768 = vpack.c.b16 %v676, %v675
      %v769 = vpack.c.b16 %v678, %v677
      %v770 = vpack.c.b16 %v680, %v679
      %v771 = vpack.c.b16 %v682, %v681
      %v772 = vpack.c.b16 %v684, %v683
      %v773 = vpack.c.b16 %v686, %v685
      %v774 = vpack.c.b16 %v688, %v687
      %v775 = vpack.c.b16 %v690, %v689
      %v776 = vpack.c.b16 %v692, %v691
      %v777 = vpack.c.b16 %v694, %v693
      %v778 = vpack.c.b16 %v696, %v695
      %v779 = vpack.c.b16 %v698, %v697
      %v780 = vpack.c.b16 %v700, %v699
      %v781 = vpack.c.b16 %v702, %v701
      %v782 = vpack.c.b16 %v704, %v703
      %v783 = vpack.c.b16 %v706, %v705
      %v784 = vpack.c.b16 %v708, %v707
      %v785 = vpack.c.b16 %v710, %v709
      %v786 = vpack.c.b16 %v712, %v711
      %v787 = vpack.c.b16 %v714, %v713
      %v788 = vpack.c.b16 %v716, %v715
      %v789 = vpack.c.b16 %v718, %v717
      %v790 = vpack.c.b16 %v720, %v719
      %v791 = vpack.c.b16 %v722, %v721
      %v792 = vpack.c.b16 %v724, %v723
      %v793 = vpack.c.b16 %v726, %v725
      %v794 = vpack.c.b16 %v728, %v727
      %v795 = vpack.c.b16 %v730, %v729
      %v796 = vpack.c.b16 %v732, %v731
      %v797 = vpack.c.b16 %v734, %v733
      %v798 = vpack.c.b16 %v736, %v735
      %v799 = vpack.c.b16 %v738, %v737
      %v800 = vpack.c.b16 %v740, %v739
      %v801 = vpack.c.b16 %v742, %v741
      %v802 = vpack.c.b16 %v744, %v743
      %v803 = vpack.c.b16 %v746, %v745
      %v804 = vpack.c.b16 %v748, %v747
      %v805 = vpack.c.b16 %v750, %v749
      %v806 = vpack.c.b16 %v752, %v751
      %v807 = vpack.c.b16 %v754, %v753
      %v808 = vpack.c.b16 %v756, %v755
      %v893 = vunpack.c.l.b16 %v495
      %v894 = vunpack.c.h.b16 %v495
      %v895 = vunpack.c.l.b16 %v496
      %v896 = vunpack.c.h.b16 %v496
      %v897 = vunpack.c.l.b16 %v497
      %v898 = vunpack.c.h.b16 %v497
      %v899 = vunpack.c.l.b16 %v498
      %v900 = vunpack.c.h.b16 %v498
      %v901 = vunpack.c.l.b16 %v499
      %v902 = vunpack.c.h.b16 %v499
      %v903 = vunpack.c.l.b16 %v500
      %v904 = vunpack.c.h.b16 %v500
      %v905 = vunpack.c.l.b16 %v501
      %v906 = vunpack.c.h.b16 %v501
      %v907 = vunpack.c.l.b16 %v502
      %v908 = vunpack.c.h.b16 %v502
      %v909 = vunpack.c.l.b16 %v503
      %v910 = vunpack.c.h.b16 %v503
      %v911 = vunpack.c.l.b16 %v504
      %v912 = vunpack.c.h.b16 %v504
      %v913 = vunpack.c.l.b16 %v505
      %v914 = vunpack.c.h.b16 %v505
      %v915 = vunpack.c.l.b16 %v506
      %v916 = vunpack.c.h.b16 %v506
      %v917 = vunpack.c.l.b16 %v507
      %v918 = vunpack.c.h.b16 %v507
      %v919 = vunpack.c.l.b16 %v508
      %v920 = vunpack.c.h.b16 %v508
      %v921 = vunpack.c.l.b16 %v509
      %v922 = vunpack.c.h.b16 %v509
      %v923 = vunpack.c.l.b16 %v510
      %v924 = vunpack.c.h.b16 %v510
      %v925 = vunpack.c.l.b16 %v511
      %v926 = vunpack.c.h.b16 %v511
      %v927 = vunpack.c.l.b16 %v512
      %v928 = vunpack.c.h.b16 %v512
      %v929 = vunpack.c.l.b16 %v513
      %v930 = vunpack.c.h.b16 %v513
      %v931 = vunpack.c.l.b16 %v514
      %v932 = vunpack.c.h.b16 %v514
      %v933 = vunpack.c.l.b16 %v515
      %v934 = vunpack.c.h.b16 %v515
      %v935 = vunpack.c.l.b16 %v516
      %v936 = vunpack.c.h.b16 %v516
      %v937 = vunpack.c.l.b16 %v517
      %v938 = vunpack.c.h.b16 %v517
      %v939 = vunpack.c.l.b16 %v518
      %v940 = vunpack.c.h.b16 %v518
      %v941 = vunpack.c.l.b16 %v519
      %v942 = vunpack.c.h.b16 %v519
      %v943 = vunpack.c.l.b16 %v520
      %v944 = vunpack.c.h.b16 %v520
      %v945 = vunpack.c.l.b16 %v521
      %v946 = vunpack.c.h.b16 %v521
      %v947 = vunpack.c.l.b16 %v522
      %v948 = vunpack.c.h.b16 %v522
      %v949 = vunpack.c.l.b16 %v523
      %v950 = vunpack.c.h.b16 %v523
      %v951 = vunpack.c.l.b16 %v524
      %v952 = vunpack.c.h.b16 %v524
      %v953 = vunpack.c.l.b16 %v525
      %v954 = vunpack.c.h.b16 %v525
      %v955 = vunpack.c.l.b16 %v526
      %v956 = vunpack.c.h.b16 %v526
      %v957 = vpack.c.b16 %v897, %v893
      %v958 = vpack.c.b16 %v898, %v894
      %v959 = vpack.c.b16 %v899, %v895
      %v960 = vpack.c.b16 %v900, %v896
      %v961 = vpack.c.b16 %v905, %v901
      %v962 = vpack.c.b16 %v906, %v902
      %v963 = vpack.c.b16 %v907, %v903
      %v964 = vpack.c.b16 %v908, %v904
      %v965 = vpack.c.b16 %v913, %v909
      %v966 = vpack.c.b16 %v914, %v910
      %v967 = vpack.c.b16 %v915, %v911
      %v968 = vpack.c.b16 %v916, %v912
      %v969 = vpack.c.b16 %v921, %v917
      %v970 = vpack.c.b16 %v922, %v918
      %v971 = vpack.c.b16 %v923, %v919
      %v972 = vpack.c.b16 %v924, %v920
      %v973 = vpack.c.b16 %v929, %v925
      %v974 = vpack.c.b16 %v930, %v926
      %v975 = vpack.c.b16 %v931, %v927
      %v976 = vpack.c.b16 %v932, %v928
      %v977 = vpack.c.b16 %v937, %v933
      %v978 = vpack.c.b16 %v938, %v934
      %v979 = vpack.c.b16 %v939, %v935
      %v980 = vpack.c.b16 %v940, %v936
      %v981 = vpack.c.b16 %v945, %v941
      %v982 = vpack.c.b16 %v946, %v942
      %v983 = vpack.c.b16 %v947, %v943
      %v984 = vpack.c.b16 %v948, %v944
      %v985 = vpack.c.b16 %v953, %v949
      %v986 = vpack.c.b16 %v954, %v950
      %v987 = vpack.c.b16 %v955, %v951
      %v988 = vpack.c.b16 %v956, %v952
      %1021 = vmatprep.subr.bf16.mxu0 %v958
      %1022 = vmatpush1.bf16.msra.mxu0 %v957
      %1023 = vmatprep.subr.bf16.mxu0 %v962
      %1024 = vmatpush1.bf16.msra.mxu0 %v961
      %1025 = vmatprep.subr.bf16.mxu0 %v966
      %1026 = vmatpush1.bf16.msra.mxu0 %v965
      %1027 = vmatprep.subr.bf16.mxu0 %v970
      %1028 = vmatpush1.bf16.msra.mxu0 %v969
      %1029 = vmatprep.subr.bf16.mxu0 %v974
      %1030 = vmatpush1.bf16.msra.mxu0 %v973
      %1031 = vmatprep.subr.bf16.mxu0 %v978
      %1032 = vmatpush1.bf16.msra.mxu0 %v977
      %1033 = vmatprep.subr.bf16.mxu0 %v982
      %1034 = vmatpush1.bf16.msra.mxu0 %v981
      %1035 = vmatprep.subr.bf16.mxu0 %v986
      %1036 = vmatpush1.bf16.msra.mxu0 %v985
      %1037 = vmatprep.subr.bf16.mxu0 0
      %1038 = vmatpush1.bf16.msra.mxu0 0
      %1039 = vmatprep.subr.bf16.mxu0 0
      %1040 = vmatpush1.bf16.msra.mxu0 0
      %1041 = vmatprep.subr.bf16.mxu0 0
      %1042 = vmatpush1.bf16.msra.mxu0 0
      %1043 = vmatprep.subr.bf16.mxu0 0
      %1044 = vmatpush1.bf16.msra.mxu0 0
      %1045 = vmatprep.subr.bf16.mxu0 0
      %1046 = vmatpush1.bf16.msra.mxu0 0
      %1047 = vmatprep.subr.bf16.mxu0 0
      %1048 = vmatpush1.bf16.msra.mxu0 0
      %1049 = vmatprep.subr.bf16.mxu0 0
      %1050 = vmatpush1.bf16.msra.mxu0 0
      %1051 = vmatprep.subr.bf16.mxu0 0
      %1052 = vmatpush1.bf16.msra.mxu0 0
      %1053 = vmatprep.mubr.bf16.mxu0 0
      %1054 = vmatmul.mubr.bf16.gmra.mrb[0].mxu0 %v757
      %v1055 = vpop.f32.mrb[0].mxu0
      %v1056 = vadd.f32 %v532, %v1055
      %v1057 = vpop.f32.mrb[0].mxu0
      %v1058 = vadd.f32 %v536, %v1057
      %v1059 = vpop.f32.mrb[0].mxu0
      %v1060 = vadd.f32 %v532, %v1059
      %v1061 = vpop.f32.mrb[0].mxu0
      %v1062 = vadd.f32 %v536, %v1061
      %1063 = vmatprep.mubr.bf16.mxu0 0
      %1064 = vmatmul.mubr.bf16.gmra.mrb[0].mxu0 %v758
      %v1065 = vpop.f32.mrb[0].mxu0
      %v1066 = vadd.f32 %v532, %v1065
      %v1067 = vpop.f32.mrb[0].mxu0
      %v1068 = vadd.f32 %v536, %v1067
      %v1069 = vpop.f32.mrb[0].mxu0
      %v1070 = vadd.f32 %v532, %v1069
      %v1071 = vpop.f32.mrb[0].mxu0
      %v1072 = vadd.f32 %v536, %v1071
      %1073 = vmatprep.mubr.bf16.mxu0 0
      %1074 = vmatmul.mubr.bf16.gmra.mrb[0].mxu0 %v759
      %v1075 = vpop.f32.mrb[0].mxu0
      %v1076 = vadd.f32 %v532, %v1075
      %v1077 = vpop.f32.mrb[0].mxu0
      %v1078 = vadd.f32 %v536, %v1077
      %v1079 = vpop.f32.mrb[0].mxu0
      %v1080 = vadd.f32 %v532, %v1079
      %v1081 = vpop.f32.mrb[0].mxu0
      %v1082 = vadd.f32 %v536, %v1081
      %1083 = vmatprep.mubr.bf16.mxu0 0
      %1084 = vmatmul.mubr.bf16.gmra.mrb[0].mxu0 %v760
      %v1085 = vpop.f32.mrb[0].mxu0
      %v1086 = vadd.f32 %v532, %v1085
      %v1087 = vpop.f32.mrb[0].mxu0
      %v1088 = vadd.f32 %v536, %v1087
      %v1089 = vpop.f32.mrb[0].mxu0
      %v1090 = vadd.f32 %v532, %v1089
      %v1091 = vpop.f32.mrb[0].mxu0
      %v1092 = vadd.f32 %v536, %v1091
      %1093 = vmatprep.mubr.bf16.mxu0 0
      %1094 = vmatmul.mubr.bf16.gmra.mrb[0].mxu0 %v761
      %v1095 = vpop.f32.mrb[0].mxu0
      %v1096 = vadd.f32 %v532, %v1095
      %v1097 = vpop.f32.mrb[0].mxu0
      %v1098 = vadd.f32 %v536, %v1097
      %v1099 = vpop.f32.mrb[0].mxu0
      %v1100 = vadd.f32 %v532, %v1099
      %v1101 = vpop.f32.mrb[0].mxu0
      %v1102 = vadd.f32 %v536, %v1101
      %1103 = vmatprep.mubr.bf16.mxu0 0
      %1104 = vmatmul.mubr.bf16.gmra.mrb[0].mxu0 %v762
      %v1105 = vpop.f32.mrb[0].mxu0
      %v1106 = vadd.f32 %v532, %v1105
      %v1107 = vpop.f32.mrb[0].mxu0
      %v1108 = vadd.f32 %v536, %v1107
      %v1109 = vpop.f32.mrb[0].mxu0
      %v1110 = vadd.f32 %v532, %v1109
      %v1111 = vpop.f32.mrb[0].mxu0
      %v1112 = vadd.f32 %v536, %v1111
      %1113 = vmatprep.mubr.bf16.mxu0 0
      %1114 = vmatmul.mubr.bf16.gmra.mrb[0].mxu0 %v763
      %v1115 = vpop.f32.mrb[0].mxu0
      %v1116 = vadd.f32 %v532, %v1115
      %v1117 = vpop.f32.mrb[0].mxu0
      %v1118 = vadd.f32 %v536, %v1117
      %v1119 = vpop.f32.mrb[0].mxu0
      %v1120 = vadd.f32 %v532, %v1119
      %v1121 = vpop.f32.mrb[0].mxu0
      %v1122 = vadd.f32 %v536, %v1121
      %1123 = vmatprep.mubr.bf16.mxu0 0
      %1124 = vmatmul.mubr.bf16.gmra.mrb[0].mxu0 %v764
      %v1125 = vpop.f32.mrb[0].mxu0
      %v1126 = vadd.f32 %v532, %v1125
      %v1127 = vpop.f32.mrb[0].mxu0
      %v1128 = vadd.f32 %v536, %v1127
      %v1129 = vpop.f32.mrb[0].mxu0
      %v1130 = vadd.f32 %v532, %v1129
      %v1131 = vpop.f32.mrb[0].mxu0
      %v1132 = vadd.f32 %v536, %v1131
      %1133 = vmatprep.mubr.bf16.mxu0 0
      %1134 = vmatmul.mubr.bf16.gmra.mrb[0].mxu0 %v765
      %v1135 = vpop.f32.mrb[0].mxu0
      %v1136 = vadd.f32 %v532, %v1135
      %v1137 = vpop.f32.mrb[0].mxu0
      %v1138 = vadd.f32 %v536, %v1137
      %v1139 = vpop.f32.mrb[0].mxu0
      %v1140 = vadd.f32 %v532, %v1139
      %v1141 = vpop.f32.mrb[0].mxu0
      %v1142 = vadd.f32 %v536, %v1141
      %1143 = vmatprep.mubr.bf16.mxu0 0
      %1144 = vmatmul.mubr.bf16.gmra.mrb[0].mxu0 %v766
      %v1145 = vpop.f32.mrb[0].mxu0
      %v1146 = vadd.f32 %v532, %v1145
      %v1147 = vpop.f32.mrb[0].mxu0
      %v1148 = vadd.f32 %v536, %v1147
      %v1149 = vpop.f32.mrb[0].mxu0
      %v1150 = vadd.f32 %v532, %v1149
      %v1151 = vpop.f32.mrb[0].mxu0
      %v1152 = vadd.f32 %v536, %v1151
      %1153 = vmatprep.mubr.bf16.mxu0 0
      %1154 = vmatmul.mubr.bf16.gmra.mrb[0].mxu0 %v767
      %v1155 = vpop.f32.mrb[0].mxu0
      %v1156 = vadd.f32 %v532, %v1155
      %v1157 = vpop.f32.mrb[0].mxu0
      %v1158 = vadd.f32 %v536, %v1157
      %v1159 = vpop.f32.mrb[0].mxu0
      %v1160 = vadd.f32 %v532, %v1159
      %v1161 = vpop.f32.mrb[0].mxu0
      %v1162 = vadd.f32 %v536, %v1161
      %1163 = vmatprep.mubr.bf16.mxu0 0
      %1164 = vmatmul.mubr.bf16.gmra.mrb[0].mxu0 %v768
      %v1165 = vpop.f32.mrb[0].mxu0
      %v1166 = vadd.f32 %v532, %v1165
      %v1167 = vpop.f32.mrb[0].mxu0
      %v1168 = vadd.f32 %v536, %v1167
      %v1169 = vpop.f32.mrb[0].mxu0
      %v1170 = vadd.f32 %v532, %v1169
      %v1171 = vpop.f32.mrb[0].mxu0
      %v1172 = vadd.f32 %v536, %v1171
      %1173 = vmatprep.mubr.bf16.mxu0 0
      %1174 = vmatmul.mubr.bf16.gmra.mrb[0].mxu0 %v769
      %v1175 = vpop.f32.mrb[0].mxu0
      %v1176 = vadd.f32 %v532, %v1175
      %v1177 = vpop.f32.mrb[0].mxu0
      %v1178 = vadd.f32 %v536, %v1177
      %v1179 = vpop.f32.mrb[0].mxu0
      %v1180 = vadd.f32 %v532, %v1179
      %v1181 = vpop.f32.mrb[0].mxu0
      %v1182 = vadd.f32 %v536, %v1181
      %1183 = vmatprep.mubr.bf16.mxu0 0
      %1184 = vmatmul.mubr.bf16.gmra.mrb[0].mxu0 %v770
      %v1185 = vpop.f32.mrb[0].mxu0
      %v1186 = vadd.f32 %v532, %v1185
      %v1187 = vpop.f32.mrb[0].mxu0
      %v1188 = vadd.f32 %v536, %v1187
      %v1189 = vpop.f32.mrb[0].mxu0
      %v1190 = vadd.f32 %v532, %v1189
      %v1191 = vpop.f32.mrb[0].mxu0
      %v1192 = vadd.f32 %v536, %v1191
      %1193 = vmatprep.mubr.bf16.mxu0 0
      %1194 = vmatmul.mubr.bf16.gmra.mrb[0].mxu0 %v771
      %v1195 = vpop.f32.mrb[0].mxu0
      %v1196 = vadd.f32 %v532, %v1195
      %v1197 = vpop.f32.mrb[0].mxu0
      %v1198 = vadd.f32 %v536, %v1197
      %v1199 = vpop.f32.mrb[0].mxu0
      %v1200 = vadd.f32 %v532, %v1199
      %v1201 = vpop.f32.mrb[0].mxu0
      %v1202 = vadd.f32 %v536, %v1201
      %1203 = vmatprep.mubr.bf16.mxu0 0
      %1204 = vmatmul.mubr.bf16.gmra.mrb[0].mxu0 %v772
      %v1205 = vpop.f32.mrb[0].mxu0
      %v1206 = vadd.f32 %v532, %v1205
      %v1207 = vpop.f32.mrb[0].mxu0
      %v1208 = vadd.f32 %v536, %v1207
      %v1209 = vpop.f32.mrb[0].mxu0
      %v1210 = vadd.f32 %v532, %v1209
      %v1211 = vpop.f32.mrb[0].mxu0
      %v1212 = vadd.f32 %v536, %v1211
      %1213 = vmatprep.mubr.bf16.mxu0 0
      %1214 = vmatmul.mubr.bf16.gmra.mrb[0].mxu0 %v773
      %v1215 = vpop.f32.mrb[0].mxu0
      %v1216 = vadd.f32 %v532, %v1215
      %v1217 = vpop.f32.mrb[0].mxu0
      %v1218 = vadd.f32 %v536, %v1217
      %v1219 = vpop.f32.mrb[0].mxu0
      %v1220 = vadd.f32 %v532, %v1219
      %v1221 = vpop.f32.mrb[0].mxu0
      %v1222 = vadd.f32 %v536, %v1221
      %1223 = vmatprep.mubr.bf16.mxu0 0
      %1224 = vmatmul.mubr.bf16.gmra.mrb[0].mxu0 %v774
      %v1225 = vpop.f32.mrb[0].mxu0
      %v1226 = vadd.f32 %v532, %v1225
      %v1227 = vpop.f32.mrb[0].mxu0
      %v1228 = vadd.f32 %v536, %v1227
      %v1229 = vpop.f32.mrb[0].mxu0
      %v1230 = vadd.f32 %v532, %v1229
      %v1231 = vpop.f32.mrb[0].mxu0
      %v1232 = vadd.f32 %v536, %v1231
      %1233 = vmatprep.mubr.bf16.mxu0 0
      %1234 = vmatmul.mubr.bf16.gmra.mrb[0].mxu0 %v775
      %v1235 = vpop.f32.mrb[0].mxu0
      %v1236 = vadd.f32 %v532, %v1235
      %v1237 = vpop.f32.mrb[0].mxu0
      %v1238 = vadd.f32 %v536, %v1237
      %v1239 = vpop.f32.mrb[0].mxu0
      %v1240 = vadd.f32 %v532, %v1239
      %v1241 = vpop.f32.mrb[0].mxu0
      %v1242 = vadd.f32 %v536, %v1241
      %1243 = vmatprep.mubr.bf16.mxu0 0
      %1244 = vmatmul.mubr.bf16.gmra.mrb[0].mxu0 %v776
      %v1245 = vpop.f32.mrb[0].mxu0
      %v1246 = vadd.f32 %v532, %v1245
      %v1247 = vpop.f32.mrb[0].mxu0
      %v1248 = vadd.f32 %v536, %v1247
      %v1249 = vpop.f32.mrb[0].mxu0
      %v1250 = vadd.f32 %v532, %v1249
      %v1251 = vpop.f32.mrb[0].mxu0
      %v1252 = vadd.f32 %v536, %v1251
      %1253 = vmatprep.mubr.bf16.mxu0 0
      %1254 = vmatmul.mubr.bf16.gmra.mrb[0].mxu0 %v777
      %v1255 = vpop.f32.mrb[0].mxu0
      %v1256 = vadd.f32 %v532, %v1255
      %v1257 = vpop.f32.mrb[0].mxu0
      %v1258 = vadd.f32 %v536, %v1257
      %v1259 = vpop.f32.mrb[0].mxu0
      %v1260 = vadd.f32 %v532, %v1259
      %v1261 = vpop.f32.mrb[0].mxu0
      %v1262 = vadd.f32 %v536, %v1261
      %1263 = vmatprep.mubr.bf16.mxu0 0
      %1264 = vmatmul.mubr.bf16.gmra.mrb[0].mxu0 %v778
      %v1265 = vpop.f32.mrb[0].mxu0
      %v1266 = vadd.f32 %v532, %v1265
      %v1267 = vpop.f32.mrb[0].mxu0
      %v1268 = vadd.f32 %v536, %v1267
      %v1269 = vpop.f32.mrb[0].mxu0
      %v1270 = vadd.f32 %v532, %v1269
      %v1271 = vpop.f32.mrb[0].mxu0
      %v1272 = vadd.f32 %v536, %v1271
      %1273 = vmatprep.mubr.bf16.mxu0 0
      %1274 = vmatmul.mubr.bf16.gmra.mrb[0].mxu0 %v779
      %v1275 = vpop.f32.mrb[0].mxu0
      %v1276 = vadd.f32 %v532, %v1275
      %v1277 = vpop.f32.mrb[0].mxu0
      %v1278 = vadd.f32 %v536, %v1277
      %v1279 = vpop.f32.mrb[0].mxu0
      %v1280 = vadd.f32 %v532, %v1279
      %v1281 = vpop.f32.mrb[0].mxu0
      %v1282 = vadd.f32 %v536, %v1281
      %1283 = vmatprep.mubr.bf16.mxu0 0
      %1284 = vmatmul.mubr.bf16.gmra.mrb[0].mxu0 %v780
      %v1285 = vpop.f32.mrb[0].mxu0
      %v1286 = vadd.f32 %v532, %v1285
      %v1287 = vpop.f32.mrb[0].mxu0
      %v1288 = vadd.f32 %v536, %v1287
      %v1289 = vpop.f32.mrb[0].mxu0
      %v1290 = vadd.f32 %v532, %v1289
      %v1291 = vpop.f32.mrb[0].mxu0
      %v1292 = vadd.f32 %v536, %v1291
      %1293 = vmatprep.mubr.bf16.mxu0 0
      %1294 = vmatmul.mubr.bf16.gmra.mrb[0].mxu0 %v781
      %v1295 = vpop.f32.mrb[0].mxu0
      %v1296 = vpop.f32.mrb[0].mxu0
      %v1297 = vpop.f32.mrb[0].mxu0
      %v1298 = vpop.f32.mrb[0].mxu0
      %1299 = vmatprep.mubr.bf16.mxu0 0
      %1300 = vmatmul.mubr.bf16.gmra.mrb[0].mxu0 %v782
      %v1301 = vpop.f32.mrb[0].mxu0
      %v1302 = vpop.f32.mrb[0].mxu0
      %v1303 = vpop.f32.mrb[0].mxu0
      %v1304 = vpop.f32.mrb[0].mxu0
      %1305 = vmatprep.mubr.bf16.mxu0 0
      %1306 = vmatmul.mubr.bf16.gmra.mrb[0].mxu0 %v783
      %v1307 = vpop.f32.mrb[0].mxu0
      %v1308 = vadd.f32 %v532, %v1307
      %v1309 = vpop.f32.mrb[0].mxu0
      %v1310 = vadd.f32 %v536, %v1309
      %v1311 = vpop.f32.mrb[0].mxu0
      %v1312 = vadd.f32 %v532, %v1311
      %v1313 = vpop.f32.mrb[0].mxu0
      %v1314 = vadd.f32 %v536, %v1313
      %1315 = vmatprep.mubr.bf16.mxu0 0
      %1316 = vmatmul.mubr.bf16.gmra.mrb[0].mxu0 %v784
      %v1317 = vpop.f32.mrb[0].mxu0
      %v1318 = vadd.f32 %v532, %v1317
      %v1319 = vpop.f32.mrb[0].mxu0
      %v1320 = vadd.f32 %v536, %v1319
      %v1321 = vpop.f32.mrb[0].mxu0
      %v1322 = vadd.f32 %v532, %v1321
      %v1323 = vpop.f32.mrb[0].mxu0
      %v1324 = vadd.f32 %v536, %v1323
      %1325 = vmatprep.mubr.bf16.mxu0 0
      %1326 = vmatmul.mubr.bf16.gmra.mrb[0].mxu0 %v785
      %v1327 = vpop.f32.mrb[0].mxu0
      %v1328 = vadd.f32 %v532, %v1327
      %v1329 = vpop.f32.mrb[0].mxu0
      %v1330 = vadd.f32 %v536, %v1329
      %v1331 = vpop.f32.mrb[0].mxu0
      %v1332 = vadd.f32 %v532, %v1331
      %v1333 = vpop.f32.mrb[0].mxu0
      %v1334 = vadd.f32 %v536, %v1333
      %1335 = vmatprep.mubr.bf16.mxu0 0
      %1336 = vmatmul.mubr.bf16.gmra.mrb[0].mxu0 %v786
      %v1337 = vpop.f32.mrb[0].mxu0
      %v1338 = vadd.f32 %v532, %v1337
      %v1339 = vpop.f32.mrb[0].mxu0
      %v1340 = vadd.f32 %v536, %v1339
      %v1341 = vpop.f32.mrb[0].mxu0
      %v1342 = vadd.f32 %v532, %v1341
      %v1343 = vpop.f32.mrb[0].mxu0
      %v1344 = vadd.f32 %v536, %v1343
      %1345 = vmatprep.mubr.bf16.mxu0 0
      %1346 = vmatmul.mubr.bf16.gmra.mrb[0].mxu0 %v787
      %v1347 = vpop.f32.mrb[0].mxu0
      %v1348 = vadd.f32 %v532, %v1347
      %v1349 = vpop.f32.mrb[0].mxu0
      %v1350 = vadd.f32 %v536, %v1349
      %v1351 = vpop.f32.mrb[0].mxu0
      %v1352 = vadd.f32 %v532, %v1351
      %v1353 = vpop.f32.mrb[0].mxu0
      %v1354 = vadd.f32 %v536, %v1353
      %1355 = vmatprep.mubr.bf16.mxu0 0
      %1356 = vmatmul.mubr.bf16.gmra.mrb[0].mxu0 %v788
      %v1357 = vpop.f32.mrb[0].mxu0
      %v1358 = vadd.f32 %v532, %v1357
      %v1359 = vpop.f32.mrb[0].mxu0
      %v1360 = vadd.f32 %v536, %v1359
      %v1361 = vpop.f32.mrb[0].mxu0
      %v1362 = vadd.f32 %v532, %v1361
      %v1363 = vpop.f32.mrb[0].mxu0
      %v1364 = vadd.f32 %v536, %v1363
      %1365 = vmatprep.mubr.bf16.mxu0 0
      %1366 = vmatmul.mubr.bf16.gmra.mrb[0].mxu0 %v789
      %v1367 = vpop.f32.mrb[0].mxu0
      %v1368 = vadd.f32 %v532, %v1367
      %v1369 = vpop.f32.mrb[0].mxu0
      %v1370 = vadd.f32 %v536, %v1369
      %v1371 = vpop.f32.mrb[0].mxu0
      %v1372 = vadd.f32 %v532, %v1371
      %v1373 = vpop.f32.mrb[0].mxu0
      %v1374 = vadd.f32 %v536, %v1373
      %1375 = vmatprep.mubr.bf16.mxu0 0
      %1376 = vmatmul.mubr.bf16.gmra.mrb[0].mxu0 %v790
      %v1377 = vpop.f32.mrb[0].mxu0
      %v1378 = vadd.f32 %v532, %v1377
      %v1379 = vpop.f32.mrb[0].mxu0
      %v1380 = vadd.f32 %v536, %v1379
      %v1381 = vpop.f32.mrb[0].mxu0
      %v1382 = vadd.f32 %v532, %v1381
      %v1383 = vpop.f32.mrb[0].mxu0
      %v1384 = vadd.f32 %v536, %v1383
      %1385 = vmatprep.mubr.bf16.mxu0 0
      %1386 = vmatmul.mubr.bf16.gmra.mrb[0].mxu0 %v791
      %v1387 = vpop.f32.mrb[0].mxu0
      %v1388 = vadd.f32 %v532, %v1387
      %v1389 = vpop.f32.mrb[0].mxu0
      %v1390 = vadd.f32 %v536, %v1389
      %v1391 = vpop.f32.mrb[0].mxu0
      %v1392 = vadd.f32 %v532, %v1391
      %v1393 = vpop.f32.mrb[0].mxu0
      %v1394 = vadd.f32 %v536, %v1393
      %1395 = vmatprep.mubr.bf16.mxu0 0
      %1396 = vmatmul.mubr.bf16.gmra.mrb[0].mxu0 %v792
      %v1397 = vpop.f32.mrb[0].mxu0
      %v1398 = vadd.f32 %v532, %v1397
      %v1399 = vpop.f32.mrb[0].mxu0
      %v1400 = vadd.f32 %v536, %v1399
      %v1401 = vpop.f32.mrb[0].mxu0
      %v1402 = vadd.f32 %v532, %v1401
      %v1403 = vpop.f32.mrb[0].mxu0
      %v1404 = vadd.f32 %v536, %v1403
      %1405 = vmatprep.mubr.bf16.mxu0 0
      %1406 = vmatmul.mubr.bf16.gmra.mrb[0].mxu0 %v793
      %v1407 = vpop.f32.mrb[0].mxu0
      %v1408 = vadd.f32 %v532, %v1407
      %v1409 = vpop.f32.mrb[0].mxu0
      %v1410 = vadd.f32 %v536, %v1409
      %v1411 = vpop.f32.mrb[0].mxu0
      %v1412 = vadd.f32 %v532, %v1411
      %v1413 = vpop.f32.mrb[0].mxu0
      %v1414 = vadd.f32 %v536, %v1413
      %1415 = vmatprep.mubr.bf16.mxu0 0
      %1416 = vmatmul.mubr.bf16.gmra.mrb[0].mxu0 %v794
      %v1417 = vpop.f32.mrb[0].mxu0
      %v1418 = vadd.f32 %v532, %v1417
      %v1419 = vpop.f32.mrb[0].mxu0
      %v1420 = vadd.f32 %v536, %v1419
      %v1421 = vpop.f32.mrb[0].mxu0
      %v1422 = vadd.f32 %v532, %v1421
      %v1423 = vpop.f32.mrb[0].mxu0
      %v1424 = vadd.f32 %v536, %v1423
      %1425 = vmatprep.mubr.bf16.mxu0 0
      %1426 = vmatmul.mubr.bf16.gmra.mrb[0].mxu0 %v795
      %v1427 = vpop.f32.mrb[0].mxu0
      %v1428 = vadd.f32 %v532, %v1427
      %v1429 = vpop.f32.mrb[0].mxu0
      %v1430 = vadd.f32 %v536, %v1429
      %v1431 = vpop.f32.mrb[0].mxu0
      %v1432 = vadd.f32 %v532, %v1431
      %v1433 = vpop.f32.mrb[0].mxu0
      %v1434 = vadd.f32 %v536, %v1433
      %1435 = vmatprep.mubr.bf16.mxu0 0
      %1436 = vmatmul.mubr.bf16.gmra.mrb[0].mxu0 %v796
      %v1437 = vpop.f32.mrb[0].mxu0
      %v1438 = vadd.f32 %v532, %v1437
      %v1439 = vpop.f32.mrb[0].mxu0
      %v1440 = vadd.f32 %v536, %v1439
      %v1441 = vpop.f32.mrb[0].mxu0
      %v1442 = vadd.f32 %v532, %v1441
      %v1443 = vpop.f32.mrb[0].mxu0
      %v1444 = vadd.f32 %v536, %v1443
      %1445 = vmatprep.mubr.bf16.mxu0 0
      %1446 = vmatmul.mubr.bf16.gmra.mrb[0].mxu0 %v797
      %v1447 = vpop.f32.mrb[0].mxu0
      %v1448 = vadd.f32 %v532, %v1447
      %v1449 = vpop.f32.mrb[0].mxu0
      %v1450 = vadd.f32 %v536, %v1449
      %v1451 = vpop.f32.mrb[0].mxu0
      %v1452 = vadd.f32 %v532, %v1451
      %v1453 = vpop.f32.mrb[0].mxu0
      %v1454 = vadd.f32 %v536, %v1453
      %1455 = vmatprep.mubr.bf16.mxu0 0
      %1456 = vmatmul.mubr.bf16.gmra.mrb[0].mxu0 %v798
      %v1457 = vpop.f32.mrb[0].mxu0
      %v1458 = vadd.f32 %v532, %v1457
      %v1459 = vpop.f32.mrb[0].mxu0
      %v1460 = vadd.f32 %v536, %v1459
      %v1461 = vpop.f32.mrb[0].mxu0
      %v1462 = vadd.f32 %v532, %v1461
      %v1463 = vpop.f32.mrb[0].mxu0
      %v1464 = vadd.f32 %v536, %v1463
      %1465 = vmatprep.mubr.bf16.mxu0 0
      %1466 = vmatmul.mubr.bf16.gmra.mrb[0].mxu0 %v799
      %v1467 = vpop.f32.mrb[0].mxu0
      %v1468 = vadd.f32 %v532, %v1467
      %v1469 = vpop.f32.mrb[0].mxu0
      %v1470 = vadd.f32 %v536, %v1469
      %v1471 = vpop.f32.mrb[0].mxu0
      %v1472 = vadd.f32 %v532, %v1471
      %v1473 = vpop.f32.mrb[0].mxu0
      %v1474 = vadd.f32 %v536, %v1473
      %1475 = vmatprep.mubr.bf16.mxu0 0
      %1476 = vmatmul.mubr.bf16.gmra.mrb[0].mxu0 %v800
      %v1477 = vpop.f32.mrb[0].mxu0
      %v1478 = vadd.f32 %v532, %v1477
      %v1479 = vpop.f32.mrb[0].mxu0
      %v1480 = vadd.f32 %v536, %v1479
      %v1481 = vpop.f32.mrb[0].mxu0
      %v1482 = vadd.f32 %v532, %v1481
      %v1483 = vpop.f32.mrb[0].mxu0
      %v1484 = vadd.f32 %v536, %v1483
      %1485 = vmatprep.mubr.bf16.mxu0 0
      %1486 = vmatmul.mubr.bf16.gmra.mrb[0].mxu0 %v801
      %v1487 = vpop.f32.mrb[0].mxu0
      %v1488 = vadd.f32 %v532, %v1487
      %v1489 = vpop.f32.mrb[0].mxu0
      %v1490 = vadd.f32 %v536, %v1489
      %v1491 = vpop.f32.mrb[0].mxu0
      %v1492 = vadd.f32 %v532, %v1491
      %v1493 = vpop.f32.mrb[0].mxu0
      %v1494 = vadd.f32 %v536, %v1493
      %1495 = vmatprep.mubr.bf16.mxu0 0
      %1496 = vmatmul.mubr.bf16.gmra.mrb[0].mxu0 %v802
      %v1497 = vpop.f32.mrb[0].mxu0
      %v1498 = vadd.f32 %v532, %v1497
      %v1499 = vpop.f32.mrb[0].mxu0
      %v1500 = vadd.f32 %v536, %v1499
      %v1501 = vpop.f32.mrb[0].mxu0
      %v1502 = vadd.f32 %v532, %v1501
      %v1503 = vpop.f32.mrb[0].mxu0
      %v1504 = vadd.f32 %v536, %v1503
      %1505 = vmatprep.mubr.bf16.mxu0 0
      %1506 = vmatmul.mubr.bf16.gmra.mrb[0].mxu0 %v803
      %v1507 = vpop.f32.mrb[0].mxu0
      %v1508 = vadd.f32 %v532, %v1507
      %v1509 = vpop.f32.mrb[0].mxu0
      %v1510 = vadd.f32 %v536, %v1509
      %v1511 = vpop.f32.mrb[0].mxu0
      %v1512 = vadd.f32 %v532, %v1511
      %v1513 = vpop.f32.mrb[0].mxu0
      %v1514 = vadd.f32 %v536, %v1513
      %1515 = vmatprep.mubr.bf16.mxu0 0
      %1516 = vmatmul.mubr.bf16.gmra.mrb[0].mxu0 %v804
      %v1517 = vpop.f32.mrb[0].mxu0
      %v1518 = vadd.f32 %v532, %v1517
      %v1519 = vpop.f32.mrb[0].mxu0
      %v1520 = vadd.f32 %v536, %v1519
      %v1521 = vpop.f32.mrb[0].mxu0
      %v1522 = vadd.f32 %v532, %v1521
      %v1523 = vpop.f32.mrb[0].mxu0
      %v1524 = vadd.f32 %v536, %v1523
      %1525 = vmatprep.mubr.bf16.mxu0 0
      %1526 = vmatmul.mubr.bf16.gmra.mrb[0].mxu0 %v805
      %v1527 = vpop.f32.mrb[0].mxu0
      %v1528 = vadd.f32 %v532, %v1527
      %v1529 = vpop.f32.mrb[0].mxu0
      %v1530 = vadd.f32 %v536, %v1529
      %v1531 = vpop.f32.mrb[0].mxu0
      %v1532 = vadd.f32 %v532, %v1531
      %v1533 = vpop.f32.mrb[0].mxu0
      %v1534 = vadd.f32 %v536, %v1533
      %1535 = vmatprep.mubr.bf16.mxu0 0
      %1536 = vmatmul.mubr.bf16.gmra.mrb[0].mxu0 %v806
      %v1537 = vpop.f32.mrb[0].mxu0
      %v1538 = vadd.f32 %v532, %v1537
      %v1539 = vpop.f32.mrb[0].mxu0
      %v1540 = vadd.f32 %v536, %v1539
      %v1541 = vpop.f32.mrb[0].mxu0
      %v1542 = vadd.f32 %v532, %v1541
      %v1543 = vpop.f32.mrb[0].mxu0
      %v1544 = vadd.f32 %v536, %v1543
      %1545 = vmatprep.mubr.bf16.mxu0 0
      %1546 = vmatmul.mubr.bf16.gmra.mrb[0].mxu0 %v807
      %v1547 = vpop.f32.mrb[0].mxu0
      %v1548 = vpop.f32.mrb[0].mxu0
      %v1549 = vpop.f32.mrb[0].mxu0
      %v1550 = vpop.f32.mrb[0].mxu0
      %1551 = vmatprep.mubr.bf16.mxu0 0
      %1552 = vmatmul.mubr.bf16.gmra.mrb[0].mxu0 %v808
      %v1553 = vpop.f32.mrb[0].mxu0
      %v1554 = vpop.f32.mrb[0].mxu0
      %v1555 = vpop.f32.mrb[0].mxu0
      %v1556 = vpop.f32.mrb[0].mxu0
      %1557 = vdwg.mxu0
      %1558 = vmatprep.subr.bf16.mxu0 %v960
      %1559 = vmatpush1.bf16.msra.mxu0 %v959
      %1560 = vmatprep.subr.bf16.mxu0 %v964
      %1561 = vmatpush1.bf16.msra.mxu0 %v963
      %1562 = vmatprep.subr.bf16.mxu0 %v968
      %1563 = vmatpush1.bf16.msra.mxu0 %v967
      %1564 = vmatprep.subr.bf16.mxu0 %v972
      %1565 = vmatpush1.bf16.msra.mxu0 %v971
      %1566 = vmatprep.subr.bf16.mxu0 %v976
      %1567 = vmatpush1.bf16.msra.mxu0 %v975
      %1568 = vmatprep.subr.bf16.mxu0 %v980
      %1569 = vmatpush1.bf16.msra.mxu0 %v979
      %1570 = vmatprep.subr.bf16.mxu0 %v984
      %1571 = vmatpush1.bf16.msra.mxu0 %v983
      %1572 = vmatprep.subr.bf16.mxu0 %v988
      %1573 = vmatpush1.bf16.msra.mxu0 %v987
      %1574 = vmatprep.subr.bf16.mxu0 0
      %1575 = vmatpush1.bf16.msra.mxu0 0
      %1576 = vmatprep.subr.bf16.mxu0 0
      %1577 = vmatpush1.bf16.msra.mxu0 0
      %1578 = vmatprep.subr.bf16.mxu0 0
      %1579 = vmatpush1.bf16.msra.mxu0 0
      %1580 = vmatprep.subr.bf16.mxu0 0
      %1581 = vmatpush1.bf16.msra.mxu0 0
      %1582 = vmatprep.subr.bf16.mxu0 0
      %1583 = vmatpush1.bf16.msra.mxu0 0
      %1584 = vmatprep.subr.bf16.mxu0 0
      %1585 = vmatpush1.bf16.msra.mxu0 0
      %1586 = vmatprep.subr.bf16.mxu0 0
      %1587 = vmatpush1.bf16.msra.mxu0 0
      %1588 = vmatprep.subr.bf16.mxu0 0
      %1589 = vmatpush1.bf16.msra.mxu0 0
      %1590 = vmatprep.mubr.bf16.mxu0 0
      %1591 = vmatmul.mubr.bf16.gmra.mrb[0].mxu0 %v757
      %v1592 = vpop.f32.mrb[0].mxu0
      %v1593 = vadd.f32 %v540, %v1592
      %v1594 = vpop.f32.mrb[0].mxu0
      %v1595 = vadd.f32 %v544, %v1594
      %v1596 = vpop.f32.mrb[0].mxu0
      %v1597 = vadd.f32 %v540, %v1596
      %v1598 = vpop.f32.mrb[0].mxu0
      %v1599 = vadd.f32 %v544, %v1598
      %1600 = vmatprep.mubr.bf16.mxu0 0
      %1601 = vmatmul.mubr.bf16.gmra.mrb[0].mxu0 %v758
      %v1602 = vpop.f32.mrb[0].mxu0
      %v1603 = vadd.f32 %v540, %v1602
      %v1604 = vpop.f32.mrb[0].mxu0
      %v1605 = vadd.f32 %v544, %v1604
      %v1606 = vpop.f32.mrb[0].mxu0
      %v1607 = vadd.f32 %v540, %v1606
      %v1608 = vpop.f32.mrb[0].mxu0
      %v1609 = vadd.f32 %v544, %v1608
      %1610 = vmatprep.mubr.bf16.mxu0 0
      %1611 = vmatmul.mubr.bf16.gmra.mrb[0].mxu0 %v759
      %v1612 = vpop.f32.mrb[0].mxu0
      %v1613 = vadd.f32 %v540, %v1612
      %v1614 = vpop.f32.mrb[0].mxu0
      %v1615 = vadd.f32 %v544, %v1614
      %v1616 = vpop.f32.mrb[0].mxu0
      %v1617 = vadd.f32 %v540, %v1616
      %v1618 = vpop.f32.mrb[0].mxu0
      %v1619 = vadd.f32 %v544, %v1618
      %1620 = vmatprep.mubr.bf16.mxu0 0
      %1621 = vmatmul.mubr.bf16.gmra.mrb[0].mxu0 %v760
      %v1622 = vpop.f32.mrb[0].mxu0
      %v1623 = vadd.f32 %v540, %v1622
      %v1624 = vpop.f32.mrb[0].mxu0
      %v1625 = vadd.f32 %v544, %v1624
      %v1626 = vpop.f32.mrb[0].mxu0
      %v1627 = vadd.f32 %v540, %v1626
      %v1628 = vpop.f32.mrb[0].mxu0
      %v1629 = vadd.f32 %v544, %v1628
      %1630 = vmatprep.mubr.bf16.mxu0 0
      %1631 = vmatmul.mubr.bf16.gmra.mrb[0].mxu0 %v761
      %v1632 = vpop.f32.mrb[0].mxu0
      %v1633 = vadd.f32 %v540, %v1632
      %v1634 = vpop.f32.mrb[0].mxu0
      %v1635 = vadd.f32 %v544, %v1634
      %v1636 = vpop.f32.mrb[0].mxu0
      %v1637 = vadd.f32 %v540, %v1636
      %v1638 = vpop.f32.mrb[0].mxu0
      %v1639 = vadd.f32 %v544, %v1638
      %1640 = vmatprep.mubr.bf16.mxu0 0
      %1641 = vmatmul.mubr.bf16.gmra.mrb[0].mxu0 %v762
      %v1642 = vpop.f32.mrb[0].mxu0
      %v1643 = vadd.f32 %v540, %v1642
      %v1644 = vpop.f32.mrb[0].mxu0
      %v1645 = vadd.f32 %v544, %v1644
      %v1646 = vpop.f32.mrb[0].mxu0
      %v1647 = vadd.f32 %v540, %v1646
      %v1648 = vpop.f32.mrb[0].mxu0
      %v1649 = vadd.f32 %v544, %v1648
      %1650 = vmatprep.mubr.bf16.mxu0 0
      %1651 = vmatmul.mubr.bf16.gmra.mrb[0].mxu0 %v763
      %v1652 = vpop.f32.mrb[0].mxu0
      %v1653 = vadd.f32 %v540, %v1652
      %v1654 = vpop.f32.mrb[0].mxu0
      %v1655 = vadd.f32 %v544, %v1654
      %v1656 = vpop.f32.mrb[0].mxu0
      %v1657 = vadd.f32 %v540, %v1656
      %v1658 = vpop.f32.mrb[0].mxu0
      %v1659 = vadd.f32 %v544, %v1658
      %1660 = vmatprep.mubr.bf16.mxu0 0
      %1661 = vmatmul.mubr.bf16.gmra.mrb[0].mxu0 %v764
      %v1662 = vpop.f32.mrb[0].mxu0
      %v1663 = vadd.f32 %v540, %v1662
      %v1664 = vpop.f32.mrb[0].mxu0
      %v1665 = vadd.f32 %v544, %v1664
      %v1666 = vpop.f32.mrb[0].mxu0
      %v1667 = vadd.f32 %v540, %v1666
      %v1668 = vpop.f32.mrb[0].mxu0
      %v1669 = vadd.f32 %v544, %v1668
      %1670 = vmatprep.mubr.bf16.mxu0 0
      %1671 = vmatmul.mubr.bf16.gmra.mrb[0].mxu0 %v765
      %v1672 = vpop.f32.mrb[0].mxu0
      %v1673 = vadd.f32 %v540, %v1672
      %v1674 = vpop.f32.mrb[0].mxu0
      %v1675 = vadd.f32 %v544, %v1674
      %v1676 = vpop.f32.mrb[0].mxu0
      %v1677 = vadd.f32 %v540, %v1676
      %v1678 = vpop.f32.mrb[0].mxu0
      %v1679 = vadd.f32 %v544, %v1678
      %1680 = vmatprep.mubr.bf16.mxu0 0
      %1681 = vmatmul.mubr.bf16.gmra.mrb[0].mxu0 %v766
      %v1682 = vpop.f32.mrb[0].mxu0
      %v1683 = vadd.f32 %v540, %v1682
      %v1684 = vpop.f32.mrb[0].mxu0
      %v1685 = vadd.f32 %v544, %v1684
      %v1686 = vpop.f32.mrb[0].mxu0
      %v1687 = vadd.f32 %v540, %v1686
      %v1688 = vpop.f32.mrb[0].mxu0
      %v1689 = vadd.f32 %v544, %v1688
      %1690 = vmatprep.mubr.bf16.mxu0 0
      %1691 = vmatmul.mubr.bf16.gmra.mrb[0].mxu0 %v767
      %v1692 = vpop.f32.mrb[0].mxu0
      %v1693 = vadd.f32 %v540, %v1692
      %v1694 = vpop.f32.mrb[0].mxu0
      %v1695 = vadd.f32 %v544, %v1694
      %v1696 = vpop.f32.mrb[0].mxu0
      %v1697 = vadd.f32 %v540, %v1696
      %v1698 = vpop.f32.mrb[0].mxu0
      %v1699 = vadd.f32 %v544, %v1698
      %1700 = vmatprep.mubr.bf16.mxu0 0
      %1701 = vmatmul.mubr.bf16.gmra.mrb[0].mxu0 %v768
      %v1702 = vpop.f32.mrb[0].mxu0
      %v1703 = vadd.f32 %v540, %v1702
      %v1704 = vpop.f32.mrb[0].mxu0
      %v1705 = vadd.f32 %v544, %v1704
      %v1706 = vpop.f32.mrb[0].mxu0
      %v1707 = vadd.f32 %v540, %v1706
      %v1708 = vpop.f32.mrb[0].mxu0
      %v1709 = vadd.f32 %v544, %v1708
      %1710 = vmatprep.mubr.bf16.mxu0 0
      %1711 = vmatmul.mubr.bf16.gmra.mrb[0].mxu0 %v769
      %v1712 = vpop.f32.mrb[0].mxu0
      %v1713 = vadd.f32 %v540, %v1712
      %v1714 = vpop.f32.mrb[0].mxu0
      %v1715 = vadd.f32 %v544, %v1714
      %v1716 = vpop.f32.mrb[0].mxu0
      %v1717 = vadd.f32 %v540, %v1716
      %v1718 = vpop.f32.mrb[0].mxu0
      %v1719 = vadd.f32 %v544, %v1718
      %1720 = vmatprep.mubr.bf16.mxu0 0
      %1721 = vmatmul.mubr.bf16.gmra.mrb[0].mxu0 %v770
      %v1722 = vpop.f32.mrb[0].mxu0
      %v1723 = vadd.f32 %v540, %v1722
      %v1724 = vpop.f32.mrb[0].mxu0
      %v1725 = vadd.f32 %v544, %v1724
      %v1726 = vpop.f32.mrb[0].mxu0
      %v1727 = vadd.f32 %v540, %v1726
      %v1728 = vpop.f32.mrb[0].mxu0
      %v1729 = vadd.f32 %v544, %v1728
      %1730 = vmatprep.mubr.bf16.mxu0 0
      %1731 = vmatmul.mubr.bf16.gmra.mrb[0].mxu0 %v771
      %v1732 = vpop.f32.mrb[0].mxu0
      %v1733 = vadd.f32 %v540, %v1732
      %v1734 = vpop.f32.mrb[0].mxu0
      %v1735 = vadd.f32 %v544, %v1734
      %v1736 = vpop.f32.mrb[0].mxu0
      %v1737 = vadd.f32 %v540, %v1736
      %v1738 = vpop.f32.mrb[0].mxu0
      %v1739 = vadd.f32 %v544, %v1738
      %1740 = vmatprep.mubr.bf16.mxu0 0
      %1741 = vmatmul.mubr.bf16.gmra.mrb[0].mxu0 %v772
      %v1742 = vpop.f32.mrb[0].mxu0
      %v1743 = vadd.f32 %v540, %v1742
      %v1744 = vpop.f32.mrb[0].mxu0
      %v1745 = vadd.f32 %v544, %v1744
      %v1746 = vpop.f32.mrb[0].mxu0
      %v1747 = vadd.f32 %v540, %v1746
      %v1748 = vpop.f32.mrb[0].mxu0
      %v1749 = vadd.f32 %v544, %v1748
      %1750 = vmatprep.mubr.bf16.mxu0 0
      %1751 = vmatmul.mubr.bf16.gmra.mrb[0].mxu0 %v773
      %v1752 = vpop.f32.mrb[0].mxu0
      %v1753 = vadd.f32 %v540, %v1752
      %v1754 = vpop.f32.mrb[0].mxu0
      %v1755 = vadd.f32 %v544, %v1754
      %v1756 = vpop.f32.mrb[0].mxu0
      %v1757 = vadd.f32 %v540, %v1756
      %v1758 = vpop.f32.mrb[0].mxu0
      %v1759 = vadd.f32 %v544, %v1758
      %1760 = vmatprep.mubr.bf16.mxu0 0
      %1761 = vmatmul.mubr.bf16.gmra.mrb[0].mxu0 %v774
      %v1762 = vpop.f32.mrb[0].mxu0
      %v1763 = vadd.f32 %v540, %v1762
      %v1764 = vpop.f32.mrb[0].mxu0
      %v1765 = vadd.f32 %v544, %v1764
      %v1766 = vpop.f32.mrb[0].mxu0
      %v1767 = vadd.f32 %v540, %v1766
      %v1768 = vpop.f32.mrb[0].mxu0
      %v1769 = vadd.f32 %v544, %v1768
      %1770 = vmatprep.mubr.bf16.mxu0 0
      %1771 = vmatmul.mubr.bf16.gmra.mrb[0].mxu0 %v775
      %v1772 = vpop.f32.mrb[0].mxu0
      %v1773 = vadd.f32 %v540, %v1772
      %v1774 = vpop.f32.mrb[0].mxu0
      %v1775 = vadd.f32 %v544, %v1774
      %v1776 = vpop.f32.mrb[0].mxu0
      %v1777 = vadd.f32 %v540, %v1776
      %v1778 = vpop.f32.mrb[0].mxu0
      %v1779 = vadd.f32 %v544, %v1778
      %1780 = vmatprep.mubr.bf16.mxu0 0
      %1781 = vmatmul.mubr.bf16.gmra.mrb[0].mxu0 %v776
      %v1782 = vpop.f32.mrb[0].mxu0
      %v1783 = vadd.f32 %v540, %v1782
      %v1784 = vpop.f32.mrb[0].mxu0
      %v1785 = vadd.f32 %v544, %v1784
      %v1786 = vpop.f32.mrb[0].mxu0
      %v1787 = vadd.f32 %v540, %v1786
      %v1788 = vpop.f32.mrb[0].mxu0
      %v1789 = vadd.f32 %v544, %v1788
      %1790 = vmatprep.mubr.bf16.mxu0 0
      %1791 = vmatmul.mubr.bf16.gmra.mrb[0].mxu0 %v777
      %v1792 = vpop.f32.mrb[0].mxu0
      %v1793 = vadd.f32 %v540, %v1792
      %v1794 = vpop.f32.mrb[0].mxu0
      %v1795 = vadd.f32 %v544, %v1794
      %v1796 = vpop.f32.mrb[0].mxu0
      %v1797 = vadd.f32 %v540, %v1796
      %v1798 = vpop.f32.mrb[0].mxu0
      %v1799 = vadd.f32 %v544, %v1798
      %1800 = vmatprep.mubr.bf16.mxu0 0
      %1801 = vmatmul.mubr.bf16.gmra.mrb[0].mxu0 %v778
      %v1802 = vpop.f32.mrb[0].mxu0
      %v1803 = vadd.f32 %v540, %v1802
      %v1804 = vpop.f32.mrb[0].mxu0
      %v1805 = vadd.f32 %v544, %v1804
      %v1806 = vpop.f32.mrb[0].mxu0
      %v1807 = vadd.f32 %v540, %v1806
      %v1808 = vpop.f32.mrb[0].mxu0
      %v1809 = vadd.f32 %v544, %v1808
      %1810 = vmatprep.mubr.bf16.mxu0 0
      %1811 = vmatmul.mubr.bf16.gmra.mrb[0].mxu0 %v779
      %v1812 = vpop.f32.mrb[0].mxu0
      %v1813 = vadd.f32 %v540, %v1812
      %v1814 = vpop.f32.mrb[0].mxu0
      %v1815 = vadd.f32 %v544, %v1814
      %v1816 = vpop.f32.mrb[0].mxu0
      %v1817 = vadd.f32 %v540, %v1816
      %v1818 = vpop.f32.mrb[0].mxu0
      %v1819 = vadd.f32 %v544, %v1818
      %1820 = vmatprep.mubr.bf16.mxu0 0
      %1821 = vmatmul.mubr.bf16.gmra.mrb[0].mxu0 %v780
      %v1822 = vpop.f32.mrb[0].mxu0
      %v1823 = vadd.f32 %v540, %v1822
      %v1824 = vpop.f32.mrb[0].mxu0
      %v1825 = vadd.f32 %v544, %v1824
      %v1826 = vpop.f32.mrb[0].mxu0
      %v1827 = vadd.f32 %v540, %v1826
      %v1828 = vpop.f32.mrb[0].mxu0
      %v1829 = vadd.f32 %v544, %v1828
      %1830 = vmatprep.mubr.bf16.mxu0 0
      %1831 = vmatmul.mubr.bf16.gmra.mrb[0].mxu0 %v781
      %v1832 = vpop.f32.mrb[0].mxu0
      %v1833 = vpop.f32.mrb[0].mxu0
      %v1834 = vpop.f32.mrb[0].mxu0
      %v1835 = vpop.f32.mrb[0].mxu0
      %1836 = vmatprep.mubr.bf16.mxu0 0
      %1837 = vmatmul.mubr.bf16.gmra.mrb[0].mxu0 %v782
      %v1838 = vpop.f32.mrb[0].mxu0
      %v1839 = vpop.f32.mrb[0].mxu0
      %v1840 = vpop.f32.mrb[0].mxu0
      %v1841 = vpop.f32.mrb[0].mxu0
      %1842 = vmatprep.mubr.bf16.mxu0 0
      %1843 = vmatmul.mubr.bf16.gmra.mrb[0].mxu0 %v783
      %v1844 = vpop.f32.mrb[0].mxu0
      %v1845 = vadd.f32 %v540, %v1844
      %v1846 = vpop.f32.mrb[0].mxu0
      %v1847 = vadd.f32 %v544, %v1846
      %v1848 = vpop.f32.mrb[0].mxu0
      %v1849 = vadd.f32 %v540, %v1848
      %v1850 = vpop.f32.mrb[0].mxu0
      %v1851 = vadd.f32 %v544, %v1850
      %1852 = vmatprep.mubr.bf16.mxu0 0
      %1853 = vmatmul.mubr.bf16.gmra.mrb[0].mxu0 %v784
      %v1854 = vpop.f32.mrb[0].mxu0
      %v1855 = vadd.f32 %v540, %v1854
      %v1856 = vpop.f32.mrb[0].mxu0
      %v1857 = vadd.f32 %v544, %v1856
      %v1858 = vpop.f32.mrb[0].mxu0
      %v1859 = vadd.f32 %v540, %v1858
      %v1860 = vpop.f32.mrb[0].mxu0
      %v1861 = vadd.f32 %v544, %v1860
      %1862 = vmatprep.mubr.bf16.mxu0 0
      %1863 = vmatmul.mubr.bf16.gmra.mrb[0].mxu0 %v785
      %v1864 = vpop.f32.mrb[0].mxu0
      %v1865 = vadd.f32 %v540, %v1864
      %v1866 = vpop.f32.mrb[0].mxu0
      %v1867 = vadd.f32 %v544, %v1866
      %v1868 = vpop.f32.mrb[0].mxu0
      %v1869 = vadd.f32 %v540, %v1868
      %v1870 = vpop.f32.mrb[0].mxu0
      %v1871 = vadd.f32 %v544, %v1870
      %1872 = vmatprep.mubr.bf16.mxu0 0
      %1873 = vmatmul.mubr.bf16.gmra.mrb[0].mxu0 %v786
      %v1874 = vpop.f32.mrb[0].mxu0
      %v1875 = vadd.f32 %v540, %v1874
      %v1876 = vpop.f32.mrb[0].mxu0
      %v1877 = vadd.f32 %v544, %v1876
      %v1878 = vpop.f32.mrb[0].mxu0
      %v1879 = vadd.f32 %v540, %v1878
      %v1880 = vpop.f32.mrb[0].mxu0
      %v1881 = vadd.f32 %v544, %v1880
      %1882 = vmatprep.mubr.bf16.mxu0 0
      %1883 = vmatmul.mubr.bf16.gmra.mrb[0].mxu0 %v787
      %v1884 = vpop.f32.mrb[0].mxu0
      %v1885 = vadd.f32 %v540, %v1884
      %v1886 = vpop.f32.mrb[0].mxu0
      %v1887 = vadd.f32 %v544, %v1886
      %v1888 = vpop.f32.mrb[0].mxu0
      %v1889 = vadd.f32 %v540, %v1888
      %v1890 = vpop.f32.mrb[0].mxu0
      %v1891 = vadd.f32 %v544, %v1890
      %1892 = vmatprep.mubr.bf16.mxu0 0
      %1893 = vmatmul.mubr.bf16.gmra.mrb[0].mxu0 %v788
      %v1894 = vpop.f32.mrb[0].mxu0
      %v1895 = vadd.f32 %v540, %v1894
      %v1896 = vpop.f32.mrb[0].mxu0
      %v1897 = vadd.f32 %v544, %v1896
      %v1898 = vpop.f32.mrb[0].mxu0
      %v1899 = vadd.f32 %v540, %v1898
      %v1900 = vpop.f32.mrb[0].mxu0
      %v1901 = vadd.f32 %v544, %v1900
      %1902 = vmatprep.mubr.bf16.mxu0 0
      %1903 = vmatmul.mubr.bf16.gmra.mrb[0].mxu0 %v789
      %v1904 = vpop.f32.mrb[0].mxu0
      %v1905 = vadd.f32 %v540, %v1904
      %v1906 = vpop.f32.mrb[0].mxu0
      %v1907 = vadd.f32 %v544, %v1906
      %v1908 = vpop.f32.mrb[0].mxu0
      %v1909 = vadd.f32 %v540, %v1908
      %v1910 = vpop.f32.mrb[0].mxu0
      %v1911 = vadd.f32 %v544, %v1910
      %1912 = vmatprep.mubr.bf16.mxu0 0
      %1913 = vmatmul.mubr.bf16.gmra.mrb[0].mxu0 %v790
      %v1914 = vpop.f32.mrb[0].mxu0
      %v1915 = vadd.f32 %v540, %v1914
      %v1916 = vpop.f32.mrb[0].mxu0
      %v1917 = vadd.f32 %v544, %v1916
      %v1918 = vpop.f32.mrb[0].mxu0
      %v1919 = vadd.f32 %v540, %v1918
      %v1920 = vpop.f32.mrb[0].mxu0
      %v1921 = vadd.f32 %v544, %v1920
      %1922 = vmatprep.mubr.bf16.mxu0 0
      %1923 = vmatmul.mubr.bf16.gmra.mrb[0].mxu0 %v791
      %v1924 = vpop.f32.mrb[0].mxu0
      %v1925 = vadd.f32 %v540, %v1924
      %v1926 = vpop.f32.mrb[0].mxu0
      %v1927 = vadd.f32 %v544, %v1926
      %v1928 = vpop.f32.mrb[0].mxu0
      %v1929 = vadd.f32 %v540, %v1928
      %v1930 = vpop.f32.mrb[0].mxu0
      %v1931 = vadd.f32 %v544, %v1930
      %1932 = vmatprep.mubr.bf16.mxu0 0
      %1933 = vmatmul.mubr.bf16.gmra.mrb[0].mxu0 %v792
      %v1934 = vpop.f32.mrb[0].mxu0
      %v1935 = vadd.f32 %v540, %v1934
      %v1936 = vpop.f32.mrb[0].mxu0
      %v1937 = vadd.f32 %v544, %v1936
      %v1938 = vpop.f32.mrb[0].mxu0
      %v1939 = vadd.f32 %v540, %v1938
      %v1940 = vpop.f32.mrb[0].mxu0
      %v1941 = vadd.f32 %v544, %v1940
      %1942 = vmatprep.mubr.bf16.mxu0 0
      %1943 = vmatmul.mubr.bf16.gmra.mrb[0].mxu0 %v793
      %v1944 = vpop.f32.mrb[0].mxu0
      %v1945 = vadd.f32 %v540, %v1944
      %v1946 = vpop.f32.mrb[0].mxu0
      %v1947 = vadd.f32 %v544, %v1946
      %v1948 = vpop.f32.mrb[0].mxu0
      %v1949 = vadd.f32 %v540, %v1948
      %v1950 = vpop.f32.mrb[0].mxu0
      %v1951 = vadd.f32 %v544, %v1950
      %1952 = vmatprep.mubr.bf16.mxu0 0
      %1953 = vmatmul.mubr.bf16.gmra.mrb[0].mxu0 %v794
      %v1954 = vpop.f32.mrb[0].mxu0
      %v1955 = vadd.f32 %v540, %v1954
      %v1956 = vpop.f32.mrb[0].mxu0
      %v1957 = vadd.f32 %v544, %v1956
      %v1958 = vpop.f32.mrb[0].mxu0
      %v1959 = vadd.f32 %v540, %v1958
      %v1960 = vpop.f32.mrb[0].mxu0
      %v1961 = vadd.f32 %v544, %v1960
      %1962 = vmatprep.mubr.bf16.mxu0 0
      %1963 = vmatmul.mubr.bf16.gmra.mrb[0].mxu0 %v795
      %v1964 = vpop.f32.mrb[0].mxu0
      %v1965 = vadd.f32 %v540, %v1964
      %v1966 = vpop.f32.mrb[0].mxu0
      %v1967 = vadd.f32 %v544, %v1966
      %v1968 = vpop.f32.mrb[0].mxu0
      %v1969 = vadd.f32 %v540, %v1968
      %v1970 = vpop.f32.mrb[0].mxu0
      %v1971 = vadd.f32 %v544, %v1970
      %1972 = vmatprep.mubr.bf16.mxu0 0
      %1973 = vmatmul.mubr.bf16.gmra.mrb[0].mxu0 %v796
      %v1974 = vpop.f32.mrb[0].mxu0
      %v1975 = vadd.f32 %v540, %v1974
      %v1976 = vpop.f32.mrb[0].mxu0
      %v1977 = vadd.f32 %v544, %v1976
      %v1978 = vpop.f32.mrb[0].mxu0
      %v1979 = vadd.f32 %v540, %v1978
      %v1980 = vpop.f32.mrb[0].mxu0
      %v1981 = vadd.f32 %v544, %v1980
      %1982 = vmatprep.mubr.bf16.mxu0 0
      %1983 = vmatmul.mubr.bf16.gmra.mrb[0].mxu0 %v797
      %v1984 = vpop.f32.mrb[0].mxu0
      %v1985 = vadd.f32 %v540, %v1984
      %v1986 = vpop.f32.mrb[0].mxu0
      %v1987 = vadd.f32 %v544, %v1986
      %v1988 = vpop.f32.mrb[0].mxu0
      %v1989 = vadd.f32 %v540, %v1988
      %v1990 = vpop.f32.mrb[0].mxu0
      %v1991 = vadd.f32 %v544, %v1990
      %1992 = vmatprep.mubr.bf16.mxu0 0
      %1993 = vmatmul.mubr.bf16.gmra.mrb[0].mxu0 %v798
      %v1994 = vpop.f32.mrb[0].mxu0
      %v1995 = vadd.f32 %v540, %v1994
      %v1996 = vpop.f32.mrb[0].mxu0
      %v1997 = vadd.f32 %v544, %v1996
      %v1998 = vpop.f32.mrb[0].mxu0
      %v1999 = vadd.f32 %v540, %v1998
      %v2000 = vpop.f32.mrb[0].mxu0
      %v2001 = vadd.f32 %v544, %v2000
      %2002 = vmatprep.mubr.bf16.mxu0 0
      %2003 = vmatmul.mubr.bf16.gmra.mrb[0].mxu0 %v799
      %v2004 = vpop.f32.mrb[0].mxu0
      %v2005 = vadd.f32 %v540, %v2004
      %v2006 = vpop.f32.mrb[0].mxu0
      %v2007 = vadd.f32 %v544, %v2006
      %v2008 = vpop.f32.mrb[0].mxu0
      %v2009 = vadd.f32 %v540, %v2008
      %v2010 = vpop.f32.mrb[0].mxu0
      %v2011 = vadd.f32 %v544, %v2010
      %2012 = vmatprep.mubr.bf16.mxu0 0
      %2013 = vmatmul.mubr.bf16.gmra.mrb[0].mxu0 %v800
      %v2014 = vpop.f32.mrb[0].mxu0
      %v2015 = vadd.f32 %v540, %v2014
      %v2016 = vpop.f32.mrb[0].mxu0
      %v2017 = vadd.f32 %v544, %v2016
      %v2018 = vpop.f32.mrb[0].mxu0
      %v2019 = vadd.f32 %v540, %v2018
      %v2020 = vpop.f32.mrb[0].mxu0
      %v2021 = vadd.f32 %v544, %v2020
      %2022 = vmatprep.mubr.bf16.mxu0 0
      %2023 = vmatmul.mubr.bf16.gmra.mrb[0].mxu0 %v801
      %v2024 = vpop.f32.mrb[0].mxu0
      %v2025 = vadd.f32 %v540, %v2024
      %v2026 = vpop.f32.mrb[0].mxu0
      %v2027 = vadd.f32 %v544, %v2026
      %v2028 = vpop.f32.mrb[0].mxu0
      %v2029 = vadd.f32 %v540, %v2028
      %v2030 = vpop.f32.mrb[0].mxu0
      %v2031 = vadd.f32 %v544, %v2030
      %2032 = vmatprep.mubr.bf16.mxu0 0
      %2033 = vmatmul.mubr.bf16.gmra.mrb[0].mxu0 %v802
      %v2034 = vpop.f32.mrb[0].mxu0
      %v2035 = vadd.f32 %v540, %v2034
      %v2036 = vpop.f32.mrb[0].mxu0
      %v2037 = vadd.f32 %v544, %v2036
      %v2038 = vpop.f32.mrb[0].mxu0
      %v2039 = vadd.f32 %v540, %v2038
      %v2040 = vpop.f32.mrb[0].mxu0
      %v2041 = vadd.f32 %v544, %v2040
      %2042 = vmatprep.mubr.bf16.mxu0 0
      %2043 = vmatmul.mubr.bf16.gmra.mrb[0].mxu0 %v803
      %v2044 = vpop.f32.mrb[0].mxu0
      %v2045 = vadd.f32 %v540, %v2044
      %v2046 = vpop.f32.mrb[0].mxu0
      %v2047 = vadd.f32 %v544, %v2046
      %v2048 = vpop.f32.mrb[0].mxu0
      %v2049 = vadd.f32 %v540, %v2048
      %v2050 = vpop.f32.mrb[0].mxu0
      %v2051 = vadd.f32 %v544, %v2050
      %2052 = vmatprep.mubr.bf16.mxu0 0
      %2053 = vmatmul.mubr.bf16.gmra.mrb[0].mxu0 %v804
      %v2054 = vpop.f32.mrb[0].mxu0
      %v2055 = vadd.f32 %v540, %v2054
      %v2056 = vpop.f32.mrb[0].mxu0
      %v2057 = vadd.f32 %v544, %v2056
      %v2058 = vpop.f32.mrb[0].mxu0
      %v2059 = vadd.f32 %v540, %v2058
      %v2060 = vpop.f32.mrb[0].mxu0
      %v2061 = vadd.f32 %v544, %v2060
      %2062 = vmatprep.mubr.bf16.mxu0 0
      %2063 = vmatmul.mubr.bf16.gmra.mrb[0].mxu0 %v805
      %v2064 = vpop.f32.mrb[0].mxu0
      %v2065 = vadd.f32 %v540, %v2064
      %v2066 = vpop.f32.mrb[0].mxu0
      %v2067 = vadd.f32 %v544, %v2066
      %v2068 = vpop.f32.mrb[0].mxu0
      %v2069 = vadd.f32 %v540, %v2068
      %v2070 = vpop.f32.mrb[0].mxu0
      %v2071 = vadd.f32 %v544, %v2070
      %2072 = vmatprep.mubr.bf16.mxu0 0
      %2073 = vmatmul.mubr.bf16.gmra.mrb[0].mxu0 %v806
      %v2074 = vpop.f32.mrb[0].mxu0
      %v2075 = vadd.f32 %v540, %v2074
      %v2076 = vpop.f32.mrb[0].mxu0
      %v2077 = vadd.f32 %v544, %v2076
      %v2078 = vpop.f32.mrb[0].mxu0
      %v2079 = vadd.f32 %v540, %v2078
      %v2080 = vpop.f32.mrb[0].mxu0
      %v2081 = vadd.f32 %v544, %v2080
      %2082 = vmatprep.mubr.bf16.mxu0 0
      %2083 = vmatmul.mubr.bf16.gmra.mrb[0].mxu0 %v807
      %v2084 = vpop.f32.mrb[0].mxu0
      %v2085 = vpop.f32.mrb[0].mxu0
      %v2086 = vpop.f32.mrb[0].mxu0
      %v2087 = vpop.f32.mrb[0].mxu0
      %2088 = vmatprep.mubr.bf16.mxu0 0
      %2089 = vmatmul.mubr.bf16.gmra.mrb[0].mxu0 %v808
      %v2090 = vpop.f32.mrb[0].mxu0
      %v2091 = vpop.f32.mrb[0].mxu0
      %v2092 = vpop.f32.mrb[0].mxu0
      %v2093 = vpop.f32.mrb[0].mxu0
      %2094 = vdwg.mxu0
      %v2095 = vmax.f32 %v1056, 0.0
      %v2096 = vmax.f32 %v1058, 0.0
      %v2097 = vmax.f32 %v1593, 0.0
      %v2098 = vmax.f32 %v1595, 0.0
      %v2099 = vmax.f32 %v1060, 0.0
      %v2100 = vmax.f32 %v1062, 0.0
      %v2101 = vmax.f32 %v1597, 0.0
      %v2102 = vmax.f32 %v1599, 0.0
      %v2103 = vmax.f32 %v1066, 0.0
      %v2104 = vmax.f32 %v1068, 0.0
      %v2105 = vmax.f32 %v1603, 0.0
      %v2106 = vmax.f32 %v1605, 0.0
      %v2107 = vmax.f32 %v1070, 0.0
      %v2108 = vmax.f32 %v1072, 0.0
      %v2109 = vmax.f32 %v1607, 0.0
      %v2110 = vmax.f32 %v1609, 0.0
      %v2111 = vmax.f32 %v1076, 0.0
      %v2112 = vmax.f32 %v1078, 0.0
      %v2113 = vmax.f32 %v1613, 0.0
      %v2114 = vmax.f32 %v1615, 0.0
      %v2115 = vmax.f32 %v1080, 0.0
      %v2116 = vmax.f32 %v1082, 0.0
      %v2117 = vmax.f32 %v1617, 0.0
      %v2118 = vmax.f32 %v1619, 0.0
      %v2119 = vmax.f32 %v1086, 0.0
      %v2120 = vmax.f32 %v1088, 0.0
      %v2121 = vmax.f32 %v1623, 0.0
      %v2122 = vmax.f32 %v1625, 0.0
      %v2123 = vmax.f32 %v1090, 0.0
      %v2124 = vmax.f32 %v1092, 0.0
      %v2125 = vmax.f32 %v1627, 0.0
      %v2126 = vmax.f32 %v1629, 0.0
      %v2127 = vmax.f32 %v1096, 0.0
      %v2128 = vmax.f32 %v1098, 0.0
      %v2129 = vmax.f32 %v1633, 0.0
      %v2130 = vmax.f32 %v1635, 0.0
      %v2131 = vmax.f32 %v1100, 0.0
      %v2132 = vmax.f32 %v1102, 0.0
      %v2133 = vmax.f32 %v1637, 0.0
      %v2134 = vmax.f32 %v1639, 0.0
      %v2135 = vmax.f32 %v1106, 0.0
      %v2136 = vmax.f32 %v1108, 0.0
      %v2137 = vmax.f32 %v1643, 0.0
      %v2138 = vmax.f32 %v1645, 0.0
      %v2139 = vmax.f32 %v1110, 0.0
      %v2140 = vmax.f32 %v1112, 0.0
      %v2141 = vmax.f32 %v1647, 0.0
      %v2142 = vmax.f32 %v1649, 0.0
      %v2143 = vmax.f32 %v1116, 0.0
      %v2144 = vmax.f32 %v1118, 0.0
      %v2145 = vmax.f32 %v1653, 0.0
      %v2146 = vmax.f32 %v1655, 0.0
      %v2147 = vmax.f32 %v1120, 0.0
      %v2148 = vmax.f32 %v1122, 0.0
      %v2149 = vmax.f32 %v1657, 0.0
      %v2150 = vmax.f32 %v1659, 0.0
      %v2151 = vmax.f32 %v1126, 0.0
      %v2152 = vmax.f32 %v1128, 0.0
      %v2153 = vmax.f32 %v1663, 0.0
      %v2154 = vmax.f32 %v1665, 0.0
      %v2155 = vmax.f32 %v1130, 0.0
      %v2156 = vmax.f32 %v1132, 0.0
      %v2157 = vmax.f32 %v1667, 0.0
      %v2158 = vmax.f32 %v1669, 0.0
      %v2159 = vmax.f32 %v1136, 0.0
      %v2160 = vmax.f32 %v1138, 0.0
      %v2161 = vmax.f32 %v1673, 0.0
      %v2162 = vmax.f32 %v1675, 0.0
      %v2163 = vmax.f32 %v1140, 0.0
      %v2164 = vmax.f32 %v1142, 0.0
      %v2165 = vmax.f32 %v1677, 0.0
      %v2166 = vmax.f32 %v1679, 0.0
      %v2167 = vmax.f32 %v1146, 0.0
      %v2168 = vmax.f32 %v1148, 0.0
      %v2169 = vmax.f32 %v1683, 0.0
      %v2170 = vmax.f32 %v1685, 0.0
      %v2171 = vmax.f32 %v1150, 0.0
      %v2172 = vmax.f32 %v1152, 0.0
      %v2173 = vmax.f32 %v1687, 0.0
      %v2174 = vmax.f32 %v1689, 0.0
      %v2175 = vmax.f32 %v1156, 0.0
      %v2176 = vmax.f32 %v1158, 0.0
      %v2177 = vmax.f32 %v1693, 0.0
      %v2178 = vmax.f32 %v1695, 0.0
      %v2179 = vmax.f32 %v1160, 0.0
      %v2180 = vmax.f32 %v1162, 0.0
      %v2181 = vmax.f32 %v1697, 0.0
      %v2182 = vmax.f32 %v1699, 0.0
      %v2183 = vmax.f32 %v1166, 0.0
      %v2184 = vmax.f32 %v1168, 0.0
      %v2185 = vmax.f32 %v1703, 0.0
      %v2186 = vmax.f32 %v1705, 0.0
      %v2187 = vmax.f32 %v1170, 0.0
      %v2188 = vmax.f32 %v1172, 0.0
      %v2189 = vmax.f32 %v1707, 0.0
      %v2190 = vmax.f32 %v1709, 0.0
      %v2191 = vmax.f32 %v1176, 0.0
      %v2192 = vmax.f32 %v1178, 0.0
      %v2193 = vmax.f32 %v1713, 0.0
      %v2194 = vmax.f32 %v1715, 0.0
      %v2195 = vmax.f32 %v1180, 0.0
      %v2196 = vmax.f32 %v1182, 0.0
      %v2197 = vmax.f32 %v1717, 0.0
      %v2198 = vmax.f32 %v1719, 0.0
      %v2199 = vmax.f32 %v1186, 0.0
      %v2200 = vmax.f32 %v1188, 0.0
      %v2201 = vmax.f32 %v1723, 0.0
      %v2202 = vmax.f32 %v1725, 0.0
      %v2203 = vmax.f32 %v1190, 0.0
      %v2204 = vmax.f32 %v1192, 0.0
      %v2205 = vmax.f32 %v1727, 0.0
      %v2206 = vmax.f32 %v1729, 0.0
      %v2207 = vmax.f32 %v1196, 0.0
      %v2208 = vmax.f32 %v1198, 0.0
      %v2209 = vmax.f32 %v1733, 0.0
      %v2210 = vmax.f32 %v1735, 0.0
      %v2211 = vmax.f32 %v1200, 0.0
      %v2212 = vmax.f32 %v1202, 0.0
      %v2213 = vmax.f32 %v1737, 0.0
      %v2214 = vmax.f32 %v1739, 0.0
      %v2215 = vmax.f32 %v1206, 0.0
      %v2216 = vmax.f32 %v1208, 0.0
      %v2217 = vmax.f32 %v1743, 0.0
      %v2218 = vmax.f32 %v1745, 0.0
      %v2219 = vmax.f32 %v1210, 0.0
      %v2220 = vmax.f32 %v1212, 0.0
      %v2221 = vmax.f32 %v1747, 0.0
      %v2222 = vmax.f32 %v1749, 0.0
      %v2223 = vmax.f32 %v1216, 0.0
      %v2224 = vmax.f32 %v1218, 0.0
      %v2225 = vmax.f32 %v1753, 0.0
      %v2226 = vmax.f32 %v1755, 0.0
      %v2227 = vmax.f32 %v1220, 0.0
      %v2228 = vmax.f32 %v1222, 0.0
      %v2229 = vmax.f32 %v1757, 0.0
      %v2230 = vmax.f32 %v1759, 0.0
      %v2231 = vmax.f32 %v1226, 0.0
      %v2232 = vmax.f32 %v1228, 0.0
      %v2233 = vmax.f32 %v1763, 0.0
      %v2234 = vmax.f32 %v1765, 0.0
      %v2235 = vmax.f32 %v1230, 0.0
      %v2236 = vmax.f32 %v1232, 0.0
      %v2237 = vmax.f32 %v1767, 0.0
      %v2238 = vmax.f32 %v1769, 0.0
      %v2239 = vmax.f32 %v1236, 0.0
      %v2240 = vmax.f32 %v1238, 0.0
      %v2241 = vmax.f32 %v1773, 0.0
      %v2242 = vmax.f32 %v1775, 0.0
      %v2243 = vmax.f32 %v1240, 0.0
      %v2244 = vmax.f32 %v1242, 0.0
      %v2245 = vmax.f32 %v1777, 0.0
      %v2246 = vmax.f32 %v1779, 0.0
      %v2247 = vmax.f32 %v1246, 0.0
      %v2248 = vmax.f32 %v1248, 0.0
      %v2249 = vmax.f32 %v1783, 0.0
      %v2250 = vmax.f32 %v1785, 0.0
      %v2251 = vmax.f32 %v1250, 0.0
      %v2252 = vmax.f32 %v1252, 0.0
      %v2253 = vmax.f32 %v1787, 0.0
      %v2254 = vmax.f32 %v1789, 0.0
      %v2255 = vmax.f32 %v1256, 0.0
      %v2256 = vmax.f32 %v1258, 0.0
      %v2257 = vmax.f32 %v1793, 0.0
      %v2258 = vmax.f32 %v1795, 0.0
      %v2259 = vmax.f32 %v1260, 0.0
      %v2260 = vmax.f32 %v1262, 0.0
      %v2261 = vmax.f32 %v1797, 0.0
      %v2262 = vmax.f32 %v1799, 0.0
      %v2263 = vmax.f32 %v1266, 0.0
      %v2264 = vmax.f32 %v1268, 0.0
      %v2265 = vmax.f32 %v1803, 0.0
      %v2266 = vmax.f32 %v1805, 0.0
      %v2267 = vmax.f32 %v1270, 0.0
      %v2268 = vmax.f32 %v1272, 0.0
      %v2269 = vmax.f32 %v1807, 0.0
      %v2270 = vmax.f32 %v1809, 0.0
      %v2271 = vmax.f32 %v1276, 0.0
      %v2272 = vmax.f32 %v1278, 0.0
      %v2273 = vmax.f32 %v1813, 0.0
      %v2274 = vmax.f32 %v1815, 0.0
      %v2275 = vmax.f32 %v1280, 0.0
      %v2276 = vmax.f32 %v1282, 0.0
      %v2277 = vmax.f32 %v1817, 0.0
      %v2278 = vmax.f32 %v1819, 0.0
      %v2279 = vmax.f32 %v1286, 0.0
      %v2280 = vmax.f32 %v1288, 0.0
      %v2281 = vmax.f32 %v1823, 0.0
      %v2282 = vmax.f32 %v1825, 0.0
      %v2283 = vmax.f32 %v1290, 0.0
      %v2284 = vmax.f32 %v1292, 0.0
      %v2285 = vmax.f32 %v1827, 0.0
      %v2286 = vmax.f32 %v1829, 0.0
      %v2287 = vmax.f32 %v1308, 0.0
      %v2288 = vmax.f32 %v1310, 0.0
      %v2289 = vmax.f32 %v1845, 0.0
      %v2290 = vmax.f32 %v1847, 0.0
      %v2291 = vmax.f32 %v1312, 0.0
      %v2292 = vmax.f32 %v1314, 0.0
      %v2293 = vmax.f32 %v1849, 0.0
      %v2294 = vmax.f32 %v1851, 0.0
      %v2295 = vmax.f32 %v1318, 0.0
      %v2296 = vmax.f32 %v1320, 0.0
      %v2297 = vmax.f32 %v1855, 0.0
      %v2298 = vmax.f32 %v1857, 0.0
      %v2299 = vmax.f32 %v1322, 0.0
      %v2300 = vmax.f32 %v1324, 0.0
      %v2301 = vmax.f32 %v1859, 0.0
      %v2302 = vmax.f32 %v1861, 0.0
      %v2303 = vmax.f32 %v1328, 0.0
      %v2304 = vmax.f32 %v1330, 0.0
      %v2305 = vmax.f32 %v1865, 0.0
      %v2306 = vmax.f32 %v1867, 0.0
      %v2307 = vmax.f32 %v1332, 0.0
      %v2308 = vmax.f32 %v1334, 0.0
      %v2309 = vmax.f32 %v1869, 0.0
      %v2310 = vmax.f32 %v1871, 0.0
      %v2311 = vmax.f32 %v1338, 0.0
      %v2312 = vmax.f32 %v1340, 0.0
      %v2313 = vmax.f32 %v1875, 0.0
      %v2314 = vmax.f32 %v1877, 0.0
      %v2315 = vmax.f32 %v1342, 0.0
      %v2316 = vmax.f32 %v1344, 0.0
      %v2317 = vmax.f32 %v1879, 0.0
      %v2318 = vmax.f32 %v1881, 0.0
      %v2319 = vmax.f32 %v1348, 0.0
      %v2320 = vmax.f32 %v1350, 0.0
      %v2321 = vmax.f32 %v1885, 0.0
      %v2322 = vmax.f32 %v1887, 0.0
      %v2323 = vmax.f32 %v1352, 0.0
      %v2324 = vmax.f32 %v1354, 0.0
      %v2325 = vmax.f32 %v1889, 0.0
      %v2326 = vmax.f32 %v1891, 0.0
      %v2327 = vmax.f32 %v1358, 0.0
      %v2328 = vmax.f32 %v1360, 0.0
      %v2329 = vmax.f32 %v1895, 0.0
      %v2330 = vmax.f32 %v1897, 0.0
      %v2331 = vmax.f32 %v1362, 0.0
      %v2332 = vmax.f32 %v1364, 0.0
      %v2333 = vmax.f32 %v1899, 0.0
      %v2334 = vmax.f32 %v1901, 0.0
      %v2335 = vmax.f32 %v1368, 0.0
      %v2336 = vmax.f32 %v1370, 0.0
      %v2337 = vmax.f32 %v1905, 0.0
      %v2338 = vmax.f32 %v1907, 0.0
      %v2339 = vmax.f32 %v1372, 0.0
      %v2340 = vmax.f32 %v1374, 0.0
      %v2341 = vmax.f32 %v1909, 0.0
      %v2342 = vmax.f32 %v1911, 0.0
      %v2343 = vmax.f32 %v1378, 0.0
      %v2344 = vmax.f32 %v1380, 0.0
      %v2345 = vmax.f32 %v1915, 0.0
      %v2346 = vmax.f32 %v1917, 0.0
      %v2347 = vmax.f32 %v1382, 0.0
      %v2348 = vmax.f32 %v1384, 0.0
      %v2349 = vmax.f32 %v1919, 0.0
      %v2350 = vmax.f32 %v1921, 0.0
      %v2351 = vmax.f32 %v1388, 0.0
      %v2352 = vmax.f32 %v1390, 0.0
      %v2353 = vmax.f32 %v1925, 0.0
      %v2354 = vmax.f32 %v1927, 0.0
      %v2355 = vmax.f32 %v1392, 0.0
      %v2356 = vmax.f32 %v1394, 0.0
      %v2357 = vmax.f32 %v1929, 0.0
      %v2358 = vmax.f32 %v1931, 0.0
      %v2359 = vmax.f32 %v1398, 0.0
      %v2360 = vmax.f32 %v1400, 0.0
      %v2361 = vmax.f32 %v1935, 0.0
      %v2362 = vmax.f32 %v1937, 0.0
      %v2363 = vmax.f32 %v1402, 0.0
      %v2364 = vmax.f32 %v1404, 0.0
      %v2365 = vmax.f32 %v1939, 0.0
      %v2366 = vmax.f32 %v1941, 0.0
      %v2367 = vmax.f32 %v1408, 0.0
      %v2368 = vmax.f32 %v1410, 0.0
      %v2369 = vmax.f32 %v1945, 0.0
      %v2370 = vmax.f32 %v1947, 0.0
      %v2371 = vmax.f32 %v1412, 0.0
      %v2372 = vmax.f32 %v1414, 0.0
      %v2373 = vmax.f32 %v1949, 0.0
      %v2374 = vmax.f32 %v1951, 0.0
      %v2375 = vmax.f32 %v1418, 0.0
      %v2376 = vmax.f32 %v1420, 0.0
      %v2377 = vmax.f32 %v1955, 0.0
      %v2378 = vmax.f32 %v1957, 0.0
      %v2379 = vmax.f32 %v1422, 0.0
      %v2380 = vmax.f32 %v1424, 0.0
      %v2381 = vmax.f32 %v1959, 0.0
      %v2382 = vmax.f32 %v1961, 0.0
      %v2383 = vmax.f32 %v1428, 0.0
      %v2384 = vmax.f32 %v1430, 0.0
      %v2385 = vmax.f32 %v1965, 0.0
      %v2386 = vmax.f32 %v1967, 0.0
      %v2387 = vmax.f32 %v1432, 0.0
      %v2388 = vmax.f32 %v1434, 0.0
      %v2389 = vmax.f32 %v1969, 0.0
      %v2390 = vmax.f32 %v1971, 0.0
      %v2391 = vmax.f32 %v1438, 0.0
      %v2392 = vmax.f32 %v1440, 0.0
      %v2393 = vmax.f32 %v1975, 0.0
      %v2394 = vmax.f32 %v1977, 0.0
      %v2395 = vmax.f32 %v1442, 0.0
      %v2396 = vmax.f32 %v1444, 0.0
      %v2397 = vmax.f32 %v1979, 0.0
      %v2398 = vmax.f32 %v1981, 0.0
      %v2399 = vmax.f32 %v1448, 0.0
      %v2400 = vmax.f32 %v1450, 0.0
      %v2401 = vmax.f32 %v1985, 0.0
      %v2402 = vmax.f32 %v1987, 0.0
      %v2403 = vmax.f32 %v1452, 0.0
      %v2404 = vmax.f32 %v1454, 0.0
      %v2405 = vmax.f32 %v1989, 0.0
      %v2406 = vmax.f32 %v1991, 0.0
      %v2407 = vmax.f32 %v1458, 0.0
      %v2408 = vmax.f32 %v1460, 0.0
      %v2409 = vmax.f32 %v1995, 0.0
      %v2410 = vmax.f32 %v1997, 0.0
      %v2411 = vmax.f32 %v1462, 0.0
      %v2412 = vmax.f32 %v1464, 0.0
      %v2413 = vmax.f32 %v1999, 0.0
      %v2414 = vmax.f32 %v2001, 0.0
      %v2415 = vmax.f32 %v1468, 0.0
      %v2416 = vmax.f32 %v1470, 0.0
      %v2417 = vmax.f32 %v2005, 0.0
      %v2418 = vmax.f32 %v2007, 0.0
      %v2419 = vmax.f32 %v1472, 0.0
      %v2420 = vmax.f32 %v1474, 0.0
      %v2421 = vmax.f32 %v2009, 0.0
      %v2422 = vmax.f32 %v2011, 0.0
      %v2423 = vmax.f32 %v1478, 0.0
      %v2424 = vmax.f32 %v1480, 0.0
      %v2425 = vmax.f32 %v2015, 0.0
      %v2426 = vmax.f32 %v2017, 0.0
      %v2427 = vmax.f32 %v1482, 0.0
      %v2428 = vmax.f32 %v1484, 0.0
      %v2429 = vmax.f32 %v2019, 0.0
      %v2430 = vmax.f32 %v2021, 0.0
      %v2431 = vmax.f32 %v1488, 0.0
      %v2432 = vmax.f32 %v1490, 0.0
      %v2433 = vmax.f32 %v2025, 0.0
      %v2434 = vmax.f32 %v2027, 0.0
      %v2435 = vmax.f32 %v1492, 0.0
      %v2436 = vmax.f32 %v1494, 0.0
      %v2437 = vmax.f32 %v2029, 0.0
      %v2438 = vmax.f32 %v2031, 0.0
      %v2439 = vmax.f32 %v1498, 0.0
      %v2440 = vmax.f32 %v1500, 0.0
      %v2441 = vmax.f32 %v2035, 0.0
      %v2442 = vmax.f32 %v2037, 0.0
      %v2443 = vmax.f32 %v1502, 0.0
      %v2444 = vmax.f32 %v1504, 0.0
      %v2445 = vmax.f32 %v2039, 0.0
      %v2446 = vmax.f32 %v2041, 0.0
      %v2447 = vmax.f32 %v1508, 0.0
      %v2448 = vmax.f32 %v1510, 0.0
      %v2449 = vmax.f32 %v2045, 0.0
      %v2450 = vmax.f32 %v2047, 0.0
      %v2451 = vmax.f32 %v1512, 0.0
      %v2452 = vmax.f32 %v1514, 0.0
      %v2453 = vmax.f32 %v2049, 0.0
      %v2454 = vmax.f32 %v2051, 0.0
      %v2455 = vmax.f32 %v1518, 0.0
      %v2456 = vmax.f32 %v1520, 0.0
      %v2457 = vmax.f32 %v2055, 0.0
      %v2458 = vmax.f32 %v2057, 0.0
      %v2459 = vmax.f32 %v1522, 0.0
      %v2460 = vmax.f32 %v1524, 0.0
      %v2461 = vmax.f32 %v2059, 0.0
      %v2462 = vmax.f32 %v2061, 0.0
      %v2463 = vmax.f32 %v1528, 0.0
      %v2464 = vmax.f32 %v1530, 0.0
      %v2465 = vmax.f32 %v2065, 0.0
      %v2466 = vmax.f32 %v2067, 0.0
      %v2467 = vmax.f32 %v1532, 0.0
      %v2468 = vmax.f32 %v1534, 0.0
      %v2469 = vmax.f32 %v2069, 0.0
      %v2470 = vmax.f32 %v2071, 0.0
      %v2471 = vmax.f32 %v1538, 0.0
      %v2472 = vmax.f32 %v1540, 0.0
      %v2473 = vmax.f32 %v2075, 0.0
      %v2474 = vmax.f32 %v2077, 0.0
      %v2475 = vmax.f32 %v1542, 0.0
      %v2476 = vmax.f32 %v1544, 0.0
      %v2477 = vmax.f32 %v2079, 0.0
      %v2478 = vmax.f32 %v2081, 0.0
      %v2479 = vmax.f32 %v2095, %v2097
      %v2480 = vmax.f32 %v2096, %v2098
      %v2481 = vmax.f32 %v2099, %v2101
      %v2482 = vmax.f32 %v2100, %v2102
      %v2483 = vmax.f32 %v2103, %v2105
      %v2484 = vmax.f32 %v2104, %v2106
      %v2485 = vmax.f32 %v2107, %v2109
      %v2486 = vmax.f32 %v2108, %v2110
      %v2487 = vmax.f32 %v2111, %v2113
      %v2488 = vmax.f32 %v2112, %v2114
      %v2489 = vmax.f32 %v2115, %v2117
      %v2490 = vmax.f32 %v2116, %v2118
      %v2491 = vmax.f32 %v2119, %v2121
      %v2492 = vmax.f32 %v2120, %v2122
      %v2493 = vmax.f32 %v2123, %v2125
      %v2494 = vmax.f32 %v2124, %v2126
      %v2495 = vmax.f32 %v2127, %v2129
      %v2496 = vmax.f32 %v2128, %v2130
      %v2497 = vmax.f32 %v2131, %v2133
      %v2498 = vmax.f32 %v2132, %v2134
      %v2499 = vmax.f32 %v2135, %v2137
      %v2500 = vmax.f32 %v2136, %v2138
      %v2501 = vmax.f32 %v2139, %v2141
      %v2502 = vmax.f32 %v2140, %v2142
      %v2503 = vmax.f32 %v2143, %v2145
      %v2504 = vmax.f32 %v2144, %v2146
      %v2505 = vmax.f32 %v2147, %v2149
      %v2506 = vmax.f32 %v2148, %v2150
      %v2507 = vmax.f32 %v2151, %v2153
      %v2508 = vmax.f32 %v2152, %v2154
      %v2509 = vmax.f32 %v2155, %v2157
      %v2510 = vmax.f32 %v2156, %v2158
      %v2511 = vmax.f32 %v2159, %v2161
      %v2512 = vmax.f32 %v2160, %v2162
      %v2513 = vmax.f32 %v2163, %v2165
      %v2514 = vmax.f32 %v2164, %v2166
      %v2515 = vmax.f32 %v2167, %v2169
      %v2516 = vmax.f32 %v2168, %v2170
      %v2517 = vmax.f32 %v2171, %v2173
      %v2518 = vmax.f32 %v2172, %v2174
      %v2519 = vmax.f32 %v2175, %v2177
      %v2520 = vmax.f32 %v2176, %v2178
      %v2521 = vmax.f32 %v2179, %v2181
      %v2522 = vmax.f32 %v2180, %v2182
      %v2523 = vmax.f32 %v2183, %v2185
      %v2524 = vmax.f32 %v2184, %v2186
      %v2525 = vmax.f32 %v2187, %v2189
      %v2526 = vmax.f32 %v2188, %v2190
      %v2527 = vmax.f32 %v2191, %v2193
      %v2528 = vmax.f32 %v2192, %v2194
      %v2529 = vmax.f32 %v2195, %v2197
      %v2530 = vmax.f32 %v2196, %v2198
      %v2531 = vmax.f32 %v2199, %v2201
      %v2532 = vmax.f32 %v2200, %v2202
      %v2533 = vmax.f32 %v2203, %v2205
      %v2534 = vmax.f32 %v2204, %v2206
      %v2535 = vmax.f32 %v2207, %v2209
      %v2536 = vmax.f32 %v2208, %v2210
      %v2537 = vmax.f32 %v2211, %v2213
      %v2538 = vmax.f32 %v2212, %v2214
      %v2539 = vmax.f32 %v2215, %v2217
      %v2540 = vmax.f32 %v2216, %v2218
      %v2541 = vmax.f32 %v2219, %v2221
      %v2542 = vmax.f32 %v2220, %v2222
      %v2543 = vmax.f32 %v2223, %v2225
      %v2544 = vmax.f32 %v2224, %v2226
      %v2545 = vmax.f32 %v2227, %v2229
      %v2546 = vmax.f32 %v2228, %v2230
      %v2547 = vmax.f32 %v2231, %v2233
      %v2548 = vmax.f32 %v2232, %v2234
      %v2549 = vmax.f32 %v2235, %v2237
      %v2550 = vmax.f32 %v2236, %v2238
      %v2551 = vmax.f32 %v2239, %v2241
      %v2552 = vmax.f32 %v2240, %v2242
      %v2553 = vmax.f32 %v2243, %v2245
      %v2554 = vmax.f32 %v2244, %v2246
      %v2555 = vmax.f32 %v2247, %v2249
      %v2556 = vmax.f32 %v2248, %v2250
      %v2557 = vmax.f32 %v2251, %v2253
      %v2558 = vmax.f32 %v2252, %v2254
      %v2559 = vmax.f32 %v2255, %v2257
      %v2560 = vmax.f32 %v2256, %v2258
      %v2561 = vmax.f32 %v2259, %v2261
      %v2562 = vmax.f32 %v2260, %v2262
      %v2563 = vmax.f32 %v2263, %v2265
      %v2564 = vmax.f32 %v2264, %v2266
      %v2565 = vmax.f32 %v2267, %v2269
      %v2566 = vmax.f32 %v2268, %v2270
      %v2567 = vmax.f32 %v2271, %v2273
      %v2568 = vmax.f32 %v2272, %v2274
      %v2569 = vmax.f32 %v2275, %v2277
      %v2570 = vmax.f32 %v2276, %v2278
      %v2571 = vmax.f32 %v2279, %v2281
      %v2572 = vmax.f32 %v2280, %v2282
      %v2573 = vmax.f32 %v2283, %v2285
      %v2574 = vmax.f32 %v2284, %v2286
      %v2575 = vmax.f32 %v2287, %v2289
      %v2576 = vmax.f32 %v2288, %v2290
      %v2577 = vmax.f32 %v2291, %v2293
      %v2578 = vmax.f32 %v2292, %v2294
      %v2579 = vmax.f32 %v2295, %v2297
      %v2580 = vmax.f32 %v2296, %v2298
      %v2581 = vmax.f32 %v2299, %v2301
      %v2582 = vmax.f32 %v2300, %v2302
      %v2583 = vmax.f32 %v2303, %v2305
      %v2584 = vmax.f32 %v2304, %v2306
      %v2585 = vmax.f32 %v2307, %v2309
      %v2586 = vmax.f32 %v2308, %v2310
      %v2587 = vmax.f32 %v2311, %v2313
      %v2588 = vmax.f32 %v2312, %v2314
      %v2589 = vmax.f32 %v2315, %v2317
      %v2590 = vmax.f32 %v2316, %v2318
      %v2591 = vmax.f32 %v2319, %v2321
      %v2592 = vmax.f32 %v2320, %v2322
      %v2593 = vmax.f32 %v2323, %v2325
      %v2594 = vmax.f32 %v2324, %v2326
      %v2595 = vmax.f32 %v2327, %v2329
      %v2596 = vmax.f32 %v2328, %v2330
      %v2597 = vmax.f32 %v2331, %v2333
      %v2598 = vmax.f32 %v2332, %v2334
      %v2599 = vmax.f32 %v2335, %v2337
      %v2600 = vmax.f32 %v2336, %v2338
      %v2601 = vmax.f32 %v2339, %v2341
      %v2602 = vmax.f32 %v2340, %v2342
      %v2603 = vmax.f32 %v2343, %v2345
      %v2604 = vmax.f32 %v2344, %v2346
      %v2605 = vmax.f32 %v2347, %v2349
      %v2606 = vmax.f32 %v2348, %v2350
      %v2607 = vmax.f32 %v2351, %v2353
      %v2608 = vmax.f32 %v2352, %v2354
      %v2609 = vmax.f32 %v2355, %v2357
      %v2610 = vmax.f32 %v2356, %v2358
      %v2611 = vmax.f32 %v2359, %v2361
      %v2612 = vmax.f32 %v2360, %v2362
      %v2613 = vmax.f32 %v2363, %v2365
      %v2614 = vmax.f32 %v2364, %v2366
      %v2615 = vmax.f32 %v2367, %v2369
      %v2616 = vmax.f32 %v2368, %v2370
      %v2617 = vmax.f32 %v2371, %v2373
      %v2618 = vmax.f32 %v2372, %v2374
      %v2619 = vmax.f32 %v2375, %v2377
      %v2620 = vmax.f32 %v2376, %v2378
      %v2621 = vmax.f32 %v2379, %v2381
      %v2622 = vmax.f32 %v2380, %v2382
      %v2623 = vmax.f32 %v2383, %v2385
      %v2624 = vmax.f32 %v2384, %v2386
      %v2625 = vmax.f32 %v2387, %v2389
      %v2626 = vmax.f32 %v2388, %v2390
      %v2627 = vmax.f32 %v2391, %v2393
      %v2628 = vmax.f32 %v2392, %v2394
      %v2629 = vmax.f32 %v2395, %v2397
      %v2630 = vmax.f32 %v2396, %v2398
      %v2631 = vmax.f32 %v2399, %v2401
      %v2632 = vmax.f32 %v2400, %v2402
      %v2633 = vmax.f32 %v2403, %v2405
      %v2634 = vmax.f32 %v2404, %v2406
      %v2635 = vmax.f32 %v2407, %v2409
      %v2636 = vmax.f32 %v2408, %v2410
      %v2637 = vmax.f32 %v2411, %v2413
      %v2638 = vmax.f32 %v2412, %v2414
      %v2639 = vmax.f32 %v2415, %v2417
      %v2640 = vmax.f32 %v2416, %v2418
      %v2641 = vmax.f32 %v2419, %v2421
      %v2642 = vmax.f32 %v2420, %v2422
      %v2643 = vmax.f32 %v2423, %v2425
      %v2644 = vmax.f32 %v2424, %v2426
      %v2645 = vmax.f32 %v2427, %v2429
      %v2646 = vmax.f32 %v2428, %v2430
      %v2647 = vmax.f32 %v2431, %v2433
      %v2648 = vmax.f32 %v2432, %v2434
      %v2649 = vmax.f32 %v2435, %v2437
      %v2650 = vmax.f32 %v2436, %v2438
      %v2651 = vmax.f32 %v2439, %v2441
      %v2652 = vmax.f32 %v2440, %v2442
      %v2653 = vmax.f32 %v2443, %v2445
      %v2654 = vmax.f32 %v2444, %v2446
      %v2655 = vmax.f32 %v2447, %v2449
      %v2656 = vmax.f32 %v2448, %v2450
      %v2657 = vmax.f32 %v2451, %v2453
      %v2658 = vmax.f32 %v2452, %v2454
      %v2659 = vmax.f32 %v2455, %v2457
      %v2660 = vmax.f32 %v2456, %v2458
      %v2661 = vmax.f32 %v2459, %v2461
      %v2662 = vmax.f32 %v2460, %v2462
      %v2663 = vmax.f32 %v2463, %v2465
      %v2664 = vmax.f32 %v2464, %v2466
      %v2665 = vmax.f32 %v2467, %v2469
      %v2666 = vmax.f32 %v2468, %v2470
      %v2667 = vmax.f32 %v2471, %v2473
      %v2668 = vmax.f32 %v2472, %v2474
      %v2669 = vmax.f32 %v2475, %v2477
      %v2670 = vmax.f32 %v2476, %v2478
      %v2671 = vmax.f32 %v2479, %v2575
      %v2672 = vmax.f32 %v2480, %v2576
      %v2673 = vmax.f32 %v2481, %v2577
      %v2674 = vmax.f32 %v2482, %v2578
      %v2675 = vmax.f32 %v2483, %v2579
      %v2676 = vmax.f32 %v2484, %v2580
      %v2677 = vmax.f32 %v2485, %v2581
      %v2678 = vmax.f32 %v2486, %v2582
      %v2679 = vmax.f32 %v2487, %v2583
      %v2680 = vmax.f32 %v2488, %v2584
      %v2681 = vmax.f32 %v2489, %v2585
      %v2682 = vmax.f32 %v2490, %v2586
      %v2683 = vmax.f32 %v2491, %v2587
      %v2684 = vmax.f32 %v2492, %v2588
      %v2685 = vmax.f32 %v2493, %v2589
      %v2686 = vmax.f32 %v2494, %v2590
      %v2687 = vmax.f32 %v2495, %v2591
      %v2688 = vmax.f32 %v2496, %v2592
      %v2689 = vmax.f32 %v2497, %v2593
      %v2690 = vmax.f32 %v2498, %v2594
      %v2691 = vmax.f32 %v2499, %v2595
      %v2692 = vmax.f32 %v2500, %v2596
      %v2693 = vmax.f32 %v2501, %v2597
      %v2694 = vmax.f32 %v2502, %v2598
      %v2695 = vmax.f32 %v2503, %v2599
      %v2696 = vmax.f32 %v2504, %v2600
      %v2697 = vmax.f32 %v2505, %v2601
      %v2698 = vmax.f32 %v2506, %v2602
      %v2699 = vmax.f32 %v2507, %v2603
      %v2700 = vmax.f32 %v2508, %v2604
      %v2701 = vmax.f32 %v2509, %v2605
      %v2702 = vmax.f32 %v2510, %v2606
      %v2703 = vmax.f32 %v2511, %v2607
      %v2704 = vmax.f32 %v2512, %v2608
      %v2705 = vmax.f32 %v2513, %v2609
      %v2706 = vmax.f32 %v2514, %v2610
      %v2707 = vmax.f32 %v2515, %v2611
      %v2708 = vmax.f32 %v2516, %v2612
      %v2709 = vmax.f32 %v2517, %v2613
      %v2710 = vmax.f32 %v2518, %v2614
      %v2711 = vmax.f32 %v2519, %v2615
      %v2712 = vmax.f32 %v2520, %v2616
      %v2713 = vmax.f32 %v2521, %v2617
      %v2714 = vmax.f32 %v2522, %v2618
      %v2715 = vmax.f32 %v2523, %v2619
      %v2716 = vmax.f32 %v2524, %v2620
      %v2717 = vmax.f32 %v2525, %v2621
      %v2718 = vmax.f32 %v2526, %v2622
      %v2719 = vmax.f32 %v2527, %v2623
      %v2720 = vmax.f32 %v2528, %v2624
      %v2721 = vmax.f32 %v2529, %v2625
      %v2722 = vmax.f32 %v2530, %v2626
      %v2723 = vmax.f32 %v2531, %v2627
      %v2724 = vmax.f32 %v2532, %v2628
      %v2725 = vmax.f32 %v2533, %v2629
      %v2726 = vmax.f32 %v2534, %v2630
      %v2727 = vmax.f32 %v2535, %v2631
      %v2728 = vmax.f32 %v2536, %v2632
      %v2729 = vmax.f32 %v2537, %v2633
      %v2730 = vmax.f32 %v2538, %v2634
      %v2731 = vmax.f32 %v2539, %v2635
      %v2732 = vmax.f32 %v2540, %v2636
      %v2733 = vmax.f32 %v2541, %v2637
      %v2734 = vmax.f32 %v2542, %v2638
      %v2735 = vmax.f32 %v2543, %v2639
      %v2736 = vmax.f32 %v2544, %v2640
      %v2737 = vmax.f32 %v2545, %v2641
      %v2738 = vmax.f32 %v2546, %v2642
      %v2739 = vmax.f32 %v2547, %v2643
      %v2740 = vmax.f32 %v2548, %v2644
      %v2741 = vmax.f32 %v2549, %v2645
      %v2742 = vmax.f32 %v2550, %v2646
      %v2743 = vmax.f32 %v2551, %v2647
      %v2744 = vmax.f32 %v2552, %v2648
      %v2745 = vmax.f32 %v2553, %v2649
      %v2746 = vmax.f32 %v2554, %v2650
      %v2747 = vmax.f32 %v2555, %v2651
      %v2748 = vmax.f32 %v2556, %v2652
      %v2749 = vmax.f32 %v2557, %v2653
      %v2750 = vmax.f32 %v2558, %v2654
      %v2751 = vmax.f32 %v2559, %v2655
      %v2752 = vmax.f32 %v2560, %v2656
      %v2753 = vmax.f32 %v2561, %v2657
      %v2754 = vmax.f32 %v2562, %v2658
      %v2755 = vmax.f32 %v2563, %v2659
      %v2756 = vmax.f32 %v2564, %v2660
      %v2757 = vmax.f32 %v2565, %v2661
      %v2758 = vmax.f32 %v2566, %v2662
      %v2759 = vmax.f32 %v2567, %v2663
      %v2760 = vmax.f32 %v2568, %v2664
      %v2761 = vmax.f32 %v2569, %v2665
      %v2762 = vmax.f32 %v2570, %v2666
      %v2763 = vmax.f32 %v2571, %v2667
      %v2764 = vmax.f32 %v2572, %v2668
      %v2765 = vmax.f32 %v2573, %v2669
      %v2766 = vmax.f32 %v2574, %v2670
      %v2767 = vpack.c.bf16 %v2673, %v2671
      %v2768 = vpack.c.bf16 %v2674, %v2672
      %v2769 = vpack.c.bf16 %v2681, %v2679
      %v2770 = vpack.c.bf16 %v2682, %v2680
      %v2771 = vpack.c.bf16 %v2689, %v2687
      %v2772 = vpack.c.bf16 %v2690, %v2688
      %v2773 = vpack.c.bf16 %v2677, %v2675
      %v2774 = vpack.c.bf16 %v2678, %v2676
      %v2775 = vpack.c.bf16 %v2685, %v2683
      %v2776 = vpack.c.bf16 %v2686, %v2684
      %v2777 = vpack.c.bf16 %v2693, %v2691
      %v2778 = vpack.c.bf16 %v2694, %v2692
      %v2779 = vpack.c.bf16 %v2697, %v2695
      %v2780 = vpack.c.bf16 %v2698, %v2696
      %v2781 = vpack.c.bf16 %v2701, %v2699
      %v2782 = vpack.c.bf16 %v2702, %v2700
      %v2783 = vpack.c.bf16 %v2705, %v2703
      %v2784 = vpack.c.bf16 %v2706, %v2704
      %v2785 = vpack.c.bf16 %v2709, %v2707
      %v2786 = vpack.c.bf16 %v2710, %v2708
      %v2787 = vpack.c.bf16 %v2713, %v2711
      %v2788 = vpack.c.bf16 %v2714, %v2712
      %v2789 = vpack.c.bf16 %v2717, %v2715
      %v2790 = vpack.c.bf16 %v2718, %v2716
      %v2791 = vpack.c.bf16 %v2721, %v2719
      %v2792 = vpack.c.bf16 %v2722, %v2720
      %v2793 = vpack.c.bf16 %v2725, %v2723
      %v2794 = vpack.c.bf16 %v2726, %v2724
      %v2795 = vpack.c.bf16 %v2729, %v2727
      %v2796 = vpack.c.bf16 %v2730, %v2728
      %v2797 = vpack.c.bf16 %v2733, %v2731
      %v2798 = vpack.c.bf16 %v2734, %v2732
      %v2799 = vpack.c.bf16 %v2737, %v2735
      %v2800 = vpack.c.bf16 %v2738, %v2736
      %v2801 = vpack.c.bf16 %v2741, %v2739
      %v2802 = vpack.c.bf16 %v2742, %v2740
      %v2803 = vpack.c.bf16 %v2745, %v2743
      %v2804 = vpack.c.bf16 %v2746, %v2744
      %v2805 = vpack.c.bf16 %v2749, %v2747
      %v2806 = vpack.c.bf16 %v2750, %v2748
      %v2807 = vpack.c.bf16 %v2753, %v2751
      %v2808 = vpack.c.bf16 %v2754, %v2752
      %v2809 = vpack.c.bf16 %v2757, %v2755
      %v2810 = vpack.c.bf16 %v2758, %v2756
      %v2811 = vpack.c.bf16 %v2761, %v2759
      %v2812 = vpack.c.bf16 %v2762, %v2760
      %v2813 = vpack.c.bf16 %v2765, %v2763
      %v2814 = vpack.c.bf16 %v2766, %v2764
      %v2815 = vld [vmem:[%s3] sm:$0xff]
      %v2816 = vld [vmem:[%s3 + $0x8] sm:$0xff]
      %v2817 = vld [vmem:[%s3 + $0x10] sm:$0xff]
      %v2818 = vld [vmem:[%s3 + $0x18] sm:$0xff]
      %v2819 = vld [vmem:[%s3 + $0x20] sm:$0xff]
      %v2820 = vld [vmem:[%s3 + $0x28] sm:$0xff]
      %v2821 = vld [vmem:[%s3 + $0x30] sm:$0xff]
      %v2822 = vld [vmem:[%s3 + $0x38] sm:$0xff]
      %v2823 = vld [vmem:[%s3 + $0x40] sm:$0xff]
      %v2824 = vld [vmem:[%s3 + $0x48] sm:$0xff]
      %v2825 = vld [vmem:[%s3 + $0x50] sm:$0xff]
      %v2826 = vld [vmem:[%s3 + $0x58] sm:$0xff]
      %v2827 = vld [vmem:[%s3 + $0x60] sm:$0xff]
      %v2828 = vld [vmem:[%s3 + $0x68] sm:$0xff]
      %v2829 = vld [vmem:[%s3 + $0x70] sm:$0xff]
      %v2830 = vld [vmem:[%s3 + $0x78] sm:$0xff]
      %v2831 = vld [vmem:[%s3 + $0x80] sm:$0xff]
      %v2832 = vld [vmem:[%s3 + $0x88] sm:$0xff]
      %v2833 = vld [vmem:[%s3 + $0x90] sm:$0xff]
      %v2834 = vld [vmem:[%s3 + $0x98] sm:$0xff]
      %v2835 = vld [vmem:[%s3 + $0xa0] sm:$0xff]
      %v2836 = vld [vmem:[%s3 + $0xa8] sm:$0xff]
      %v2837 = vld [vmem:[%s3 + $0xb0] sm:$0xff]
      %v2838 = vld [vmem:[%s3 + $0xb8] sm:$0xff]
      %v2839 = vld [vmem:[%s3 + $0xc0] sm:$0xff]
      %v2840 = vld [vmem:[%s3 + $0xc8] sm:$0xff]
      %v2841 = vld [vmem:[%s3 + $0xd0] sm:$0xff]
      %v2842 = vld [vmem:[%s3 + $0xd8] sm:$0xff]
      %v2843 = vld [vmem:[%s3 + $0xe0] sm:$0xff]
      %v2844 = vld [vmem:[%s3 + $0xe8] sm:$0xff]
      %v2845 = vld [vmem:[%s3 + $0xf0] sm:$0xff]
      %v2846 = vld [vmem:[%s3 + $0xf8] sm:$0xff]
      %v2847 = vld [vmem:[%s3 + $0x100] sm:$0xff]
      %v2848 = vld [vmem:[%s3 + $0x108] sm:$0xff]
      %v2849 = vld [vmem:[%s3 + $0x110] sm:$0xff]
      %v2850 = vld [vmem:[%s3 + $0x118] sm:$0xff]
      %v2851 = vld [vmem:[%s3 + $0x120] sm:$0xff]
      %v2852 = vld [vmem:[%s3 + $0x128] sm:$0xff]
      %v2853 = vld [vmem:[%s3 + $0x130] sm:$0xff]
      %v2854 = vld [vmem:[%s3 + $0x138] sm:$0xff]
      %v2855 = vld [vmem:[%s3 + $0x140] sm:$0xff]
      %v2856 = vld [vmem:[%s3 + $0x148] sm:$0xff]
      %v2857 = vld [vmem:[%s3 + $0x150] sm:$0xff]
      %v2858 = vld [vmem:[%s3 + $0x158] sm:$0xff]
      %v2859 = vld [vmem:[%s3 + $0x160] sm:$0xff]
      %v2860 = vld [vmem:[%s3 + $0x168] sm:$0xff]
      %v2861 = vld [vmem:[%s3 + $0x170] sm:$0xff]
      %v2862 = vld [vmem:[%s3 + $0x178] sm:$0xff]
      %v2863 = vld [vmem:[%s3 + $0x180] sm:$0xff]
      %v2864 = vld [vmem:[%s3 + $0x188] sm:$0xff]
      %v2865 = vld [vmem:[%s3 + $0x190] sm:$0xff]
      %v2866 = vld [vmem:[%s3 + $0x198] sm:$0xff]
      %v2867 = vld [vmem:[%s3 + $0x1a0] sm:$0xff]
      %v2868 = vld [vmem:[%s3 + $0x1a8] sm:$0xff]
      %v2869 = vld [vmem:[%s3 + $0x1b0] sm:$0xff]
      %v2870 = vld [vmem:[%s3 + $0x1b8] sm:$0xff]
      %v2871 = vld [vmem:[%s3 + $0x1c0] sm:$0xff]
      %v2872 = vld [vmem:[%s3 + $0x1c8] sm:$0xff]
      %v2873 = vld [vmem:[%s3 + $0x1d0] sm:$0xff]
      %v2874 = vld [vmem:[%s3 + $0x1d8] sm:$0xff]
      %v2875 = vld [vmem:[%s3 + $0x1e0] sm:$0xff]
      %v2876 = vld [vmem:[%s3 + $0x1e8] sm:$0xff]
      %v2877 = vld [vmem:[%s3 + $0x1f0] sm:$0xff]
      %v2878 = vld [vmem:[%s3 + $0x1f8] sm:$0xff]
      %v2879 = vld [vmem:[%s3 + $0x200] sm:$0xff]
      %v2880 = vld [vmem:[%s3 + $0x208] sm:$0xff]
      %v2881 = vld [vmem:[%s3 + $0x210] sm:$0xff]
      %v2882 = vld [vmem:[%s3 + $0x218] sm:$0xff]
      %v2883 = vld [vmem:[%s3 + $0x220] sm:$0xff]
      %v2884 = vld [vmem:[%s3 + $0x228] sm:$0xff]
      %v2885 = vld [vmem:[%s3 + $0x230] sm:$0xff]
      %v2886 = vld [vmem:[%s3 + $0x238] sm:$0xff]
      %v2887 = vld [vmem:[%s3 + $0x240] sm:$0xff]
      %v2888 = vld [vmem:[%s3 + $0x248] sm:$0xff]
      %v2889 = vld [vmem:[%s3 + $0x250] sm:$0xff]
      %v2890 = vld [vmem:[%s3 + $0x258] sm:$0xff]
      %v2891 = vld [vmem:[%s3 + $0x260] sm:$0xff]
      %v2892 = vld [vmem:[%s3 + $0x268] sm:$0xff]
      %v2893 = vld [vmem:[%s3 + $0x270] sm:$0xff]
      %v2894 = vld [vmem:[%s3 + $0x278] sm:$0xff]
      %v2895 = vld [vmem:[%s3 + $0x280] sm:$0xff]
      %v2896 = vld [vmem:[%s3 + $0x288] sm:$0xff]
      %v2897 = vld [vmem:[%s3 + $0x290] sm:$0xff]
      %v2898 = vld [vmem:[%s3 + $0x298] sm:$0xff]
      %v2899 = vld [vmem:[%s3 + $0x2a0] sm:$0xff]
      %v2900 = vld [vmem:[%s3 + $0x2a8] sm:$0xff]
      %v2901 = vld [vmem:[%s3 + $0x2b0] sm:$0xff]
      %v2902 = vld [vmem:[%s3 + $0x2b8] sm:$0xff]
      %v2903 = vld [vmem:[%s3 + $0x2c0] sm:$0xff]
      %v2904 = vld [vmem:[%s3 + $0x2c8] sm:$0xff]
      %v2905 = vld [vmem:[%s3 + $0x2d0] sm:$0xff]
      %v2906 = vld [vmem:[%s3 + $0x2d8] sm:$0xff]
      %v2907 = vld [vmem:[%s3 + $0x2e0] sm:$0xff]
      %v2908 = vld [vmem:[%s3 + $0x2e8] sm:$0xff]
      %v2909 = vld [vmem:[%s3 + $0x2f0] sm:$0xff]
      %v2910 = vld [vmem:[%s3 + $0x2f8] sm:$0xff]
      %v2911 = vld [vmem:[%s3 + $0x300] sm:$0xff]
      %v2912 = vld [vmem:[%s3 + $0x308] sm:$0xff]
      %v2913 = vld [vmem:[%s3 + $0x310] sm:$0xff]
      %v2914 = vld [vmem:[%s3 + $0x318] sm:$0xff]
      %v2915 = vld [vmem:[%s3 + $0x320] sm:$0xff]
      %v2916 = vld [vmem:[%s3 + $0x328] sm:$0xff]
      %v2917 = vld [vmem:[%s3 + $0x330] sm:$0xff]
      %v2918 = vld [vmem:[%s3 + $0x338] sm:$0xff]
      %v2919 = vld [vmem:[%s3 + $0x340] sm:$0xff]
      %v2920 = vld [vmem:[%s3 + $0x348] sm:$0xff]
      %v2921 = vld [vmem:[%s3 + $0x350] sm:$0xff]
      %v2922 = vld [vmem:[%s3 + $0x358] sm:$0xff]
      %v2923 = vld [vmem:[%s3 + $0x360] sm:$0xff]
      %v2924 = vld [vmem:[%s3 + $0x368] sm:$0xff]
      %v2925 = vld [vmem:[%s3 + $0x370] sm:$0xff]
      %v2926 = vld [vmem:[%s3 + $0x378] sm:$0xff]
      %v2927 = vld [vmem:[%s3 + $0x380] sm:$0xff]
      %v2928 = vld [vmem:[%s3 + $0x388] sm:$0xff]
      %v2929 = vld [vmem:[%s3 + $0x390] sm:$0xff]
      %v2930 = vld [vmem:[%s3 + $0x398] sm:$0xff]
      %v2931 = vld [vmem:[%s3 + $0x3a0] sm:$0xff]
      %v2932 = vld [vmem:[%s3 + $0x3a8] sm:$0xff]
      %v2933 = vld [vmem:[%s3 + $0x3b0] sm:$0xff]
      %v2934 = vld [vmem:[%s3 + $0x3b8] sm:$0xff]
      %v2935 = vld [vmem:[%s3 + $0x3c0] sm:$0xff]
      %v2936 = vld [vmem:[%s3 + $0x3c8] sm:$0xff]
      %v2937 = vld [vmem:[%s3 + $0x3d0] sm:$0xff]
      %v2938 = vld [vmem:[%s3 + $0x3d8] sm:$0xff]
      %v2939 = vld [vmem:[%s3 + $0x3e0] sm:$0xff]
      %v2940 = vld [vmem:[%s3 + $0x3e8] sm:$0xff]
      %v2941 = vld [vmem:[%s3 + $0x3f0] sm:$0xff]
      %v2942 = vld [vmem:[%s3 + $0x3f8] sm:$0xff]
      %v2943 = vld [vmem:[%s3 + $0x400] sm:$0xff]
      %v2944 = vld [vmem:[%s3 + $0x408] sm:$0xff]
      %v2945 = vld [vmem:[%s3 + $0x410] sm:$0xff]
      %v2946 = vld [vmem:[%s3 + $0x418] sm:$0xff]
      %v2947 = vld [vmem:[%s3 + $0x420] sm:$0xff]
      %v2948 = vld [vmem:[%s3 + $0x428] sm:$0xff]
      %v2949 = vld [vmem:[%s3 + $0x430] sm:$0xff]
      %v2950 = vld [vmem:[%s3 + $0x438] sm:$0xff]
      %v2951 = vld [vmem:[%s3 + $0x440] sm:$0xff]
      %v2952 = vld [vmem:[%s3 + $0x448] sm:$0xff]
      %v2953 = vld [vmem:[%s3 + $0x450] sm:$0xff]
      %v2954 = vld [vmem:[%s3 + $0x458] sm:$0xff]
      %v2955 = vld [vmem:[%s3 + $0x460] sm:$0xff]
      %v2956 = vld [vmem:[%s3 + $0x468] sm:$0xff]
      %v2957 = vld [vmem:[%s3 + $0x470] sm:$0xff]
      %v2958 = vld [vmem:[%s3 + $0x478] sm:$0xff]
      %v2959 = vld [vmem:[%s3 + $0x480] sm:$0xff]
      %v2960 = vld [vmem:[%s3 + $0x488] sm:$0xff]
      %v2961 = vld [vmem:[%s3 + $0x490] sm:$0xff]
      %v2962 = vld [vmem:[%s3 + $0x498] sm:$0xff]
      %v2963 = vld [vmem:[%s3 + $0x4a0] sm:$0xff]
      %v2964 = vld [vmem:[%s3 + $0x4a8] sm:$0xff]
      %v2965 = vld [vmem:[%s3 + $0x4b0] sm:$0xff]
      %v2966 = vld [vmem:[%s3 + $0x4b8] sm:$0xff]
      %v2967 = vld [vmem:[%s3 + $0x4c0] sm:$0xff]
      %v2968 = vld [vmem:[%s3 + $0x4c8] sm:$0xff]
      %v2969 = vld [vmem:[%s3 + $0x4d0] sm:$0xff]
      %v2970 = vld [vmem:[%s3 + $0x4d8] sm:$0xff]
      %v2971 = vld [vmem:[%s3 + $0x4e0] sm:$0xff]
      %v2972 = vld [vmem:[%s3 + $0x4e8] sm:$0xff]
      %v2973 = vld [vmem:[%s3 + $0x4f0] sm:$0xff]
      %v2974 = vld [vmem:[%s3 + $0x4f8] sm:$0xff]
      %v2975 = vld [vmem:[%s3 + $0x500] sm:$0xff]
      %v2976 = vld [vmem:[%s3 + $0x508] sm:$0xff]
      %v2977 = vld [vmem:[%s3 + $0x510] sm:$0xff]
      %v2978 = vld [vmem:[%s3 + $0x518] sm:$0xff]
      %v2979 = vld [vmem:[%s3 + $0x520] sm:$0xff]
      %v2980 = vld [vmem:[%s3 + $0x528] sm:$0xff]
      %v2981 = vld [vmem:[%s3 + $0x530] sm:$0xff]
      %v2982 = vld [vmem:[%s3 + $0x538] sm:$0xff]
      %v2983 = vld [vmem:[%s3 + $0x540] sm:$0xff]
      %v2984 = vld [vmem:[%s3 + $0x548] sm:$0xff]
      %v2985 = vld [vmem:[%s3 + $0x550] sm:$0xff]
      %v2986 = vld [vmem:[%s3 + $0x558] sm:$0xff]
      %v2987 = vld [vmem:[%s3 + $0x560] sm:$0xff]
      %v2988 = vld [vmem:[%s3 + $0x568] sm:$0xff]
      %v2989 = vld [vmem:[%s3 + $0x570] sm:$0xff]
      %v2990 = vld [vmem:[%s3 + $0x578] sm:$0xff]
      %v2991 = vld [vmem:[%s3 + $0x580] sm:$0xff]
      %v2992 = vld [vmem:[%s3 + $0x588] sm:$0xff]
      %v2993 = vld [vmem:[%s3 + $0x590] sm:$0xff]
      %v2994 = vld [vmem:[%s3 + $0x598] sm:$0xff]
      %v2995 = vld [vmem:[%s3 + $0x5a0] sm:$0xff]
      %v2996 = vld [vmem:[%s3 + $0x5a8] sm:$0xff]
      %v2997 = vld [vmem:[%s3 + $0x5b0] sm:$0xff]
      %v2998 = vld [vmem:[%s3 + $0x5b8] sm:$0xff]
      %v2999 = vld [vmem:[%s3 + $0x5c0] sm:$0xff]
      %v3000 = vld [vmem:[%s3 + $0x5c8] sm:$0xff]
      %v3001 = vld [vmem:[%s3 + $0x5d0] sm:$0xff]
      %v3002 = vld [vmem:[%s3 + $0x5d8] sm:$0xff]
      %v3003 = vld [vmem:[%s3 + $0x5e0] sm:$0xff]
      %v3004 = vld [vmem:[%s3 + $0x5e8] sm:$0xff]
      %v3005 = vld [vmem:[%s3 + $0x5f0] sm:$0xff]
      %v3006 = vld [vmem:[%s3 + $0x5f8] sm:$0xff]
      %v3007 = vld [vmem:[%s4] sm:$0xf]
      %v3009 = vlaneseq
      %v3010 = vshrl.u32 %v3009, 7
      %v3011 = vsub.s32 0, %v3010
      %v3012 = vrot.slane %v3007, %v3011
      %v3013 = vlaneseq
      %v3014 = vshrl.u32 %v3013, 7
      %v3015 = vsub.s32 1, %v3014
      %v3016 = vrot.slane %v3007, %v3015
      %v3017 = vlaneseq
      %v3018 = vshrl.u32 %v3017, 7
      %v3019 = vsub.s32 2, %v3018
      %v3020 = vrot.slane %v3007, %v3019
      %v3021 = vlaneseq
      %v3022 = vshrl.u32 %v3021, 7
      %v3023 = vsub.s32 3, %v3022
      %v3024 = vrot.slane %v3007, %v3023
      %v3221 = vunpack.c.l.b16 %v2815
      %v3222 = vunpack.c.h.b16 %v2815
      %v3223 = vunpack.c.l.b16 %v2816
      %v3224 = vunpack.c.h.b16 %v2816
      %v3225 = vunpack.c.l.b16 %v2817
      %v3226 = vunpack.c.h.b16 %v2817
      %v3227 = vunpack.c.l.b16 %v2818
      %v3228 = vunpack.c.h.b16 %v2818
      %v3229 = vunpack.c.l.b16 %v2819
      %v3230 = vunpack.c.h.b16 %v2819
      %v3231 = vunpack.c.l.b16 %v2820
      %v3232 = vunpack.c.h.b16 %v2820
      %v3233 = vunpack.c.l.b16 %v2821
      %v3234 = vunpack.c.h.b16 %v2821
      %v3235 = vunpack.c.l.b16 %v2822
      %v3236 = vunpack.c.h.b16 %v2822
      %v3237 = vunpack.c.l.b16 %v2823
      %v3238 = vunpack.c.h.b16 %v2823
      %v3239 = vunpack.c.l.b16 %v2824
      %v3240 = vunpack.c.h.b16 %v2824
      %v3241 = vunpack.c.l.b16 %v2825
      %v3242 = vunpack.c.h.b16 %v2825
      %v3243 = vunpack.c.l.b16 %v2826
      %v3244 = vunpack.c.h.b16 %v2826
      %v3245 = vunpack.c.l.b16 %v2827
      %v3246 = vunpack.c.h.b16 %v2827
      %v3247 = vunpack.c.l.b16 %v2828
      %v3248 = vunpack.c.h.b16 %v2828
      %v3249 = vunpack.c.l.b16 %v2829
      %v3250 = vunpack.c.h.b16 %v2829
      %v3251 = vunpack.c.l.b16 %v2830
      %v3252 = vunpack.c.h.b16 %v2830
      %v3253 = vunpack.c.l.b16 %v2831
      %v3254 = vunpack.c.h.b16 %v2831
      %v3255 = vunpack.c.l.b16 %v2832
      %v3256 = vunpack.c.h.b16 %v2832
      %v3257 = vunpack.c.l.b16 %v2833
      %v3258 = vunpack.c.h.b16 %v2833
      %v3259 = vunpack.c.l.b16 %v2834
      %v3260 = vunpack.c.h.b16 %v2834
      %v3261 = vunpack.c.l.b16 %v2835
      %v3262 = vunpack.c.h.b16 %v2835
      %v3263 = vunpack.c.l.b16 %v2836
      %v3264 = vunpack.c.h.b16 %v2836
      %v3265 = vunpack.c.l.b16 %v2837
      %v3266 = vunpack.c.h.b16 %v2837
      %v3267 = vunpack.c.l.b16 %v2838
      %v3268 = vunpack.c.h.b16 %v2838
      %v3269 = vunpack.c.l.b16 %v2839
      %v3270 = vunpack.c.h.b16 %v2839
      %v3271 = vunpack.c.l.b16 %v2840
      %v3272 = vunpack.c.h.b16 %v2840
      %v3273 = vunpack.c.l.b16 %v2841
      %v3274 = vunpack.c.h.b16 %v2841
      %v3275 = vunpack.c.l.b16 %v2842
      %v3276 = vunpack.c.h.b16 %v2842
      %v3277 = vunpack.c.l.b16 %v2843
      %v3278 = vunpack.c.h.b16 %v2843
      %v3279 = vunpack.c.l.b16 %v2844
      %v3280 = vunpack.c.h.b16 %v2844
      %v3281 = vunpack.c.l.b16 %v2845
      %v3282 = vunpack.c.h.b16 %v2845
      %v3283 = vunpack.c.l.b16 %v2846
      %v3284 = vunpack.c.h.b16 %v2846
      %v3285 = vunpack.c.l.b16 %v2847
      %v3286 = vunpack.c.h.b16 %v2847
      %v3287 = vunpack.c.l.b16 %v2848
      %v3288 = vunpack.c.h.b16 %v2848
      %v3289 = vunpack.c.l.b16 %v2849
      %v3290 = vunpack.c.h.b16 %v2849
      %v3291 = vunpack.c.l.b16 %v2850
      %v3292 = vunpack.c.h.b16 %v2850
      %v3293 = vunpack.c.l.b16 %v2851
      %v3294 = vunpack.c.h.b16 %v2851
      %v3295 = vunpack.c.l.b16 %v2852
      %v3296 = vunpack.c.h.b16 %v2852
      %v3297 = vunpack.c.l.b16 %v2853
      %v3298 = vunpack.c.h.b16 %v2853
      %v3299 = vunpack.c.l.b16 %v2854
      %v3300 = vunpack.c.h.b16 %v2854
      %v3301 = vunpack.c.l.b16 %v2855
      %v3302 = vunpack.c.h.b16 %v2855
      %v3303 = vunpack.c.l.b16 %v2856
      %v3304 = vunpack.c.h.b16 %v2856
      %v3305 = vunpack.c.l.b16 %v2857
      %v3306 = vunpack.c.h.b16 %v2857
      %v3307 = vunpack.c.l.b16 %v2858
      %v3308 = vunpack.c.h.b16 %v2858
      %v3309 = vunpack.c.l.b16 %v2859
      %v3310 = vunpack.c.h.b16 %v2859
      %v3311 = vunpack.c.l.b16 %v2860
      %v3312 = vunpack.c.h.b16 %v2860
      %v3313 = vunpack.c.l.b16 %v2861
      %v3314 = vunpack.c.h.b16 %v2861
      %v3315 = vunpack.c.l.b16 %v2862
      %v3316 = vunpack.c.h.b16 %v2862
      %v3317 = vunpack.c.l.b16 %v2863
      %v3318 = vunpack.c.h.b16 %v2863
      %v3319 = vunpack.c.l.b16 %v2864
      %v3320 = vunpack.c.h.b16 %v2864
      %v3321 = vunpack.c.l.b16 %v2865
      %v3322 = vunpack.c.h.b16 %v2865
      %v3323 = vunpack.c.l.b16 %v2866
      %v3324 = vunpack.c.h.b16 %v2866
      %v3325 = vunpack.c.l.b16 %v2867
      %v3326 = vunpack.c.h.b16 %v2867
      %v3327 = vunpack.c.l.b16 %v2868
      %v3328 = vunpack.c.h.b16 %v2868
      %v3329 = vunpack.c.l.b16 %v2869
      %v3330 = vunpack.c.h.b16 %v2869
      %v3331 = vunpack.c.l.b16 %v2870
      %v3332 = vunpack.c.h.b16 %v2870
      %v3333 = vunpack.c.l.b16 %v2871
      %v3334 = vunpack.c.h.b16 %v2871
      %v3335 = vunpack.c.l.b16 %v2872
      %v3336 = vunpack.c.h.b16 %v2872
      %v3337 = vunpack.c.l.b16 %v2873
      %v3338 = vunpack.c.h.b16 %v2873
      %v3339 = vunpack.c.l.b16 %v2874
      %v3340 = vunpack.c.h.b16 %v2874
      %v3341 = vunpack.c.l.b16 %v2875
      %v3342 = vunpack.c.h.b16 %v2875
      %v3343 = vunpack.c.l.b16 %v2876
      %v3344 = vunpack.c.h.b16 %v2876
      %v3345 = vunpack.c.l.b16 %v2877
      %v3346 = vunpack.c.h.b16 %v2877
      %v3347 = vunpack.c.l.b16 %v2878
      %v3348 = vunpack.c.h.b16 %v2878
      %v3349 = vunpack.c.l.b16 %v2879
      %v3350 = vunpack.c.h.b16 %v2879
      %v3351 = vunpack.c.l.b16 %v2880
      %v3352 = vunpack.c.h.b16 %v2880
      %v3353 = vunpack.c.l.b16 %v2881
      %v3354 = vunpack.c.h.b16 %v2881
      %v3355 = vunpack.c.l.b16 %v2882
      %v3356 = vunpack.c.h.b16 %v2882
      %v3357 = vunpack.c.l.b16 %v2883
      %v3358 = vunpack.c.h.b16 %v2883
      %v3359 = vunpack.c.l.b16 %v2884
      %v3360 = vunpack.c.h.b16 %v2884
      %v3361 = vunpack.c.l.b16 %v2885
      %v3362 = vunpack.c.h.b16 %v2885
      %v3363 = vunpack.c.l.b16 %v2886
      %v3364 = vunpack.c.h.b16 %v2886
      %v3365 = vunpack.c.l.b16 %v2887
      %v3366 = vunpack.c.h.b16 %v2887
      %v3367 = vunpack.c.l.b16 %v2888
      %v3368 = vunpack.c.h.b16 %v2888
      %v3369 = vunpack.c.l.b16 %v2889
      %v3370 = vunpack.c.h.b16 %v2889
      %v3371 = vunpack.c.l.b16 %v2890
      %v3372 = vunpack.c.h.b16 %v2890
      %v3373 = vunpack.c.l.b16 %v2891
      %v3374 = vunpack.c.h.b16 %v2891
      %v3375 = vunpack.c.l.b16 %v2892
      %v3376 = vunpack.c.h.b16 %v2892
      %v3377 = vunpack.c.l.b16 %v2893
      %v3378 = vunpack.c.h.b16 %v2893
      %v3379 = vunpack.c.l.b16 %v2894
      %v3380 = vunpack.c.h.b16 %v2894
      %v3381 = vunpack.c.l.b16 %v2895
      %v3382 = vunpack.c.h.b16 %v2895
      %v3383 = vunpack.c.l.b16 %v2896
      %v3384 = vunpack.c.h.b16 %v2896
      %v3385 = vunpack.c.l.b16 %v2897
      %v3386 = vunpack.c.h.b16 %v2897
      %v3387 = vunpack.c.l.b16 %v2898
      %v3388 = vunpack.c.h.b16 %v2898
      %v3389 = vunpack.c.l.b16 %v2899
      %v3390 = vunpack.c.h.b16 %v2899
      %v3391 = vunpack.c.l.b16 %v2900
      %v3392 = vunpack.c.h.b16 %v2900
      %v3393 = vunpack.c.l.b16 %v2901
      %v3394 = vunpack.c.h.b16 %v2901
      %v3395 = vunpack.c.l.b16 %v2902
      %v3396 = vunpack.c.h.b16 %v2902
      %v3397 = vunpack.c.l.b16 %v2903
      %v3398 = vunpack.c.h.b16 %v2903
      %v3399 = vunpack.c.l.b16 %v2904
      %v3400 = vunpack.c.h.b16 %v2904
      %v3401 = vunpack.c.l.b16 %v2905
      %v3402 = vunpack.c.h.b16 %v2905
      %v3403 = vunpack.c.l.b16 %v2906
      %v3404 = vunpack.c.h.b16 %v2906
      %v3405 = vunpack.c.l.b16 %v2907
      %v3406 = vunpack.c.h.b16 %v2907
      %v3407 = vunpack.c.l.b16 %v2908
      %v3408 = vunpack.c.h.b16 %v2908
      %v3409 = vunpack.c.l.b16 %v2909
      %v3410 = vunpack.c.h.b16 %v2909
      %v3411 = vunpack.c.l.b16 %v2910
      %v3412 = vunpack.c.h.b16 %v2910
      %v3413 = vunpack.c.l.b16 %v2911
      %v3414 = vunpack.c.h.b16 %v2911
      %v3415 = vunpack.c.l.b16 %v2912
      %v3416 = vunpack.c.h.b16 %v2912
      %v3417 = vunpack.c.l.b16 %v2913
      %v3418 = vunpack.c.h.b16 %v2913
      %v3419 = vunpack.c.l.b16 %v2914
      %v3420 = vunpack.c.h.b16 %v2914
      %v3421 = vunpack.c.l.b16 %v2915
      %v3422 = vunpack.c.h.b16 %v2915
      %v3423 = vunpack.c.l.b16 %v2916
      %v3424 = vunpack.c.h.b16 %v2916
      %v3425 = vunpack.c.l.b16 %v2917
      %v3426 = vunpack.c.h.b16 %v2917
      %v3427 = vunpack.c.l.b16 %v2918
      %v3428 = vunpack.c.h.b16 %v2918
      %v3429 = vunpack.c.l.b16 %v2919
      %v3430 = vunpack.c.h.b16 %v2919
      %v3431 = vunpack.c.l.b16 %v2920
      %v3432 = vunpack.c.h.b16 %v2920
      %v3433 = vunpack.c.l.b16 %v2921
      %v3434 = vunpack.c.h.b16 %v2921
      %v3435 = vunpack.c.l.b16 %v2922
      %v3436 = vunpack.c.h.b16 %v2922
      %v3437 = vunpack.c.l.b16 %v2923
      %v3438 = vunpack.c.h.b16 %v2923
      %v3439 = vunpack.c.l.b16 %v2924
      %v3440 = vunpack.c.h.b16 %v2924
      %v3441 = vunpack.c.l.b16 %v2925
      %v3442 = vunpack.c.h.b16 %v2925
      %v3443 = vunpack.c.l.b16 %v2926
      %v3444 = vunpack.c.h.b16 %v2926
      %v3445 = vunpack.c.l.b16 %v2927
      %v3446 = vunpack.c.h.b16 %v2927
      %v3447 = vunpack.c.l.b16 %v2928
      %v3448 = vunpack.c.h.b16 %v2928
      %v3449 = vunpack.c.l.b16 %v2929
      %v3450 = vunpack.c.h.b16 %v2929
      %v3451 = vunpack.c.l.b16 %v2930
      %v3452 = vunpack.c.h.b16 %v2930
      %v3453 = vunpack.c.l.b16 %v2931
      %v3454 = vunpack.c.h.b16 %v2931
      %v3455 = vunpack.c.l.b16 %v2932
      %v3456 = vunpack.c.h.b16 %v2932
      %v3457 = vunpack.c.l.b16 %v2933
      %v3458 = vunpack.c.h.b16 %v2933
      %v3459 = vunpack.c.l.b16 %v2934
      %v3460 = vunpack.c.h.b16 %v2934
      %v3461 = vunpack.c.l.b16 %v2935
      %v3462 = vunpack.c.h.b16 %v2935
      %v3463 = vunpack.c.l.b16 %v2936
      %v3464 = vunpack.c.h.b16 %v2936
      %v3465 = vunpack.c.l.b16 %v2937
      %v3466 = vunpack.c.h.b16 %v2937
      %v3467 = vunpack.c.l.b16 %v2938
      %v3468 = vunpack.c.h.b16 %v2938
      %v3469 = vunpack.c.l.b16 %v2939
      %v3470 = vunpack.c.h.b16 %v2939
      %v3471 = vunpack.c.l.b16 %v2940
      %v3472 = vunpack.c.h.b16 %v2940
      %v3473 = vunpack.c.l.b16 %v2941
      %v3474 = vunpack.c.h.b16 %v2941
      %v3475 = vunpack.c.l.b16 %v2942
      %v3476 = vunpack.c.h.b16 %v2942
      %v3477 = vunpack.c.l.b16 %v2943
      %v3478 = vunpack.c.h.b16 %v2943
      %v3479 = vunpack.c.l.b16 %v2944
      %v3480 = vunpack.c.h.b16 %v2944
      %v3481 = vunpack.c.l.b16 %v2945
      %v3482 = vunpack.c.h.b16 %v2945
      %v3483 = vunpack.c.l.b16 %v2946
      %v3484 = vunpack.c.h.b16 %v2946
      %v3485 = vunpack.c.l.b16 %v2947
      %v3486 = vunpack.c.h.b16 %v2947
      %v3487 = vunpack.c.l.b16 %v2948
      %v3488 = vunpack.c.h.b16 %v2948
      %v3489 = vunpack.c.l.b16 %v2949
      %v3490 = vunpack.c.h.b16 %v2949
      %v3491 = vunpack.c.l.b16 %v2950
      %v3492 = vunpack.c.h.b16 %v2950
      %v3493 = vunpack.c.l.b16 %v2951
      %v3494 = vunpack.c.h.b16 %v2951
      %v3495 = vunpack.c.l.b16 %v2952
      %v3496 = vunpack.c.h.b16 %v2952
      %v3497 = vunpack.c.l.b16 %v2953
      %v3498 = vunpack.c.h.b16 %v2953
      %v3499 = vunpack.c.l.b16 %v2954
      %v3500 = vunpack.c.h.b16 %v2954
      %v3501 = vunpack.c.l.b16 %v2955
      %v3502 = vunpack.c.h.b16 %v2955
      %v3503 = vunpack.c.l.b16 %v2956
      %v3504 = vunpack.c.h.b16 %v2956
      %v3505 = vunpack.c.l.b16 %v2957
      %v3506 = vunpack.c.h.b16 %v2957
      %v3507 = vunpack.c.l.b16 %v2958
      %v3508 = vunpack.c.h.b16 %v2958
      %v3509 = vunpack.c.l.b16 %v2959
      %v3510 = vunpack.c.h.b16 %v2959
      %v3511 = vunpack.c.l.b16 %v2960
      %v3512 = vunpack.c.h.b16 %v2960
      %v3513 = vunpack.c.l.b16 %v2961
      %v3514 = vunpack.c.h.b16 %v2961
      %v3515 = vunpack.c.l.b16 %v2962
      %v3516 = vunpack.c.h.b16 %v2962
      %v3517 = vunpack.c.l.b16 %v2963
      %v3518 = vunpack.c.h.b16 %v2963
      %v3519 = vunpack.c.l.b16 %v2964
      %v3520 = vunpack.c.h.b16 %v2964
      %v3521 = vunpack.c.l.b16 %v2965
      %v3522 = vunpack.c.h.b16 %v2965
      %v3523 = vunpack.c.l.b16 %v2966
      %v3524 = vunpack.c.h.b16 %v2966
      %v3525 = vunpack.c.l.b16 %v2967
      %v3526 = vunpack.c.h.b16 %v2967
      %v3527 = vunpack.c.l.b16 %v2968
      %v3528 = vunpack.c.h.b16 %v2968
      %v3529 = vunpack.c.l.b16 %v2969
      %v3530 = vunpack.c.h.b16 %v2969
      %v3531 = vunpack.c.l.b16 %v2970
      %v3532 = vunpack.c.h.b16 %v2970
      %v3533 = vunpack.c.l.b16 %v2971
      %v3534 = vunpack.c.h.b16 %v2971
      %v3535 = vunpack.c.l.b16 %v2972
      %v3536 = vunpack.c.h.b16 %v2972
      %v3537 = vunpack.c.l.b16 %v2973
      %v3538 = vunpack.c.h.b16 %v2973
      %v3539 = vunpack.c.l.b16 %v2974
      %v3540 = vunpack.c.h.b16 %v2974
      %v3541 = vunpack.c.l.b16 %v2975
      %v3542 = vunpack.c.h.b16 %v2975
      %v3543 = vunpack.c.l.b16 %v2976
      %v3544 = vunpack.c.h.b16 %v2976
      %v3545 = vunpack.c.l.b16 %v2977
      %v3546 = vunpack.c.h.b16 %v2977
      %v3547 = vunpack.c.l.b16 %v2978
      %v3548 = vunpack.c.h.b16 %v2978
      %v3549 = vunpack.c.l.b16 %v2979
      %v3550 = vunpack.c.h.b16 %v2979
      %v3551 = vunpack.c.l.b16 %v2980
      %v3552 = vunpack.c.h.b16 %v2980
      %v3553 = vunpack.c.l.b16 %v2981
      %v3554 = vunpack.c.h.b16 %v2981
      %v3555 = vunpack.c.l.b16 %v2982
      %v3556 = vunpack.c.h.b16 %v2982
      %v3557 = vunpack.c.l.b16 %v2983
      %v3558 = vunpack.c.h.b16 %v2983
      %v3559 = vunpack.c.l.b16 %v2984
      %v3560 = vunpack.c.h.b16 %v2984
      %v3561 = vunpack.c.l.b16 %v2985
      %v3562 = vunpack.c.h.b16 %v2985
      %v3563 = vunpack.c.l.b16 %v2986
      %v3564 = vunpack.c.h.b16 %v2986
      %v3565 = vunpack.c.l.b16 %v2987
      %v3566 = vunpack.c.h.b16 %v2987
      %v3567 = vunpack.c.l.b16 %v2988
      %v3568 = vunpack.c.h.b16 %v2988
      %v3569 = vunpack.c.l.b16 %v2989
      %v3570 = vunpack.c.h.b16 %v2989
      %v3571 = vunpack.c.l.b16 %v2990
      %v3572 = vunpack.c.h.b16 %v2990
      %v3573 = vunpack.c.l.b16 %v2991
      %v3574 = vunpack.c.h.b16 %v2991
      %v3575 = vunpack.c.l.b16 %v2992
      %v3576 = vunpack.c.h.b16 %v2992
      %v3577 = vunpack.c.l.b16 %v2993
      %v3578 = vunpack.c.h.b16 %v2993
      %v3579 = vunpack.c.l.b16 %v2994
      %v3580 = vunpack.c.h.b16 %v2994
      %v3581 = vunpack.c.l.b16 %v2995
      %v3582 = vunpack.c.h.b16 %v2995
      %v3583 = vunpack.c.l.b16 %v2996
      %v3584 = vunpack.c.h.b16 %v2996
      %v3585 = vunpack.c.l.b16 %v2997
      %v3586 = vunpack.c.h.b16 %v2997
      %v3587 = vunpack.c.l.b16 %v2998
      %v3588 = vunpack.c.h.b16 %v2998
      %v3589 = vunpack.c.l.b16 %v2999
      %v3590 = vunpack.c.h.b16 %v2999
      %v3591 = vunpack.c.l.b16 %v3000
      %v3592 = vunpack.c.h.b16 %v3000
      %v3593 = vunpack.c.l.b16 %v3001
      %v3594 = vunpack.c.h.b16 %v3001
      %v3595 = vunpack.c.l.b16 %v3002
      %v3596 = vunpack.c.h.b16 %v3002
      %v3597 = vunpack.c.l.b16 %v3003
      %v3598 = vunpack.c.h.b16 %v3003
      %v3599 = vunpack.c.l.b16 %v3004
      %v3600 = vunpack.c.h.b16 %v3004
      %v3601 = vunpack.c.l.b16 %v3005
      %v3602 = vunpack.c.h.b16 %v3005
      %v3603 = vunpack.c.l.b16 %v3006
      %v3604 = vunpack.c.h.b16 %v3006
      %v3605 = vpack.c.b16 %v3225, %v3221
      %v3606 = vpack.c.b16 %v3226, %v3222
      %v3607 = vpack.c.b16 %v3227, %v3223
      %v3608 = vpack.c.b16 %v3228, %v3224
      %v3609 = vpack.c.b16 %v3233, %v3229
      %v3610 = vpack.c.b16 %v3234, %v3230
      %v3611 = vpack.c.b16 %v3235, %v3231
      %v3612 = vpack.c.b16 %v3236, %v3232
      %v3613 = vpack.c.b16 %v3241, %v3237
      %v3614 = vpack.c.b16 %v3242, %v3238
      %v3615 = vpack.c.b16 %v3243, %v3239
      %v3616 = vpack.c.b16 %v3244, %v3240
      %v3617 = vpack.c.b16 %v3249, %v3245
      %v3618 = vpack.c.b16 %v3250, %v3246
      %v3619 = vpack.c.b16 %v3251, %v3247
      %v3620 = vpack.c.b16 %v3252, %v3248
      %v3621 = vpack.c.b16 %v3257, %v3253
      %v3622 = vpack.c.b16 %v3258, %v3254
      %v3623 = vpack.c.b16 %v3259, %v3255
      %v3624 = vpack.c.b16 %v3260, %v3256
      %v3625 = vpack.c.b16 %v3265, %v3261
      %v3626 = vpack.c.b16 %v3266, %v3262
      %v3627 = vpack.c.b16 %v3267, %v3263
      %v3628 = vpack.c.b16 %v3268, %v3264
      %v3629 = vpack.c.b16 %v3273, %v3269
      %v3630 = vpack.c.b16 %v3274, %v3270
      %v3631 = vpack.c.b16 %v3275, %v3271
      %v3632 = vpack.c.b16 %v3276, %v3272
      %v3633 = vpack.c.b16 %v3281, %v3277
      %v3634 = vpack.c.b16 %v3282, %v3278
      %v3635 = vpack.c.b16 %v3283, %v3279
      %v3636 = vpack.c.b16 %v3284, %v3280
      %v3637 = vpack.c.b16 %v3289, %v3285
      %v3638 = vpack.c.b16 %v3290, %v3286
      %v3639 = vpack.c.b16 %v3291, %v3287
      %v3640 = vpack.c.b16 %v3292, %v3288
      %v3641 = vpack.c.b16 %v3297, %v3293
      %v3642 = vpack.c.b16 %v3298, %v3294
      %v3643 = vpack.c.b16 %v3299, %v3295
      %v3644 = vpack.c.b16 %v3300, %v3296
      %v3645 = vpack.c.b16 %v3305, %v3301
      %v3646 = vpack.c.b16 %v3306, %v3302
      %v3647 = vpack.c.b16 %v3307, %v3303
      %v3648 = vpack.c.b16 %v3308, %v3304
      %v3649 = vpack.c.b16 %v3313, %v3309
      %v3650 = vpack.c.b16 %v3314, %v3310
      %v3651 = vpack.c.b16 %v3315, %v3311
      %v3652 = vpack.c.b16 %v3316, %v3312
      %v3653 = vpack.c.b16 %v3321, %v3317
      %v3654 = vpack.c.b16 %v3322, %v3318
      %v3655 = vpack.c.b16 %v3323, %v3319
      %v3656 = vpack.c.b16 %v3324, %v3320
      %v3657 = vpack.c.b16 %v3329, %v3325
      %v3658 = vpack.c.b16 %v3330, %v3326
      %v3659 = vpack.c.b16 %v3331, %v3327
      %v3660 = vpack.c.b16 %v3332, %v3328
      %v3661 = vpack.c.b16 %v3337, %v3333
      %v3662 = vpack.c.b16 %v3338, %v3334
      %v3663 = vpack.c.b16 %v3339, %v3335
      %v3664 = vpack.c.b16 %v3340, %v3336
      %v3665 = vpack.c.b16 %v3345, %v3341
      %v3666 = vpack.c.b16 %v3346, %v3342
      %v3667 = vpack.c.b16 %v3347, %v3343
      %v3668 = vpack.c.b16 %v3348, %v3344
      %v3669 = vpack.c.b16 %v3353, %v3349
      %v3670 = vpack.c.b16 %v3354, %v3350
      %v3671 = vpack.c.b16 %v3355, %v3351
      %v3672 = vpack.c.b16 %v3356, %v3352
      %v3673 = vpack.c.b16 %v3361, %v3357
      %v3674 = vpack.c.b16 %v3362, %v3358
      %v3675 = vpack.c.b16 %v3363, %v3359
      %v3676 = vpack.c.b16 %v3364, %v3360
      %v3677 = vpack.c.b16 %v3369, %v3365
      %v3678 = vpack.c.b16 %v3370, %v3366
      %v3679 = vpack.c.b16 %v3371, %v3367
      %v3680 = vpack.c.b16 %v3372, %v3368
      %v3681 = vpack.c.b16 %v3377, %v3373
      %v3682 = vpack.c.b16 %v3378, %v3374
      %v3683 = vpack.c.b16 %v3379, %v3375
      %v3684 = vpack.c.b16 %v3380, %v3376
      %v3685 = vpack.c.b16 %v3385, %v3381
      %v3686 = vpack.c.b16 %v3386, %v3382
      %v3687 = vpack.c.b16 %v3387, %v3383
      %v3688 = vpack.c.b16 %v3388, %v3384
      %v3689 = vpack.c.b16 %v3393, %v3389
      %v3690 = vpack.c.b16 %v3394, %v3390
      %v3691 = vpack.c.b16 %v3395, %v3391
      %v3692 = vpack.c.b16 %v3396, %v3392
      %v3693 = vpack.c.b16 %v3401, %v3397
      %v3694 = vpack.c.b16 %v3402, %v3398
      %v3695 = vpack.c.b16 %v3403, %v3399
      %v3696 = vpack.c.b16 %v3404, %v3400
      %v3697 = vpack.c.b16 %v3409, %v3405
      %v3698 = vpack.c.b16 %v3410, %v3406
      %v3699 = vpack.c.b16 %v3411, %v3407
      %v3700 = vpack.c.b16 %v3412, %v3408
      %v3701 = vpack.c.b16 %v3417, %v3413
      %v3702 = vpack.c.b16 %v3418, %v3414
      %v3703 = vpack.c.b16 %v3419, %v3415
      %v3704 = vpack.c.b16 %v3420, %v3416
      %v3705 = vpack.c.b16 %v3425, %v3421
      %v3706 = vpack.c.b16 %v3426, %v3422
      %v3707 = vpack.c.b16 %v3427, %v3423
      %v3708 = vpack.c.b16 %v3428, %v3424
      %v3709 = vpack.c.b16 %v3433, %v3429
      %v3710 = vpack.c.b16 %v3434, %v3430
      %v3711 = vpack.c.b16 %v3435, %v3431
      %v3712 = vpack.c.b16 %v3436, %v3432
      %v3713 = vpack.c.b16 %v3441, %v3437
      %v3714 = vpack.c.b16 %v3442, %v3438
      %v3715 = vpack.c.b16 %v3443, %v3439
      %v3716 = vpack.c.b16 %v3444, %v3440
      %v3717 = vpack.c.b16 %v3449, %v3445
      %v3718 = vpack.c.b16 %v3450, %v3446
      %v3719 = vpack.c.b16 %v3451, %v3447
      %v3720 = vpack.c.b16 %v3452, %v3448
      %v3721 = vpack.c.b16 %v3457, %v3453
      %v3722 = vpack.c.b16 %v3458, %v3454
      %v3723 = vpack.c.b16 %v3459, %v3455
      %v3724 = vpack.c.b16 %v3460, %v3456
      %v3725 = vpack.c.b16 %v3465, %v3461
      %v3726 = vpack.c.b16 %v3466, %v3462
      %v3727 = vpack.c.b16 %v3467, %v3463
      %v3728 = vpack.c.b16 %v3468, %v3464
      %v3729 = vpack.c.b16 %v3473, %v3469
      %v3730 = vpack.c.b16 %v3474, %v3470
      %v3731 = vpack.c.b16 %v3475, %v3471
      %v3732 = vpack.c.b16 %v3476, %v3472
      %v3733 = vpack.c.b16 %v3481, %v3477
      %v3734 = vpack.c.b16 %v3482, %v3478
      %v3735 = vpack.c.b16 %v3483, %v3479
      %v3736 = vpack.c.b16 %v3484, %v3480
      %v3737 = vpack.c.b16 %v3489, %v3485
      %v3738 = vpack.c.b16 %v3490, %v3486
      %v3739 = vpack.c.b16 %v3491, %v3487
      %v3740 = vpack.c.b16 %v3492, %v3488
      %v3741 = vpack.c.b16 %v3497, %v3493
      %v3742 = vpack.c.b16 %v3498, %v3494
      %v3743 = vpack.c.b16 %v3499, %v3495
      %v3744 = vpack.c.b16 %v3500, %v3496
      %v3745 = vpack.c.b16 %v3505, %v3501
      %v3746 = vpack.c.b16 %v3506, %v3502
      %v3747 = vpack.c.b16 %v3507, %v3503
      %v3748 = vpack.c.b16 %v3508, %v3504
      %v3749 = vpack.c.b16 %v3513, %v3509
      %v3750 = vpack.c.b16 %v3514, %v3510
      %v3751 = vpack.c.b16 %v3515, %v3511
      %v3752 = vpack.c.b16 %v3516, %v3512
      %v3753 = vpack.c.b16 %v3521, %v3517
      %v3754 = vpack.c.b16 %v3522, %v3518
      %v3755 = vpack.c.b16 %v3523, %v3519
      %v3756 = vpack.c.b16 %v3524, %v3520
      %v3757 = vpack.c.b16 %v3529, %v3525
      %v3758 = vpack.c.b16 %v3530, %v3526
      %v3759 = vpack.c.b16 %v3531, %v3527
      %v3760 = vpack.c.b16 %v3532, %v3528
      %v3761 = vpack.c.b16 %v3537, %v3533
      %v3762 = vpack.c.b16 %v3538, %v3534
      %v3763 = vpack.c.b16 %v3539, %v3535
      %v3764 = vpack.c.b16 %v3540, %v3536
      %v3765 = vpack.c.b16 %v3545, %v3541
      %v3766 = vpack.c.b16 %v3546, %v3542
      %v3767 = vpack.c.b16 %v3547, %v3543
      %v3768 = vpack.c.b16 %v3548, %v3544
      %v3769 = vpack.c.b16 %v3553, %v3549
      %v3770 = vpack.c.b16 %v3554, %v3550
      %v3771 = vpack.c.b16 %v3555, %v3551
      %v3772 = vpack.c.b16 %v3556, %v3552
      %v3773 = vpack.c.b16 %v3561, %v3557
      %v3774 = vpack.c.b16 %v3562, %v3558
      %v3775 = vpack.c.b16 %v3563, %v3559
      %v3776 = vpack.c.b16 %v3564, %v3560
      %v3777 = vpack.c.b16 %v3569, %v3565
      %v3778 = vpack.c.b16 %v3570, %v3566
      %v3779 = vpack.c.b16 %v3571, %v3567
      %v3780 = vpack.c.b16 %v3572, %v3568
      %v3781 = vpack.c.b16 %v3577, %v3573
      %v3782 = vpack.c.b16 %v3578, %v3574
      %v3783 = vpack.c.b16 %v3579, %v3575
      %v3784 = vpack.c.b16 %v3580, %v3576
      %v3785 = vpack.c.b16 %v3585, %v3581
      %v3786 = vpack.c.b16 %v3586, %v3582
      %v3787 = vpack.c.b16 %v3587, %v3583
      %v3788 = vpack.c.b16 %v3588, %v3584
      %v3789 = vpack.c.b16 %v3593, %v3589
      %v3790 = vpack.c.b16 %v3594, %v3590
      %v3791 = vpack.c.b16 %v3595, %v3591
      %v3792 = vpack.c.b16 %v3596, %v3592
      %v3793 = vpack.c.b16 %v3601, %v3597
      %v3794 = vpack.c.b16 %v3602, %v3598
      %v3795 = vpack.c.b16 %v3603, %v3599
      %v3796 = vpack.c.b16 %v3604, %v3600
      %3989 = vmatprep.subr.bf16.mxu0 %v3606
      %3990 = vmatpush1.bf16.msra.mxu0 %v3605
      %3991 = vmatprep.subr.bf16.mxu0 %v3610
      %3992 = vmatpush1.bf16.msra.mxu0 %v3609
      %3993 = vmatprep.subr.bf16.mxu0 %v3614
      %3994 = vmatpush1.bf16.msra.mxu0 %v3613
      %3995 = vmatprep.subr.bf16.mxu0 %v3618
      %3996 = vmatpush1.bf16.msra.mxu0 %v3617
      %3997 = vmatprep.subr.bf16.mxu0 %v3622
      %3998 = vmatpush1.bf16.msra.mxu0 %v3621
      %3999 = vmatprep.subr.bf16.mxu0 %v3626
      %4000 = vmatpush1.bf16.msra.mxu0 %v3625
      %4001 = vmatprep.subr.bf16.mxu0 %v3630
      %4002 = vmatpush1.bf16.msra.mxu0 %v3629
      %4003 = vmatprep.subr.bf16.mxu0 %v3634
      %4004 = vmatpush1.bf16.msra.mxu0 %v3633
      %4005 = vmatprep.subr.bf16.mxu0 %v3638
      %4006 = vmatpush1.bf16.msra.mxu0 %v3637
      %4007 = vmatprep.subr.bf16.mxu0 %v3642
      %4008 = vmatpush1.bf16.msra.mxu0 %v3641
      %4009 = vmatprep.subr.bf16.mxu0 %v3646
      %4010 = vmatpush1.bf16.msra.mxu0 %v3645
      %4011 = vmatprep.subr.bf16.mxu0 %v3650
      %4012 = vmatpush1.bf16.msra.mxu0 %v3649
      %4013 = vmatprep.subr.bf16.mxu0 %v3654
      %4014 = vmatpush1.bf16.msra.mxu0 %v3653
      %4015 = vmatprep.subr.bf16.mxu0 %v3658
      %4016 = vmatpush1.bf16.msra.mxu0 %v3657
      %4017 = vmatprep.subr.bf16.mxu0 %v3662
      %4018 = vmatpush1.bf16.msra.mxu0 %v3661
      %4019 = vmatprep.subr.bf16.mxu0 %v3666
      %4020 = vmatpush1.bf16.msra.mxu0 %v3665
      %4021 = vmatprep.mubr.bf16.mxu0 %v2768
      %4022 = vmatmul.mubr.bf16.gmra.mrb[0].mxu0 %v2767
      %v4023 = vpop.f32.mrb[0].mxu0
      %v4024 = vadd.f32 %v3012, %v4023
      %v4025 = vpop.f32.mrb[0].mxu0
      %v4026 = vadd.f32 %v3016, %v4025
      %v4027 = vpop.f32.mrb[0].mxu0
      %v4028 = vadd.f32 %v3012, %v4027
      %v4029 = vpop.f32.mrb[0].mxu0
      %v4030 = vadd.f32 %v3016, %v4029
      %4031 = vmatprep.mubr.bf16.mxu0 %v2774
      %4032 = vmatmul.mubr.bf16.gmra.mrb[0].mxu0 %v2773
      %v4033 = vpop.f32.mrb[0].mxu0
      %v4034 = vadd.f32 %v3012, %v4033
      %v4035 = vpop.f32.mrb[0].mxu0
      %v4036 = vadd.f32 %v3016, %v4035
      %v4037 = vpop.f32.mrb[0].mxu0
      %v4038 = vadd.f32 %v3012, %v4037
      %v4039 = vpop.f32.mrb[0].mxu0
      %v4040 = vadd.f32 %v3016, %v4039
      %4041 = vmatprep.mubr.bf16.mxu0 %v2770
      %4042 = vmatmul.mubr.bf16.gmra.mrb[0].mxu0 %v2769
      %v4043 = vpop.f32.mrb[0].mxu0
      %v4044 = vadd.f32 %v3012, %v4043
      %v4045 = vpop.f32.mrb[0].mxu0
      %v4046 = vadd.f32 %v3016, %v4045
      %v4047 = vpop.f32.mrb[0].mxu0
      %v4048 = vadd.f32 %v3012, %v4047
      %v4049 = vpop.f32.mrb[0].mxu0
      %v4050 = vadd.f32 %v3016, %v4049
      %4051 = vmatprep.mubr.bf16.mxu0 %v2776
      %4052 = vmatmul.mubr.bf16.gmra.mrb[0].mxu0 %v2775
      %v4053 = vpop.f32.mrb[0].mxu0
      %v4054 = vadd.f32 %v3012, %v4053
      %v4055 = vpop.f32.mrb[0].mxu0
      %v4056 = vadd.f32 %v3016, %v4055
      %v4057 = vpop.f32.mrb[0].mxu0
      %v4058 = vadd.f32 %v3012, %v4057
      %v4059 = vpop.f32.mrb[0].mxu0
      %v4060 = vadd.f32 %v3016, %v4059
      %4061 = vmatprep.mubr.bf16.mxu0 %v2772
      %4062 = vmatmul.mubr.bf16.gmra.mrb[0].mxu0 %v2771
      %v4063 = vpop.f32.mrb[0].mxu0
      %v4064 = vadd.f32 %v3012, %v4063
      %v4065 = vpop.f32.mrb[0].mxu0
      %v4066 = vadd.f32 %v3016, %v4065
      %v4067 = vpop.f32.mrb[0].mxu0
      %v4068 = vadd.f32 %v3012, %v4067
      %v4069 = vpop.f32.mrb[0].mxu0
      %v4070 = vadd.f32 %v3016, %v4069
      %4071 = vmatprep.mubr.bf16.mxu0 %v2778
      %4072 = vmatmul.mubr.bf16.gmra.mrb[0].mxu0 %v2777
      %v4073 = vpop.f32.mrb[0].mxu0
      %v4074 = vadd.f32 %v3012, %v4073
      %v4075 = vpop.f32.mrb[0].mxu0
      %v4076 = vadd.f32 %v3016, %v4075
      %v4077 = vpop.f32.mrb[0].mxu0
      %v4078 = vadd.f32 %v3012, %v4077
      %v4079 = vpop.f32.mrb[0].mxu0
      %v4080 = vadd.f32 %v3016, %v4079
      %4081 = vmatprep.mubr.bf16.mxu0 %v2780
      %4082 = vmatmul.mubr.bf16.gmra.mrb[0].mxu0 %v2779
      %v4083 = vpop.f32.mrb[0].mxu0
      %v4084 = vadd.f32 %v3012, %v4083
      %v4085 = vpop.f32.mrb[0].mxu0
      %v4086 = vadd.f32 %v3016, %v4085
      %v4087 = vpop.f32.mrb[0].mxu0
      %v4088 = vadd.f32 %v3012, %v4087
      %v4089 = vpop.f32.mrb[0].mxu0
      %v4090 = vadd.f32 %v3016, %v4089
      %4091 = vmatprep.mubr.bf16.mxu0 %v2782
      %4092 = vmatmul.mubr.bf16.gmra.mrb[0].mxu0 %v2781
      %v4093 = vpop.f32.mrb[0].mxu0
      %v4094 = vadd.f32 %v3012, %v4093
      %v4095 = vpop.f32.mrb[0].mxu0
      %v4096 = vadd.f32 %v3016, %v4095
      %v4097 = vpop.f32.mrb[0].mxu0
      %v4098 = vadd.f32 %v3012, %v4097
      %v4099 = vpop.f32.mrb[0].mxu0
      %v4100 = vadd.f32 %v3016, %v4099
      %4101 = vmatprep.mubr.bf16.mxu0 %v2784
      %4102 = vmatmul.mubr.bf16.gmra.mrb[0].mxu0 %v2783
      %v4103 = vpop.f32.mrb[0].mxu0
      %v4104 = vadd.f32 %v3012, %v4103
      %v4105 = vpop.f32.mrb[0].mxu0
      %v4106 = vadd.f32 %v3016, %v4105
      %v4107 = vpop.f32.mrb[0].mxu0
      %v4108 = vadd.f32 %v3012, %v4107
      %v4109 = vpop.f32.mrb[0].mxu0
      %v4110 = vadd.f32 %v3016, %v4109
      %4111 = vmatprep.mubr.bf16.mxu0 %v2786
      %4112 = vmatmul.mubr.bf16.gmra.mrb[0].mxu0 %v2785
      %v4113 = vpop.f32.mrb[0].mxu0
      %v4114 = vadd.f32 %v3012, %v4113
      %v4115 = vpop.f32.mrb[0].mxu0
      %v4116 = vadd.f32 %v3016, %v4115
      %v4117 = vpop.f32.mrb[0].mxu0
      %v4118 = vadd.f32 %v3012, %v4117
      %v4119 = vpop.f32.mrb[0].mxu0
      %v4120 = vadd.f32 %v3016, %v4119
      %4121 = vmatprep.mubr.bf16.mxu0 %v2788
      %4122 = vmatmul.mubr.bf16.gmra.mrb[0].mxu0 %v2787
      %v4123 = vpop.f32.mrb[0].mxu0
      %v4124 = vadd.f32 %v3012, %v4123
      %v4125 = vpop.f32.mrb[0].mxu0
      %v4126 = vadd.f32 %v3016, %v4125
      %v4127 = vpop.f32.mrb[0].mxu0
      %v4128 = vadd.f32 %v3012, %v4127
      %v4129 = vpop.f32.mrb[0].mxu0
      %v4130 = vadd.f32 %v3016, %v4129
      %4131 = vmatprep.mubr.bf16.mxu0 %v2790
      %4132 = vmatmul.mubr.bf16.gmra.mrb[0].mxu0 %v2789
      %v4133 = vpop.f32.mrb[0].mxu0
      %v4134 = vadd.f32 %v3012, %v4133
      %v4135 = vpop.f32.mrb[0].mxu0
      %v4136 = vadd.f32 %v3016, %v4135
      %v4137 = vpop.f32.mrb[0].mxu0
      %v4138 = vadd.f32 %v3012, %v4137
      %v4139 = vpop.f32.mrb[0].mxu0
      %v4140 = vadd.f32 %v3016, %v4139
      %4141 = vmatprep.mubr.bf16.mxu0 %v2792
      %4142 = vmatmul.mubr.bf16.gmra.mrb[0].mxu0 %v2791
      %v4143 = vpop.f32.mrb[0].mxu0
      %v4144 = vadd.f32 %v3012, %v4143
      %v4145 = vpop.f32.mrb[0].mxu0
      %v4146 = vadd.f32 %v3016, %v4145
      %v4147 = vpop.f32.mrb[0].mxu0
      %v4148 = vadd.f32 %v3012, %v4147
      %v4149 = vpop.f32.mrb[0].mxu0
      %v4150 = vadd.f32 %v3016, %v4149
      %4151 = vmatprep.mubr.bf16.mxu0 %v2794
      %4152 = vmatmul.mubr.bf16.gmra.mrb[0].mxu0 %v2793
      %v4153 = vpop.f32.mrb[0].mxu0
      %v4154 = vadd.f32 %v3012, %v4153
      %v4155 = vpop.f32.mrb[0].mxu0
      %v4156 = vadd.f32 %v3016, %v4155
      %v4157 = vpop.f32.mrb[0].mxu0
      %v4158 = vadd.f32 %v3012, %v4157
      %v4159 = vpop.f32.mrb[0].mxu0
      %v4160 = vadd.f32 %v3016, %v4159
      %4161 = vmatprep.mubr.bf16.mxu0 %v2796
      %4162 = vmatmul.mubr.bf16.gmra.mrb[0].mxu0 %v2795
      %v4163 = vpop.f32.mrb[0].mxu0
      %v4164 = vadd.f32 %v3012, %v4163
      %v4165 = vpop.f32.mrb[0].mxu0
      %v4166 = vadd.f32 %v3016, %v4165
      %v4167 = vpop.f32.mrb[0].mxu0
      %v4168 = vadd.f32 %v3012, %v4167
      %v4169 = vpop.f32.mrb[0].mxu0
      %v4170 = vadd.f32 %v3016, %v4169
      %4171 = vmatprep.mubr.bf16.mxu0 %v2798
      %4172 = vmatmul.mubr.bf16.gmra.mrb[0].mxu0 %v2797
      %v4173 = vpop.f32.mrb[0].mxu0
      %v4174 = vadd.f32 %v3012, %v4173
      %v4175 = vpop.f32.mrb[0].mxu0
      %v4176 = vadd.f32 %v3016, %v4175
      %v4177 = vpop.f32.mrb[0].mxu0
      %v4178 = vadd.f32 %v3012, %v4177
      %v4179 = vpop.f32.mrb[0].mxu0
      %v4180 = vadd.f32 %v3016, %v4179
      %4181 = vmatprep.mubr.bf16.mxu0 %v2800
      %4182 = vmatmul.mubr.bf16.gmra.mrb[0].mxu0 %v2799
      %v4183 = vpop.f32.mrb[0].mxu0
      %v4184 = vadd.f32 %v3012, %v4183
      %v4185 = vpop.f32.mrb[0].mxu0
      %v4186 = vadd.f32 %v3016, %v4185
      %v4187 = vpop.f32.mrb[0].mxu0
      %v4188 = vadd.f32 %v3012, %v4187
      %v4189 = vpop.f32.mrb[0].mxu0
      %v4190 = vadd.f32 %v3016, %v4189
      %4191 = vmatprep.mubr.bf16.mxu0 %v2802
      %4192 = vmatmul.mubr.bf16.gmra.mrb[0].mxu0 %v2801
      %v4193 = vpop.f32.mrb[0].mxu0
      %v4194 = vadd.f32 %v3012, %v4193
      %v4195 = vpop.f32.mrb[0].mxu0
      %v4196 = vadd.f32 %v3016, %v4195
      %v4197 = vpop.f32.mrb[0].mxu0
      %v4198 = vadd.f32 %v3012, %v4197
      %v4199 = vpop.f32.mrb[0].mxu0
      %v4200 = vadd.f32 %v3016, %v4199
      %4201 = vmatprep.mubr.bf16.mxu0 %v2804
      %4202 = vmatmul.mubr.bf16.gmra.mrb[0].mxu0 %v2803
      %v4203 = vpop.f32.mrb[0].mxu0
      %v4204 = vadd.f32 %v3012, %v4203
      %v4205 = vpop.f32.mrb[0].mxu0
      %v4206 = vadd.f32 %v3016, %v4205
      %v4207 = vpop.f32.mrb[0].mxu0
      %v4208 = vadd.f32 %v3012, %v4207
      %v4209 = vpop.f32.mrb[0].mxu0
      %v4210 = vadd.f32 %v3016, %v4209
      %4211 = vmatprep.mubr.bf16.mxu0 %v2806
      %4212 = vmatmul.mubr.bf16.gmra.mrb[0].mxu0 %v2805
      %v4213 = vpop.f32.mrb[0].mxu0
      %v4214 = vadd.f32 %v3012, %v4213
      %v4215 = vpop.f32.mrb[0].mxu0
      %v4216 = vadd.f32 %v3016, %v4215
      %v4217 = vpop.f32.mrb[0].mxu0
      %v4218 = vadd.f32 %v3012, %v4217
      %v4219 = vpop.f32.mrb[0].mxu0
      %v4220 = vadd.f32 %v3016, %v4219
      %4221 = vdwg.mxu0
      %4222 = vmatprep.subr.bf16.mxu0 %v3670
      %4223 = vmatpush1.bf16.msra.mxu0 %v3669
      %4224 = vmatprep.subr.bf16.mxu0 %v3674
      %4225 = vmatpush1.bf16.msra.mxu0 %v3673
      %4226 = vmatprep.subr.bf16.mxu0 %v3678
      %4227 = vmatpush1.bf16.msra.mxu0 %v3677
      %4228 = vmatprep.subr.bf16.mxu0 %v3682
      %4229 = vmatpush1.bf16.msra.mxu0 %v3681
      %4230 = vmatprep.subr.bf16.mxu0 %v3686
      %4231 = vmatpush1.bf16.msra.mxu0 %v3685
      %4232 = vmatprep.subr.bf16.mxu0 %v3690
      %4233 = vmatpush1.bf16.msra.mxu0 %v3689
      %4234 = vmatprep.subr.bf16.mxu0 %v3694
      %4235 = vmatpush1.bf16.msra.mxu0 %v3693
      %4236 = vmatprep.subr.bf16.mxu0 %v3698
      %4237 = vmatpush1.bf16.msra.mxu0 %v3697
      %4238 = vmatprep.subr.bf16.mxu0 %v3702
      %4239 = vmatpush1.bf16.msra.mxu0 %v3701
      %4240 = vmatprep.subr.bf16.mxu0 %v3706
      %4241 = vmatpush1.bf16.msra.mxu0 %v3705
      %4242 = vmatprep.subr.bf16.mxu0 %v3710
      %4243 = vmatpush1.bf16.msra.mxu0 %v3709
      %4244 = vmatprep.subr.bf16.mxu0 %v3714
      %4245 = vmatpush1.bf16.msra.mxu0 %v3713
      %4246 = vmatprep.subr.bf16.mxu0 %v3718
      %4247 = vmatpush1.bf16.msra.mxu0 %v3717
      %4248 = vmatprep.subr.bf16.mxu0 %v3722
      %4249 = vmatpush1.bf16.msra.mxu0 %v3721
      %4250 = vmatprep.subr.bf16.mxu0 %v3726
      %4251 = vmatpush1.bf16.msra.mxu0 %v3725
      %4252 = vmatprep.subr.bf16.mxu0 %v3730
      %4253 = vmatpush1.bf16.msra.mxu0 %v3729
      %4254 = vmatprep.mubr.bf16.mxu0 %v2770
      %4255 = vmatmul.mubr.bf16.gmra.mrb[0].mxu0 %v2769
      %v4256 = vpop.f32.mrb[0].mxu0
      %v4257 = vadd.f32 %v4024, %v4256
      %v4258 = vpop.f32.mrb[0].mxu0
      %v4259 = vadd.f32 %v4026, %v4258
      %v4260 = vpop.f32.mrb[0].mxu0
      %v4261 = vadd.f32 %v4028, %v4260
      %v4262 = vpop.f32.mrb[0].mxu0
      %v4263 = vadd.f32 %v4030, %v4262
      %4264 = vmatprep.mubr.bf16.mxu0 %v2776
      %4265 = vmatmul.mubr.bf16.gmra.mrb[0].mxu0 %v2775
      %v4266 = vpop.f32.mrb[0].mxu0
      %v4267 = vadd.f32 %v4034, %v4266
      %v4268 = vpop.f32.mrb[0].mxu0
      %v4269 = vadd.f32 %v4036, %v4268
      %v4270 = vpop.f32.mrb[0].mxu0
      %v4271 = vadd.f32 %v4038, %v4270
      %v4272 = vpop.f32.mrb[0].mxu0
      %v4273 = vadd.f32 %v4040, %v4272
      %4274 = vmatprep.mubr.bf16.mxu0 %v2772
      %4275 = vmatmul.mubr.bf16.gmra.mrb[0].mxu0 %v2771
      %v4276 = vpop.f32.mrb[0].mxu0
      %v4277 = vadd.f32 %v4044, %v4276
      %v4278 = vpop.f32.mrb[0].mxu0
      %v4279 = vadd.f32 %v4046, %v4278
      %v4280 = vpop.f32.mrb[0].mxu0
      %v4281 = vadd.f32 %v4048, %v4280
      %v4282 = vpop.f32.mrb[0].mxu0
      %v4283 = vadd.f32 %v4050, %v4282
      %4284 = vmatprep.mubr.bf16.mxu0 %v2778
      %4285 = vmatmul.mubr.bf16.gmra.mrb[0].mxu0 %v2777
      %v4286 = vpop.f32.mrb[0].mxu0
      %v4287 = vadd.f32 %v4054, %v4286
      %v4288 = vpop.f32.mrb[0].mxu0
      %v4289 = vadd.f32 %v4056, %v4288
      %v4290 = vpop.f32.mrb[0].mxu0
      %v4291 = vadd.f32 %v4058, %v4290
      %v4292 = vpop.f32.mrb[0].mxu0
      %v4293 = vadd.f32 %v4060, %v4292
      %4294 = vmatprep.mubr.bf16.mxu0 %v2780
      %4295 = vmatmul.mubr.bf16.gmra.mrb[0].mxu0 %v2779
      %v4296 = vpop.f32.mrb[0].mxu0
      %v4297 = vadd.f32 %v4064, %v4296
      %v4298 = vpop.f32.mrb[0].mxu0
      %v4299 = vadd.f32 %v4066, %v4298
      %v4300 = vpop.f32.mrb[0].mxu0
      %v4301 = vadd.f32 %v4068, %v4300
      %v4302 = vpop.f32.mrb[0].mxu0
      %v4303 = vadd.f32 %v4070, %v4302
      %4304 = vmatprep.mubr.bf16.mxu0 %v2782
      %4305 = vmatmul.mubr.bf16.gmra.mrb[0].mxu0 %v2781
      %v4306 = vpop.f32.mrb[0].mxu0
      %v4307 = vadd.f32 %v4074, %v4306
      %v4308 = vpop.f32.mrb[0].mxu0
      %v4309 = vadd.f32 %v4076, %v4308
      %v4310 = vpop.f32.mrb[0].mxu0
      %v4311 = vadd.f32 %v4078, %v4310
      %v4312 = vpop.f32.mrb[0].mxu0
      %v4313 = vadd.f32 %v4080, %v4312
      %4314 = vmatprep.mubr.bf16.mxu0 %v2784
      %4315 = vmatmul.mubr.bf16.gmra.mrb[0].mxu0 %v2783
      %v4316 = vpop.f32.mrb[0].mxu0
      %v4317 = vadd.f32 %v4084, %v4316
      %v4318 = vpop.f32.mrb[0].mxu0
      %v4319 = vadd.f32 %v4086, %v4318
      %v4320 = vpop.f32.mrb[0].mxu0
      %v4321 = vadd.f32 %v4088, %v4320
      %v4322 = vpop.f32.mrb[0].mxu0
      %v4323 = vadd.f32 %v4090, %v4322
      %4324 = vmatprep.mubr.bf16.mxu0 %v2786
      %4325 = vmatmul.mubr.bf16.gmra.mrb[0].mxu0 %v2785
      %v4326 = vpop.f32.mrb[0].mxu0
      %v4327 = vadd.f32 %v4094, %v4326
      %v4328 = vpop.f32.mrb[0].mxu0
      %v4329 = vadd.f32 %v4096, %v4328
      %v4330 = vpop.f32.mrb[0].mxu0
      %v4331 = vadd.f32 %v4098, %v4330
      %v4332 = vpop.f32.mrb[0].mxu0
      %v4333 = vadd.f32 %v4100, %v4332
      %4334 = vmatprep.mubr.bf16.mxu0 %v2788
      %4335 = vmatmul.mubr.bf16.gmra.mrb[0].mxu0 %v2787
      %v4336 = vpop.f32.mrb[0].mxu0
      %v4337 = vadd.f32 %v4104, %v4336
      %v4338 = vpop.f32.mrb[0].mxu0
      %v4339 = vadd.f32 %v4106, %v4338
      %v4340 = vpop.f32.mrb[0].mxu0
      %v4341 = vadd.f32 %v4108, %v4340
      %v4342 = vpop.f32.mrb[0].mxu0
      %v4343 = vadd.f32 %v4110, %v4342
      %4344 = vmatprep.mubr.bf16.mxu0 %v2790
      %4345 = vmatmul.mubr.bf16.gmra.mrb[0].mxu0 %v2789
      %v4346 = vpop.f32.mrb[0].mxu0
      %v4347 = vadd.f32 %v4114, %v4346
      %v4348 = vpop.f32.mrb[0].mxu0
      %v4349 = vadd.f32 %v4116, %v4348
      %v4350 = vpop.f32.mrb[0].mxu0
      %v4351 = vadd.f32 %v4118, %v4350
      %v4352 = vpop.f32.mrb[0].mxu0
      %v4353 = vadd.f32 %v4120, %v4352
      %4354 = vmatprep.mubr.bf16.mxu0 %v2792
      %4355 = vmatmul.mubr.bf16.gmra.mrb[0].mxu0 %v2791
      %v4356 = vpop.f32.mrb[0].mxu0
      %v4357 = vadd.f32 %v4124, %v4356
      %v4358 = vpop.f32.mrb[0].mxu0
      %v4359 = vadd.f32 %v4126, %v4358
      %v4360 = vpop.f32.mrb[0].mxu0
      %v4361 = vadd.f32 %v4128, %v4360
      %v4362 = vpop.f32.mrb[0].mxu0
      %v4363 = vadd.f32 %v4130, %v4362
      %4364 = vmatprep.mubr.bf16.mxu0 %v2794
      %4365 = vmatmul.mubr.bf16.gmra.mrb[0].mxu0 %v2793
      %v4366 = vpop.f32.mrb[0].mxu0
      %v4367 = vadd.f32 %v4134, %v4366
      %v4368 = vpop.f32.mrb[0].mxu0
      %v4369 = vadd.f32 %v4136, %v4368
      %v4370 = vpop.f32.mrb[0].mxu0
      %v4371 = vadd.f32 %v4138, %v4370
      %v4372 = vpop.f32.mrb[0].mxu0
      %v4373 = vadd.f32 %v4140, %v4372
      %4374 = vmatprep.mubr.bf16.mxu0 %v2796
      %4375 = vmatmul.mubr.bf16.gmra.mrb[0].mxu0 %v2795
      %v4376 = vpop.f32.mrb[0].mxu0
      %v4377 = vadd.f32 %v4144, %v4376
      %v4378 = vpop.f32.mrb[0].mxu0
      %v4379 = vadd.f32 %v4146, %v4378
      %v4380 = vpop.f32.mrb[0].mxu0
      %v4381 = vadd.f32 %v4148, %v4380
      %v4382 = vpop.f32.mrb[0].mxu0
      %v4383 = vadd.f32 %v4150, %v4382
      %4384 = vmatprep.mubr.bf16.mxu0 %v2798
      %4385 = vmatmul.mubr.bf16.gmra.mrb[0].mxu0 %v2797
      %v4386 = vpop.f32.mrb[0].mxu0
      %v4387 = vadd.f32 %v4154, %v4386
      %v4388 = vpop.f32.mrb[0].mxu0
      %v4389 = vadd.f32 %v4156, %v4388
      %v4390 = vpop.f32.mrb[0].mxu0
      %v4391 = vadd.f32 %v4158, %v4390
      %v4392 = vpop.f32.mrb[0].mxu0
      %v4393 = vadd.f32 %v4160, %v4392
      %4394 = vmatprep.mubr.bf16.mxu0 %v2800
      %4395 = vmatmul.mubr.bf16.gmra.mrb[0].mxu0 %v2799
      %v4396 = vpop.f32.mrb[0].mxu0
      %v4397 = vadd.f32 %v4164, %v4396
      %v4398 = vpop.f32.mrb[0].mxu0
      %v4399 = vadd.f32 %v4166, %v4398
      %v4400 = vpop.f32.mrb[0].mxu0
      %v4401 = vadd.f32 %v4168, %v4400
      %v4402 = vpop.f32.mrb[0].mxu0
      %v4403 = vadd.f32 %v4170, %v4402
      %4404 = vmatprep.mubr.bf16.mxu0 %v2802
      %4405 = vmatmul.mubr.bf16.gmra.mrb[0].mxu0 %v2801
      %v4406 = vpop.f32.mrb[0].mxu0
      %v4407 = vadd.f32 %v4174, %v4406
      %v4408 = vpop.f32.mrb[0].mxu0
      %v4409 = vadd.f32 %v4176, %v4408
      %v4410 = vpop.f32.mrb[0].mxu0
      %v4411 = vadd.f32 %v4178, %v4410
      %v4412 = vpop.f32.mrb[0].mxu0
      %v4413 = vadd.f32 %v4180, %v4412
      %4414 = vmatprep.mubr.bf16.mxu0 %v2804
      %4415 = vmatmul.mubr.bf16.gmra.mrb[0].mxu0 %v2803
      %v4416 = vpop.f32.mrb[0].mxu0
      %v4417 = vadd.f32 %v4184, %v4416
      %v4418 = vpop.f32.mrb[0].mxu0
      %v4419 = vadd.f32 %v4186, %v4418
      %v4420 = vpop.f32.mrb[0].mxu0
      %v4421 = vadd.f32 %v4188, %v4420
      %v4422 = vpop.f32.mrb[0].mxu0
      %v4423 = vadd.f32 %v4190, %v4422
      %4424 = vmatprep.mubr.bf16.mxu0 %v2806
      %4425 = vmatmul.mubr.bf16.gmra.mrb[0].mxu0 %v2805
      %v4426 = vpop.f32.mrb[0].mxu0
      %v4427 = vadd.f32 %v4194, %v4426
      %v4428 = vpop.f32.mrb[0].mxu0
      %v4429 = vadd.f32 %v4196, %v4428
      %v4430 = vpop.f32.mrb[0].mxu0
      %v4431 = vadd.f32 %v4198, %v4430
      %v4432 = vpop.f32.mrb[0].mxu0
      %v4433 = vadd.f32 %v4200, %v4432
      %4434 = vmatprep.mubr.bf16.mxu0 %v2808
      %4435 = vmatmul.mubr.bf16.gmra.mrb[0].mxu0 %v2807
      %v4436 = vpop.f32.mrb[0].mxu0
      %v4437 = vadd.f32 %v4204, %v4436
      %v4438 = vpop.f32.mrb[0].mxu0
      %v4439 = vadd.f32 %v4206, %v4438
      %v4440 = vpop.f32.mrb[0].mxu0
      %v4441 = vadd.f32 %v4208, %v4440
      %v4442 = vpop.f32.mrb[0].mxu0
      %v4443 = vadd.f32 %v4210, %v4442
      %4444 = vmatprep.mubr.bf16.mxu0 %v2810
      %4445 = vmatmul.mubr.bf16.gmra.mrb[0].mxu0 %v2809
      %v4446 = vpop.f32.mrb[0].mxu0
      %v4447 = vadd.f32 %v4214, %v4446
      %v4448 = vpop.f32.mrb[0].mxu0
      %v4449 = vadd.f32 %v4216, %v4448
      %v4450 = vpop.f32.mrb[0].mxu0
      %v4451 = vadd.f32 %v4218, %v4450
      %v4452 = vpop.f32.mrb[0].mxu0
      %v4453 = vadd.f32 %v4220, %v4452
      %4454 = vdwg.mxu0
      %4455 = vmatprep.subr.bf16.mxu0 %v3734
      %4456 = vmatpush1.bf16.msra.mxu0 %v3733
      %4457 = vmatprep.subr.bf16.mxu0 %v3738
      %4458 = vmatpush1.bf16.msra.mxu0 %v3737
      %4459 = vmatprep.subr.bf16.mxu0 %v3742
      %4460 = vmatpush1.bf16.msra.mxu0 %v3741
      %4461 = vmatprep.subr.bf16.mxu0 %v3746
      %4462 = vmatpush1.bf16.msra.mxu0 %v3745
      %4463 = vmatprep.subr.bf16.mxu0 %v3750
      %4464 = vmatpush1.bf16.msra.mxu0 %v3749
      %4465 = vmatprep.subr.bf16.mxu0 %v3754
      %4466 = vmatpush1.bf16.msra.mxu0 %v3753
      %4467 = vmatprep.subr.bf16.mxu0 %v3758
      %4468 = vmatpush1.bf16.msra.mxu0 %v3757
      %4469 = vmatprep.subr.bf16.mxu0 %v3762
      %4470 = vmatpush1.bf16.msra.mxu0 %v3761
      %4471 = vmatprep.subr.bf16.mxu0 %v3766
      %4472 = vmatpush1.bf16.msra.mxu0 %v3765
      %4473 = vmatprep.subr.bf16.mxu0 %v3770
      %4474 = vmatpush1.bf16.msra.mxu0 %v3769
      %4475 = vmatprep.subr.bf16.mxu0 %v3774
      %4476 = vmatpush1.bf16.msra.mxu0 %v3773
      %4477 = vmatprep.subr.bf16.mxu0 %v3778
      %4478 = vmatpush1.bf16.msra.mxu0 %v3777
      %4479 = vmatprep.subr.bf16.mxu0 %v3782
      %4480 = vmatpush1.bf16.msra.mxu0 %v3781
      %4481 = vmatprep.subr.bf16.mxu0 %v3786
      %4482 = vmatpush1.bf16.msra.mxu0 %v3785
      %4483 = vmatprep.subr.bf16.mxu0 %v3790
      %4484 = vmatpush1.bf16.msra.mxu0 %v3789
      %4485 = vmatprep.subr.bf16.mxu0 %v3794
      %4486 = vmatpush1.bf16.msra.mxu0 %v3793
      %4487 = vmatprep.mubr.bf16.mxu0 %v2772
      %4488 = vmatmul.mubr.bf16.gmra.mrb[0].mxu0 %v2771
      %v4489 = vpop.f32.mrb[0].mxu0
      %v4490 = vadd.f32 %v4257, %v4489
      %v4491 = vpop.f32.mrb[0].mxu0
      %v4492 = vadd.f32 %v4259, %v4491
      %v4493 = vpop.f32.mrb[0].mxu0
      %v4494 = vadd.f32 %v4261, %v4493
      %v4495 = vpop.f32.mrb[0].mxu0
      %v4496 = vadd.f32 %v4263, %v4495
      %4497 = vmatprep.mubr.bf16.mxu0 %v2778
      %4498 = vmatmul.mubr.bf16.gmra.mrb[0].mxu0 %v2777
      %v4499 = vpop.f32.mrb[0].mxu0
      %v4500 = vadd.f32 %v4267, %v4499
      %v4501 = vpop.f32.mrb[0].mxu0
      %v4502 = vadd.f32 %v4269, %v4501
      %v4503 = vpop.f32.mrb[0].mxu0
      %v4504 = vadd.f32 %v4271, %v4503
      %v4505 = vpop.f32.mrb[0].mxu0
      %v4506 = vadd.f32 %v4273, %v4505
      %4507 = vmatprep.mubr.bf16.mxu0 %v2780
      %4508 = vmatmul.mubr.bf16.gmra.mrb[0].mxu0 %v2779
      %v4509 = vpop.f32.mrb[0].mxu0
      %v4510 = vadd.f32 %v4277, %v4509
      %v4511 = vpop.f32.mrb[0].mxu0
      %v4512 = vadd.f32 %v4279, %v4511
      %v4513 = vpop.f32.mrb[0].mxu0
      %v4514 = vadd.f32 %v4281, %v4513
      %v4515 = vpop.f32.mrb[0].mxu0
      %v4516 = vadd.f32 %v4283, %v4515
      %4517 = vmatprep.mubr.bf16.mxu0 %v2782
      %4518 = vmatmul.mubr.bf16.gmra.mrb[0].mxu0 %v2781
      %v4519 = vpop.f32.mrb[0].mxu0
      %v4520 = vadd.f32 %v4287, %v4519
      %v4521 = vpop.f32.mrb[0].mxu0
      %v4522 = vadd.f32 %v4289, %v4521
      %v4523 = vpop.f32.mrb[0].mxu0
      %v4524 = vadd.f32 %v4291, %v4523
      %v4525 = vpop.f32.mrb[0].mxu0
      %v4526 = vadd.f32 %v4293, %v4525
      %4527 = vmatprep.mubr.bf16.mxu0 %v2784
      %4528 = vmatmul.mubr.bf16.gmra.mrb[0].mxu0 %v2783
      %v4529 = vpop.f32.mrb[0].mxu0
      %v4530 = vadd.f32 %v4297, %v4529
      %v4531 = vpop.f32.mrb[0].mxu0
      %v4532 = vadd.f32 %v4299, %v4531
      %v4533 = vpop.f32.mrb[0].mxu0
      %v4534 = vadd.f32 %v4301, %v4533
      %v4535 = vpop.f32.mrb[0].mxu0
      %v4536 = vadd.f32 %v4303, %v4535
      %4537 = vmatprep.mubr.bf16.mxu0 %v2786
      %4538 = vmatmul.mubr.bf16.gmra.mrb[0].mxu0 %v2785
      %v4539 = vpop.f32.mrb[0].mxu0
      %v4540 = vadd.f32 %v4307, %v4539
      %v4541 = vpop.f32.mrb[0].mxu0
      %v4542 = vadd.f32 %v4309, %v4541
      %v4543 = vpop.f32.mrb[0].mxu0
      %v4544 = vadd.f32 %v4311, %v4543
      %v4545 = vpop.f32.mrb[0].mxu0
      %v4546 = vadd.f32 %v4313, %v4545
      %4547 = vmatprep.mubr.bf16.mxu0 %v2788
      %4548 = vmatmul.mubr.bf16.gmra.mrb[0].mxu0 %v2787
      %v4549 = vpop.f32.mrb[0].mxu0
      %v4550 = vadd.f32 %v4317, %v4549
      %v4551 = vpop.f32.mrb[0].mxu0
      %v4552 = vadd.f32 %v4319, %v4551
      %v4553 = vpop.f32.mrb[0].mxu0
      %v4554 = vadd.f32 %v4321, %v4553
      %v4555 = vpop.f32.mrb[0].mxu0
      %v4556 = vadd.f32 %v4323, %v4555
      %4557 = vmatprep.mubr.bf16.mxu0 %v2790
      %4558 = vmatmul.mubr.bf16.gmra.mrb[0].mxu0 %v2789
      %v4559 = vpop.f32.mrb[0].mxu0
      %v4560 = vadd.f32 %v4327, %v4559
      %v4561 = vpop.f32.mrb[0].mxu0
      %v4562 = vadd.f32 %v4329, %v4561
      %v4563 = vpop.f32.mrb[0].mxu0
      %v4564 = vadd.f32 %v4331, %v4563
      %v4565 = vpop.f32.mrb[0].mxu0
      %v4566 = vadd.f32 %v4333, %v4565
      %4567 = vmatprep.mubr.bf16.mxu0 %v2792
      %4568 = vmatmul.mubr.bf16.gmra.mrb[0].mxu0 %v2791
      %v4569 = vpop.f32.mrb[0].mxu0
      %v4570 = vadd.f32 %v4337, %v4569
      %v4571 = vpop.f32.mrb[0].mxu0
      %v4572 = vadd.f32 %v4339, %v4571
      %v4573 = vpop.f32.mrb[0].mxu0
      %v4574 = vadd.f32 %v4341, %v4573
      %v4575 = vpop.f32.mrb[0].mxu0
      %v4576 = vadd.f32 %v4343, %v4575
      %4577 = vmatprep.mubr.bf16.mxu0 %v2794
      %4578 = vmatmul.mubr.bf16.gmra.mrb[0].mxu0 %v2793
      %v4579 = vpop.f32.mrb[0].mxu0
      %v4580 = vadd.f32 %v4347, %v4579
      %v4581 = vpop.f32.mrb[0].mxu0
      %v4582 = vadd.f32 %v4349, %v4581
      %v4583 = vpop.f32.mrb[0].mxu0
      %v4584 = vadd.f32 %v4351, %v4583
      %v4585 = vpop.f32.mrb[0].mxu0
      %v4586 = vadd.f32 %v4353, %v4585
      %4587 = vmatprep.mubr.bf16.mxu0 %v2796
      %4588 = vmatmul.mubr.bf16.gmra.mrb[0].mxu0 %v2795
      %v4589 = vpop.f32.mrb[0].mxu0
      %v4590 = vadd.f32 %v4357, %v4589
      %v4591 = vpop.f32.mrb[0].mxu0
      %v4592 = vadd.f32 %v4359, %v4591
      %v4593 = vpop.f32.mrb[0].mxu0
      %v4594 = vadd.f32 %v4361, %v4593
      %v4595 = vpop.f32.mrb[0].mxu0
      %v4596 = vadd.f32 %v4363, %v4595
      %4597 = vmatprep.mubr.bf16.mxu0 %v2798
      %4598 = vmatmul.mubr.bf16.gmra.mrb[0].mxu0 %v2797
      %v4599 = vpop.f32.mrb[0].mxu0
      %v4600 = vadd.f32 %v4367, %v4599
      %v4601 = vpop.f32.mrb[0].mxu0
      %v4602 = vadd.f32 %v4369, %v4601
      %v4603 = vpop.f32.mrb[0].mxu0
      %v4604 = vadd.f32 %v4371, %v4603
      %v4605 = vpop.f32.mrb[0].mxu0
      %v4606 = vadd.f32 %v4373, %v4605
      %4607 = vmatprep.mubr.bf16.mxu0 %v2800
      %4608 = vmatmul.mubr.bf16.gmra.mrb[0].mxu0 %v2799
      %v4609 = vpop.f32.mrb[0].mxu0
      %v4610 = vadd.f32 %v4377, %v4609
      %v4611 = vpop.f32.mrb[0].mxu0
      %v4612 = vadd.f32 %v4379, %v4611
      %v4613 = vpop.f32.mrb[0].mxu0
      %v4614 = vadd.f32 %v4381, %v4613
      %v4615 = vpop.f32.mrb[0].mxu0
      %v4616 = vadd.f32 %v4383, %v4615
      %4617 = vmatprep.mubr.bf16.mxu0 %v2802
      %4618 = vmatmul.mubr.bf16.gmra.mrb[0].mxu0 %v2801
      %v4619 = vpop.f32.mrb[0].mxu0
      %v4620 = vadd.f32 %v4387, %v4619
      %v4621 = vpop.f32.mrb[0].mxu0
      %v4622 = vadd.f32 %v4389, %v4621
      %v4623 = vpop.f32.mrb[0].mxu0
      %v4624 = vadd.f32 %v4391, %v4623
      %v4625 = vpop.f32.mrb[0].mxu0
      %v4626 = vadd.f32 %v4393, %v4625
      %4627 = vmatprep.mubr.bf16.mxu0 %v2804
      %4628 = vmatmul.mubr.bf16.gmra.mrb[0].mxu0 %v2803
      %v4629 = vpop.f32.mrb[0].mxu0
      %v4630 = vadd.f32 %v4397, %v4629
      %v4631 = vpop.f32.mrb[0].mxu0
      %v4632 = vadd.f32 %v4399, %v4631
      %v4633 = vpop.f32.mrb[0].mxu0
      %v4634 = vadd.f32 %v4401, %v4633
      %v4635 = vpop.f32.mrb[0].mxu0
      %v4636 = vadd.f32 %v4403, %v4635
      %4637 = vmatprep.mubr.bf16.mxu0 %v2806
      %4638 = vmatmul.mubr.bf16.gmra.mrb[0].mxu0 %v2805
      %v4639 = vpop.f32.mrb[0].mxu0
      %v4640 = vadd.f32 %v4407, %v4639
      %v4641 = vpop.f32.mrb[0].mxu0
      %v4642 = vadd.f32 %v4409, %v4641
      %v4643 = vpop.f32.mrb[0].mxu0
      %v4644 = vadd.f32 %v4411, %v4643
      %v4645 = vpop.f32.mrb[0].mxu0
      %v4646 = vadd.f32 %v4413, %v4645
      %4647 = vmatprep.mubr.bf16.mxu0 %v2808
      %4648 = vmatmul.mubr.bf16.gmra.mrb[0].mxu0 %v2807
      %v4649 = vpop.f32.mrb[0].mxu0
      %v4650 = vadd.f32 %v4417, %v4649
      %v4651 = vpop.f32.mrb[0].mxu0
      %v4652 = vadd.f32 %v4419, %v4651
      %v4653 = vpop.f32.mrb[0].mxu0
      %v4654 = vadd.f32 %v4421, %v4653
      %v4655 = vpop.f32.mrb[0].mxu0
      %v4656 = vadd.f32 %v4423, %v4655
      %4657 = vmatprep.mubr.bf16.mxu0 %v2810
      %4658 = vmatmul.mubr.bf16.gmra.mrb[0].mxu0 %v2809
      %v4659 = vpop.f32.mrb[0].mxu0
      %v4660 = vadd.f32 %v4427, %v4659
      %v4661 = vpop.f32.mrb[0].mxu0
      %v4662 = vadd.f32 %v4429, %v4661
      %v4663 = vpop.f32.mrb[0].mxu0
      %v4664 = vadd.f32 %v4431, %v4663
      %v4665 = vpop.f32.mrb[0].mxu0
      %v4666 = vadd.f32 %v4433, %v4665
      %4667 = vmatprep.mubr.bf16.mxu0 %v2812
      %4668 = vmatmul.mubr.bf16.gmra.mrb[0].mxu0 %v2811
      %v4669 = vpop.f32.mrb[0].mxu0
      %v4670 = vadd.f32 %v4437, %v4669
      %v4671 = vpop.f32.mrb[0].mxu0
      %v4672 = vadd.f32 %v4439, %v4671
      %v4673 = vpop.f32.mrb[0].mxu0
      %v4674 = vadd.f32 %v4441, %v4673
      %v4675 = vpop.f32.mrb[0].mxu0
      %v4676 = vadd.f32 %v4443, %v4675
      %4677 = vmatprep.mubr.bf16.mxu0 %v2814
      %4678 = vmatmul.mubr.bf16.gmra.mrb[0].mxu0 %v2813
      %v4679 = vpop.f32.mrb[0].mxu0
      %v4680 = vadd.f32 %v4447, %v4679
      %v4681 = vpop.f32.mrb[0].mxu0
      %v4682 = vadd.f32 %v4449, %v4681
      %v4683 = vpop.f32.mrb[0].mxu0
      %v4684 = vadd.f32 %v4451, %v4683
      %v4685 = vpop.f32.mrb[0].mxu0
      %v4686 = vadd.f32 %v4453, %v4685
      %4687 = vdwg.mxu0
      %4688 = vmatprep.subr.bf16.mxu0 %v3608
      %4689 = vmatpush1.bf16.msra.mxu0 %v3607
      %4690 = vmatprep.subr.bf16.mxu0 %v3612
      %4691 = vmatpush1.bf16.msra.mxu0 %v3611
      %4692 = vmatprep.subr.bf16.mxu0 %v3616
      %4693 = vmatpush1.bf16.msra.mxu0 %v3615
      %4694 = vmatprep.subr.bf16.mxu0 %v3620
      %4695 = vmatpush1.bf16.msra.mxu0 %v3619
      %4696 = vmatprep.subr.bf16.mxu0 %v3624
      %4697 = vmatpush1.bf16.msra.mxu0 %v3623
      %4698 = vmatprep.subr.bf16.mxu0 %v3628
      %4699 = vmatpush1.bf16.msra.mxu0 %v3627
      %4700 = vmatprep.subr.bf16.mxu0 %v3632
      %4701 = vmatpush1.bf16.msra.mxu0 %v3631
      %4702 = vmatprep.subr.bf16.mxu0 %v3636
      %4703 = vmatpush1.bf16.msra.mxu0 %v3635
      %4704 = vmatprep.subr.bf16.mxu0 %v3640
      %4705 = vmatpush1.bf16.msra.mxu0 %v3639
      %4706 = vmatprep.subr.bf16.mxu0 %v3644
      %4707 = vmatpush1.bf16.msra.mxu0 %v3643
      %4708 = vmatprep.subr.bf16.mxu0 %v3648
      %4709 = vmatpush1.bf16.msra.mxu0 %v3647
      %4710 = vmatprep.subr.bf16.mxu0 %v3652
      %4711 = vmatpush1.bf16.msra.mxu0 %v3651
      %4712 = vmatprep.subr.bf16.mxu0 %v3656
      %4713 = vmatpush1.bf16.msra.mxu0 %v3655
      %4714 = vmatprep.subr.bf16.mxu0 %v3660
      %4715 = vmatpush1.bf16.msra.mxu0 %v3659
      %4716 = vmatprep.subr.bf16.mxu0 %v3664
      %4717 = vmatpush1.bf16.msra.mxu0 %v3663
      %4718 = vmatprep.subr.bf16.mxu0 %v3668
      %4719 = vmatpush1.bf16.msra.mxu0 %v3667
      %4720 = vmatprep.mubr.bf16.mxu0 %v2768
      %4721 = vmatmul.mubr.bf16.gmra.mrb[0].mxu0 %v2767
      %v4722 = vpop.f32.mrb[0].mxu0
      %v4723 = vadd.f32 %v3020, %v4722
      %v4724 = vpop.f32.mrb[0].mxu0
      %v4725 = vadd.f32 %v3024, %v4724
      %v4726 = vpop.f32.mrb[0].mxu0
      %v4727 = vadd.f32 %v3020, %v4726
      %v4728 = vpop.f32.mrb[0].mxu0
      %v4729 = vadd.f32 %v3024, %v4728
      %4730 = vmatprep.mubr.bf16.mxu0 %v2774
      %4731 = vmatmul.mubr.bf16.gmra.mrb[0].mxu0 %v2773
      %v4732 = vpop.f32.mrb[0].mxu0
      %v4733 = vadd.f32 %v3020, %v4732
      %v4734 = vpop.f32.mrb[0].mxu0
      %v4735 = vadd.f32 %v3024, %v4734
      %v4736 = vpop.f32.mrb[0].mxu0
      %v4737 = vadd.f32 %v3020, %v4736
      %v4738 = vpop.f32.mrb[0].mxu0
      %v4739 = vadd.f32 %v3024, %v4738
      %4740 = vmatprep.mubr.bf16.mxu0 %v2770
      %4741 = vmatmul.mubr.bf16.gmra.mrb[0].mxu0 %v2769
      %v4742 = vpop.f32.mrb[0].mxu0
      %v4743 = vadd.f32 %v3020, %v4742
      %v4744 = vpop.f32.mrb[0].mxu0
      %v4745 = vadd.f32 %v3024, %v4744
      %v4746 = vpop.f32.mrb[0].mxu0
      %v4747 = vadd.f32 %v3020, %v4746
      %v4748 = vpop.f32.mrb[0].mxu0
      %v4749 = vadd.f32 %v3024, %v4748
      %4750 = vmatprep.mubr.bf16.mxu0 %v2776
      %4751 = vmatmul.mubr.bf16.gmra.mrb[0].mxu0 %v2775
      %v4752 = vpop.f32.mrb[0].mxu0
      %v4753 = vadd.f32 %v3020, %v4752
      %v4754 = vpop.f32.mrb[0].mxu0
      %v4755 = vadd.f32 %v3024, %v4754
      %v4756 = vpop.f32.mrb[0].mxu0
      %v4757 = vadd.f32 %v3020, %v4756
      %v4758 = vpop.f32.mrb[0].mxu0
      %v4759 = vadd.f32 %v3024, %v4758
      %4760 = vmatprep.mubr.bf16.mxu0 %v2772
      %4761 = vmatmul.mubr.bf16.gmra.mrb[0].mxu0 %v2771
      %v4762 = vpop.f32.mrb[0].mxu0
      %v4763 = vadd.f32 %v3020, %v4762
      %v4764 = vpop.f32.mrb[0].mxu0
      %v4765 = vadd.f32 %v3024, %v4764
      %v4766 = vpop.f32.mrb[0].mxu0
      %v4767 = vadd.f32 %v3020, %v4766
      %v4768 = vpop.f32.mrb[0].mxu0
      %v4769 = vadd.f32 %v3024, %v4768
      %4770 = vmatprep.mubr.bf16.mxu0 %v2778
      %4771 = vmatmul.mubr.bf16.gmra.mrb[0].mxu0 %v2777
      %v4772 = vpop.f32.mrb[0].mxu0
      %v4773 = vadd.f32 %v3020, %v4772
      %v4774 = vpop.f32.mrb[0].mxu0
      %v4775 = vadd.f32 %v3024, %v4774
      %v4776 = vpop.f32.mrb[0].mxu0
      %v4777 = vadd.f32 %v3020, %v4776
      %v4778 = vpop.f32.mrb[0].mxu0
      %v4779 = vadd.f32 %v3024, %v4778
      %4780 = vmatprep.mubr.bf16.mxu0 %v2780
      %4781 = vmatmul.mubr.bf16.gmra.mrb[0].mxu0 %v2779
      %v4782 = vpop.f32.mrb[0].mxu0
      %v4783 = vadd.f32 %v3020, %v4782
      %v4784 = vpop.f32.mrb[0].mxu0
      %v4785 = vadd.f32 %v3024, %v4784
      %v4786 = vpop.f32.mrb[0].mxu0
      %v4787 = vadd.f32 %v3020, %v4786
      %v4788 = vpop.f32.mrb[0].mxu0
      %v4789 = vadd.f32 %v3024, %v4788
      %4790 = vmatprep.mubr.bf16.mxu0 %v2782
      %4791 = vmatmul.mubr.bf16.gmra.mrb[0].mxu0 %v2781
      %v4792 = vpop.f32.mrb[0].mxu0
      %v4793 = vadd.f32 %v3020, %v4792
      %v4794 = vpop.f32.mrb[0].mxu0
      %v4795 = vadd.f32 %v3024, %v4794
      %v4796 = vpop.f32.mrb[0].mxu0
      %v4797 = vadd.f32 %v3020, %v4796
      %v4798 = vpop.f32.mrb[0].mxu0
      %v4799 = vadd.f32 %v3024, %v4798
      %4800 = vmatprep.mubr.bf16.mxu0 %v2784
      %4801 = vmatmul.mubr.bf16.gmra.mrb[0].mxu0 %v2783
      %v4802 = vpop.f32.mrb[0].mxu0
      %v4803 = vadd.f32 %v3020, %v4802
      %v4804 = vpop.f32.mrb[0].mxu0
      %v4805 = vadd.f32 %v3024, %v4804
      %v4806 = vpop.f32.mrb[0].mxu0
      %v4807 = vadd.f32 %v3020, %v4806
      %v4808 = vpop.f32.mrb[0].mxu0
      %v4809 = vadd.f32 %v3024, %v4808
      %4810 = vmatprep.mubr.bf16.mxu0 %v2786
      %4811 = vmatmul.mubr.bf16.gmra.mrb[0].mxu0 %v2785
      %v4812 = vpop.f32.mrb[0].mxu0
      %v4813 = vadd.f32 %v3020, %v4812
      %v4814 = vpop.f32.mrb[0].mxu0
      %v4815 = vadd.f32 %v3024, %v4814
      %v4816 = vpop.f32.mrb[0].mxu0
      %v4817 = vadd.f32 %v3020, %v4816
      %v4818 = vpop.f32.mrb[0].mxu0
      %v4819 = vadd.f32 %v3024, %v4818
      %4820 = vmatprep.mubr.bf16.mxu0 %v2788
      %4821 = vmatmul.mubr.bf16.gmra.mrb[0].mxu0 %v2787
      %v4822 = vpop.f32.mrb[0].mxu0
      %v4823 = vadd.f32 %v3020, %v4822
      %v4824 = vpop.f32.mrb[0].mxu0
      %v4825 = vadd.f32 %v3024, %v4824
      %v4826 = vpop.f32.mrb[0].mxu0
      %v4827 = vadd.f32 %v3020, %v4826
      %v4828 = vpop.f32.mrb[0].mxu0
      %v4829 = vadd.f32 %v3024, %v4828
      %4830 = vmatprep.mubr.bf16.mxu0 %v2790
      %4831 = vmatmul.mubr.bf16.gmra.mrb[0].mxu0 %v2789
      %v4832 = vpop.f32.mrb[0].mxu0
      %v4833 = vadd.f32 %v3020, %v4832
      %v4834 = vpop.f32.mrb[0].mxu0
      %v4835 = vadd.f32 %v3024, %v4834
      %v4836 = vpop.f32.mrb[0].mxu0
      %v4837 = vadd.f32 %v3020, %v4836
      %v4838 = vpop.f32.mrb[0].mxu0
      %v4839 = vadd.f32 %v3024, %v4838
      %4840 = vmatprep.mubr.bf16.mxu0 %v2792
      %4841 = vmatmul.mubr.bf16.gmra.mrb[0].mxu0 %v2791
      %v4842 = vpop.f32.mrb[0].mxu0
      %v4843 = vadd.f32 %v3020, %v4842
      %v4844 = vpop.f32.mrb[0].mxu0
      %v4845 = vadd.f32 %v3024, %v4844
      %v4846 = vpop.f32.mrb[0].mxu0
      %v4847 = vadd.f32 %v3020, %v4846
      %v4848 = vpop.f32.mrb[0].mxu0
      %v4849 = vadd.f32 %v3024, %v4848
      %4850 = vmatprep.mubr.bf16.mxu0 %v2794
      %4851 = vmatmul.mubr.bf16.gmra.mrb[0].mxu0 %v2793
      %v4852 = vpop.f32.mrb[0].mxu0
      %v4853 = vadd.f32 %v3020, %v4852
      %v4854 = vpop.f32.mrb[0].mxu0
      %v4855 = vadd.f32 %v3024, %v4854
      %v4856 = vpop.f32.mrb[0].mxu0
      %v4857 = vadd.f32 %v3020, %v4856
      %v4858 = vpop.f32.mrb[0].mxu0
      %v4859 = vadd.f32 %v3024, %v4858
      %4860 = vmatprep.mubr.bf16.mxu0 %v2796
      %4861 = vmatmul.mubr.bf16.gmra.mrb[0].mxu0 %v2795
      %v4862 = vpop.f32.mrb[0].mxu0
      %v4863 = vadd.f32 %v3020, %v4862
      %v4864 = vpop.f32.mrb[0].mxu0
      %v4865 = vadd.f32 %v3024, %v4864
      %v4866 = vpop.f32.mrb[0].mxu0
      %v4867 = vadd.f32 %v3020, %v4866
      %v4868 = vpop.f32.mrb[0].mxu0
      %v4869 = vadd.f32 %v3024, %v4868
      %4870 = vmatprep.mubr.bf16.mxu0 %v2798
      %4871 = vmatmul.mubr.bf16.gmra.mrb[0].mxu0 %v2797
      %v4872 = vpop.f32.mrb[0].mxu0
      %v4873 = vadd.f32 %v3020, %v4872
      %v4874 = vpop.f32.mrb[0].mxu0
      %v4875 = vadd.f32 %v3024, %v4874
      %v4876 = vpop.f32.mrb[0].mxu0
      %v4877 = vadd.f32 %v3020, %v4876
      %v4878 = vpop.f32.mrb[0].mxu0
      %v4879 = vadd.f32 %v3024, %v4878
      %4880 = vmatprep.mubr.bf16.mxu0 %v2800
      %4881 = vmatmul.mubr.bf16.gmra.mrb[0].mxu0 %v2799
      %v4882 = vpop.f32.mrb[0].mxu0
      %v4883 = vadd.f32 %v3020, %v4882
      %v4884 = vpop.f32.mrb[0].mxu0
      %v4885 = vadd.f32 %v3024, %v4884
      %v4886 = vpop.f32.mrb[0].mxu0
      %v4887 = vadd.f32 %v3020, %v4886
      %v4888 = vpop.f32.mrb[0].mxu0
      %v4889 = vadd.f32 %v3024, %v4888
      %4890 = vmatprep.mubr.bf16.mxu0 %v2802
      %4891 = vmatmul.mubr.bf16.gmra.mrb[0].mxu0 %v2801
      %v4892 = vpop.f32.mrb[0].mxu0
      %v4893 = vadd.f32 %v3020, %v4892
      %v4894 = vpop.f32.mrb[0].mxu0
      %v4895 = vadd.f32 %v3024, %v4894
      %v4896 = vpop.f32.mrb[0].mxu0
      %v4897 = vadd.f32 %v3020, %v4896
      %v4898 = vpop.f32.mrb[0].mxu0
      %v4899 = vadd.f32 %v3024, %v4898
      %4900 = vmatprep.mubr.bf16.mxu0 %v2804
      %4901 = vmatmul.mubr.bf16.gmra.mrb[0].mxu0 %v2803
      %v4902 = vpop.f32.mrb[0].mxu0
      %v4903 = vadd.f32 %v3020, %v4902
      %v4904 = vpop.f32.mrb[0].mxu0
      %v4905 = vadd.f32 %v3024, %v4904
      %v4906 = vpop.f32.mrb[0].mxu0
      %v4907 = vadd.f32 %v3020, %v4906
      %v4908 = vpop.f32.mrb[0].mxu0
      %v4909 = vadd.f32 %v3024, %v4908
      %4910 = vmatprep.mubr.bf16.mxu0 %v2806
      %4911 = vmatmul.mubr.bf16.gmra.mrb[0].mxu0 %v2805
      %v4912 = vpop.f32.mrb[0].mxu0
      %v4913 = vadd.f32 %v3020, %v4912
      %v4914 = vpop.f32.mrb[0].mxu0
      %v4915 = vadd.f32 %v3024, %v4914
      %v4916 = vpop.f32.mrb[0].mxu0
      %v4917 = vadd.f32 %v3020, %v4916
      %v4918 = vpop.f32.mrb[0].mxu0
      %v4919 = vadd.f32 %v3024, %v4918
      %4920 = vdwg.mxu0
      %4921 = vmatprep.subr.bf16.mxu0 %v3672
      %4922 = vmatpush1.bf16.msra.mxu0 %v3671
      %4923 = vmatprep.subr.bf16.mxu0 %v3676
      %4924 = vmatpush1.bf16.msra.mxu0 %v3675
      %4925 = vmatprep.subr.bf16.mxu0 %v3680
      %4926 = vmatpush1.bf16.msra.mxu0 %v3679
      %4927 = vmatprep.subr.bf16.mxu0 %v3684
      %4928 = vmatpush1.bf16.msra.mxu0 %v3683
      %4929 = vmatprep.subr.bf16.mxu0 %v3688
      %4930 = vmatpush1.bf16.msra.mxu0 %v3687
      %4931 = vmatprep.subr.bf16.mxu0 %v3692
      %4932 = vmatpush1.bf16.msra.mxu0 %v3691
      %4933 = vmatprep.subr.bf16.mxu0 %v3696
      %4934 = vmatpush1.bf16.msra.mxu0 %v3695
      %4935 = vmatprep.subr.bf16.mxu0 %v3700
      %4936 = vmatpush1.bf16.msra.mxu0 %v3699
      %4937 = vmatprep.subr.bf16.mxu0 %v3704
      %4938 = vmatpush1.bf16.msra.mxu0 %v3703
      %4939 = vmatprep.subr.bf16.mxu0 %v3708
      %4940 = vmatpush1.bf16.msra.mxu0 %v3707
      %4941 = vmatprep.subr.bf16.mxu0 %v3712
      %4942 = vmatpush1.bf16.msra.mxu0 %v3711
      %4943 = vmatprep.subr.bf16.mxu0 %v3716
      %4944 = vmatpush1.bf16.msra.mxu0 %v3715
      %4945 = vmatprep.subr.bf16.mxu0 %v3720
      %4946 = vmatpush1.bf16.msra.mxu0 %v3719
      %4947 = vmatprep.subr.bf16.mxu0 %v3724
      %4948 = vmatpush1.bf16.msra.mxu0 %v3723
      %4949 = vmatprep.subr.bf16.mxu0 %v3728
      %4950 = vmatpush1.bf16.msra.mxu0 %v3727
      %4951 = vmatprep.subr.bf16.mxu0 %v3732
      %4952 = vmatpush1.bf16.msra.mxu0 %v3731
      %4953 = vmatprep.mubr.bf16.mxu0 %v2770
      %4954 = vmatmul.mubr.bf16.gmra.mrb[0].mxu0 %v2769
      %v4955 = vpop.f32.mrb[0].mxu0
      %v4956 = vadd.f32 %v4723, %v4955
      %v4957 = vpop.f32.mrb[0].mxu0
      %v4958 = vadd.f32 %v4725, %v4957
      %v4959 = vpop.f32.mrb[0].mxu0
      %v4960 = vadd.f32 %v4727, %v4959
      %v4961 = vpop.f32.mrb[0].mxu0
      %v4962 = vadd.f32 %v4729, %v4961
      %4963 = vmatprep.mubr.bf16.mxu0 %v2776
      %4964 = vmatmul.mubr.bf16.gmra.mrb[0].mxu0 %v2775
      %v4965 = vpop.f32.mrb[0].mxu0
      %v4966 = vadd.f32 %v4733, %v4965
      %v4967 = vpop.f32.mrb[0].mxu0
      %v4968 = vadd.f32 %v4735, %v4967
      %v4969 = vpop.f32.mrb[0].mxu0
      %v4970 = vadd.f32 %v4737, %v4969
      %v4971 = vpop.f32.mrb[0].mxu0
      %v4972 = vadd.f32 %v4739, %v4971
      %4973 = vmatprep.mubr.bf16.mxu0 %v2772
      %4974 = vmatmul.mubr.bf16.gmra.mrb[0].mxu0 %v2771
      %v4975 = vpop.f32.mrb[0].mxu0
      %v4976 = vadd.f32 %v4743, %v4975
      %v4977 = vpop.f32.mrb[0].mxu0
      %v4978 = vadd.f32 %v4745, %v4977
      %v4979 = vpop.f32.mrb[0].mxu0
      %v4980 = vadd.f32 %v4747, %v4979
      %v4981 = vpop.f32.mrb[0].mxu0
      %v4982 = vadd.f32 %v4749, %v4981
      %4983 = vmatprep.mubr.bf16.mxu0 %v2778
      %4984 = vmatmul.mubr.bf16.gmra.mrb[0].mxu0 %v2777
      %v4985 = vpop.f32.mrb[0].mxu0
      %v4986 = vadd.f32 %v4753, %v4985
      %v4987 = vpop.f32.mrb[0].mxu0
      %v4988 = vadd.f32 %v4755, %v4987
      %v4989 = vpop.f32.mrb[0].mxu0
      %v4990 = vadd.f32 %v4757, %v4989
      %v4991 = vpop.f32.mrb[0].mxu0
      %v4992 = vadd.f32 %v4759, %v4991
      %4993 = vmatprep.mubr.bf16.mxu0 %v2780
      %4994 = vmatmul.mubr.bf16.gmra.mrb[0].mxu0 %v2779
      %v4995 = vpop.f32.mrb[0].mxu0
      %v4996 = vadd.f32 %v4763, %v4995
      %v4997 = vpop.f32.mrb[0].mxu0
      %v4998 = vadd.f32 %v4765, %v4997
      %v4999 = vpop.f32.mrb[0].mxu0
      %v5000 = vadd.f32 %v4767, %v4999
      %v5001 = vpop.f32.mrb[0].mxu0
      %v5002 = vadd.f32 %v4769, %v5001
      %5003 = vmatprep.mubr.bf16.mxu0 %v2782
      %5004 = vmatmul.mubr.bf16.gmra.mrb[0].mxu0 %v2781
      %v5005 = vpop.f32.mrb[0].mxu0
      %v5006 = vadd.f32 %v4773, %v5005
      %v5007 = vpop.f32.mrb[0].mxu0
      %v5008 = vadd.f32 %v4775, %v5007
      %v5009 = vpop.f32.mrb[0].mxu0
      %v5010 = vadd.f32 %v4777, %v5009
      %v5011 = vpop.f32.mrb[0].mxu0
      %v5012 = vadd.f32 %v4779, %v5011
      %5013 = vmatprep.mubr.bf16.mxu0 %v2784
      %5014 = vmatmul.mubr.bf16.gmra.mrb[0].mxu0 %v2783
      %v5015 = vpop.f32.mrb[0].mxu0
      %v5016 = vadd.f32 %v4783, %v5015
      %v5017 = vpop.f32.mrb[0].mxu0
      %v5018 = vadd.f32 %v4785, %v5017
      %v5019 = vpop.f32.mrb[0].mxu0
      %v5020 = vadd.f32 %v4787, %v5019
      %v5021 = vpop.f32.mrb[0].mxu0
      %v5022 = vadd.f32 %v4789, %v5021
      %5023 = vmatprep.mubr.bf16.mxu0 %v2786
      %5024 = vmatmul.mubr.bf16.gmra.mrb[0].mxu0 %v2785
      %v5025 = vpop.f32.mrb[0].mxu0
      %v5026 = vadd.f32 %v4793, %v5025
      %v5027 = vpop.f32.mrb[0].mxu0
      %v5028 = vadd.f32 %v4795, %v5027
      %v5029 = vpop.f32.mrb[0].mxu0
      %v5030 = vadd.f32 %v4797, %v5029
      %v5031 = vpop.f32.mrb[0].mxu0
      %v5032 = vadd.f32 %v4799, %v5031
      %5033 = vmatprep.mubr.bf16.mxu0 %v2788
      %5034 = vmatmul.mubr.bf16.gmra.mrb[0].mxu0 %v2787
      %v5035 = vpop.f32.mrb[0].mxu0
      %v5036 = vadd.f32 %v4803, %v5035
      %v5037 = vpop.f32.mrb[0].mxu0
      %v5038 = vadd.f32 %v4805, %v5037
      %v5039 = vpop.f32.mrb[0].mxu0
      %v5040 = vadd.f32 %v4807, %v5039
      %v5041 = vpop.f32.mrb[0].mxu0
      %v5042 = vadd.f32 %v4809, %v5041
      %5043 = vmatprep.mubr.bf16.mxu0 %v2790
      %5044 = vmatmul.mubr.bf16.gmra.mrb[0].mxu0 %v2789
      %v5045 = vpop.f32.mrb[0].mxu0
      %v5046 = vadd.f32 %v4813, %v5045
      %v5047 = vpop.f32.mrb[0].mxu0
      %v5048 = vadd.f32 %v4815, %v5047
      %v5049 = vpop.f32.mrb[0].mxu0
      %v5050 = vadd.f32 %v4817, %v5049
      %v5051 = vpop.f32.mrb[0].mxu0
      %v5052 = vadd.f32 %v4819, %v5051
      %5053 = vmatprep.mubr.bf16.mxu0 %v2792
      %5054 = vmatmul.mubr.bf16.gmra.mrb[0].mxu0 %v2791
      %v5055 = vpop.f32.mrb[0].mxu0
      %v5056 = vadd.f32 %v4823, %v5055
      %v5057 = vpop.f32.mrb[0].mxu0
      %v5058 = vadd.f32 %v4825, %v5057
      %v5059 = vpop.f32.mrb[0].mxu0
      %v5060 = vadd.f32 %v4827, %v5059
      %v5061 = vpop.f32.mrb[0].mxu0
      %v5062 = vadd.f32 %v4829, %v5061
      %5063 = vmatprep.mubr.bf16.mxu0 %v2794
      %5064 = vmatmul.mubr.bf16.gmra.mrb[0].mxu0 %v2793
      %v5065 = vpop.f32.mrb[0].mxu0
      %v5066 = vadd.f32 %v4833, %v5065
      %v5067 = vpop.f32.mrb[0].mxu0
      %v5068 = vadd.f32 %v4835, %v5067
      %v5069 = vpop.f32.mrb[0].mxu0
      %v5070 = vadd.f32 %v4837, %v5069
      %v5071 = vpop.f32.mrb[0].mxu0
      %v5072 = vadd.f32 %v4839, %v5071
      %5073 = vmatprep.mubr.bf16.mxu0 %v2796
      %5074 = vmatmul.mubr.bf16.gmra.mrb[0].mxu0 %v2795
      %v5075 = vpop.f32.mrb[0].mxu0
      %v5076 = vadd.f32 %v4843, %v5075
      %v5077 = vpop.f32.mrb[0].mxu0
      %v5078 = vadd.f32 %v4845, %v5077
      %v5079 = vpop.f32.mrb[0].mxu0
      %v5080 = vadd.f32 %v4847, %v5079
      %v5081 = vpop.f32.mrb[0].mxu0
      %v5082 = vadd.f32 %v4849, %v5081
      %5083 = vmatprep.mubr.bf16.mxu0 %v2798
      %5084 = vmatmul.mubr.bf16.gmra.mrb[0].mxu0 %v2797
      %v5085 = vpop.f32.mrb[0].mxu0
      %v5086 = vadd.f32 %v4853, %v5085
      %v5087 = vpop.f32.mrb[0].mxu0
      %v5088 = vadd.f32 %v4855, %v5087
      %v5089 = vpop.f32.mrb[0].mxu0
      %v5090 = vadd.f32 %v4857, %v5089
      %v5091 = vpop.f32.mrb[0].mxu0
      %v5092 = vadd.f32 %v4859, %v5091
      %5093 = vmatprep.mubr.bf16.mxu0 %v2800
      %5094 = vmatmul.mubr.bf16.gmra.mrb[0].mxu0 %v2799
      %v5095 = vpop.f32.mrb[0].mxu0
      %v5096 = vadd.f32 %v4863, %v5095
      %v5097 = vpop.f32.mrb[0].mxu0
      %v5098 = vadd.f32 %v4865, %v5097
      %v5099 = vpop.f32.mrb[0].mxu0
      %v5100 = vadd.f32 %v4867, %v5099
      %v5101 = vpop.f32.mrb[0].mxu0
      %v5102 = vadd.f32 %v4869, %v5101
      %5103 = vmatprep.mubr.bf16.mxu0 %v2802
      %5104 = vmatmul.mubr.bf16.gmra.mrb[0].mxu0 %v2801
      %v5105 = vpop.f32.mrb[0].mxu0
      %v5106 = vadd.f32 %v4873, %v5105
      %v5107 = vpop.f32.mrb[0].mxu0
      %v5108 = vadd.f32 %v4875, %v5107
      %v5109 = vpop.f32.mrb[0].mxu0
      %v5110 = vadd.f32 %v4877, %v5109
      %v5111 = vpop.f32.mrb[0].mxu0
      %v5112 = vadd.f32 %v4879, %v5111
      %5113 = vmatprep.mubr.bf16.mxu0 %v2804
      %5114 = vmatmul.mubr.bf16.gmra.mrb[0].mxu0 %v2803
      %v5115 = vpop.f32.mrb[0].mxu0
      %v5116 = vadd.f32 %v4883, %v5115
      %v5117 = vpop.f32.mrb[0].mxu0
      %v5118 = vadd.f32 %v4885, %v5117
      %v5119 = vpop.f32.mrb[0].mxu0
      %v5120 = vadd.f32 %v4887, %v5119
      %v5121 = vpop.f32.mrb[0].mxu0
      %v5122 = vadd.f32 %v4889, %v5121
      %5123 = vmatprep.mubr.bf16.mxu0 %v2806
      %5124 = vmatmul.mubr.bf16.gmra.mrb[0].mxu0 %v2805
      %v5125 = vpop.f32.mrb[0].mxu0
      %v5126 = vadd.f32 %v4893, %v5125
      %v5127 = vpop.f32.mrb[0].mxu0
      %v5128 = vadd.f32 %v4895, %v5127
      %v5129 = vpop.f32.mrb[0].mxu0
      %v5130 = vadd.f32 %v4897, %v5129
      %v5131 = vpop.f32.mrb[0].mxu0
      %v5132 = vadd.f32 %v4899, %v5131
      %5133 = vmatprep.mubr.bf16.mxu0 %v2808
      %5134 = vmatmul.mubr.bf16.gmra.mrb[0].mxu0 %v2807
      %v5135 = vpop.f32.mrb[0].mxu0
      %v5136 = vadd.f32 %v4903, %v5135
      %v5137 = vpop.f32.mrb[0].mxu0
      %v5138 = vadd.f32 %v4905, %v5137
      %v5139 = vpop.f32.mrb[0].mxu0
      %v5140 = vadd.f32 %v4907, %v5139
      %v5141 = vpop.f32.mrb[0].mxu0
      %v5142 = vadd.f32 %v4909, %v5141
      %5143 = vmatprep.mubr.bf16.mxu0 %v2810
      %5144 = vmatmul.mubr.bf16.gmra.mrb[0].mxu0 %v2809
      %v5145 = vpop.f32.mrb[0].mxu0
      %v5146 = vadd.f32 %v4913, %v5145
      %v5147 = vpop.f32.mrb[0].mxu0
      %v5148 = vadd.f32 %v4915, %v5147
      %v5149 = vpop.f32.mrb[0].mxu0
      %v5150 = vadd.f32 %v4917, %v5149
      %v5151 = vpop.f32.mrb[0].mxu0
      %v5152 = vadd.f32 %v4919, %v5151
      %5153 = vdwg.mxu0
      %5154 = vmatprep.subr.bf16.mxu0 %v3736
      %5155 = vmatpush1.bf16.msra.mxu0 %v3735
      %5156 = vmatprep.subr.bf16.mxu0 %v3740
      %5157 = vmatpush1.bf16.msra.mxu0 %v3739
      %5158 = vmatprep.subr.bf16.mxu0 %v3744
      %5159 = vmatpush1.bf16.msra.mxu0 %v3743
      %5160 = vmatprep.subr.bf16.mxu0 %v3748
      %5161 = vmatpush1.bf16.msra.mxu0 %v3747
      %5162 = vmatprep.subr.bf16.mxu0 %v3752
      %5163 = vmatpush1.bf16.msra.mxu0 %v3751
      %5164 = vmatprep.subr.bf16.mxu0 %v3756
      %5165 = vmatpush1.bf16.msra.mxu0 %v3755
      %5166 = vmatprep.subr.bf16.mxu0 %v3760
      %5167 = vmatpush1.bf16.msra.mxu0 %v3759
      %5168 = vmatprep.subr.bf16.mxu0 %v3764
      %5169 = vmatpush1.bf16.msra.mxu0 %v3763
      %5170 = vmatprep.subr.bf16.mxu0 %v3768
      %5171 = vmatpush1.bf16.msra.mxu0 %v3767
      %5172 = vmatprep.subr.bf16.mxu0 %v3772
      %5173 = vmatpush1.bf16.msra.mxu0 %v3771
      %5174 = vmatprep.subr.bf16.mxu0 %v3776
      %5175 = vmatpush1.bf16.msra.mxu0 %v3775
      %5176 = vmatprep.subr.bf16.mxu0 %v3780
      %5177 = vmatpush1.bf16.msra.mxu0 %v3779
      %5178 = vmatprep.subr.bf16.mxu0 %v3784
      %5179 = vmatpush1.bf16.msra.mxu0 %v3783
      %5180 = vmatprep.subr.bf16.mxu0 %v3788
      %5181 = vmatpush1.bf16.msra.mxu0 %v3787
      %5182 = vmatprep.subr.bf16.mxu0 %v3792
      %5183 = vmatpush1.bf16.msra.mxu0 %v3791
      %5184 = vmatprep.subr.bf16.mxu0 %v3796
      %5185 = vmatpush1.bf16.msra.mxu0 %v3795
      %5186 = vmatprep.mubr.bf16.mxu0 %v2772
      %5187 = vmatmul.mubr.bf16.gmra.mrb[0].mxu0 %v2771
      %v5188 = vpop.f32.mrb[0].mxu0
      %v5189 = vadd.f32 %v4956, %v5188
      %v5190 = vpop.f32.mrb[0].mxu0
      %v5191 = vadd.f32 %v4958, %v5190
      %v5192 = vpop.f32.mrb[0].mxu0
      %v5193 = vadd.f32 %v4960, %v5192
      %v5194 = vpop.f32.mrb[0].mxu0
      %v5195 = vadd.f32 %v4962, %v5194
      %5196 = vmatprep.mubr.bf16.mxu0 %v2778
      %5197 = vmatmul.mubr.bf16.gmra.mrb[0].mxu0 %v2777
      %v5198 = vpop.f32.mrb[0].mxu0
      %v5199 = vadd.f32 %v4966, %v5198
      %v5200 = vpop.f32.mrb[0].mxu0
      %v5201 = vadd.f32 %v4968, %v5200
      %v5202 = vpop.f32.mrb[0].mxu0
      %v5203 = vadd.f32 %v4970, %v5202
      %v5204 = vpop.f32.mrb[0].mxu0
      %v5205 = vadd.f32 %v4972, %v5204
      %5206 = vmatprep.mubr.bf16.mxu0 %v2780
      %5207 = vmatmul.mubr.bf16.gmra.mrb[0].mxu0 %v2779
      %v5208 = vpop.f32.mrb[0].mxu0
      %v5209 = vadd.f32 %v4976, %v5208
      %v5210 = vpop.f32.mrb[0].mxu0
      %v5211 = vadd.f32 %v4978, %v5210
      %v5212 = vpop.f32.mrb[0].mxu0
      %v5213 = vadd.f32 %v4980, %v5212
      %v5214 = vpop.f32.mrb[0].mxu0
      %v5215 = vadd.f32 %v4982, %v5214
      %5216 = vmatprep.mubr.bf16.mxu0 %v2782
      %5217 = vmatmul.mubr.bf16.gmra.mrb[0].mxu0 %v2781
      %v5218 = vpop.f32.mrb[0].mxu0
      %v5219 = vadd.f32 %v4986, %v5218
      %v5220 = vpop.f32.mrb[0].mxu0
      %v5221 = vadd.f32 %v4988, %v5220
      %v5222 = vpop.f32.mrb[0].mxu0
      %v5223 = vadd.f32 %v4990, %v5222
      %v5224 = vpop.f32.mrb[0].mxu0
      %v5225 = vadd.f32 %v4992, %v5224
      %5226 = vmatprep.mubr.bf16.mxu0 %v2784
      %5227 = vmatmul.mubr.bf16.gmra.mrb[0].mxu0 %v2783
      %v5228 = vpop.f32.mrb[0].mxu0
      %v5229 = vadd.f32 %v4996, %v5228
      %v5230 = vpop.f32.mrb[0].mxu0
      %v5231 = vadd.f32 %v4998, %v5230
      %v5232 = vpop.f32.mrb[0].mxu0
      %v5233 = vadd.f32 %v5000, %v5232
      %v5234 = vpop.f32.mrb[0].mxu0
      %v5235 = vadd.f32 %v5002, %v5234
      %5236 = vmatprep.mubr.bf16.mxu0 %v2786
      %5237 = vmatmul.mubr.bf16.gmra.mrb[0].mxu0 %v2785
      %v5238 = vpop.f32.mrb[0].mxu0
      %v5239 = vadd.f32 %v5006, %v5238
      %v5240 = vpop.f32.mrb[0].mxu0
      %v5241 = vadd.f32 %v5008, %v5240
      %v5242 = vpop.f32.mrb[0].mxu0
      %v5243 = vadd.f32 %v5010, %v5242
      %v5244 = vpop.f32.mrb[0].mxu0
      %v5245 = vadd.f32 %v5012, %v5244
      %5246 = vmatprep.mubr.bf16.mxu0 %v2788
      %5247 = vmatmul.mubr.bf16.gmra.mrb[0].mxu0 %v2787
      %v5248 = vpop.f32.mrb[0].mxu0
      %v5249 = vadd.f32 %v5016, %v5248
      %v5250 = vpop.f32.mrb[0].mxu0
      %v5251 = vadd.f32 %v5018, %v5250
      %v5252 = vpop.f32.mrb[0].mxu0
      %v5253 = vadd.f32 %v5020, %v5252
      %v5254 = vpop.f32.mrb[0].mxu0
      %v5255 = vadd.f32 %v5022, %v5254
      %5256 = vmatprep.mubr.bf16.mxu0 %v2790
      %5257 = vmatmul.mubr.bf16.gmra.mrb[0].mxu0 %v2789
      %v5258 = vpop.f32.mrb[0].mxu0
      %v5259 = vadd.f32 %v5026, %v5258
      %v5260 = vpop.f32.mrb[0].mxu0
      %v5261 = vadd.f32 %v5028, %v5260
      %v5262 = vpop.f32.mrb[0].mxu0
      %v5263 = vadd.f32 %v5030, %v5262
      %v5264 = vpop.f32.mrb[0].mxu0
      %v5265 = vadd.f32 %v5032, %v5264
      %5266 = vmatprep.mubr.bf16.mxu0 %v2792
      %5267 = vmatmul.mubr.bf16.gmra.mrb[0].mxu0 %v2791
      %v5268 = vpop.f32.mrb[0].mxu0
      %v5269 = vadd.f32 %v5036, %v5268
      %v5270 = vpop.f32.mrb[0].mxu0
      %v5271 = vadd.f32 %v5038, %v5270
      %v5272 = vpop.f32.mrb[0].mxu0
      %v5273 = vadd.f32 %v5040, %v5272
      %v5274 = vpop.f32.mrb[0].mxu0
      %v5275 = vadd.f32 %v5042, %v5274
      %5276 = vmatprep.mubr.bf16.mxu0 %v2794
      %5277 = vmatmul.mubr.bf16.gmra.mrb[0].mxu0 %v2793
      %v5278 = vpop.f32.mrb[0].mxu0
      %v5279 = vadd.f32 %v5046, %v5278
      %v5280 = vpop.f32.mrb[0].mxu0
      %v5281 = vadd.f32 %v5048, %v5280
      %v5282 = vpop.f32.mrb[0].mxu0
      %v5283 = vadd.f32 %v5050, %v5282
      %v5284 = vpop.f32.mrb[0].mxu0
      %v5285 = vadd.f32 %v5052, %v5284
      %5286 = vmatprep.mubr.bf16.mxu0 %v2796
      %5287 = vmatmul.mubr.bf16.gmra.mrb[0].mxu0 %v2795
      %v5288 = vpop.f32.mrb[0].mxu0
      %v5289 = vadd.f32 %v5056, %v5288
      %v5290 = vpop.f32.mrb[0].mxu0
      %v5291 = vadd.f32 %v5058, %v5290
      %v5292 = vpop.f32.mrb[0].mxu0
      %v5293 = vadd.f32 %v5060, %v5292
      %v5294 = vpop.f32.mrb[0].mxu0
      %v5295 = vadd.f32 %v5062, %v5294
      %5296 = vmatprep.mubr.bf16.mxu0 %v2798
      %5297 = vmatmul.mubr.bf16.gmra.mrb[0].mxu0 %v2797
      %v5298 = vpop.f32.mrb[0].mxu0
      %v5299 = vadd.f32 %v5066, %v5298
      %v5300 = vpop.f32.mrb[0].mxu0
      %v5301 = vadd.f32 %v5068, %v5300
      %v5302 = vpop.f32.mrb[0].mxu0
      %v5303 = vadd.f32 %v5070, %v5302
      %v5304 = vpop.f32.mrb[0].mxu0
      %v5305 = vadd.f32 %v5072, %v5304
      %5306 = vmatprep.mubr.bf16.mxu0 %v2800
      %5307 = vmatmul.mubr.bf16.gmra.mrb[0].mxu0 %v2799
      %v5308 = vpop.f32.mrb[0].mxu0
      %v5309 = vadd.f32 %v5076, %v5308
      %v5310 = vpop.f32.mrb[0].mxu0
      %v5311 = vadd.f32 %v5078, %v5310
      %v5312 = vpop.f32.mrb[0].mxu0
      %v5313 = vadd.f32 %v5080, %v5312
      %v5314 = vpop.f32.mrb[0].mxu0
      %v5315 = vadd.f32 %v5082, %v5314
      %5316 = vmatprep.mubr.bf16.mxu0 %v2802
      %5317 = vmatmul.mubr.bf16.gmra.mrb[0].mxu0 %v2801
      %v5318 = vpop.f32.mrb[0].mxu0
      %v5319 = vadd.f32 %v5086, %v5318
      %v5320 = vpop.f32.mrb[0].mxu0
      %v5321 = vadd.f32 %v5088, %v5320
      %v5322 = vpop.f32.mrb[0].mxu0
      %v5323 = vadd.f32 %v5090, %v5322
      %v5324 = vpop.f32.mrb[0].mxu0
      %v5325 = vadd.f32 %v5092, %v5324
      %5326 = vmatprep.mubr.bf16.mxu0 %v2804
      %5327 = vmatmul.mubr.bf16.gmra.mrb[0].mxu0 %v2803
      %v5328 = vpop.f32.mrb[0].mxu0
      %v5329 = vadd.f32 %v5096, %v5328
      %v5330 = vpop.f32.mrb[0].mxu0
      %v5331 = vadd.f32 %v5098, %v5330
      %v5332 = vpop.f32.mrb[0].mxu0
      %v5333 = vadd.f32 %v5100, %v5332
      %v5334 = vpop.f32.mrb[0].mxu0
      %v5335 = vadd.f32 %v5102, %v5334
      %5336 = vmatprep.mubr.bf16.mxu0 %v2806
      %5337 = vmatmul.mubr.bf16.gmra.mrb[0].mxu0 %v2805
      %v5338 = vpop.f32.mrb[0].mxu0
      %v5339 = vadd.f32 %v5106, %v5338
      %v5340 = vpop.f32.mrb[0].mxu0
      %v5341 = vadd.f32 %v5108, %v5340
      %v5342 = vpop.f32.mrb[0].mxu0
      %v5343 = vadd.f32 %v5110, %v5342
      %v5344 = vpop.f32.mrb[0].mxu0
      %v5345 = vadd.f32 %v5112, %v5344
      %5346 = vmatprep.mubr.bf16.mxu0 %v2808
      %5347 = vmatmul.mubr.bf16.gmra.mrb[0].mxu0 %v2807
      %v5348 = vpop.f32.mrb[0].mxu0
      %v5349 = vadd.f32 %v5116, %v5348
      %v5350 = vpop.f32.mrb[0].mxu0
      %v5351 = vadd.f32 %v5118, %v5350
      %v5352 = vpop.f32.mrb[0].mxu0
      %v5353 = vadd.f32 %v5120, %v5352
      %v5354 = vpop.f32.mrb[0].mxu0
      %v5355 = vadd.f32 %v5122, %v5354
      %5356 = vmatprep.mubr.bf16.mxu0 %v2810
      %5357 = vmatmul.mubr.bf16.gmra.mrb[0].mxu0 %v2809
      %v5358 = vpop.f32.mrb[0].mxu0
      %v5359 = vadd.f32 %v5126, %v5358
      %v5360 = vpop.f32.mrb[0].mxu0
      %v5361 = vadd.f32 %v5128, %v5360
      %v5362 = vpop.f32.mrb[0].mxu0
      %v5363 = vadd.f32 %v5130, %v5362
      %v5364 = vpop.f32.mrb[0].mxu0
      %v5365 = vadd.f32 %v5132, %v5364
      %5366 = vmatprep.mubr.bf16.mxu0 %v2812
      %5367 = vmatmul.mubr.bf16.gmra.mrb[0].mxu0 %v2811
      %v5368 = vpop.f32.mrb[0].mxu0
      %v5369 = vadd.f32 %v5136, %v5368
      %v5370 = vpop.f32.mrb[0].mxu0
      %v5371 = vadd.f32 %v5138, %v5370
      %v5372 = vpop.f32.mrb[0].mxu0
      %v5373 = vadd.f32 %v5140, %v5372
      %v5374 = vpop.f32.mrb[0].mxu0
      %v5375 = vadd.f32 %v5142, %v5374
      %5376 = vmatprep.mubr.bf16.mxu0 %v2814
      %5377 = vmatmul.mubr.bf16.gmra.mrb[0].mxu0 %v2813
      %v5378 = vpop.f32.mrb[0].mxu0
      %v5379 = vadd.f32 %v5146, %v5378
      %v5380 = vpop.f32.mrb[0].mxu0
      %v5381 = vadd.f32 %v5148, %v5380
      %v5382 = vpop.f32.mrb[0].mxu0
      %v5383 = vadd.f32 %v5150, %v5382
      %v5384 = vpop.f32.mrb[0].mxu0
      %v5385 = vadd.f32 %v5152, %v5384
      %5386 = vdwg.mxu0
      %v5387 = vmax.f32 %v4490, 0.0
      %v5388 = vmax.f32 %v4492, 0.0
      %v5389 = vmax.f32 %v5189, 0.0
      %v5390 = vmax.f32 %v5191, 0.0
      %v5391 = vmax.f32 %v4494, 0.0
      %v5392 = vmax.f32 %v4496, 0.0
      %v5393 = vmax.f32 %v5193, 0.0
      %v5394 = vmax.f32 %v5195, 0.0
      %v5395 = vmax.f32 %v4500, 0.0
      %v5396 = vmax.f32 %v4502, 0.0
      %v5397 = vmax.f32 %v5199, 0.0
      %v5398 = vmax.f32 %v5201, 0.0
      %v5399 = vmax.f32 %v4504, 0.0
      %v5400 = vmax.f32 %v4506, 0.0
      %v5401 = vmax.f32 %v5203, 0.0
      %v5402 = vmax.f32 %v5205, 0.0
      %v5403 = vmax.f32 %v4510, 0.0
      %v5404 = vmax.f32 %v4512, 0.0
      %v5405 = vmax.f32 %v5209, 0.0
      %v5406 = vmax.f32 %v5211, 0.0
      %v5407 = vmax.f32 %v4514, 0.0
      %v5408 = vmax.f32 %v4516, 0.0
      %v5409 = vmax.f32 %v5213, 0.0
      %v5410 = vmax.f32 %v5215, 0.0
      %v5411 = vmax.f32 %v4520, 0.0
      %v5412 = vmax.f32 %v4522, 0.0
      %v5413 = vmax.f32 %v5219, 0.0
      %v5414 = vmax.f32 %v5221, 0.0
      %v5415 = vmax.f32 %v4524, 0.0
      %v5416 = vmax.f32 %v4526, 0.0
      %v5417 = vmax.f32 %v5223, 0.0
      %v5418 = vmax.f32 %v5225, 0.0
      %v5419 = vmax.f32 %v4530, 0.0
      %v5420 = vmax.f32 %v4532, 0.0
      %v5421 = vmax.f32 %v5229, 0.0
      %v5422 = vmax.f32 %v5231, 0.0
      %v5423 = vmax.f32 %v4534, 0.0
      %v5424 = vmax.f32 %v4536, 0.0
      %v5425 = vmax.f32 %v5233, 0.0
      %v5426 = vmax.f32 %v5235, 0.0
      %v5427 = vmax.f32 %v4540, 0.0
      %v5428 = vmax.f32 %v4542, 0.0
      %v5429 = vmax.f32 %v5239, 0.0
      %v5430 = vmax.f32 %v5241, 0.0
      %v5431 = vmax.f32 %v4544, 0.0
      %v5432 = vmax.f32 %v4546, 0.0
      %v5433 = vmax.f32 %v5243, 0.0
      %v5434 = vmax.f32 %v5245, 0.0
      %v5435 = vmax.f32 %v4550, 0.0
      %v5436 = vmax.f32 %v4552, 0.0
      %v5437 = vmax.f32 %v5249, 0.0
      %v5438 = vmax.f32 %v5251, 0.0
      %v5439 = vmax.f32 %v4554, 0.0
      %v5440 = vmax.f32 %v4556, 0.0
      %v5441 = vmax.f32 %v5253, 0.0
      %v5442 = vmax.f32 %v5255, 0.0
      %v5443 = vmax.f32 %v4560, 0.0
      %v5444 = vmax.f32 %v4562, 0.0
      %v5445 = vmax.f32 %v5259, 0.0
      %v5446 = vmax.f32 %v5261, 0.0
      %v5447 = vmax.f32 %v4564, 0.0
      %v5448 = vmax.f32 %v4566, 0.0
      %v5449 = vmax.f32 %v5263, 0.0
      %v5450 = vmax.f32 %v5265, 0.0
      %v5451 = vmax.f32 %v4570, 0.0
      %v5452 = vmax.f32 %v4572, 0.0
      %v5453 = vmax.f32 %v5269, 0.0
      %v5454 = vmax.f32 %v5271, 0.0
      %v5455 = vmax.f32 %v4574, 0.0
      %v5456 = vmax.f32 %v4576, 0.0
      %v5457 = vmax.f32 %v5273, 0.0
      %v5458 = vmax.f32 %v5275, 0.0
      %v5459 = vmax.f32 %v4580, 0.0
      %v5460 = vmax.f32 %v4582, 0.0
      %v5461 = vmax.f32 %v5279, 0.0
      %v5462 = vmax.f32 %v5281, 0.0
      %v5463 = vmax.f32 %v4584, 0.0
      %v5464 = vmax.f32 %v4586, 0.0
      %v5465 = vmax.f32 %v5283, 0.0
      %v5466 = vmax.f32 %v5285, 0.0
      %v5467 = vmax.f32 %v4590, 0.0
      %v5468 = vmax.f32 %v4592, 0.0
      %v5469 = vmax.f32 %v5289, 0.0
      %v5470 = vmax.f32 %v5291, 0.0
      %v5471 = vmax.f32 %v4594, 0.0
      %v5472 = vmax.f32 %v4596, 0.0
      %v5473 = vmax.f32 %v5293, 0.0
      %v5474 = vmax.f32 %v5295, 0.0
      %v5475 = vmax.f32 %v4600, 0.0
      %v5476 = vmax.f32 %v4602, 0.0
      %v5477 = vmax.f32 %v5299, 0.0
      %v5478 = vmax.f32 %v5301, 0.0
      %v5479 = vmax.f32 %v4604, 0.0
      %v5480 = vmax.f32 %v4606, 0.0
      %v5481 = vmax.f32 %v5303, 0.0
      %v5482 = vmax.f32 %v5305, 0.0
      %v5483 = vmax.f32 %v4610, 0.0
      %v5484 = vmax.f32 %v4612, 0.0
      %v5485 = vmax.f32 %v5309, 0.0
      %v5486 = vmax.f32 %v5311, 0.0
      %v5487 = vmax.f32 %v4614, 0.0
      %v5488 = vmax.f32 %v4616, 0.0
      %v5489 = vmax.f32 %v5313, 0.0
      %v5490 = vmax.f32 %v5315, 0.0
      %v5491 = vmax.f32 %v4620, 0.0
      %v5492 = vmax.f32 %v4622, 0.0
      %v5493 = vmax.f32 %v5319, 0.0
      %v5494 = vmax.f32 %v5321, 0.0
      %v5495 = vmax.f32 %v4624, 0.0
      %v5496 = vmax.f32 %v4626, 0.0
      %v5497 = vmax.f32 %v5323, 0.0
      %v5498 = vmax.f32 %v5325, 0.0
      %v5499 = vmax.f32 %v4630, 0.0
      %v5500 = vmax.f32 %v4632, 0.0
      %v5501 = vmax.f32 %v5329, 0.0
      %v5502 = vmax.f32 %v5331, 0.0
      %v5503 = vmax.f32 %v4634, 0.0
      %v5504 = vmax.f32 %v4636, 0.0
      %v5505 = vmax.f32 %v5333, 0.0
      %v5506 = vmax.f32 %v5335, 0.0
      %v5507 = vmax.f32 %v4640, 0.0
      %v5508 = vmax.f32 %v4642, 0.0
      %v5509 = vmax.f32 %v5339, 0.0
      %v5510 = vmax.f32 %v5341, 0.0
      %v5511 = vmax.f32 %v4644, 0.0
      %v5512 = vmax.f32 %v4646, 0.0
      %v5513 = vmax.f32 %v5343, 0.0
      %v5514 = vmax.f32 %v5345, 0.0
      %v5515 = vmax.f32 %v4650, 0.0
      %v5516 = vmax.f32 %v4652, 0.0
      %v5517 = vmax.f32 %v5349, 0.0
      %v5518 = vmax.f32 %v5351, 0.0
      %v5519 = vmax.f32 %v4654, 0.0
      %v5520 = vmax.f32 %v4656, 0.0
      %v5521 = vmax.f32 %v5353, 0.0
      %v5522 = vmax.f32 %v5355, 0.0
      %v5523 = vmax.f32 %v4660, 0.0
      %v5524 = vmax.f32 %v4662, 0.0
      %v5525 = vmax.f32 %v5359, 0.0
      %v5526 = vmax.f32 %v5361, 0.0
      %v5527 = vmax.f32 %v4664, 0.0
      %v5528 = vmax.f32 %v4666, 0.0
      %v5529 = vmax.f32 %v5363, 0.0
      %v5530 = vmax.f32 %v5365, 0.0
      %v5531 = vmax.f32 %v4670, 0.0
      %v5532 = vmax.f32 %v4672, 0.0
      %v5533 = vmax.f32 %v5369, 0.0
      %v5534 = vmax.f32 %v5371, 0.0
      %v5535 = vmax.f32 %v4674, 0.0
      %v5536 = vmax.f32 %v4676, 0.0
      %v5537 = vmax.f32 %v5373, 0.0
      %v5538 = vmax.f32 %v5375, 0.0
      %v5539 = vmax.f32 %v4680, 0.0
      %v5540 = vmax.f32 %v4682, 0.0
      %v5541 = vmax.f32 %v5379, 0.0
      %v5542 = vmax.f32 %v5381, 0.0
      %v5543 = vmax.f32 %v4684, 0.0
      %v5544 = vmax.f32 %v4686, 0.0
      %v5545 = vmax.f32 %v5383, 0.0
      %v5546 = vmax.f32 %v5385, 0.0
      %v5547 = vmax.f32 %v5387, %v5389
      %v5548 = vmax.f32 %v5388, %v5390
      %v5549 = vmax.f32 %v5391, %v5393
      %v5550 = vmax.f32 %v5392, %v5394
      %v5551 = vmax.f32 %v5395, %v5397
      %v5552 = vmax.f32 %v5396, %v5398
      %v5553 = vmax.f32 %v5399, %v5401
      %v5554 = vmax.f32 %v5400, %v5402
      %v5555 = vmax.f32 %v5403, %v5405
      %v5556 = vmax.f32 %v5404, %v5406
      %v5557 = vmax.f32 %v5407, %v5409
      %v5558 = vmax.f32 %v5408, %v5410
      %v5559 = vmax.f32 %v5411, %v5413
      %v5560 = vmax.f32 %v5412, %v5414
      %v5561 = vmax.f32 %v5415, %v5417
      %v5562 = vmax.f32 %v5416, %v5418
      %v5563 = vmax.f32 %v5419, %v5421
      %v5564 = vmax.f32 %v5420, %v5422
      %v5565 = vmax.f32 %v5423, %v5425
      %v5566 = vmax.f32 %v5424, %v5426
      %v5567 = vmax.f32 %v5427, %v5429
      %v5568 = vmax.f32 %v5428, %v5430
      %v5569 = vmax.f32 %v5431, %v5433
      %v5570 = vmax.f32 %v5432, %v5434
      %v5571 = vmax.f32 %v5435, %v5437
      %v5572 = vmax.f32 %v5436, %v5438
      %v5573 = vmax.f32 %v5439, %v5441
      %v5574 = vmax.f32 %v5440, %v5442
      %v5575 = vmax.f32 %v5443, %v5445
      %v5576 = vmax.f32 %v5444, %v5446
      %v5577 = vmax.f32 %v5447, %v5449
      %v5578 = vmax.f32 %v5448, %v5450
      %v5579 = vmax.f32 %v5451, %v5453
      %v5580 = vmax.f32 %v5452, %v5454
      %v5581 = vmax.f32 %v5455, %v5457
      %v5582 = vmax.f32 %v5456, %v5458
      %v5583 = vmax.f32 %v5459, %v5461
      %v5584 = vmax.f32 %v5460, %v5462
      %v5585 = vmax.f32 %v5463, %v5465
      %v5586 = vmax.f32 %v5464, %v5466
      %v5587 = vmax.f32 %v5467, %v5469
      %v5588 = vmax.f32 %v5468, %v5470
      %v5589 = vmax.f32 %v5471, %v5473
      %v5590 = vmax.f32 %v5472, %v5474
      %v5591 = vmax.f32 %v5475, %v5477
      %v5592 = vmax.f32 %v5476, %v5478
      %v5593 = vmax.f32 %v5479, %v5481
      %v5594 = vmax.f32 %v5480, %v5482
      %v5595 = vmax.f32 %v5483, %v5485
      %v5596 = vmax.f32 %v5484, %v5486
      %v5597 = vmax.f32 %v5487, %v5489
      %v5598 = vmax.f32 %v5488, %v5490
      %v5599 = vmax.f32 %v5491, %v5493
      %v5600 = vmax.f32 %v5492, %v5494
      %v5601 = vmax.f32 %v5495, %v5497
      %v5602 = vmax.f32 %v5496, %v5498
      %v5603 = vmax.f32 %v5499, %v5501
      %v5604 = vmax.f32 %v5500, %v5502
      %v5605 = vmax.f32 %v5503, %v5505
      %v5606 = vmax.f32 %v5504, %v5506
      %v5607 = vmax.f32 %v5507, %v5509
      %v5608 = vmax.f32 %v5508, %v5510
      %v5609 = vmax.f32 %v5511, %v5513
      %v5610 = vmax.f32 %v5512, %v5514
      %v5611 = vmax.f32 %v5515, %v5517
      %v5612 = vmax.f32 %v5516, %v5518
      %v5613 = vmax.f32 %v5519, %v5521
      %v5614 = vmax.f32 %v5520, %v5522
      %v5615 = vmax.f32 %v5523, %v5525
      %v5616 = vmax.f32 %v5524, %v5526
      %v5617 = vmax.f32 %v5527, %v5529
      %v5618 = vmax.f32 %v5528, %v5530
      %v5619 = vmax.f32 %v5531, %v5533
      %v5620 = vmax.f32 %v5532, %v5534
      %v5621 = vmax.f32 %v5535, %v5537
      %v5622 = vmax.f32 %v5536, %v5538
      %v5623 = vmax.f32 %v5539, %v5541
      %v5624 = vmax.f32 %v5540, %v5542
      %v5625 = vmax.f32 %v5543, %v5545
      %v5626 = vmax.f32 %v5544, %v5546
      %v5627 = vmax.f32 %v5547, %v5555
      %v5628 = vmax.f32 %v5548, %v5556
      %v5629 = vmax.f32 %v5549, %v5557
      %v5630 = vmax.f32 %v5550, %v5558
      %v5631 = vmax.f32 %v5551, %v5559
      %v5632 = vmax.f32 %v5552, %v5560
      %v5633 = vmax.f32 %v5553, %v5561
      %v5634 = vmax.f32 %v5554, %v5562
      %v5635 = vmax.f32 %v5563, %v5571
      %v5636 = vmax.f32 %v5564, %v5572
      %v5637 = vmax.f32 %v5565, %v5573
      %v5638 = vmax.f32 %v5566, %v5574
      %v5639 = vmax.f32 %v5567, %v5575
      %v5640 = vmax.f32 %v5568, %v5576
      %v5641 = vmax.f32 %v5569, %v5577
      %v5642 = vmax.f32 %v5570, %v5578
      %v5643 = vmax.f32 %v5579, %v5587
      %v5644 = vmax.f32 %v5580, %v5588
      %v5645 = vmax.f32 %v5581, %v5589
      %v5646 = vmax.f32 %v5582, %v5590
      %v5647 = vmax.f32 %v5583, %v5591
      %v5648 = vmax.f32 %v5584, %v5592
      %v5649 = vmax.f32 %v5585, %v5593
      %v5650 = vmax.f32 %v5586, %v5594
      %v5651 = vmax.f32 %v5595, %v5603
      %v5652 = vmax.f32 %v5596, %v5604
      %v5653 = vmax.f32 %v5597, %v5605
      %v5654 = vmax.f32 %v5598, %v5606
      %v5655 = vmax.f32 %v5599, %v5607
      %v5656 = vmax.f32 %v5600, %v5608
      %v5657 = vmax.f32 %v5601, %v5609
      %v5658 = vmax.f32 %v5602, %v5610
      %v5659 = vmax.f32 %v5611, %v5619
      %v5660 = vmax.f32 %v5612, %v5620
      %v5661 = vmax.f32 %v5613, %v5621
      %v5662 = vmax.f32 %v5614, %v5622
      %v5663 = vmax.f32 %v5615, %v5623
      %v5664 = vmax.f32 %v5616, %v5624
      %v5665 = vmax.f32 %v5617, %v5625
      %v5666 = vmax.f32 %v5618, %v5626
      %v5667 = vpack.c.bf16 %v5629, %v5627
      %v5668 = vpack.c.bf16 %v5630, %v5628
      %v5669 = vpack.c.bf16 %v5637, %v5635
      %v5670 = vpack.c.bf16 %v5638, %v5636
      %v5671 = vpack.c.bf16 %v5645, %v5643
      %v5672 = vpack.c.bf16 %v5646, %v5644
      %v5673 = vpack.c.bf16 %v5633, %v5631
      %v5674 = vpack.c.bf16 %v5634, %v5632
      %v5675 = vpack.c.bf16 %v5641, %v5639
      %v5676 = vpack.c.bf16 %v5642, %v5640
      %v5677 = vpack.c.bf16 %v5649, %v5647
      %v5678 = vpack.c.bf16 %v5650, %v5648
      %v5679 = vpack.c.bf16 %v5653, %v5651
      %v5680 = vpack.c.bf16 %v5654, %v5652
      %v5681 = vpack.c.bf16 %v5657, %v5655
      %v5682 = vpack.c.bf16 %v5658, %v5656
      %v5683 = vpack.c.bf16 %v5661, %v5659
      %v5684 = vpack.c.bf16 %v5662, %v5660
      %v5685 = vpack.c.bf16 %v5665, %v5663
      %v5686 = vpack.c.bf16 %v5666, %v5664
      %v5687 = vld [vmem:[%s5] sm:$0xff]
      %v5688 = vld [vmem:[%s5 + $0x8] sm:$0xff]
      %v5689 = vld [vmem:[%s5 + $0x10] sm:$0xff]
      %v5690 = vld [vmem:[%s5 + $0x18] sm:$0xff]
      %v5691 = vld [vmem:[%s5 + $0x20] sm:$0xff]
      %v5692 = vld [vmem:[%s5 + $0x28] sm:$0xff]
      %v5693 = vld [vmem:[%s5 + $0x30] sm:$0xff]
      %v5694 = vld [vmem:[%s5 + $0x38] sm:$0xff]
      %v5695 = vld [vmem:[%s5 + $0x40] sm:$0xff]
      %v5696 = vld [vmem:[%s5 + $0x48] sm:$0xff]
      %v5697 = vld [vmem:[%s5 + $0x50] sm:$0xff]
      %v5698 = vld [vmem:[%s5 + $0x58] sm:$0xff]
      %v5699 = vld [vmem:[%s5 + $0x60] sm:$0xff]
      %v5700 = vld [vmem:[%s5 + $0x68] sm:$0xff]
      %v5701 = vld [vmem:[%s5 + $0x70] sm:$0xff]
      %v5702 = vld [vmem:[%s5 + $0x78] sm:$0xff]
      %v5703 = vld [vmem:[%s5 + $0x80] sm:$0xff]
      %v5704 = vld [vmem:[%s5 + $0x88] sm:$0xff]
      %v5705 = vld [vmem:[%s5 + $0x90] sm:$0xff]
      %v5706 = vld [vmem:[%s5 + $0x98] sm:$0xff]
      %v5707 = vld [vmem:[%s5 + $0xa0] sm:$0xff]
      %v5708 = vld [vmem:[%s5 + $0xa8] sm:$0xff]
      %v5709 = vld [vmem:[%s5 + $0xb0] sm:$0xff]
      %v5710 = vld [vmem:[%s5 + $0xb8] sm:$0xff]
      %v5711 = vld [vmem:[%s5 + $0xc0] sm:$0xff]
      %v5712 = vld [vmem:[%s5 + $0xc8] sm:$0xff]
      %v5713 = vld [vmem:[%s5 + $0xd0] sm:$0xff]
      %v5714 = vld [vmem:[%s5 + $0xd8] sm:$0xff]
      %v5715 = vld [vmem:[%s5 + $0xe0] sm:$0xff]
      %v5716 = vld [vmem:[%s5 + $0xe8] sm:$0xff]
      %v5717 = vld [vmem:[%s5 + $0xf0] sm:$0xff]
      %v5718 = vld [vmem:[%s5 + $0xf8] sm:$0xff]
      %v5719 = vld [vmem:[%s5 + $0x100] sm:$0xff]
      %v5720 = vld [vmem:[%s5 + $0x108] sm:$0xff]
      %v5721 = vld [vmem:[%s5 + $0x110] sm:$0xff]
      %v5722 = vld [vmem:[%s5 + $0x118] sm:$0xff]
      %v5723 = vld [vmem:[%s5 + $0x120] sm:$0xff]
      %v5724 = vld [vmem:[%s5 + $0x128] sm:$0xff]
      %v5725 = vld [vmem:[%s5 + $0x130] sm:$0xff]
      %v5726 = vld [vmem:[%s5 + $0x138] sm:$0xff]
      %v5727 = vld [vmem:[%s5 + $0x140] sm:$0xff]
      %v5728 = vld [vmem:[%s5 + $0x148] sm:$0xff]
      %v5729 = vld [vmem:[%s5 + $0x150] sm:$0xff]
      %v5730 = vld [vmem:[%s5 + $0x158] sm:$0xff]
      %v5731 = vld [vmem:[%s5 + $0x160] sm:$0xff]
      %v5732 = vld [vmem:[%s5 + $0x168] sm:$0xff]
      %v5733 = vld [vmem:[%s5 + $0x170] sm:$0xff]
      %v5734 = vld [vmem:[%s5 + $0x178] sm:$0xff]
      %v5735 = vld [vmem:[%s5 + $0x180] sm:$0xff]
      %v5736 = vld [vmem:[%s5 + $0x188] sm:$0xff]
      %v5737 = vld [vmem:[%s5 + $0x190] sm:$0xff]
      %v5738 = vld [vmem:[%s5 + $0x198] sm:$0xff]
      %v5739 = vld [vmem:[%s5 + $0x1a0] sm:$0xff]
      %v5740 = vld [vmem:[%s5 + $0x1a8] sm:$0xff]
      %v5741 = vld [vmem:[%s5 + $0x1b0] sm:$0xff]
      %v5742 = vld [vmem:[%s5 + $0x1b8] sm:$0xff]
      %v5743 = vld [vmem:[%s5 + $0x1c0] sm:$0xff]
      %v5744 = vld [vmem:[%s5 + $0x1c8] sm:$0xff]
      %v5745 = vld [vmem:[%s5 + $0x1d0] sm:$0xff]
      %v5746 = vld [vmem:[%s5 + $0x1d8] sm:$0xff]
      %v5747 = vld [vmem:[%s5 + $0x1e0] sm:$0xff]
      %v5748 = vld [vmem:[%s5 + $0x1e8] sm:$0xff]
      %v5749 = vld [vmem:[%s5 + $0x1f0] sm:$0xff]
      %v5750 = vld [vmem:[%s5 + $0x1f8] sm:$0xff]
      %v5751 = vld [vmem:[%s5 + $0x200] sm:$0xff]
      %v5752 = vld [vmem:[%s5 + $0x208] sm:$0xff]
      %v5753 = vld [vmem:[%s5 + $0x210] sm:$0xff]
      %v5754 = vld [vmem:[%s5 + $0x218] sm:$0xff]
      %v5755 = vld [vmem:[%s5 + $0x220] sm:$0xff]
      %v5756 = vld [vmem:[%s5 + $0x228] sm:$0xff]
      %v5757 = vld [vmem:[%s5 + $0x230] sm:$0xff]
      %v5758 = vld [vmem:[%s5 + $0x238] sm:$0xff]
      %v5759 = vld [vmem:[%s5 + $0x240] sm:$0xff]
      %v5760 = vld [vmem:[%s5 + $0x248] sm:$0xff]
      %v5761 = vld [vmem:[%s5 + $0x250] sm:$0xff]
      %v5762 = vld [vmem:[%s5 + $0x258] sm:$0xff]
      %v5763 = vld [vmem:[%s5 + $0x260] sm:$0xff]
      %v5764 = vld [vmem:[%s5 + $0x268] sm:$0xff]
      %v5765 = vld [vmem:[%s5 + $0x270] sm:$0xff]
      %v5766 = vld [vmem:[%s5 + $0x278] sm:$0xff]
      %v5767 = vld [vmem:[%s5 + $0x280] sm:$0xff]
      %v5768 = vld [vmem:[%s5 + $0x288] sm:$0xff]
      %v5769 = vld [vmem:[%s5 + $0x290] sm:$0xff]
      %v5770 = vld [vmem:[%s5 + $0x298] sm:$0xff]
      %v5771 = vld [vmem:[%s5 + $0x2a0] sm:$0xff]
      %v5772 = vld [vmem:[%s5 + $0x2a8] sm:$0xff]
      %v5773 = vld [vmem:[%s5 + $0x2b0] sm:$0xff]
      %v5774 = vld [vmem:[%s5 + $0x2b8] sm:$0xff]
      %v5775 = vld [vmem:[%s5 + $0x2c0] sm:$0xff]
      %v5776 = vld [vmem:[%s5 + $0x2c8] sm:$0xff]
      %v5777 = vld [vmem:[%s5 + $0x2d0] sm:$0xff]
      %v5778 = vld [vmem:[%s5 + $0x2d8] sm:$0xff]
      %v5779 = vld [vmem:[%s5 + $0x2e0] sm:$0xff]
      %v5780 = vld [vmem:[%s5 + $0x2e8] sm:$0xff]
      %v5781 = vld [vmem:[%s5 + $0x2f0] sm:$0xff]
      %v5782 = vld [vmem:[%s5 + $0x2f8] sm:$0xff]
      %v5783 = vld [vmem:[%s6] sm:$0x3]
      %v5785 = vlaneseq
      %v5786 = vshrl.u32 %v5785, 7
      %v5787 = vsub.s32 0, %v5786
      %v5788 = vrot.slane %v5783, %v5787
      %v5789 = vlaneseq
      %v5790 = vshrl.u32 %v5789, 7
      %v5791 = vsub.s32 1, %v5790
      %v5792 = vrot.slane %v5783, %v5791
      %v5891 = vunpack.c.l.b16 %v5687
      %v5892 = vunpack.c.h.b16 %v5687
      %v5893 = vunpack.c.l.b16 %v5688
      %v5894 = vunpack.c.h.b16 %v5688
      %v5895 = vunpack.c.l.b16 %v5689
      %v5896 = vunpack.c.h.b16 %v5689
      %v5897 = vunpack.c.l.b16 %v5690
      %v5898 = vunpack.c.h.b16 %v5690
      %v5899 = vunpack.c.l.b16 %v5691
      %v5900 = vunpack.c.h.b16 %v5691
      %v5901 = vunpack.c.l.b16 %v5692
      %v5902 = vunpack.c.h.b16 %v5692
      %v5903 = vunpack.c.l.b16 %v5693
      %v5904 = vunpack.c.h.b16 %v5693
      %v5905 = vunpack.c.l.b16 %v5694
      %v5906 = vunpack.c.h.b16 %v5694
      %v5907 = vunpack.c.l.b16 %v5695
      %v5908 = vunpack.c.h.b16 %v5695
      %v5909 = vunpack.c.l.b16 %v5696
      %v5910 = vunpack.c.h.b16 %v5696
      %v5911 = vunpack.c.l.b16 %v5697
      %v5912 = vunpack.c.h.b16 %v5697
      %v5913 = vunpack.c.l.b16 %v5698
      %v5914 = vunpack.c.h.b16 %v5698
      %v5915 = vunpack.c.l.b16 %v5699
      %v5916 = vunpack.c.h.b16 %v5699
      %v5917 = vunpack.c.l.b16 %v5700
      %v5918 = vunpack.c.h.b16 %v5700
      %v5919 = vunpack.c.l.b16 %v5701
      %v5920 = vunpack.c.h.b16 %v5701
      %v5921 = vunpack.c.l.b16 %v5702
      %v5922 = vunpack.c.h.b16 %v5702
      %v5923 = vunpack.c.l.b16 %v5703
      %v5924 = vunpack.c.h.b16 %v5703
      %v5925 = vunpack.c.l.b16 %v5704
      %v5926 = vunpack.c.h.b16 %v5704
      %v5927 = vunpack.c.l.b16 %v5705
      %v5928 = vunpack.c.h.b16 %v5705
      %v5929 = vunpack.c.l.b16 %v5706
      %v5930 = vunpack.c.h.b16 %v5706
      %v5931 = vunpack.c.l.b16 %v5707
      %v5932 = vunpack.c.h.b16 %v5707
      %v5933 = vunpack.c.l.b16 %v5708
      %v5934 = vunpack.c.h.b16 %v5708
      %v5935 = vunpack.c.l.b16 %v5709
      %v5936 = vunpack.c.h.b16 %v5709
      %v5937 = vunpack.c.l.b16 %v5710
      %v5938 = vunpack.c.h.b16 %v5710
      %v5939 = vunpack.c.l.b16 %v5711
      %v5940 = vunpack.c.h.b16 %v5711
      %v5941 = vunpack.c.l.b16 %v5712
      %v5942 = vunpack.c.h.b16 %v5712
      %v5943 = vunpack.c.l.b16 %v5713
      %v5944 = vunpack.c.h.b16 %v5713
      %v5945 = vunpack.c.l.b16 %v5714
      %v5946 = vunpack.c.h.b16 %v5714
      %v5947 = vunpack.c.l.b16 %v5715
      %v5948 = vunpack.c.h.b16 %v5715
      %v5949 = vunpack.c.l.b16 %v5716
      %v5950 = vunpack.c.h.b16 %v5716
      %v5951 = vunpack.c.l.b16 %v5717
      %v5952 = vunpack.c.h.b16 %v5717
      %v5953 = vunpack.c.l.b16 %v5718
      %v5954 = vunpack.c.h.b16 %v5718
      %v5955 = vunpack.c.l.b16 %v5719
      %v5956 = vunpack.c.h.b16 %v5719
      %v5957 = vunpack.c.l.b16 %v5720
      %v5958 = vunpack.c.h.b16 %v5720
      %v5959 = vunpack.c.l.b16 %v5721
      %v5960 = vunpack.c.h.b16 %v5721
      %v5961 = vunpack.c.l.b16 %v5722
      %v5962 = vunpack.c.h.b16 %v5722
      %v5963 = vunpack.c.l.b16 %v5723
      %v5964 = vunpack.c.h.b16 %v5723
      %v5965 = vunpack.c.l.b16 %v5724
      %v5966 = vunpack.c.h.b16 %v5724
      %v5967 = vunpack.c.l.b16 %v5725
      %v5968 = vunpack.c.h.b16 %v5725
      %v5969 = vunpack.c.l.b16 %v5726
      %v5970 = vunpack.c.h.b16 %v5726
      %v5971 = vunpack.c.l.b16 %v5727
      %v5972 = vunpack.c.h.b16 %v5727
      %v5973 = vunpack.c.l.b16 %v5728
      %v5974 = vunpack.c.h.b16 %v5728
      %v5975 = vunpack.c.l.b16 %v5729
      %v5976 = vunpack.c.h.b16 %v5729
      %v5977 = vunpack.c.l.b16 %v5730
      %v5978 = vunpack.c.h.b16 %v5730
      %v5979 = vunpack.c.l.b16 %v5731
      %v5980 = vunpack.c.h.b16 %v5731
      %v5981 = vunpack.c.l.b16 %v5732
      %v5982 = vunpack.c.h.b16 %v5732
      %v5983 = vunpack.c.l.b16 %v5733
      %v5984 = vunpack.c.h.b16 %v5733
      %v5985 = vunpack.c.l.b16 %v5734
      %v5986 = vunpack.c.h.b16 %v5734
      %v5987 = vunpack.c.l.b16 %v5735
      %v5988 = vunpack.c.h.b16 %v5735
      %v5989 = vunpack.c.l.b16 %v5736
      %v5990 = vunpack.c.h.b16 %v5736
      %v5991 = vunpack.c.l.b16 %v5737
      %v5992 = vunpack.c.h.b16 %v5737
      %v5993 = vunpack.c.l.b16 %v5738
      %v5994 = vunpack.c.h.b16 %v5738
      %v5995 = vunpack.c.l.b16 %v5739
      %v5996 = vunpack.c.h.b16 %v5739
      %v5997 = vunpack.c.l.b16 %v5740
      %v5998 = vunpack.c.h.b16 %v5740
      %v5999 = vunpack.c.l.b16 %v5741
      %v6000 = vunpack.c.h.b16 %v5741
      %v6001 = vunpack.c.l.b16 %v5742
      %v6002 = vunpack.c.h.b16 %v5742
      %v6003 = vunpack.c.l.b16 %v5743
      %v6004 = vunpack.c.h.b16 %v5743
      %v6005 = vunpack.c.l.b16 %v5744
      %v6006 = vunpack.c.h.b16 %v5744
      %v6007 = vunpack.c.l.b16 %v5745
      %v6008 = vunpack.c.h.b16 %v5745
      %v6009 = vunpack.c.l.b16 %v5746
      %v6010 = vunpack.c.h.b16 %v5746
      %v6011 = vunpack.c.l.b16 %v5747
      %v6012 = vunpack.c.h.b16 %v5747
      %v6013 = vunpack.c.l.b16 %v5748
      %v6014 = vunpack.c.h.b16 %v5748
      %v6015 = vunpack.c.l.b16 %v5749
      %v6016 = vunpack.c.h.b16 %v5749
      %v6017 = vunpack.c.l.b16 %v5750
      %v6018 = vunpack.c.h.b16 %v5750
      %v6019 = vunpack.c.l.b16 %v5751
      %v6020 = vunpack.c.h.b16 %v5751
      %v6021 = vunpack.c.l.b16 %v5752
      %v6022 = vunpack.c.h.b16 %v5752
      %v6023 = vunpack.c.l.b16 %v5753
      %v6024 = vunpack.c.h.b16 %v5753
      %v6025 = vunpack.c.l.b16 %v5754
      %v6026 = vunpack.c.h.b16 %v5754
      %v6027 = vunpack.c.l.b16 %v5755
      %v6028 = vunpack.c.h.b16 %v5755
      %v6029 = vunpack.c.l.b16 %v5756
      %v6030 = vunpack.c.h.b16 %v5756
      %v6031 = vunpack.c.l.b16 %v5757
      %v6032 = vunpack.c.h.b16 %v5757
      %v6033 = vunpack.c.l.b16 %v5758
      %v6034 = vunpack.c.h.b16 %v5758
      %v6035 = vunpack.c.l.b16 %v5759
      %v6036 = vunpack.c.h.b16 %v5759
      %v6037 = vunpack.c.l.b16 %v5760
      %v6038 = vunpack.c.h.b16 %v5760
      %v6039 = vunpack.c.l.b16 %v5761
      %v6040 = vunpack.c.h.b16 %v5761
      %v6041 = vunpack.c.l.b16 %v5762
      %v6042 = vunpack.c.h.b16 %v5762
      %v6043 = vunpack.c.l.b16 %v5763
      %v6044 = vunpack.c.h.b16 %v5763
      %v6045 = vunpack.c.l.b16 %v5764
      %v6046 = vunpack.c.h.b16 %v5764
      %v6047 = vunpack.c.l.b16 %v5765
      %v6048 = vunpack.c.h.b16 %v5765
      %v6049 = vunpack.c.l.b16 %v5766
      %v6050 = vunpack.c.h.b16 %v5766
      %v6051 = vunpack.c.l.b16 %v5767
      %v6052 = vunpack.c.h.b16 %v5767
      %v6053 = vunpack.c.l.b16 %v5768
      %v6054 = vunpack.c.h.b16 %v5768
      %v6055 = vunpack.c.l.b16 %v5769
      %v6056 = vunpack.c.h.b16 %v5769
      %v6057 = vunpack.c.l.b16 %v5770
      %v6058 = vunpack.c.h.b16 %v5770
      %v6059 = vunpack.c.l.b16 %v5771
      %v6060 = vunpack.c.h.b16 %v5771
      %v6061 = vunpack.c.l.b16 %v5772
      %v6062 = vunpack.c.h.b16 %v5772
      %v6063 = vunpack.c.l.b16 %v5773
      %v6064 = vunpack.c.h.b16 %v5773
      %v6065 = vunpack.c.l.b16 %v5774
      %v6066 = vunpack.c.h.b16 %v5774
      %v6067 = vunpack.c.l.b16 %v5775
      %v6068 = vunpack.c.h.b16 %v5775
      %v6069 = vunpack.c.l.b16 %v5776
      %v6070 = vunpack.c.h.b16 %v5776
      %v6071 = vunpack.c.l.b16 %v5777
      %v6072 = vunpack.c.h.b16 %v5777
      %v6073 = vunpack.c.l.b16 %v5778
      %v6074 = vunpack.c.h.b16 %v5778
      %v6075 = vunpack.c.l.b16 %v5779
      %v6076 = vunpack.c.h.b16 %v5779
      %v6077 = vunpack.c.l.b16 %v5780
      %v6078 = vunpack.c.h.b16 %v5780
      %v6079 = vunpack.c.l.b16 %v5781
      %v6080 = vunpack.c.h.b16 %v5781
      %v6081 = vunpack.c.l.b16 %v5782
      %v6082 = vunpack.c.h.b16 %v5782
      %v6083 = vpack.c.b16 %v5893, %v5891
      %v6084 = vpack.c.b16 %v5894, %v5892
      %v6085 = vpack.c.b16 %v5897, %v5895
      %v6086 = vpack.c.b16 %v5898, %v5896
      %v6087 = vpack.c.b16 %v5901, %v5899
      %v6088 = vpack.c.b16 %v5902, %v5900
      %v6089 = vpack.c.b16 %v5905, %v5903
      %v6090 = vpack.c.b16 %v5906, %v5904
      %v6091 = vpack.c.b16 %v5909, %v5907
      %v6092 = vpack.c.b16 %v5910, %v5908
      %v6093 = vpack.c.b16 %v5913, %v5911
      %v6094 = vpack.c.b16 %v5914, %v5912
      %v6095 = vpack.c.b16 %v5917, %v5915
      %v6096 = vpack.c.b16 %v5918, %v5916
      %v6097 = vpack.c.b16 %v5921, %v5919
      %v6098 = vpack.c.b16 %v5922, %v5920
      %v6099 = vpack.c.b16 %v5925, %v5923
      %v6100 = vpack.c.b16 %v5926, %v5924
      %v6101 = vpack.c.b16 %v5929, %v5927
      %v6102 = vpack.c.b16 %v5930, %v5928
      %v6103 = vpack.c.b16 %v5933, %v5931
      %v6104 = vpack.c.b16 %v5934, %v5932
      %v6105 = vpack.c.b16 %v5937, %v5935
      %v6106 = vpack.c.b16 %v5938, %v5936
      %v6107 = vpack.c.b16 %v5941, %v5939
      %v6108 = vpack.c.b16 %v5942, %v5940
      %v6109 = vpack.c.b16 %v5945, %v5943
      %v6110 = vpack.c.b16 %v5946, %v5944
      %v6111 = vpack.c.b16 %v5949, %v5947
      %v6112 = vpack.c.b16 %v5950, %v5948
      %v6113 = vpack.c.b16 %v5953, %v5951
      %v6114 = vpack.c.b16 %v5954, %v5952
      %v6115 = vpack.c.b16 %v5957, %v5955
      %v6116 = vpack.c.b16 %v5958, %v5956
      %v6117 = vpack.c.b16 %v5961, %v5959
      %v6118 = vpack.c.b16 %v5962, %v5960
      %v6119 = vpack.c.b16 %v5965, %v5963
      %v6120 = vpack.c.b16 %v5966, %v5964
      %v6121 = vpack.c.b16 %v5969, %v5967
      %v6122 = vpack.c.b16 %v5970, %v5968
      %v6123 = vpack.c.b16 %v5973, %v5971
      %v6124 = vpack.c.b16 %v5974, %v5972
      %v6125 = vpack.c.b16 %v5977, %v5975
      %v6126 = vpack.c.b16 %v5978, %v5976
      %v6127 = vpack.c.b16 %v5981, %v5979
      %v6128 = vpack.c.b16 %v5982, %v5980
      %v6129 = vpack.c.b16 %v5985, %v5983
      %v6130 = vpack.c.b16 %v5986, %v5984
      %v6131 = vpack.c.b16 %v5989, %v5987
      %v6132 = vpack.c.b16 %v5990, %v5988
      %v6133 = vpack.c.b16 %v5993, %v5991
      %v6134 = vpack.c.b16 %v5994, %v5992
      %v6135 = vpack.c.b16 %v5997, %v5995
      %v6136 = vpack.c.b16 %v5998, %v5996
      %v6137 = vpack.c.b16 %v6001, %v5999
      %v6138 = vpack.c.b16 %v6002, %v6000
      %v6139 = vpack.c.b16 %v6005, %v6003
      %v6140 = vpack.c.b16 %v6006, %v6004
      %v6141 = vpack.c.b16 %v6009, %v6007
      %v6142 = vpack.c.b16 %v6010, %v6008
      %v6143 = vpack.c.b16 %v6013, %v6011
      %v6144 = vpack.c.b16 %v6014, %v6012
      %v6145 = vpack.c.b16 %v6017, %v6015
      %v6146 = vpack.c.b16 %v6018, %v6016
      %v6147 = vpack.c.b16 %v6021, %v6019
      %v6148 = vpack.c.b16 %v6022, %v6020
      %v6149 = vpack.c.b16 %v6025, %v6023
      %v6150 = vpack.c.b16 %v6026, %v6024
      %v6151 = vpack.c.b16 %v6029, %v6027
      %v6152 = vpack.c.b16 %v6030, %v6028
      %v6153 = vpack.c.b16 %v6033, %v6031
      %v6154 = vpack.c.b16 %v6034, %v6032
      %v6155 = vpack.c.b16 %v6037, %v6035
      %v6156 = vpack.c.b16 %v6038, %v6036
      %v6157 = vpack.c.b16 %v6041, %v6039
      %v6158 = vpack.c.b16 %v6042, %v6040
      %v6159 = vpack.c.b16 %v6045, %v6043
      %v6160 = vpack.c.b16 %v6046, %v6044
      %v6161 = vpack.c.b16 %v6049, %v6047
      %v6162 = vpack.c.b16 %v6050, %v6048
      %v6163 = vpack.c.b16 %v6053, %v6051
      %v6164 = vpack.c.b16 %v6054, %v6052
      %v6165 = vpack.c.b16 %v6057, %v6055
      %v6166 = vpack.c.b16 %v6058, %v6056
      %v6167 = vpack.c.b16 %v6061, %v6059
      %v6168 = vpack.c.b16 %v6062, %v6060
      %v6169 = vpack.c.b16 %v6065, %v6063
      %v6170 = vpack.c.b16 %v6066, %v6064
      %v6171 = vpack.c.b16 %v6069, %v6067
      %v6172 = vpack.c.b16 %v6070, %v6068
      %v6173 = vpack.c.b16 %v6073, %v6071
      %v6174 = vpack.c.b16 %v6074, %v6072
      %v6175 = vpack.c.b16 %v6077, %v6075
      %v6176 = vpack.c.b16 %v6078, %v6076
      %v6177 = vpack.c.b16 %v6081, %v6079
      %v6178 = vpack.c.b16 %v6082, %v6080
      %6275 = vmatprep.subr.bf16.mxu0 %v6084
      %6276 = vmatpush1.bf16.msra.mxu0 %v6083
      %6277 = vmatprep.subr.bf16.mxu0 %v6086
      %6278 = vmatpush1.bf16.msra.mxu0 %v6085
      %6279 = vmatprep.subr.bf16.mxu0 %v6088
      %6280 = vmatpush1.bf16.msra.mxu0 %v6087
      %6281 = vmatprep.subr.bf16.mxu0 %v6090
      %6282 = vmatpush1.bf16.msra.mxu0 %v6089
      %6283 = vmatprep.subr.bf16.mxu0 %v6092
      %6284 = vmatpush1.bf16.msra.mxu0 %v6091
      %6285 = vmatprep.subr.bf16.mxu0 %v6094
      %6286 = vmatpush1.bf16.msra.mxu0 %v6093
      %6287 = vmatprep.subr.bf16.mxu0 %v6096
      %6288 = vmatpush1.bf16.msra.mxu0 %v6095
      %6289 = vmatprep.subr.bf16.mxu0 %v6098
      %6290 = vmatpush1.bf16.msra.mxu0 %v6097
      %6291 = vmatprep.subr.bf16.mxu0 %v6100
      %6292 = vmatpush1.bf16.msra.mxu0 %v6099
      %6293 = vmatprep.subr.bf16.mxu0 %v6102
      %6294 = vmatpush1.bf16.msra.mxu0 %v6101
      %6295 = vmatprep.subr.bf16.mxu0 %v6104
      %6296 = vmatpush1.bf16.msra.mxu0 %v6103
      %6297 = vmatprep.subr.bf16.mxu0 %v6106
      %6298 = vmatpush1.bf16.msra.mxu0 %v6105
      %6299 = vmatprep.subr.bf16.mxu0 %v6108
      %6300 = vmatpush1.bf16.msra.mxu0 %v6107
      %6301 = vmatprep.subr.bf16.mxu0 %v6110
      %6302 = vmatpush1.bf16.msra.mxu0 %v6109
      %6303 = vmatprep.subr.bf16.mxu0 %v6112
      %6304 = vmatpush1.bf16.msra.mxu0 %v6111
      %6305 = vmatprep.subr.bf16.mxu0 %v6114
      %6306 = vmatpush1.bf16.msra.mxu0 %v6113
      %6307 = vmatprep.mubr.bf16.mxu0 %v5668
      %6308 = vmatmul.mubr.bf16.gmra.mrb[0].mxu0 %v5667
      %v6309 = vpop.f32.mrb[0].mxu0
      %v6310 = vadd.f32 %v5788, %v6309
      %v6311 = vpop.f32.mrb[0].mxu0
      %v6312 = vadd.f32 %v5792, %v6311
      %v6313 = vpop.f32.mrb[0].mxu0
      %v6314 = vadd.f32 %v5788, %v6313
      %v6315 = vpop.f32.mrb[0].mxu0
      %v6316 = vadd.f32 %v5792, %v6315
      %6317 = vmatprep.mubr.bf16.mxu0 %v5674
      %6318 = vmatmul.mubr.bf16.gmra.mrb[0].mxu0 %v5673
      %v6319 = vpop.f32.mrb[0].mxu0
      %v6320 = vadd.f32 %v5788, %v6319
      %v6321 = vpop.f32.mrb[0].mxu0
      %v6322 = vadd.f32 %v5792, %v6321
      %v6323 = vpop.f32.mrb[0].mxu0
      %v6324 = vadd.f32 %v5788, %v6323
      %v6325 = vpop.f32.mrb[0].mxu0
      %v6326 = vadd.f32 %v5792, %v6325
      %6327 = vmatprep.mubr.bf16.mxu0 %v5670
      %6328 = vmatmul.mubr.bf16.gmra.mrb[0].mxu0 %v5669
      %v6329 = vpop.f32.mrb[0].mxu0
      %v6330 = vadd.f32 %v5788, %v6329
      %v6331 = vpop.f32.mrb[0].mxu0
      %v6332 = vadd.f32 %v5792, %v6331
      %v6333 = vpop.f32.mrb[0].mxu0
      %v6334 = vadd.f32 %v5788, %v6333
      %v6335 = vpop.f32.mrb[0].mxu0
      %v6336 = vadd.f32 %v5792, %v6335
      %6337 = vmatprep.mubr.bf16.mxu0 %v5676
      %6338 = vmatmul.mubr.bf16.gmra.mrb[0].mxu0 %v5675
      %v6339 = vpop.f32.mrb[0].mxu0
      %v6340 = vadd.f32 %v5788, %v6339
      %v6341 = vpop.f32.mrb[0].mxu0
      %v6342 = vadd.f32 %v5792, %v6341
      %v6343 = vpop.f32.mrb[0].mxu0
      %v6344 = vadd.f32 %v5788, %v6343
      %v6345 = vpop.f32.mrb[0].mxu0
      %v6346 = vadd.f32 %v5792, %v6345
      %6347 = vmatprep.mubr.bf16.mxu0 %v5672
      %6348 = vmatmul.mubr.bf16.gmra.mrb[0].mxu0 %v5671
      %v6349 = vpop.f32.mrb[0].mxu0
      %v6350 = vadd.f32 %v5788, %v6349
      %v6351 = vpop.f32.mrb[0].mxu0
      %v6352 = vadd.f32 %v5792, %v6351
      %v6353 = vpop.f32.mrb[0].mxu0
      %v6354 = vadd.f32 %v5788, %v6353
      %v6355 = vpop.f32.mrb[0].mxu0
      %v6356 = vadd.f32 %v5792, %v6355
      %6357 = vmatprep.mubr.bf16.mxu0 %v5678
      %6358 = vmatmul.mubr.bf16.gmra.mrb[0].mxu0 %v5677
      %v6359 = vpop.f32.mrb[0].mxu0
      %v6360 = vadd.f32 %v5788, %v6359
      %v6361 = vpop.f32.mrb[0].mxu0
      %v6362 = vadd.f32 %v5792, %v6361
      %v6363 = vpop.f32.mrb[0].mxu0
      %v6364 = vadd.f32 %v5788, %v6363
      %v6365 = vpop.f32.mrb[0].mxu0
      %v6366 = vadd.f32 %v5792, %v6365
      %6367 = vdwg.mxu0
      %6368 = vmatprep.subr.bf16.mxu0 %v6116
      %6369 = vmatpush1.bf16.msra.mxu0 %v6115
      %6370 = vmatprep.subr.bf16.mxu0 %v6118
      %6371 = vmatpush1.bf16.msra.mxu0 %v6117
      %6372 = vmatprep.subr.bf16.mxu0 %v6120
      %6373 = vmatpush1.bf16.msra.mxu0 %v6119
      %6374 = vmatprep.subr.bf16.mxu0 %v6122
      %6375 = vmatpush1.bf16.msra.mxu0 %v6121
      %6376 = vmatprep.subr.bf16.mxu0 %v6124
      %6377 = vmatpush1.bf16.msra.mxu0 %v6123
      %6378 = vmatprep.subr.bf16.mxu0 %v6126
      %6379 = vmatpush1.bf16.msra.mxu0 %v6125
      %6380 = vmatprep.subr.bf16.mxu0 %v6128
      %6381 = vmatpush1.bf16.msra.mxu0 %v6127
      %6382 = vmatprep.subr.bf16.mxu0 %v6130
      %6383 = vmatpush1.bf16.msra.mxu0 %v6129
      %6384 = vmatprep.subr.bf16.mxu0 %v6132
      %6385 = vmatpush1.bf16.msra.mxu0 %v6131
      %6386 = vmatprep.subr.bf16.mxu0 %v6134
      %6387 = vmatpush1.bf16.msra.mxu0 %v6133
      %6388 = vmatprep.subr.bf16.mxu0 %v6136
      %6389 = vmatpush1.bf16.msra.mxu0 %v6135
      %6390 = vmatprep.subr.bf16.mxu0 %v6138
      %6391 = vmatpush1.bf16.msra.mxu0 %v6137
      %6392 = vmatprep.subr.bf16.mxu0 %v6140
      %6393 = vmatpush1.bf16.msra.mxu0 %v6139
      %6394 = vmatprep.subr.bf16.mxu0 %v6142
      %6395 = vmatpush1.bf16.msra.mxu0 %v6141
      %6396 = vmatprep.subr.bf16.mxu0 %v6144
      %6397 = vmatpush1.bf16.msra.mxu0 %v6143
      %6398 = vmatprep.subr.bf16.mxu0 %v6146
      %6399 = vmatpush1.bf16.msra.mxu0 %v6145
      %6400 = vmatprep.mubr.bf16.mxu0 %v5670
      %6401 = vmatmul.mubr.bf16.gmra.mrb[0].mxu0 %v5669
      %v6402 = vpop.f32.mrb[0].mxu0
      %v6403 = vadd.f32 %v6310, %v6402
      %v6404 = vpop.f32.mrb[0].mxu0
      %v6405 = vadd.f32 %v6312, %v6404
      %v6406 = vpop.f32.mrb[0].mxu0
      %v6407 = vadd.f32 %v6314, %v6406
      %v6408 = vpop.f32.mrb[0].mxu0
      %v6409 = vadd.f32 %v6316, %v6408
      %6410 = vmatprep.mubr.bf16.mxu0 %v5676
      %6411 = vmatmul.mubr.bf16.gmra.mrb[0].mxu0 %v5675
      %v6412 = vpop.f32.mrb[0].mxu0
      %v6413 = vadd.f32 %v6320, %v6412
      %v6414 = vpop.f32.mrb[0].mxu0
      %v6415 = vadd.f32 %v6322, %v6414
      %v6416 = vpop.f32.mrb[0].mxu0
      %v6417 = vadd.f32 %v6324, %v6416
      %v6418 = vpop.f32.mrb[0].mxu0
      %v6419 = vadd.f32 %v6326, %v6418
      %6420 = vmatprep.mubr.bf16.mxu0 %v5672
      %6421 = vmatmul.mubr.bf16.gmra.mrb[0].mxu0 %v5671
      %v6422 = vpop.f32.mrb[0].mxu0
      %v6423 = vadd.f32 %v6330, %v6422
      %v6424 = vpop.f32.mrb[0].mxu0
      %v6425 = vadd.f32 %v6332, %v6424
      %v6426 = vpop.f32.mrb[0].mxu0
      %v6427 = vadd.f32 %v6334, %v6426
      %v6428 = vpop.f32.mrb[0].mxu0
      %v6429 = vadd.f32 %v6336, %v6428
      %6430 = vmatprep.mubr.bf16.mxu0 %v5678
      %6431 = vmatmul.mubr.bf16.gmra.mrb[0].mxu0 %v5677
      %v6432 = vpop.f32.mrb[0].mxu0
      %v6433 = vadd.f32 %v6340, %v6432
      %v6434 = vpop.f32.mrb[0].mxu0
      %v6435 = vadd.f32 %v6342, %v6434
      %v6436 = vpop.f32.mrb[0].mxu0
      %v6437 = vadd.f32 %v6344, %v6436
      %v6438 = vpop.f32.mrb[0].mxu0
      %v6439 = vadd.f32 %v6346, %v6438
      %6440 = vmatprep.mubr.bf16.mxu0 %v5680
      %6441 = vmatmul.mubr.bf16.gmra.mrb[0].mxu0 %v5679
      %v6442 = vpop.f32.mrb[0].mxu0
      %v6443 = vadd.f32 %v6350, %v6442
      %v6444 = vpop.f32.mrb[0].mxu0
      %v6445 = vadd.f32 %v6352, %v6444
      %v6446 = vpop.f32.mrb[0].mxu0
      %v6447 = vadd.f32 %v6354, %v6446
      %v6448 = vpop.f32.mrb[0].mxu0
      %v6449 = vadd.f32 %v6356, %v6448
      %6450 = vmatprep.mubr.bf16.mxu0 %v5682
      %6451 = vmatmul.mubr.bf16.gmra.mrb[0].mxu0 %v5681
      %v6452 = vpop.f32.mrb[0].mxu0
      %v6453 = vadd.f32 %v6360, %v6452
      %v6454 = vpop.f32.mrb[0].mxu0
      %v6455 = vadd.f32 %v6362, %v6454
      %v6456 = vpop.f32.mrb[0].mxu0
      %v6457 = vadd.f32 %v6364, %v6456
      %v6458 = vpop.f32.mrb[0].mxu0
      %v6459 = vadd.f32 %v6366, %v6458
      %6460 = vdwg.mxu0
      %6461 = vmatprep.subr.bf16.mxu0 %v6148
      %6462 = vmatpush1.bf16.msra.mxu0 %v6147
      %6463 = vmatprep.subr.bf16.mxu0 %v6150
      %6464 = vmatpush1.bf16.msra.mxu0 %v6149
      %6465 = vmatprep.subr.bf16.mxu0 %v6152
      %6466 = vmatpush1.bf16.msra.mxu0 %v6151
      %6467 = vmatprep.subr.bf16.mxu0 %v6154
      %6468 = vmatpush1.bf16.msra.mxu0 %v6153
      %6469 = vmatprep.subr.bf16.mxu0 %v6156
      %6470 = vmatpush1.bf16.msra.mxu0 %v6155
      %6471 = vmatprep.subr.bf16.mxu0 %v6158
      %6472 = vmatpush1.bf16.msra.mxu0 %v6157
      %6473 = vmatprep.subr.bf16.mxu0 %v6160
      %6474 = vmatpush1.bf16.msra.mxu0 %v6159
      %6475 = vmatprep.subr.bf16.mxu0 %v6162
      %6476 = vmatpush1.bf16.msra.mxu0 %v6161
      %6477 = vmatprep.subr.bf16.mxu0 %v6164
      %6478 = vmatpush1.bf16.msra.mxu0 %v6163
      %6479 = vmatprep.subr.bf16.mxu0 %v6166
      %6480 = vmatpush1.bf16.msra.mxu0 %v6165
      %6481 = vmatprep.subr.bf16.mxu0 %v6168
      %6482 = vmatpush1.bf16.msra.mxu0 %v6167
      %6483 = vmatprep.subr.bf16.mxu0 %v6170
      %6484 = vmatpush1.bf16.msra.mxu0 %v6169
      %6485 = vmatprep.subr.bf16.mxu0 %v6172
      %6486 = vmatpush1.bf16.msra.mxu0 %v6171
      %6487 = vmatprep.subr.bf16.mxu0 %v6174
      %6488 = vmatpush1.bf16.msra.mxu0 %v6173
      %6489 = vmatprep.subr.bf16.mxu0 %v6176
      %6490 = vmatpush1.bf16.msra.mxu0 %v6175
      %6491 = vmatprep.subr.bf16.mxu0 %v6178
      %6492 = vmatpush1.bf16.msra.mxu0 %v6177
      %6493 = vmatprep.mubr.bf16.mxu0 %v5672
      %6494 = vmatmul.mubr.bf16.gmra.mrb[0].mxu0 %v5671
      %v6495 = vpop.f32.mrb[0].mxu0
      %v6496 = vadd.f32 %v6403, %v6495
      %v6497 = vpop.f32.mrb[0].mxu0
      %v6498 = vadd.f32 %v6405, %v6497
      %v6499 = vpop.f32.mrb[0].mxu0
      %v6500 = vadd.f32 %v6407, %v6499
      %v6501 = vpop.f32.mrb[0].mxu0
      %v6502 = vadd.f32 %v6409, %v6501
      %6503 = vmatprep.mubr.bf16.mxu0 %v5678
      %6504 = vmatmul.mubr.bf16.gmra.mrb[0].mxu0 %v5677
      %v6505 = vpop.f32.mrb[0].mxu0
      %v6506 = vadd.f32 %v6413, %v6505
      %v6507 = vpop.f32.mrb[0].mxu0
      %v6508 = vadd.f32 %v6415, %v6507
      %v6509 = vpop.f32.mrb[0].mxu0
      %v6510 = vadd.f32 %v6417, %v6509
      %v6511 = vpop.f32.mrb[0].mxu0
      %v6512 = vadd.f32 %v6419, %v6511
      %6513 = vmatprep.mubr.bf16.mxu0 %v5680
      %6514 = vmatmul.mubr.bf16.gmra.mrb[0].mxu0 %v5679
      %v6515 = vpop.f32.mrb[0].mxu0
      %v6516 = vadd.f32 %v6423, %v6515
      %v6517 = vpop.f32.mrb[0].mxu0
      %v6518 = vadd.f32 %v6425, %v6517
      %v6519 = vpop.f32.mrb[0].mxu0
      %v6520 = vadd.f32 %v6427, %v6519
      %v6521 = vpop.f32.mrb[0].mxu0
      %v6522 = vadd.f32 %v6429, %v6521
      %6523 = vmatprep.mubr.bf16.mxu0 %v5682
      %6524 = vmatmul.mubr.bf16.gmra.mrb[0].mxu0 %v5681
      %v6525 = vpop.f32.mrb[0].mxu0
      %v6526 = vadd.f32 %v6433, %v6525
      %v6527 = vpop.f32.mrb[0].mxu0
      %v6528 = vadd.f32 %v6435, %v6527
      %v6529 = vpop.f32.mrb[0].mxu0
      %v6530 = vadd.f32 %v6437, %v6529
      %v6531 = vpop.f32.mrb[0].mxu0
      %v6532 = vadd.f32 %v6439, %v6531
      %6533 = vmatprep.mubr.bf16.mxu0 %v5684
      %6534 = vmatmul.mubr.bf16.gmra.mrb[0].mxu0 %v5683
      %v6535 = vpop.f32.mrb[0].mxu0
      %v6536 = vadd.f32 %v6443, %v6535
      %v6537 = vpop.f32.mrb[0].mxu0
      %v6538 = vadd.f32 %v6445, %v6537
      %v6539 = vpop.f32.mrb[0].mxu0
      %v6540 = vadd.f32 %v6447, %v6539
      %v6541 = vpop.f32.mrb[0].mxu0
      %v6542 = vadd.f32 %v6449, %v6541
      %6543 = vmatprep.mubr.bf16.mxu0 %v5686
      %6544 = vmatmul.mubr.bf16.gmra.mrb[0].mxu0 %v5685
      %v6545 = vpop.f32.mrb[0].mxu0
      %v6546 = vadd.f32 %v6453, %v6545
      %v6547 = vpop.f32.mrb[0].mxu0
      %v6548 = vadd.f32 %v6455, %v6547
      %v6549 = vpop.f32.mrb[0].mxu0
      %v6550 = vadd.f32 %v6457, %v6549
      %v6551 = vpop.f32.mrb[0].mxu0
      %v6552 = vadd.f32 %v6459, %v6551
      %6553 = vdwg.mxu0
      %v6554 = vmax.f32 %v6496, 0.0
      %v6555 = vmax.f32 %v6498, 0.0
      %v6556 = vmax.f32 %v6500, 0.0
      %v6557 = vmax.f32 %v6502, 0.0
      %v6558 = vmax.f32 %v6506, 0.0
      %v6559 = vmax.f32 %v6508, 0.0
      %v6560 = vmax.f32 %v6510, 0.0
      %v6561 = vmax.f32 %v6512, 0.0
      %v6562 = vmax.f32 %v6516, 0.0
      %v6563 = vmax.f32 %v6518, 0.0
      %v6564 = vmax.f32 %v6520, 0.0
      %v6565 = vmax.f32 %v6522, 0.0
      %v6566 = vmax.f32 %v6526, 0.0
      %v6567 = vmax.f32 %v6528, 0.0
      %v6568 = vmax.f32 %v6530, 0.0
      %v6569 = vmax.f32 %v6532, 0.0
      %v6570 = vmax.f32 %v6536, 0.0
      %v6571 = vmax.f32 %v6538, 0.0
      %v6572 = vmax.f32 %v6540, 0.0
      %v6573 = vmax.f32 %v6542, 0.0
      %v6574 = vmax.f32 %v6546, 0.0
      %v6575 = vmax.f32 %v6548, 0.0
      %v6576 = vmax.f32 %v6550, 0.0
      %v6577 = vmax.f32 %v6552, 0.0
      %v6578 = vld [vmem:[%s8] sm:$0x1]
      %v6579 = vpack.c.bf16 %v6556, %v6554
      %v6580 = vpack.c.bf16 %v6557, %v6555
      %v6581 = vpack.c.bf16 %v6560, %v6558
      %v6582 = vpack.c.bf16 %v6561, %v6559
      %v6583 = vld [vmem:[%s7] sm:$0xf]
      %v6584 = vld [vmem:[%s7 + $0x4] sm:$0xf]
      %v6585 = vld [vmem:[%s7 + $0x8] sm:$0xf]
      %v6586 = vld [vmem:[%s7 + $0xc] sm:$0xf]
      %v6587 = vld [vmem:[%s7 + $0x10] sm:$0xf]
      %v6588 = vld [vmem:[%s7 + $0x14] sm:$0xf]
      %v6589 = vld [vmem:[%s7 + $0x18] sm:$0xf]
      %v6590 = vld [vmem:[%s7 + $0x1c] sm:$0xf]
      %v6591 = vld [vmem:[%s7 + $0x20] sm:$0xf]
      %v6592 = vld [vmem:[%s7 + $0x24] sm:$0xf]
      %v6593 = vld [vmem:[%s7 + $0x28] sm:$0xf]
      %v6594 = vld [vmem:[%s7 + $0x2c] sm:$0xf]
      %v6595 = vld [vmem:[%s7 + $0x30] sm:$0xf]
      %v6596 = vld [vmem:[%s7 + $0x34] sm:$0xf]
      %v6597 = vld [vmem:[%s7 + $0x38] sm:$0xf]
      %v6598 = vld [vmem:[%s7 + $0x3c] sm:$0xf]
      %v6599 = vld [vmem:[%s7 + $0x40] sm:$0xf]
      %v6600 = vld [vmem:[%s7 + $0x44] sm:$0xf]
      %v6601 = vld [vmem:[%s7 + $0x48] sm:$0xf]
      %v6602 = vld [vmem:[%s7 + $0x4c] sm:$0xf]
      %v6603 = vld [vmem:[%s7 + $0x50] sm:$0xf]
      %v6604 = vld [vmem:[%s7 + $0x54] sm:$0xf]
      %v6605 = vld [vmem:[%s7 + $0x58] sm:$0xf]
      %v6606 = vld [vmem:[%s7 + $0x5c] sm:$0xf]
      %v6631 = vunpack.c.l.b16 %v6583
      %v6632 = vunpack.c.l.b16 %v6584
      %v6633 = vunpack.c.l.b16 %v6585
      %v6634 = vunpack.c.l.b16 %v6586
      %v6635 = vunpack.c.l.b16 %v6587
      %v6636 = vunpack.c.l.b16 %v6588
      %v6637 = vunpack.c.l.b16 %v6589
      %v6638 = vunpack.c.l.b16 %v6590
      %v6639 = vunpack.c.l.b16 %v6591
      %v6640 = vunpack.c.l.b16 %v6592
      %v6641 = vunpack.c.l.b16 %v6593
      %v6642 = vunpack.c.l.b16 %v6594
      %v6643 = vunpack.c.l.b16 %v6595
      %v6644 = vunpack.c.l.b16 %v6596
      %v6645 = vunpack.c.l.b16 %v6597
      %v6646 = vunpack.c.l.b16 %v6598
      %v6647 = vunpack.c.l.b16 %v6599
      %v6648 = vunpack.c.l.b16 %v6600
      %v6649 = vunpack.c.l.b16 %v6601
      %v6650 = vunpack.c.l.b16 %v6602
      %v6651 = vunpack.c.l.b16 %v6603
      %v6652 = vunpack.c.l.b16 %v6604
      %v6653 = vunpack.c.l.b16 %v6605
      %v6654 = vunpack.c.l.b16 %v6606
      %v6655 = vpack.c.b16 %v6632, %v6631
      %v6656 = vpack.c.b16 %v6634, %v6633
      %v6657 = vpack.c.b16 %v6636, %v6635
      %v6658 = vpack.c.b16 %v6638, %v6637
      %v6659 = vpack.c.b16 %v6640, %v6639
      %v6660 = vpack.c.b16 %v6642, %v6641
      %v6661 = vpack.c.b16 %v6644, %v6643
      %v6662 = vpack.c.b16 %v6646, %v6645
      %v6663 = vpack.c.b16 %v6648, %v6647
      %v6664 = vpack.c.b16 %v6650, %v6649
      %v6665 = vpack.c.b16 %v6652, %v6651
      %v6666 = vpack.c.b16 %v6654, %v6653
      %vm6679 = vcmask 523264
      %v6681 = vsel %vm6679, %v6580, 0
      %v6684 = vsel %vm6679, %v6582, 0
      %6686 = vmatprep.subr.bf16.mxu0 0
      %6687 = vmatpush1.bf16.msra.mxu0 %v6655
      %6688 = vmatprep.subr.bf16.mxu0 0
      %6689 = vmatpush1.bf16.msra.mxu0 %v6656
      %6690 = vmatprep.subr.bf16.mxu0 0
      %6691 = vmatpush1.bf16.msra.mxu0 %v6657
      %6692 = vmatprep.subr.bf16.mxu0 0
      %6693 = vmatpush1.bf16.msra.mxu0 %v6658
      %6694 = vmatprep.subr.bf16.mxu0 0
      %6695 = vmatpush1.bf16.msra.mxu0 %v6659
      %6696 = vmatprep.subr.bf16.mxu0 0
      %6697 = vmatpush1.bf16.msra.mxu0 %v6660
      %6698 = vmatprep.subr.bf16.mxu0 0
      %6699 = vmatpush1.bf16.msra.mxu0 %v6661
      %6700 = vmatprep.subr.bf16.mxu0 0
      %6701 = vmatpush1.bf16.msra.mxu0 %v6662
      %6702 = vmatprep.subr.bf16.mxu0 0
      %6703 = vmatpush1.bf16.msra.mxu0 %v6663
      %6704 = vmatprep.subr.bf16.mxu0 0
      %6705 = vmatpush1.bf16.msra.mxu0 %v6664
      %6706 = vmatprep.subr.bf16.mxu0 0
      %6707 = vmatpush1.bf16.msra.mxu0 %v6665
      %6708 = vmatprep.subr.bf16.mxu0 0
      %6709 = vmatpush1.bf16.msra.mxu0 %v6666
      %6710 = vmatprep.subr.bf16.mxu0 0
      %6711 = vmatpush1.bf16.msra.mxu0 0
      %6712 = vmatprep.subr.bf16.mxu0 0
      %6713 = vmatpush1.bf16.msra.mxu0 0
      %6714 = vmatprep.subr.bf16.mxu0 0
      %6715 = vmatpush1.bf16.msra.mxu0 0
      %6716 = vmatprep.subr.bf16.mxu0 0
      %6717 = vmatpush1.bf16.msra.mxu0 0
      %6718 = vmatprep.mubr.bf16.mxu0 %v6681
      %6719 = vmatmul.mubr.bf16.gmra.mrb[0].mxu0 %v6579
      %v6720 = vpop.f32.mrb[0].mxu0
      %v6721 = vadd.f32 0.0, %v6720
      %v6722 = vpop.f32.mrb[0].mxu0
      %v6723 = vpop.f32.mrb[0].mxu0
      %v6724 = vadd.f32 0.0, %v6723
      %v6725 = vpop.f32.mrb[0].mxu0
      %6726 = vmatprep.mubr.bf16.mxu0 %v6684
      %6727 = vmatmul.mubr.bf16.gmra.mrb[0].mxu0 %v6581
      %v6728 = vpop.f32.mrb[0].mxu0
      %v6729 = vadd.f32 0.0, %v6728
      %v6730 = vpop.f32.mrb[0].mxu0
      %v6731 = vpop.f32.mrb[0].mxu0
      %v6732 = vadd.f32 0.0, %v6731
      %v6733 = vpop.f32.mrb[0].mxu0
      %6734 = vdwg.mxu0
      %v6736 = vlaneseq
      %v6737 = vshrl.u32 %v6736, 7
      %v6738 = vsub.s32 0, %v6737
      %v6739 = vrot.slane %v6578, %v6738
      %v6741 = vadd.f32 %v6739, %v6721
      %v6742 = vadd.f32 %v6739, %v6724
      %v6743 = vadd.f32 %v6739, %v6729
      %v6744 = vadd.f32 %v6739, %v6732
      %v6745 = vpack.c.bf16 %v6564, %v6562
      %v6746 = vpack.c.bf16 %v6565, %v6563
      %v6747 = vpack.c.bf16 %v6568, %v6566
      %v6748 = vpack.c.bf16 %v6569, %v6567
      %s6749 = scalar_lea.vmem %s7, 96
      %v6750 = vld [vmem:[%s6749] sm:$0xf]
      %v6751 = vld [vmem:[%s6749 + $0x4] sm:$0xf]
      %v6752 = vld [vmem:[%s6749 + $0x8] sm:$0xf]
      %v6753 = vld [vmem:[%s6749 + $0xc] sm:$0xf]
      %v6754 = vld [vmem:[%s6749 + $0x10] sm:$0xf]
      %v6755 = vld [vmem:[%s6749 + $0x14] sm:$0xf]
      %v6756 = vld [vmem:[%s6749 + $0x18] sm:$0xf]
      %v6757 = vld [vmem:[%s6749 + $0x1c] sm:$0xf]
      %v6758 = vld [vmem:[%s6749 + $0x20] sm:$0xf]
      %v6759 = vld [vmem:[%s6749 + $0x24] sm:$0xf]
      %v6760 = vld [vmem:[%s6749 + $0x28] sm:$0xf]
      %v6761 = vld [vmem:[%s6749 + $0x2c] sm:$0xf]
      %v6762 = vld [vmem:[%s6749 + $0x30] sm:$0xf]
      %v6763 = vld [vmem:[%s6749 + $0x34] sm:$0xf]
      %v6764 = vld [vmem:[%s6749 + $0x38] sm:$0xf]
      %v6765 = vld [vmem:[%s6749 + $0x3c] sm:$0xf]
      %v6766 = vld [vmem:[%s6749 + $0x40] sm:$0xf]
      %v6767 = vld [vmem:[%s6749 + $0x44] sm:$0xf]
      %v6768 = vld [vmem:[%s6749 + $0x48] sm:$0xf]
      %v6769 = vld [vmem:[%s6749 + $0x4c] sm:$0xf]
      %v6770 = vld [vmem:[%s6749 + $0x50] sm:$0xf]
      %v6771 = vld [vmem:[%s6749 + $0x54] sm:$0xf]
      %v6772 = vld [vmem:[%s6749 + $0x58] sm:$0xf]
      %v6773 = vld [vmem:[%s6749 + $0x5c] sm:$0xf]
      %v6798 = vunpack.c.l.b16 %v6750
      %v6799 = vunpack.c.l.b16 %v6751
      %v6800 = vunpack.c.l.b16 %v6752
      %v6801 = vunpack.c.l.b16 %v6753
      %v6802 = vunpack.c.l.b16 %v6754
      %v6803 = vunpack.c.l.b16 %v6755
      %v6804 = vunpack.c.l.b16 %v6756
      %v6805 = vunpack.c.l.b16 %v6757
      %v6806 = vunpack.c.l.b16 %v6758
      %v6807 = vunpack.c.l.b16 %v6759
      %v6808 = vunpack.c.l.b16 %v6760
      %v6809 = vunpack.c.l.b16 %v6761
      %v6810 = vunpack.c.l.b16 %v6762
      %v6811 = vunpack.c.l.b16 %v6763
      %v6812 = vunpack.c.l.b16 %v6764
      %v6813 = vunpack.c.l.b16 %v6765
      %v6814 = vunpack.c.l.b16 %v6766
      %v6815 = vunpack.c.l.b16 %v6767
      %v6816 = vunpack.c.l.b16 %v6768
      %v6817 = vunpack.c.l.b16 %v6769
      %v6818 = vunpack.c.l.b16 %v6770
      %v6819 = vunpack.c.l.b16 %v6771
      %v6820 = vunpack.c.l.b16 %v6772
      %v6821 = vunpack.c.l.b16 %v6773
      %v6822 = vpack.c.b16 %v6799, %v6798
      %v6823 = vpack.c.b16 %v6801, %v6800
      %v6824 = vpack.c.b16 %v6803, %v6802
      %v6825 = vpack.c.b16 %v6805, %v6804
      %v6826 = vpack.c.b16 %v6807, %v6806
      %v6827 = vpack.c.b16 %v6809, %v6808
      %v6828 = vpack.c.b16 %v6811, %v6810
      %v6829 = vpack.c.b16 %v6813, %v6812
      %v6830 = vpack.c.b16 %v6815, %v6814
      %v6831 = vpack.c.b16 %v6817, %v6816
      %v6832 = vpack.c.b16 %v6819, %v6818
      %v6833 = vpack.c.b16 %v6821, %v6820
      %v6847 = vsel %vm6679, %v6746, 0
      %v6850 = vsel %vm6679, %v6748, 0
      %6852 = vmatprep.subr.bf16.mxu0 0
      %6853 = vmatpush1.bf16.msra.mxu0 %v6822
      %6854 = vmatprep.subr.bf16.mxu0 0
      %6855 = vmatpush1.bf16.msra.mxu0 %v6823
      %6856 = vmatprep.subr.bf16.mxu0 0
      %6857 = vmatpush1.bf16.msra.mxu0 %v6824
      %6858 = vmatprep.subr.bf16.mxu0 0
      %6859 = vmatpush1.bf16.msra.mxu0 %v6825
      %6860 = vmatprep.subr.bf16.mxu0 0
      %6861 = vmatpush1.bf16.msra.mxu0 %v6826
      %6862 = vmatprep.subr.bf16.mxu0 0
      %6863 = vmatpush1.bf16.msra.mxu0 %v6827
      %6864 = vmatprep.subr.bf16.mxu0 0
      %6865 = vmatpush1.bf16.msra.mxu0 %v6828
      %6866 = vmatprep.subr.bf16.mxu0 0
      %6867 = vmatpush1.bf16.msra.mxu0 %v6829
      %6868 = vmatprep.subr.bf16.mxu0 0
      %6869 = vmatpush1.bf16.msra.mxu0 %v6830
      %6870 = vmatprep.subr.bf16.mxu0 0
      %6871 = vmatpush1.bf16.msra.mxu0 %v6831
      %6872 = vmatprep.subr.bf16.mxu0 0
      %6873 = vmatpush1.bf16.msra.mxu0 %v6832
      %6874 = vmatprep.subr.bf16.mxu0 0
      %6875 = vmatpush1.bf16.msra.mxu0 %v6833
      %6876 = vmatprep.subr.bf16.mxu0 0
      %6877 = vmatpush1.bf16.msra.mxu0 0
      %6878 = vmatprep.subr.bf16.mxu0 0
      %6879 = vmatpush1.bf16.msra.mxu0 0
      %6880 = vmatprep.subr.bf16.mxu0 0
      %6881 = vmatpush1.bf16.msra.mxu0 0
      %6882 = vmatprep.subr.bf16.mxu0 0
      %6883 = vmatpush1.bf16.msra.mxu0 0
      %6884 = vmatprep.mubr.bf16.mxu0 %v6847
      %6885 = vmatmul.mubr.bf16.gmra.mrb[0].mxu0 %v6745
      %v6886 = vpop.f32.mrb[0].mxu0
      %v6887 = vadd.f32 0.0, %v6886
      %v6888 = vpop.f32.mrb[0].mxu0
      %v6889 = vpop.f32.mrb[0].mxu0
      %v6890 = vadd.f32 0.0, %v6889
      %v6891 = vpop.f32.mrb[0].mxu0
      %6892 = vmatprep.mubr.bf16.mxu0 %v6850
      %6893 = vmatmul.mubr.bf16.gmra.mrb[0].mxu0 %v6747
      %v6894 = vpop.f32.mrb[0].mxu0
      %v6895 = vadd.f32 0.0, %v6894
      %v6896 = vpop.f32.mrb[0].mxu0
      %v6897 = vpop.f32.mrb[0].mxu0
      %v6898 = vadd.f32 0.0, %v6897
      %v6899 = vpop.f32.mrb[0].mxu0
      %6900 = vdwg.mxu0
      %v6901 = vadd.f32 %v6741, %v6887
      %v6902 = vadd.f32 %v6742, %v6890
      %v6903 = vadd.f32 %v6743, %v6895
      %v6904 = vadd.f32 %v6744, %v6898
      %v6905 = vpack.c.bf16 %v6572, %v6570
      %v6906 = vpack.c.bf16 %v6573, %v6571
      %v6907 = vpack.c.bf16 %v6576, %v6574
      %v6908 = vpack.c.bf16 %v6577, %v6575
      %s6909 = scalar_lea.vmem %s7, 192
      %v6910 = vld [vmem:[%s6909] sm:$0xf]
      %v6911 = vld [vmem:[%s6909 + $0x4] sm:$0xf]
      %v6912 = vld [vmem:[%s6909 + $0x8] sm:$0xf]
      %v6913 = vld [vmem:[%s6909 + $0xc] sm:$0xf]
      %v6914 = vld [vmem:[%s6909 + $0x10] sm:$0xf]
      %v6915 = vld [vmem:[%s6909 + $0x14] sm:$0xf]
      %v6916 = vld [vmem:[%s6909 + $0x18] sm:$0xf]
      %v6917 = vld [vmem:[%s6909 + $0x1c] sm:$0xf]
      %v6918 = vld [vmem:[%s6909 + $0x20] sm:$0xf]
      %v6919 = vld [vmem:[%s6909 + $0x24] sm:$0xf]
      %v6920 = vld [vmem:[%s6909 + $0x28] sm:$0xf]
      %v6921 = vld [vmem:[%s6909 + $0x2c] sm:$0xf]
      %v6922 = vld [vmem:[%s6909 + $0x30] sm:$0xf]
      %v6923 = vld [vmem:[%s6909 + $0x34] sm:$0xf]
      %v6924 = vld [vmem:[%s6909 + $0x38] sm:$0xf]
      %v6925 = vld [vmem:[%s6909 + $0x3c] sm:$0xf]
      %v6926 = vld [vmem:[%s6909 + $0x40] sm:$0xf]
      %v6927 = vld [vmem:[%s6909 + $0x44] sm:$0xf]
      %v6928 = vld [vmem:[%s6909 + $0x48] sm:$0xf]
      %v6929 = vld [vmem:[%s6909 + $0x4c] sm:$0xf]
      %v6930 = vld [vmem:[%s6909 + $0x50] sm:$0xf]
      %v6931 = vld [vmem:[%s6909 + $0x54] sm:$0xf]
      %v6932 = vld [vmem:[%s6909 + $0x58] sm:$0xf]
      %v6933 = vld [vmem:[%s6909 + $0x5c] sm:$0xf]
      %v6958 = vunpack.c.l.b16 %v6910
      %v6959 = vunpack.c.l.b16 %v6911
      %v6960 = vunpack.c.l.b16 %v6912
      %v6961 = vunpack.c.l.b16 %v6913
      %v6962 = vunpack.c.l.b16 %v6914
      %v6963 = vunpack.c.l.b16 %v6915
      %v6964 = vunpack.c.l.b16 %v6916
      %v6965 = vunpack.c.l.b16 %v6917
      %v6966 = vunpack.c.l.b16 %v6918
      %v6967 = vunpack.c.l.b16 %v6919
      %v6968 = vunpack.c.l.b16 %v6920
      %v6969 = vunpack.c.l.b16 %v6921
      %v6970 = vunpack.c.l.b16 %v6922
      %v6971 = vunpack.c.l.b16 %v6923
      %v6972 = vunpack.c.l.b16 %v6924
      %v6973 = vunpack.c.l.b16 %v6925
      %v6974 = vunpack.c.l.b16 %v6926
      %v6975 = vunpack.c.l.b16 %v6927
      %v6976 = vunpack.c.l.b16 %v6928
      %v6977 = vunpack.c.l.b16 %v6929
      %v6978 = vunpack.c.l.b16 %v6930
      %v6979 = vunpack.c.l.b16 %v6931
      %v6980 = vunpack.c.l.b16 %v6932
      %v6981 = vunpack.c.l.b16 %v6933
      %v6982 = vpack.c.b16 %v6959, %v6958
      %v6983 = vpack.c.b16 %v6961, %v6960
      %v6984 = vpack.c.b16 %v6963, %v6962
      %v6985 = vpack.c.b16 %v6965, %v6964
      %v6986 = vpack.c.b16 %v6967, %v6966
      %v6987 = vpack.c.b16 %v6969, %v6968
      %v6988 = vpack.c.b16 %v6971, %v6970
      %v6989 = vpack.c.b16 %v6973, %v6972
      %v6990 = vpack.c.b16 %v6975, %v6974
      %v6991 = vpack.c.b16 %v6977, %v6976
      %v6992 = vpack.c.b16 %v6979, %v6978
      %v6993 = vpack.c.b16 %v6981, %v6980
      %v7007 = vsel %vm6679, %v6906, 0
      %v7010 = vsel %vm6679, %v6908, 0
      %7012 = vmatprep.subr.bf16.mxu0 0
      %7013 = vmatpush1.bf16.msra.mxu0 %v6982
      %7014 = vmatprep.subr.bf16.mxu0 0
      %7015 = vmatpush1.bf16.msra.mxu0 %v6983
      %7016 = vmatprep.subr.bf16.mxu0 0
      %7017 = vmatpush1.bf16.msra.mxu0 %v6984
      %7018 = vmatprep.subr.bf16.mxu0 0
      %7019 = vmatpush1.bf16.msra.mxu0 %v6985
      %7020 = vmatprep.subr.bf16.mxu0 0
      %7021 = vmatpush1.bf16.msra.mxu0 %v6986
      %7022 = vmatprep.subr.bf16.mxu0 0
      %7023 = vmatpush1.bf16.msra.mxu0 %v6987
      %7024 = vmatprep.subr.bf16.mxu0 0
      %7025 = vmatpush1.bf16.msra.mxu0 %v6988
      %7026 = vmatprep.subr.bf16.mxu0 0
      %7027 = vmatpush1.bf16.msra.mxu0 %v6989
      %7028 = vmatprep.subr.bf16.mxu0 0
      %7029 = vmatpush1.bf16.msra.mxu0 %v6990
      %7030 = vmatprep.subr.bf16.mxu0 0
      %7031 = vmatpush1.bf16.msra.mxu0 %v6991
      %7032 = vmatprep.subr.bf16.mxu0 0
      %7033 = vmatpush1.bf16.msra.mxu0 %v6992
      %7034 = vmatprep.subr.bf16.mxu0 0
      %7035 = vmatpush1.bf16.msra.mxu0 %v6993
      %7036 = vmatprep.subr.bf16.mxu0 0
      %7037 = vmatpush1.bf16.msra.mxu0 0
      %7038 = vmatprep.subr.bf16.mxu0 0
      %7039 = vmatpush1.bf16.msra.mxu0 0
      %7040 = vmatprep.subr.bf16.mxu0 0
      %7041 = vmatpush1.bf16.msra.mxu0 0
      %7042 = vmatprep.subr.bf16.mxu0 0
      %7043 = vmatpush1.bf16.msra.mxu0 0
      %7044 = vmatprep.mubr.bf16.mxu0 %v7007
      %7045 = vmatmul.mubr.bf16.gmra.mrb[0].mxu0 %v6905
      %v7046 = vpop.f32.mrb[0].mxu0
      %v7047 = vadd.f32 0.0, %v7046
      %v7048 = vpop.f32.mrb[0].mxu0
      %v7049 = vpop.f32.mrb[0].mxu0
      %v7050 = vadd.f32 0.0, %v7049
      %v7051 = vpop.f32.mrb[0].mxu0
      %7052 = vmatprep.mubr.bf16.mxu0 %v7010
      %7053 = vmatmul.mubr.bf16.gmra.mrb[0].mxu0 %v6907
      %v7054 = vpop.f32.mrb[0].mxu0
      %v7055 = vadd.f32 0.0, %v7054
      %v7056 = vpop.f32.mrb[0].mxu0
      %v7057 = vpop.f32.mrb[0].mxu0
      %v7058 = vadd.f32 0.0, %v7057
      %v7059 = vpop.f32.mrb[0].mxu0
      %7060 = vdwg.mxu0
      %v7061 = vadd.f32 %v6901, %v7047
      %v7062 = vadd.f32 %v6902, %v7050
      %v7063 = vadd.f32 %v6903, %v7055
      %v7064 = vadd.f32 %v6904, %v7058
      %v7065 = vmax.f32 %v7061, 0.0
      %v7066 = vmax.f32 %v7062, 0.0
      %v7067 = vmax.f32 %v7063, 0.0
      %v7068 = vmax.f32 %v7064, 0.0
      %v7069 = vpack.c.bf16 %v7066, %v7065
      %v7070 = vpack.c.bf16 %v7068, %v7067
      %v7071 = vld [vmem:[%s9] sm:$0xf]
      %v7072 = vld [vmem:[%s9 + $0x4] sm:$0xf]
      %v7073 = vld [vmem:[%s9 + $0x8] sm:$0xf]
      %v7074 = vld [vmem:[%s9 + $0xc] sm:$0xf]
      %v7075 = vld [vmem:[%s9 + $0x10] sm:$0xf]
      %v7076 = vld [vmem:[%s9 + $0x14] sm:$0xf]
      %v7077 = vld [vmem:[%s9 + $0x18] sm:$0xf]
      %v7078 = vld [vmem:[%s9 + $0x1c] sm:$0xf]
      %v7079 = vld [vmem:[%s9 + $0x20] sm:$0xf]
      %v7080 = vld [vmem:[%s9 + $0x24] sm:$0xf]
      %v7081 = vld [vmem:[%s9 + $0x28] sm:$0xf]
      %v7082 = vld [vmem:[%s9 + $0x2c] sm:$0xf]
      %v7083 = vld [vmem:[%s9 + $0x30] sm:$0xf]
      %v7084 = vld [vmem:[%s9 + $0x34] sm:$0xf]
      %v7085 = vld [vmem:[%s9 + $0x38] sm:$0xf]
      %v7086 = vld [vmem:[%s9 + $0x3c] sm:$0xf]
      %v7087 = vld [vmem:[%s10] sm:$0x1]
      %v7089 = vlaneseq
      %v7090 = vshrl.u32 %v7089, 7
      %v7091 = vsub.s32 0, %v7090
      %v7092 = vrot.slane %v7087, %v7091
      %v7110 = vunpack.c.l.b16 %v7071
      %v7111 = vunpack.c.l.b16 %v7072
      %v7112 = vunpack.c.l.b16 %v7073
      %v7113 = vunpack.c.l.b16 %v7074
      %v7114 = vunpack.c.l.b16 %v7075
      %v7115 = vunpack.c.l.b16 %v7076
      %v7116 = vunpack.c.l.b16 %v7077
      %v7117 = vunpack.c.l.b16 %v7078
      %v7118 = vunpack.c.l.b16 %v7079
      %v7119 = vunpack.c.l.b16 %v7080
      %v7120 = vunpack.c.l.b16 %v7081
      %v7121 = vunpack.c.l.b16 %v7082
      %v7122 = vunpack.c.l.b16 %v7083
      %v7123 = vunpack.c.l.b16 %v7084
      %v7124 = vunpack.c.l.b16 %v7085
      %v7125 = vunpack.c.l.b16 %v7086
      %v7126 = vpack.c.b16 %v7111, %v7110
      %v7127 = vpack.c.b16 %v7113, %v7112
      %v7128 = vpack.c.b16 %v7115, %v7114
      %v7129 = vpack.c.b16 %v7117, %v7116
      %v7130 = vpack.c.b16 %v7119, %v7118
      %v7131 = vpack.c.b16 %v7121, %v7120
      %v7132 = vpack.c.b16 %v7123, %v7122
      %v7133 = vpack.c.b16 %v7125, %v7124
      %7142 = vmatprep.subr.bf16.mxu0 0
      %7143 = vmatpush1.bf16.msra.mxu0 %v7126
      %7144 = vmatprep.subr.bf16.mxu0 0
      %7145 = vmatpush1.bf16.msra.mxu0 %v7127
      %7146 = vmatprep.subr.bf16.mxu0 0
      %7147 = vmatpush1.bf16.msra.mxu0 %v7128
      %7148 = vmatprep.subr.bf16.mxu0 0
      %7149 = vmatpush1.bf16.msra.mxu0 %v7129
      %7150 = vmatprep.subr.bf16.mxu0 0
      %7151 = vmatpush1.bf16.msra.mxu0 %v7130
      %7152 = vmatprep.subr.bf16.mxu0 0
      %7153 = vmatpush1.bf16.msra.mxu0 %v7131
      %7154 = vmatprep.subr.bf16.mxu0 0
      %7155 = vmatpush1.bf16.msra.mxu0 %v7132
      %7156 = vmatprep.subr.bf16.mxu0 0
      %7157 = vmatpush1.bf16.msra.mxu0 %v7133
      %7158 = vmatprep.subr.bf16.mxu0 0
      %7159 = vmatpush1.bf16.msra.mxu0 0
      %7160 = vmatprep.subr.bf16.mxu0 0
      %7161 = vmatpush1.bf16.msra.mxu0 0
      %7162 = vmatprep.subr.bf16.mxu0 0
      %7163 = vmatpush1.bf16.msra.mxu0 0
      %7164 = vmatprep.subr.bf16.mxu0 0
      %7165 = vmatpush1.bf16.msra.mxu0 0
      %7166 = vmatprep.subr.bf16.mxu0 0
      %7167 = vmatpush1.bf16.msra.mxu0 0
      %7168 = vmatprep.subr.bf16.mxu0 0
      %7169 = vmatpush1.bf16.msra.mxu0 0
      %7170 = vmatprep.subr.bf16.mxu0 0
      %7171 = vmatpush1.bf16.msra.mxu0 0
      %7172 = vmatprep.subr.bf16.mxu0 0
      %7173 = vmatpush1.bf16.msra.mxu0 0
      %7174 = vmatprep.mubr.bf16.mxu0 0
      %7175 = vmatmul.mubr.bf16.gmra.mrb[0].mxu0 %v7069
      %v7176 = vpop.f32.mrb[0].mxu0
      %v7177 = vadd.f32 %v7092, %v7176
      %v7178 = vpop.f32.mrb[0].mxu0
      %v7179 = vpop.f32.mrb[0].mxu0
      %v7180 = vadd.f32 %v7092, %v7179
      %v7181 = vpop.f32.mrb[0].mxu0
      %7182 = vmatprep.mubr.bf16.mxu0 0
      %7183 = vmatmul.mubr.bf16.gmra.mrb[0].mxu0 %v7070
      %v7184 = vpop.f32.mrb[0].mxu0
      %v7185 = vadd.f32 %v7092, %v7184
      %v7186 = vpop.f32.mrb[0].mxu0
      %v7187 = vpop.f32.mrb[0].mxu0
      %v7188 = vadd.f32 %v7092, %v7187
      %v7189 = vpop.f32.mrb[0].mxu0
      %7190 = vdwg.mxu0
      %7191 = vmax.xlane.f32.xlu0 %v7177
      %v7192 = vpop.xlane.xlu0 %7191
      %7193 = vmax.xlane.f32.xlu0 %v7180
      %v7194 = vpop.xlane.xlu0 %7193
      %7195 = vmax.xlane.f32.xlu0 %v7185
      %v7196 = vpop.xlane.xlu0 %7195
      %7197 = vmax.xlane.f32.xlu0 %v7188
      %v7198 = vpop.xlane.xlu0 %7197
      %v7199 = vsub.f32 %v7177, %v7192
      %v7200 = vsub.f32 %v7180, %v7194
      %v7201 = vsub.f32 %v7185, %v7196
      %v7202 = vsub.f32 %v7188, %v7198
      %v7203 = vmul.f32 %v7199, 1.442695
      %v7204 = vpow.pop %v7203
      %v7205 = vmul.f32 %v7200, 1.442695
      %v7206 = vpow.pop %v7205
      %v7207 = vmul.f32 %v7201, 1.442695
      %v7208 = vpow.pop %v7207
      %v7209 = vmul.f32 %v7202, 1.442695
      %v7210 = vpow.pop %v7209
      %7211 = vadd.xlane.f32.xlu0 %v7204
      %v7212 = vpop.xlane.xlu0 %7211
      %7213 = vadd.xlane.f32.xlu0 %v7206
      %v7214 = vpop.xlane.xlu0 %7213
      %7215 = vadd.xlane.f32.xlu0 %v7208
      %v7216 = vpop.xlane.xlu0 %7215
      %7217 = vadd.xlane.f32.xlu0 %v7210
      %v7218 = vpop.xlane.xlu0 %7217
      %v7219 = vrcp.pop %v7212
      %v7220 = vmul.f32 %v7204, %v7219
      %v7221 = vrcp.pop %v7214
      %v7222 = vmul.f32 %v7206, %v7221
      %v7223 = vrcp.pop %v7216
      %v7224 = vmul.f32 %v7208, %v7223
      %v7225 = vrcp.pop %v7218
      %v7226 = vmul.f32 %v7210, %v7225
      %7227 = vst [vmem:[%s388] sm:$0xff] %v7220
      %7228 = vst [vmem:[%s388 + $0x8] sm:$0xff] %v7222
      %7229 = vst [vmem:[%s388 + $0x10] sm:$0xff] %v7224
      %7230 = vst [vmem:[%s388 + $0x18] sm:$0xff] %v7226
      %s7231 = smul.u32 4, %s22
      %p7232 = scmp.lt.s32.totalorder %s7231, 7
      %s7233 = scalar_select %p7232, %s7231, 7
      %s7234 = smul.addr %s7233, 8
      %s7235 = scalar_lea.vmem %s11, %s7234
      // Predicated region
      $region65: #{_lambda_.1} parent=63 // pred_check
        %p7236 = pneg %p276
      $region66: #{_lambda_.1} parent=63 // pred_check_branch
        %7238 = sbr.rel (%p7236) target = $region68
      $region67: #{_lambda_.1} parent=63 // pred_region
        %s7239 = smul.u32 4, %s22
      $region68: #{_lambda_.1} parent=63 // pred_fallthru
        _
    $region64: #{_lambda_.1} parent=5 // pred_fallthru
      _
    %p7240 = scmp.le.s32.totalorder 2, %s17
    // Predicated region
    $region69: #{_lambda_.1} parent=5 // pred_check
      %p7241 = pneg %p7240
    $region70: #{_lambda_.1} parent=5 // pred_check_branch
      %7243 = sbr.rel (%p7241) target = $region72
    $region71: #{_lambda_.1} parent=5 // pred_region
      %s7244 = ssub.s32 %s17, 2
      // Predicated region
      $region73: #{_lambda_.1} parent=71 // pred_check
        %p7245 = pneg %p282
      $region74: #{_lambda_.1} parent=71 // pred_check_branch
        %7247 = sbr.rel (%p7245) target = $region76
      $region75: #{_lambda_.1} parent=71 // pred_region
        %s7248 = smul.u32 4, %s23
        %p7249 = scmp.lt.s32.totalorder %s7248, 7
        %s7250 = scalar_select %p7249, %s7248, 7
        %s7251 = smul.addr %s7250, 8
        %s7252 = scalar_lea.vmem %s11, %s7251
      $region76: #{_lambda_.1} parent=71 // pred_fallthru
        _
    $region72: #{_lambda_.1} parent=5 // pred_fallthru
      _
  $region6: #{_lambda_.1} parent=0 // loop_footer
    %s21 = sadd.s32 1, %s17
  $region7: #{_lambda_.1} parent=0 // loop_footer_branch
    %16 = sbr.rel target = $region3
  $region8: #{_lambda_.1} parent=0 // loop_exit
    _

</llo_original>
